<compile_context>
chip_gen: v7x
topology: tpu7x:2x2x1
jax: 0.10.0
libtpu: 0.0.40
codegen_flags: <defaults>
</compile_context>

<pallas_src>
import math

import jax
import jax.numpy as jnp
from jax.experimental import pallas as pl
from jax.experimental.pallas import tpu as pltpu


# ----------------------------------------------------------------------------
# Parameter initialization (PyTorch-style uniform(-1/sqrt(H), 1/sqrt(H)))
# ----------------------------------------------------------------------------
def init_gru_params(key, input_size, hidden_size, num_layers):
    """List (len num_layers*2, order l0_fwd, l0_bwd, l1_fwd, ...) of tuples
    (W_ih^T, W_hh^T, b_ih, b_hh):
        W_ih^T : (in_l, 3H)   in_l = input_size for layer 0 else 2H
        W_hh^T : (H,    3H)
        b_ih   : (1,    3H)
        b_hh   : (1,    3H)
    Gate order along 3H is [r | z | n] (PyTorch convention)."""
    k = 1.0 / math.sqrt(hidden_size)
    params = []
    for layer in range(num_layers):
        in_l = input_size if layer == 0 else 2 * hidden_size
        for _direction in range(2):
            key, k1, k2, k3, k4 = jax.random.split(key, 5)
            wi = jax.random.uniform(k1, (3 * hidden_size, in_l), jnp.float32, -k, k)
            wh = jax.random.uniform(k2, (3 * hidden_size, hidden_size), jnp.float32, -k, k)
            bi = jax.random.uniform(k3, (3 * hidden_size,), jnp.float32, -k, k)
            bh = jax.random.uniform(k4, (3 * hidden_size,), jnp.float32, -k, k)
            params.append((wi.T, wh.T, bi.reshape(1, -1), bh.reshape(1, -1)))
    return params


# ----------------------------------------------------------------------------
# Weight repacking: pad H -> Hp (multiple of 128), fuse directions along N,
# merge r/z biases, block-diagonal hidden projection.
# Packed column layout (width 6*Hp): [r_fwd | r_bwd | z_fwd | z_bwd | n_fwd | n_bwd]
# Hidden-state layout per layer: (B, 2*Hp) = [h_fwd | h_bwd]
# ----------------------------------------------------------------------------
def pack_params(params, input_size, hidden_size, num_layers, Hp):
    H = hidden_size
    packed = []
    for layer in range(num_layers):
        in_p = input_size if layer == 0 else 2 * Hp
        Wi = jnp.zeros((in_p, 6 * Hp), jnp.float32)
        Wh = jnp.zeros((2 * Hp, 6 * Hp), jnp.float32)
        bi = jnp.zeros((1, 6 * Hp), jnp.float32)
        bhn = jnp.zeros((1, 2 * Hp), jnp.float32)
        for d in range(2):
            wi_t, wh_t, b_i, b_h = params[layer * 2 + d]
            for g in range(3):
                col = g * 2 * Hp + d * Hp
                # ---- input weights ----
                if layer == 0:
                    Wi = Wi.at[:, col:col + H].set(wi_t[:, g * H:(g + 1) * H])
                else:
                    # rows 0:H <- prev-layer fwd output, rows Hp:Hp+H <- prev bwd
                    for src in range(2):
                        Wi = Wi.at[src * Hp:src * Hp + H, col:col + H].set(
                            wi_t[src * H:(src + 1) * H, g * H:(g + 1) * H])
                # ---- hidden weights (block diagonal over direction) ----
                Wh = Wh.at[d * Hp:d * Hp + H, col:col + H].set(
                    wh_t[:, g * H:(g + 1) * H])
                # ---- biases: merge b_ih + b_hh for r,z; b_ih only for n ----
                if g < 2:
                    bval = b_i[:, g * H:(g + 1) * H] + b_h[:, g * H:(g + 1) * H]
                else:
                    bval = b_i[:, g * H:(g + 1) * H]
                bi = bi.at[:, col:col + H].set(bval)
            # hidden-side n bias (applied inside r * (.) )
            bhn = bhn.at[:, d * Hp:d * Hp + H].set(b_h[:, 2 * H:3 * H])
        packed.append((Wi, bi, Wh, bhn))
    return packed


# ----------------------------------------------------------------------------
# Pallas kernel: whole recurrence in one invocation
# ----------------------------------------------------------------------------
def make_encoder_kernel(num_layers, Hp, B, t_max):
    two_hp = 2 * Hp
    n_w = 4 * num_layers

    def kernel(*refs):
        x_ref = refs[0]                       # (T*B, In)   time-major, row t*B+b
        sl_ref = refs[1]                      # (B, 1) int32
        w_refs = refs[2:2 + n_w]              # per layer: Wi, bi, Wh, bhn
        out_ref = refs[2 + n_w]               # (B, 2*Hp)   lane-dense output
        gi0_scr = refs[3 + n_w]               # (T*B, 6*Hp) staged layer-0 proj

        # --- hoist all weight/bias reads out of the time loop ---------------
        Wi0 = w_refs[0][...]
        bi0 = w_refs[1][...]
        Wh = [w_refs[4 * l + 2][...] for l in range(num_layers)]
        bhn = [w_refs[4 * l + 3][...] for l in range(num_layers)]
        Wi = [None] + [w_refs[4 * l + 0][...] for l in range(1, num_layers)]
        bi = [None] + [w_refs[4 * l + 1][...] for l in range(1, num_layers)]

        # --- layer-0 input projection for ALL timesteps: one fat matmul -----
        gi0_scr[...] = (
            jnp.dot(x_ref[...], Wi0, preferred_element_type=jnp.float32) + bi0
        )

        sl = sl_ref[...]                      # (B, 1), read once

        def gru_step(gi, gh, bhn_l, h_prev):
            # gate-major layout: [:, :2Hp]=r, [:, 2Hp:4Hp]=z, [:, 4Hp:]=n inputs
            r = jax.nn.sigmoid(gi[:, :two_hp] + gh[:, :two_hp])
            z = jax.nn.sigmoid(gi[:, two_hp:2 * two_hp] + gh[:, two_hp:2 * two_hp])
            n = jnp.tanh(gi[:, 2 * two_hp:] + r * (gh[:, 2 * two_hp:] + bhn_l))
            return (1.0 - z) * n + z * h_prev

        h = [jnp.zeros((B, two_hp), jnp.float32) for _ in range(num_layers)]
        out_val = jnp.zeros((B, two_hp), jnp.float32)

        # --- serial recurrence, statically unrolled (t_max is small) --------
        for t in range(t_max):
            # layer 0: input projection already staged
            gi = gi0_scr[pl.ds(t * B, B), :]
            gh = jnp.dot(h[0], Wh[0], preferred_element_type=jnp.float32)
            h[0] = gru_step(gi, gh, bhn[0], h[0])
            layer_in = h[0]
            for l in range(1, num_layers):
                gi = jnp.dot(layer_in, Wi[l], preferred_element_type=jnp.float32) + bi[l]
                gh = jnp.dot(h[l], Wh[l], preferred_element_type=jnp.float32)
                h[l] = gru_step(gi, gh, bhn[l], h[l])
                layer_in = h[l]
            # select top-layer output for rows whose last valid step is t
            mask = sl == (t + 1)                              # (B, 1)
            out_val = jnp.where(mask, layer_in, out_val)

        out_ref[...] = out_val

    return kernel


# ----------------------------------------------------------------------------
# Wrapper
# ----------------------------------------------------------------------------
def encoder_rnn_forward(x, seq_len, params, hidden_size, num_layers):
    """x: (B, T, input_size) float32; seq_len: python list/tuple of ints (len B).
    Returns (1, B, 2*hidden_size) float32, matching EncoderRNN.forward."""
    B, T, In = x.shape
    H = hidden_size
    Hp = ((H + 127) // 128) * 128            # pad gates/state to 128-lane blocks
    t_max = int(max(seq_len))
    assert t_max <= T
    # NOTE: seq_len == 0 leaves that output row as zeros (PyTorch would index -1).

    # Pad batch up to a sublane multiple of 8 so all row slices stay aligned.
    Bp = ((B + 7) // 8) * 8
    sl_list = list(seq_len)
    if Bp != B:
        x = jnp.pad(x, ((0, Bp - B), (0, 0), (0, 0)))
        sl_list = sl_list + [1] * (Bp - B)

    x_tm = jnp.transpose(x, (1, 0, 2)).reshape(T * Bp, In)      # time-major rows
    sl = jnp.asarray(sl_list, dtype=jnp.int32).reshape(Bp, 1)
    packed = pack_params(params, In, H, num_layers, Hp)
    flat_w = [w for tup in packed for w in tup]

    in_specs = [
        pl.BlockSpec((T * Bp, In), lambda i: (0, 0)),
        pl.BlockSpec((Bp, 1), lambda i: (0, 0)),
    ]
    for w in flat_w:
        in_specs.append(pl.BlockSpec(w.shape, lambda i: (0, 0)))

    out_spec = pl.BlockSpec((Bp, 2 * Hp), lambda i: (0, 0))

    kernel = make_encoder_kernel(num_layers, Hp, Bp, t_max)

    out = pl.pallas_call(
        kernel,
        out_shape=jax.ShapeDtypeStruct((Bp, 2 * Hp), jnp.float32),
        grid_spec=pltpu.PrefetchScalarGridSpec(
            num_scalar_prefetch=0,
            grid=(1,),                                        # whole recurrence in one step
            in_specs=in_specs,
            out_specs=out_spec,
            scratch_shapes=[pltpu.VMEM((T * Bp, 6 * Hp), jnp.float32)],
        ),
        compiler_params=pltpu.CompilerParams(
            dimension_semantics=("arbitrary",),
            vmem_limit_bytes=32 * 1024 * 1024,
        ),
    )(x_tm, sl, *flat_w)

    # slice valid lanes / rows back out: [h_fwd | h_bwd]
    hidden = jnp.concatenate([out[:B, :H], out[:B, Hp:Hp + H]], axis=-1)
    return hidden.reshape(1, B, 2 * H)


# ----------------------------------------------------------------------------
# Pure-JAX reference (for verification)
# ----------------------------------------------------------------------------
def encoder_rnn_reference(x, seq_len, params, hidden_size, num_layers):
    B, T, _ = x.shape
    H = hidden_size
    t_max = int(max(seq_len))
    h = [jnp.zeros((B, H), jnp.float32) for _ in range(2 * num_layers)]
    outs = []
    for t in range(t_max):
        layer_in = x[:, t, :]
        for layer in range(num_layers):
            d_outs = []
            for direction in range(2):
                wi_t, wh_t, bi, bh = params[layer * 2 + direction]
                hp = h[layer * 2 + direction]
                gi = layer_in @ wi_t + bi
                gh = hp @ wh_t + bh
                r = jax.nn.sigmoid(gi[:, :H] + gh[:, :H])
                z = jax.nn.sigmoid(gi[:, H:2 * H] + gh[:, H:2 * H])
                n = jnp.tanh(gi[:, 2 * H:] + r * gh[:, 2 * H:])
                hn = (1.0 - z) * n + z * hp
                h[layer * 2 + direction] = hn
                d_outs.append(hn)
            layer_in = jnp.concatenate(d_outs, axis=-1)
        outs.append(layer_in)
    enc = jnp.stack(outs, axis=1)  # (B, t_max, 2H)
    idx = jnp.asarray(seq_len, jnp.int32) - 1
    hidden = enc[jnp.arange(B), idx, :]
    return hidden.reshape(1, B, 2 * H)


# ----------------------------------------------------------------------------
if __name__ == "__main__":
    B, T, INPUT_SIZE, HIDDEN, LAYERS = 8, 8, 16, 32, 2
    seq_len = [3, 8, 5, 1, 6, 2, 8, 4]  # max == T

    key = jax.random.PRNGKey(0)
    key, kx = jax.random.split(key)
    x = jax.random.normal(kx, (B, T, INPUT_SIZE), dtype=jnp.float32)
    params = init_gru_params(key, INPUT_SIZE, HIDDEN, LAYERS)

    out = encoder_rnn_forward(x, seq_len, params, HIDDEN, LAYERS)
    out = jax.block_until_ready(out)

    ref = encoder_rnn_reference(x, seq_len, params, HIDDEN, LAYERS)
    ref = jax.block_until_ready(ref)

    assert out.shape == (1, B, 2 * HIDDEN), out.shape
    assert jnp.allclose(out, ref, atol=2e-3, rtol=2e-3), float(jnp.max(jnp.abs(out - ref)))

    print("KERNEL_OK")
</pallas_src>

<mosaic_0001>
module attributes {stable_mosaic.version = 11 : i64} {
  func.func @kernel(%arg0: i32, %arg1: memref<64x16xf32, #tpu.memory_space<vmem>>, %arg2: memref<8x1xi32, #tpu.memory_space<vmem>>, %arg3: memref<16x768xf32, #tpu.memory_space<vmem>>, %arg4: memref<1x768xf32, #tpu.memory_space<vmem>>, %arg5: memref<256x768xf32, #tpu.memory_space<vmem>>, %arg6: memref<1x256xf32, #tpu.memory_space<vmem>>, %arg7: memref<256x768xf32, #tpu.memory_space<vmem>>, %arg8: memref<1x768xf32, #tpu.memory_space<vmem>>, %arg9: memref<256x768xf32, #tpu.memory_space<vmem>>, %arg10: memref<1x256xf32, #tpu.memory_space<vmem>>, %arg11: memref<8x256xf32, #tpu.memory_space<vmem>>, %arg12: memref<64x768xf32, #tpu.memory_space<vmem>>) attributes {dimension_semantics = [#tpu.dimension_semantics<arbitrary>], iteration_bounds = array<i64: 1>, scalar_prefetch = 0 : i64, scratch_operands = 1 : i64, tpu.core_type = #tpu.core_type<tc>, window_params = [{pipeline_mode = #tpu.pipeline_mode<synchronous>, transform_indices = @transform_0, window_bounds = array<i64: 64, 16>}, {pipeline_mode = #tpu.pipeline_mode<synchronous>, transform_indices = @transform_1, window_bounds = array<i64: 8, 1>}, {pipeline_mode = #tpu.pipeline_mode<synchronous>, transform_indices = @transform_2, window_bounds = array<i64: 16, 768>}, {pipeline_mode = #tpu.pipeline_mode<synchronous>, transform_indices = @transform_3, window_bounds = array<i64: 1, 768>}, {pipeline_mode = #tpu.pipeline_mode<synchronous>, transform_indices = @transform_4, window_bounds = array<i64: 256, 768>}, {pipeline_mode = #tpu.pipeline_mode<synchronous>, transform_indices = @transform_5, window_bounds = array<i64: 1, 256>}, {pipeline_mode = #tpu.pipeline_mode<synchronous>, transform_indices = @transform_6, window_bounds = array<i64: 256, 768>}, {pipeline_mode = #tpu.pipeline_mode<synchronous>, transform_indices = @transform_7, window_bounds = array<i64: 1, 768>}, {pipeline_mode = #tpu.pipeline_mode<synchronous>, transform_indices = @transform_8, window_bounds = array<i64: 256, 768>}, {pipeline_mode = #tpu.pipeline_mode<synchronous>, transform_indices = @transform_9, window_bounds = array<i64: 1, 256>}, {pipeline_mode = #tpu.pipeline_mode<synchronous>, transform_indices = @transform_10, window_bounds = array<i64: 8, 256>}]} {
    %c0 = arith.constant 0 : index
    %c0_0 = arith.constant 0 : index
    %0 = vector.load %arg3[%c0, %c0_0] : memref<16x768xf32, #tpu.memory_space<vmem>>, vector<16x768xf32>
    %c0_1 = arith.constant 0 : index
    %c0_2 = arith.constant 0 : index
    %1 = vector.load %arg4[%c0_1, %c0_2] : memref<1x768xf32, #tpu.memory_space<vmem>>, vector<1x768xf32>
    %c0_3 = arith.constant 0 : index
    %c0_4 = arith.constant 0 : index
    %2 = vector.load %arg5[%c0_3, %c0_4] : memref<256x768xf32, #tpu.memory_space<vmem>>, vector<256x768xf32>
    %c0_5 = arith.constant 0 : index
    %c0_6 = arith.constant 0 : index
    %3 = vector.load %arg9[%c0_5, %c0_6] : memref<256x768xf32, #tpu.memory_space<vmem>>, vector<256x768xf32>
    %c0_7 = arith.constant 0 : index
    %c0_8 = arith.constant 0 : index
    %4 = vector.load %arg6[%c0_7, %c0_8] : memref<1x256xf32, #tpu.memory_space<vmem>>, vector<1x256xf32>
    %c0_9 = arith.constant 0 : index
    %c0_10 = arith.constant 0 : index
    %5 = vector.load %arg10[%c0_9, %c0_10] : memref<1x256xf32, #tpu.memory_space<vmem>>, vector<1x256xf32>
    %c0_11 = arith.constant 0 : index
    %c0_12 = arith.constant 0 : index
    %6 = vector.load %arg7[%c0_11, %c0_12] : memref<256x768xf32, #tpu.memory_space<vmem>>, vector<256x768xf32>
    %c0_13 = arith.constant 0 : index
    %c0_14 = arith.constant 0 : index
    %7 = vector.load %arg8[%c0_13, %c0_14] : memref<1x768xf32, #tpu.memory_space<vmem>>, vector<1x768xf32>
    %c0_15 = arith.constant 0 : index
    %c0_16 = arith.constant 0 : index
    %8 = vector.load %arg1[%c0_15, %c0_16] : memref<64x16xf32, #tpu.memory_space<vmem>>, vector<64x16xf32>
    %cst = arith.constant dense<0.000000e+00> : vector<64x768xf32>
    %9 = tpu.matmul %8, %0, %cst {dimension_numbers = #tpu.dot_dimension_numbers<[1], [0], [0], [1], [0, 0, 1, 1], [], []>} : vector<64x16xf32>, vector<16x768xf32>, vector<64x768xf32> -> vector<64x768xf32>
    %10 = vector.broadcast %1 : vector<1x768xf32> to vector<64x768xf32>
    %11 = arith.addf %9, %10 : vector<64x768xf32>
    %c0_17 = arith.constant 0 : index
    %c0_18 = arith.constant 0 : index
    %12 = vector.load %arg12[%c0_17, %c0_18] : memref<64x768xf32, #tpu.memory_space<vmem>>, vector<64x768xf32>
    tpu.vector_store %arg12[%c0_17, %c0_18], %11 {strides = array<i32>} : memref<64x768xf32, #tpu.memory_space<vmem>>, vector<64x768xf32>,
    %c0_19 = arith.constant 0 : index
    %c0_20 = arith.constant 0 : index
    %13 = vector.load %arg2[%c0_19, %c0_20] : memref<8x1xi32, #tpu.memory_space<vmem>>, vector<8x1xi32>
    %cst_21 = arith.constant 0.000000e+00 : f32
    %14 = vector.broadcast %cst_21 : f32 to vector<8x256xf32>
    %cst_22 = arith.constant 0.000000e+00 : f32
    %15 = vector.broadcast %cst_22 : f32 to vector<8x256xf32>
    %cst_23 = arith.constant 0.000000e+00 : f32
    %16 = vector.broadcast %cst_23 : f32 to vector<8x256xf32>
    %c0_24 = arith.constant 0 : index
    %c0_25 = arith.constant 0 : index
    %17 = vector.load %arg12[%c0_24, %c0_25] : memref<64x768xf32, #tpu.memory_space<vmem>>, vector<8x768xf32>
    %cst_26 = arith.constant dense<0.000000e+00> : vector<8x768xf32>
    %18 = tpu.matmul %14, %2, %cst_26 {dimension_numbers = #tpu.dot_dimension_numbers<[1], [0], [0], [1], [0, 0, 1, 1], [], []>} : vector<8x256xf32>, vector<256x768xf32>, vector<8x768xf32> -> vector<8x768xf32>
    %19 = vector.extract_strided_slice %17 {offsets = [0, 0], sizes = [8, 256], strides = [1, 1]} : vector<8x768xf32> to vector<8x256xf32>
    %20 = vector.extract_strided_slice %18 {offsets = [0, 0], sizes = [8, 256], strides = [1, 1]} : vector<8x768xf32> to vector<8x256xf32>
    %21 = arith.addf %19, %20 : vector<8x256xf32>
    %22 = arith.negf %21 : vector<8x256xf32>
    %23 = math.exp %22 : vector<8x256xf32>
    %cst_27 = arith.constant 1.000000e+00 : f32
    %24 = vector.broadcast %cst_27 : f32 to vector<8x256xf32>
    %25 = arith.addf %24, %23 : vector<8x256xf32>
    %26 = arith.divf %24, %25 : vector<8x256xf32>
    %27 = vector.extract_strided_slice %17 {offsets = [0, 256], sizes = [8, 256], strides = [1, 1]} : vector<8x768xf32> to vector<8x256xf32>
    %28 = vector.extract_strided_slice %18 {offsets = [0, 256], sizes = [8, 256], strides = [1, 1]} : vector<8x768xf32> to vector<8x256xf32>
    %29 = arith.addf %27, %28 : vector<8x256xf32>
    %30 = arith.negf %29 : vector<8x256xf32>
    %31 = math.exp %30 : vector<8x256xf32>
    %cst_28 = arith.constant 1.000000e+00 : f32
    %32 = vector.broadcast %cst_28 : f32 to vector<8x256xf32>
    %33 = arith.addf %32, %31 : vector<8x256xf32>
    %34 = arith.divf %32, %33 : vector<8x256xf32>
    %35 = vector.extract_strided_slice %17 {offsets = [0, 512], sizes = [8, 256], strides = [1, 1]} : vector<8x768xf32> to vector<8x256xf32>
    %36 = vector.extract_strided_slice %18 {offsets = [0, 512], sizes = [8, 256], strides = [1, 1]} : vector<8x768xf32> to vector<8x256xf32>
    %37 = vector.broadcast %4 : vector<1x256xf32> to vector<8x256xf32>
    %38 = arith.addf %36, %37 : vector<8x256xf32>
    %39 = arith.mulf %26, %38 : vector<8x256xf32>
    %40 = arith.addf %35, %39 : vector<8x256xf32>
    %41 = math.tanh %40 : vector<8x256xf32>
    %cst_29 = arith.constant 1.000000e+00 : f32
    %42 = vector.broadcast %cst_29 : f32 to vector<8x256xf32>
    %43 = arith.subf %42, %34 : vector<8x256xf32>
    %44 = arith.mulf %43, %41 : vector<8x256xf32>
    %45 = arith.mulf %34, %14 : vector<8x256xf32>
    %46 = arith.addf %44, %45 : vector<8x256xf32>
    %cst_30 = arith.constant dense<0.000000e+00> : vector<8x768xf32>
    %47 = tpu.matmul %46, %6, %cst_30 {dimension_numbers = #tpu.dot_dimension_numbers<[1], [0], [0], [1], [0, 0, 1, 1], [], []>} : vector<8x256xf32>, vector<256x768xf32>, vector<8x768xf32> -> vector<8x768xf32>
    %48 = vector.broadcast %7 : vector<1x768xf32> to vector<8x768xf32>
    %49 = arith.addf %47, %48 : vector<8x768xf32>
    %cst_31 = arith.constant dense<0.000000e+00> : vector<8x768xf32>
    %50 = tpu.matmul %15, %3, %cst_31 {dimension_numbers = #tpu.dot_dimension_numbers<[1], [0], [0], [1], [0, 0, 1, 1], [], []>} : vector<8x256xf32>, vector<256x768xf32>, vector<8x768xf32> -> vector<8x768xf32>
    %51 = vector.extract_strided_slice %49 {offsets = [0, 0], sizes = [8, 256], strides = [1, 1]} : vector<8x768xf32> to vector<8x256xf32>
    %52 = vector.extract_strided_slice %50 {offsets = [0, 0], sizes = [8, 256], strides = [1, 1]} : vector<8x768xf32> to vector<8x256xf32>
    %53 = arith.addf %51, %52 : vector<8x256xf32>
    %54 = arith.negf %53 : vector<8x256xf32>
    %55 = math.exp %54 : vector<8x256xf32>
    %cst_32 = arith.constant 1.000000e+00 : f32
    %56 = vector.broadcast %cst_32 : f32 to vector<8x256xf32>
    %57 = arith.addf %56, %55 : vector<8x256xf32>
    %58 = arith.divf %56, %57 : vector<8x256xf32>
    %59 = vector.extract_strided_slice %49 {offsets = [0, 256], sizes = [8, 256], strides = [1, 1]} : vector<8x768xf32> to vector<8x256xf32>
    %60 = vector.extract_strided_slice %50 {offsets = [0, 256], sizes = [8, 256], strides = [1, 1]} : vector<8x768xf32> to vector<8x256xf32>
    %61 = arith.addf %59, %60 : vector<8x256xf32>
    %62 = arith.negf %61 : vector<8x256xf32>
    %63 = math.exp %62 : vector<8x256xf32>
    %cst_33 = arith.constant 1.000000e+00 : f32
    %64 = vector.broadcast %cst_33 : f32 to vector<8x256xf32>
    %65 = arith.addf %64, %63 : vector<8x256xf32>
    %66 = arith.divf %64, %65 : vector<8x256xf32>
    %67 = vector.extract_strided_slice %49 {offsets = [0, 512], sizes = [8, 256], strides = [1, 1]} : vector<8x768xf32> to vector<8x256xf32>
    %68 = vector.extract_strided_slice %50 {offsets = [0, 512], sizes = [8, 256], strides = [1, 1]} : vector<8x768xf32> to vector<8x256xf32>
    %69 = vector.broadcast %5 : vector<1x256xf32> to vector<8x256xf32>
    %70 = arith.addf %68, %69 : vector<8x256xf32>
    %71 = arith.mulf %58, %70 : vector<8x256xf32>
    %72 = arith.addf %67, %71 : vector<8x256xf32>
    %73 = math.tanh %72 : vector<8x256xf32>
    %cst_34 = arith.constant 1.000000e+00 : f32
    %74 = vector.broadcast %cst_34 : f32 to vector<8x256xf32>
    %75 = arith.subf %74, %66 : vector<8x256xf32>
    %76 = arith.mulf %75, %73 : vector<8x256xf32>
    %77 = arith.mulf %66, %15 : vector<8x256xf32>
    %78 = arith.addf %76, %77 : vector<8x256xf32>
    %c1_i32 = arith.constant 1 : i32
    %79 = vector.broadcast %c1_i32 : i32 to vector<8x1xi32>
    %80 = arith.cmpi eq, %13, %79 : vector<8x1xi32>
    %81 = vector.shape_cast %80 : vector<8x1xi1> to vector<8x1xi1>
    %82 = vector.broadcast %81 : vector<8x1xi1> to vector<8x256xi1>
    %83 = arith.select %82, %78, %16 : vector<8x256xi1>, vector<8x256xf32>
    %c8 = arith.constant 8 : index
    %c0_35 = arith.constant 0 : index
    %84 = vector.load %arg12[%c8, %c0_35] : memref<64x768xf32, #tpu.memory_space<vmem>>, vector<8x768xf32>
    %cst_36 = arith.constant dense<0.000000e+00> : vector<8x768xf32>
    %85 = tpu.matmul %46, %2, %cst_36 {dimension_numbers = #tpu.dot_dimension_numbers<[1], [0], [0], [1], [0, 0, 1, 1], [], []>} : vector<8x256xf32>, vector<256x768xf32>, vector<8x768xf32> -> vector<8x768xf32>
    %86 = vector.extract_strided_slice %84 {offsets = [0, 0], sizes = [8, 256], strides = [1, 1]} : vector<8x768xf32> to vector<8x256xf32>
    %87 = vector.extract_strided_slice %85 {offsets = [0, 0], sizes = [8, 256], strides = [1, 1]} : vector<8x768xf32> to vector<8x256xf32>
    %88 = arith.addf %86, %87 : vector<8x256xf32>
    %89 = arith.negf %88 : vector<8x256xf32>
    %90 = math.exp %89 : vector<8x256xf32>
    %cst_37 = arith.constant 1.000000e+00 : f32
    %91 = vector.broadcast %cst_37 : f32 to vector<8x256xf32>
    %92 = arith.addf %91, %90 : vector<8x256xf32>
    %93 = arith.divf %91, %92 : vector<8x256xf32>
    %94 = vector.extract_strided_slice %84 {offsets = [0, 256], sizes = [8, 256], strides = [1, 1]} : vector<8x768xf32> to vector<8x256xf32>
    %95 = vector.extract_strided_slice %85 {offsets = [0, 256], sizes = [8, 256], strides = [1, 1]} : vector<8x768xf32> to vector<8x256xf32>
    %96 = arith.addf %94, %95 : vector<8x256xf32>
    %97 = arith.negf %96 : vector<8x256xf32>
    %98 = math.exp %97 : vector<8x256xf32>
    %cst_38 = arith.constant 1.000000e+00 : f32
    %99 = vector.broadcast %cst_38 : f32 to vector<8x256xf32>
    %100 = arith.addf %99, %98 : vector<8x256xf32>
    %101 = arith.divf %99, %100 : vector<8x256xf32>
    %102 = vector.extract_strided_slice %84 {offsets = [0, 512], sizes = [8, 256], strides = [1, 1]} : vector<8x768xf32> to vector<8x256xf32>
    %103 = vector.extract_strided_slice %85 {offsets = [0, 512], sizes = [8, 256], strides = [1, 1]} : vector<8x768xf32> to vector<8x256xf32>
    %104 = vector.broadcast %4 : vector<1x256xf32> to vector<8x256xf32>
    %105 = arith.addf %103, %104 : vector<8x256xf32>
    %106 = arith.mulf %93, %105 : vector<8x256xf32>
    %107 = arith.addf %102, %106 : vector<8x256xf32>
    %108 = math.tanh %107 : vector<8x256xf32>
    %cst_39 = arith.constant 1.000000e+00 : f32
    %109 = vector.broadcast %cst_39 : f32 to vector<8x256xf32>
    %110 = arith.subf %109, %101 : vector<8x256xf32>
    %111 = arith.mulf %110, %108 : vector<8x256xf32>
    %112 = arith.mulf %101, %46 : vector<8x256xf32>
    %113 = arith.addf %111, %112 : vector<8x256xf32>
    %cst_40 = arith.constant dense<0.000000e+00> : vector<8x768xf32>
    %114 = tpu.matmul %113, %6, %cst_40 {dimension_numbers = #tpu.dot_dimension_numbers<[1], [0], [0], [1], [0, 0, 1, 1], [], []>} : vector<8x256xf32>, vector<256x768xf32>, vector<8x768xf32> -> vector<8x768xf32>
    %115 = vector.broadcast %7 : vector<1x768xf32> to vector<8x768xf32>
    %116 = arith.addf %114, %115 : vector<8x768xf32>
    %cst_41 = arith.constant dense<0.000000e+00> : vector<8x768xf32>
    %117 = tpu.matmul %78, %3, %cst_41 {dimension_numbers = #tpu.dot_dimension_numbers<[1], [0], [0], [1], [0, 0, 1, 1], [], []>} : vector<8x256xf32>, vector<256x768xf32>, vector<8x768xf32> -> vector<8x768xf32>
    %118 = vector.extract_strided_slice %116 {offsets = [0, 0], sizes = [8, 256], strides = [1, 1]} : vector<8x768xf32> to vector<8x256xf32>
    %119 = vector.extract_strided_slice %117 {offsets = [0, 0], sizes = [8, 256], strides = [1, 1]} : vector<8x768xf32> to vector<8x256xf32>
    %120 = arith.addf %118, %119 : vector<8x256xf32>
    %121 = arith.negf %120 : vector<8x256xf32>
    %122 = math.exp %121 : vector<8x256xf32>
    %cst_42 = arith.constant 1.000000e+00 : f32
    %123 = vector.broadcast %cst_42 : f32 to vector<8x256xf32>
    %124 = arith.addf %123, %122 : vector<8x256xf32>
    %125 = arith.divf %123, %124 : vector<8x256xf32>
    %126 = vector.extract_strided_slice %116 {offsets = [0, 256], sizes = [8, 256], strides = [1, 1]} : vector<8x768xf32> to vector<8x256xf32>
    %127 = vector.extract_strided_slice %117 {offsets = [0, 256], sizes = [8, 256], strides = [1, 1]} : vector<8x768xf32> to vector<8x256xf32>
    %128 = arith.addf %126, %127 : vector<8x256xf32>
    %129 = arith.negf %128 : vector<8x256xf32>
    %130 = math.exp %129 : vector<8x256xf32>
    %cst_43 = arith.constant 1.000000e+00 : f32
    %131 = vector.broadcast %cst_43 : f32 to vector<8x256xf32>
    %132 = arith.addf %131, %130 : vector<8x256xf32>
    %133 = arith.divf %131, %132 : vector<8x256xf32>
    %134 = vector.extract_strided_slice %116 {offsets = [0, 512], sizes = [8, 256], strides = [1, 1]} : vector<8x768xf32> to vector<8x256xf32>
    %135 = vector.extract_strided_slice %117 {offsets = [0, 512], sizes = [8, 256], strides = [1, 1]} : vector<8x768xf32> to vector<8x256xf32>
    %136 = vector.broadcast %5 : vector<1x256xf32> to vector<8x256xf32>
    %137 = arith.addf %135, %136 : vector<8x256xf32>
    %138 = arith.mulf %125, %137 : vector<8x256xf32>
    %139 = arith.addf %134, %138 : vector<8x256xf32>
    %140 = math.tanh %139 : vector<8x256xf32>
    %cst_44 = arith.constant 1.000000e+00 : f32
    %141 = vector.broadcast %cst_44 : f32 to vector<8x256xf32>
    %142 = arith.subf %141, %133 : vector<8x256xf32>
    %143 = arith.mulf %142, %140 : vector<8x256xf32>
    %144 = arith.mulf %133, %78 : vector<8x256xf32>
    %145 = arith.addf %143, %144 : vector<8x256xf32>
    %c2_i32 = arith.constant 2 : i32
    %146 = vector.broadcast %c2_i32 : i32 to vector<8x1xi32>
    %147 = arith.cmpi eq, %13, %146 : vector<8x1xi32>
    %148 = vector.shape_cast %147 : vector<8x1xi1> to vector<8x1xi1>
    %149 = vector.broadcast %148 : vector<8x1xi1> to vector<8x256xi1>
    %150 = arith.select %149, %145, %83 : vector<8x256xi1>, vector<8x256xf32>
    %c16 = arith.constant 16 : index
    %c0_45 = arith.constant 0 : index
    %151 = vector.load %arg12[%c16, %c0_45] : memref<64x768xf32, #tpu.memory_space<vmem>>, vector<8x768xf32>
    %cst_46 = arith.constant dense<0.000000e+00> : vector<8x768xf32>
    %152 = tpu.matmul %113, %2, %cst_46 {dimension_numbers = #tpu.dot_dimension_numbers<[1], [0], [0], [1], [0, 0, 1, 1], [], []>} : vector<8x256xf32>, vector<256x768xf32>, vector<8x768xf32> -> vector<8x768xf32>
    %153 = vector.extract_strided_slice %151 {offsets = [0, 0], sizes = [8, 256], strides = [1, 1]} : vector<8x768xf32> to vector<8x256xf32>
    %154 = vector.extract_strided_slice %152 {offsets = [0, 0], sizes = [8, 256], strides = [1, 1]} : vector<8x768xf32> to vector<8x256xf32>
    %155 = arith.addf %153, %154 : vector<8x256xf32>
    %156 = arith.negf %155 : vector<8x256xf32>
    %157 = math.exp %156 : vector<8x256xf32>
    %cst_47 = arith.constant 1.000000e+00 : f32
    %158 = vector.broadcast %cst_47 : f32 to vector<8x256xf32>
    %159 = arith.addf %158, %157 : vector<8x256xf32>
    %160 = arith.divf %158, %159 : vector<8x256xf32>
    %161 = vector.extract_strided_slice %151 {offsets = [0, 256], sizes = [8, 256], strides = [1, 1]} : vector<8x768xf32> to vector<8x256xf32>
    %162 = vector.extract_strided_slice %152 {offsets = [0, 256], sizes = [8, 256], strides = [1, 1]} : vector<8x768xf32> to vector<8x256xf32>
    %163 = arith.addf %161, %162 : vector<8x256xf32>
    %164 = arith.negf %163 : vector<8x256xf32>
    %165 = math.exp %164 : vector<8x256xf32>
    %cst_48 = arith.constant 1.000000e+00 : f32
    %166 = vector.broadcast %cst_48 : f32 to vector<8x256xf32>
    %167 = arith.addf %166, %165 : vector<8x256xf32>
    %168 = arith.divf %166, %167 : vector<8x256xf32>
    %169 = vector.extract_strided_slice %151 {offsets = [0, 512], sizes = [8, 256], strides = [1, 1]} : vector<8x768xf32> to vector<8x256xf32>
    %170 = vector.extract_strided_slice %152 {offsets = [0, 512], sizes = [8, 256], strides = [1, 1]} : vector<8x768xf32> to vector<8x256xf32>
    %171 = vector.broadcast %4 : vector<1x256xf32> to vector<8x256xf32>
    %172 = arith.addf %170, %171 : vector<8x256xf32>
    %173 = arith.mulf %160, %172 : vector<8x256xf32>
    %174 = arith.addf %169, %173 : vector<8x256xf32>
    %175 = math.tanh %174 : vector<8x256xf32>
    %cst_49 = arith.constant 1.000000e+00 : f32
    %176 = vector.broadcast %cst_49 : f32 to vector<8x256xf32>
    %177 = arith.subf %176, %168 : vector<8x256xf32>
    %178 = arith.mulf %177, %175 : vector<8x256xf32>
    %179 = arith.mulf %168, %113 : vector<8x256xf32>
    %180 = arith.addf %178, %179 : vector<8x256xf32>
    %cst_50 = arith.constant dense<0.000000e+00> : vector<8x768xf32>
    %181 = tpu.matmul %180, %6, %cst_50 {dimension_numbers = #tpu.dot_dimension_numbers<[1], [0], [0], [1], [0, 0, 1, 1], [], []>} : vector<8x256xf32>, vector<256x768xf32>, vector<8x768xf32> -> vector<8x768xf32>
    %182 = vector.broadcast %7 : vector<1x768xf32> to vector<8x768xf32>
    %183 = arith.addf %181, %182 : vector<8x768xf32>
    %cst_51 = arith.constant dense<0.000000e+00> : vector<8x768xf32>
    %184 = tpu.matmul %145, %3, %cst_51 {dimension_numbers = #tpu.dot_dimension_numbers<[1], [0], [0], [1], [0, 0, 1, 1], [], []>} : vector<8x256xf32>, vector<256x768xf32>, vector<8x768xf32> -> vector<8x768xf32>
    %185 = vector.extract_strided_slice %183 {offsets = [0, 0], sizes = [8, 256], strides = [1, 1]} : vector<8x768xf32> to vector<8x256xf32>
    %186 = vector.extract_strided_slice %184 {offsets = [0, 0], sizes = [8, 256], strides = [1, 1]} : vector<8x768xf32> to vector<8x256xf32>
    %187 = arith.addf %185, %186 : vector<8x256xf32>
    %188 = arith.negf %187 : vector<8x256xf32>
    %189 = math.exp %188 : vector<8x256xf32>
    %cst_52 = arith.constant 1.000000e+00 : f32
    %190 = vector.broadcast %cst_52 : f32 to vector<8x256xf32>
    %191 = arith.addf %190, %189 : vector<8x256xf32>
    %192 = arith.divf %190, %191 : vector<8x256xf32>
    %193 = vector.extract_strided_slice %183 {offsets = [0, 256], sizes = [8, 256], strides = [1, 1]} : vector<8x768xf32> to vector<8x256xf32>
    %194 = vector.extract_strided_slice %184 {offsets = [0, 256], sizes = [8, 256], strides = [1, 1]} : vector<8x768xf32> to vector<8x256xf32>
    %195 = arith.addf %193, %194 : vector<8x256xf32>
    %196 = arith.negf %195 : vector<8x256xf32>
    %197 = math.exp %196 : vector<8x256xf32>
    %cst_53 = arith.constant 1.000000e+00 : f32
    %198 = vector.broadcast %cst_53 : f32 to vector<8x256xf32>
    %199 = arith.addf %198, %197 : vector<8x256xf32>
    %200 = arith.divf %198, %199 : vector<8x256xf32>
    %201 = vector.extract_strided_slice %183 {offsets = [0, 512], sizes = [8, 256], strides = [1, 1]} : vector<8x768xf32> to vector<8x256xf32>
    %202 = vector.extract_strided_slice %184 {offsets = [0, 512], sizes = [8, 256], strides = [1, 1]} : vector<8x768xf32> to vector<8x256xf32>
    %203 = vector.broadcast %5 : vector<1x256xf32> to vector<8x256xf32>
    %204 = arith.addf %202, %203 : vector<8x256xf32>
    %205 = arith.mulf %192, %204 : vector<8x256xf32>
    %206 = arith.addf %201, %205 : vector<8x256xf32>
    %207 = math.tanh %206 : vector<8x256xf32>
    %cst_54 = arith.constant 1.000000e+00 : f32
    %208 = vector.broadcast %cst_54 : f32 to vector<8x256xf32>
    %209 = arith.subf %208, %200 : vector<8x256xf32>
    %210 = arith.mulf %209, %207 : vector<8x256xf32>
    %211 = arith.mulf %200, %145 : vector<8x256xf32>
    %212 = arith.addf %210, %211 : vector<8x256xf32>
    %c3_i32 = arith.constant 3 : i32
    %213 = vector.broadcast %c3_i32 : i32 to vector<8x1xi32>
    %214 = arith.cmpi eq, %13, %213 : vector<8x1xi32>
    %215 = vector.shape_cast %214 : vector<8x1xi1> to vector<8x1xi1>
    %216 = vector.broadcast %215 : vector<8x1xi1> to vector<8x256xi1>
    %217 = arith.select %216, %212, %150 : vector<8x256xi1>, vector<8x256xf32>
    %c24 = arith.constant 24 : index
    %c0_55 = arith.constant 0 : index
    %218 = vector.load %arg12[%c24, %c0_55] : memref<64x768xf32, #tpu.memory_space<vmem>>, vector<8x768xf32>
    %cst_56 = arith.constant dense<0.000000e+00> : vector<8x768xf32>
    %219 = tpu.matmul %180, %2, %cst_56 {dimension_numbers = #tpu.dot_dimension_numbers<[1], [0], [0], [1], [0, 0, 1, 1], [], []>} : vector<8x256xf32>, vector<256x768xf32>, vector<8x768xf32> -> vector<8x768xf32>
    %220 = vector.extract_strided_slice %218 {offsets = [0, 0], sizes = [8, 256], strides = [1, 1]} : vector<8x768xf32> to vector<8x256xf32>
    %221 = vector.extract_strided_slice %219 {offsets = [0, 0], sizes = [8, 256], strides = [1, 1]} : vector<8x768xf32> to vector<8x256xf32>
    %222 = arith.addf %220, %221 : vector<8x256xf32>
    %223 = arith.negf %222 : vector<8x256xf32>
    %224 = math.exp %223 : vector<8x256xf32>
    %cst_57 = arith.constant 1.000000e+00 : f32
    %225 = vector.broadcast %cst_57 : f32 to vector<8x256xf32>
    %226 = arith.addf %225, %224 : vector<8x256xf32>
    %227 = arith.divf %225, %226 : vector<8x256xf32>
    %228 = vector.extract_strided_slice %218 {offsets = [0, 256], sizes = [8, 256], strides = [1, 1]} : vector<8x768xf32> to vector<8x256xf32>
    %229 = vector.extract_strided_slice %219 {offsets = [0, 256], sizes = [8, 256], strides = [1, 1]} : vector<8x768xf32> to vector<8x256xf32>
    %230 = arith.addf %228, %229 : vector<8x256xf32>
    %231 = arith.negf %230 : vector<8x256xf32>
    %232 = math.exp %231 : vector<8x256xf32>
    %cst_58 = arith.constant 1.000000e+00 : f32
    %233 = vector.broadcast %cst_58 : f32 to vector<8x256xf32>
    %234 = arith.addf %233, %232 : vector<8x256xf32>
    %235 = arith.divf %233, %234 : vector<8x256xf32>
    %236 = vector.extract_strided_slice %218 {offsets = [0, 512], sizes = [8, 256], strides = [1, 1]} : vector<8x768xf32> to vector<8x256xf32>
    %237 = vector.extract_strided_slice %219 {offsets = [0, 512], sizes = [8, 256], strides = [1, 1]} : vector<8x768xf32> to vector<8x256xf32>
    %238 = vector.broadcast %4 : vector<1x256xf32> to vector<8x256xf32>
    %239 = arith.addf %237, %238 : vector<8x256xf32>
    %240 = arith.mulf %227, %239 : vector<8x256xf32>
    %241 = arith.addf %236, %240 : vector<8x256xf32>
    %242 = math.tanh %241 : vector<8x256xf32>
    %cst_59 = arith.constant 1.000000e+00 : f32
    %243 = vector.broadcast %cst_59 : f32 to vector<8x256xf32>
    %244 = arith.subf %243, %235 : vector<8x256xf32>
    %245 = arith.mulf %244, %242 : vector<8x256xf32>
    %246 = arith.mulf %235, %180 : vector<8x256xf32>
    %247 = arith.addf %245, %246 : vector<8x256xf32>
    %cst_60 = arith.constant dense<0.000000e+00> : vector<8x768xf32>
    %248 = tpu.matmul %247, %6, %cst_60 {dimension_numbers = #tpu.dot_dimension_numbers<[1], [0], [0], [1], [0, 0, 1, 1], [], []>} : vector<8x256xf32>, vector<256x768xf32>, vector<8x768xf32> -> vector<8x768xf32>
    %249 = vector.broadcast %7 : vector<1x768xf32> to vector<8x768xf32>
    %250 = arith.addf %248, %249 : vector<8x768xf32>
    %cst_61 = arith.constant dense<0.000000e+00> : vector<8x768xf32>
    %251 = tpu.matmul %212, %3, %cst_61 {dimension_numbers = #tpu.dot_dimension_numbers<[1], [0], [0], [1], [0, 0, 1, 1], [], []>} : vector<8x256xf32>, vector<256x768xf32>, vector<8x768xf32> -> vector<8x768xf32>
    %252 = vector.extract_strided_slice %250 {offsets = [0, 0], sizes = [8, 256], strides = [1, 1]} : vector<8x768xf32> to vector<8x256xf32>
    %253 = vector.extract_strided_slice %251 {offsets = [0, 0], sizes = [8, 256], strides = [1, 1]} : vector<8x768xf32> to vector<8x256xf32>
    %254 = arith.addf %252, %253 : vector<8x256xf32>
    %255 = arith.negf %254 : vector<8x256xf32>
    %256 = math.exp %255 : vector<8x256xf32>
    %cst_62 = arith.constant 1.000000e+00 : f32
    %257 = vector.broadcast %cst_62 : f32 to vector<8x256xf32>
    %258 = arith.addf %257, %256 : vector<8x256xf32>
    %259 = arith.divf %257, %258 : vector<8x256xf32>
    %260 = vector.extract_strided_slice %250 {offsets = [0, 256], sizes = [8, 256], strides = [1, 1]} : vector<8x768xf32> to vector<8x256xf32>
    %261 = vector.extract_strided_slice %251 {offsets = [0, 256], sizes = [8, 256], strides = [1, 1]} : vector<8x768xf32> to vector<8x256xf32>
    %262 = arith.addf %260, %261 : vector<8x256xf32>
    %263 = arith.negf %262 : vector<8x256xf32>
    %264 = math.exp %263 : vector<8x256xf32>
    %cst_63 = arith.constant 1.000000e+00 : f32
    %265 = vector.broadcast %cst_63 : f32 to vector<8x256xf32>
    %266 = arith.addf %265, %264 : vector<8x256xf32>
    %267 = arith.divf %265, %266 : vector<8x256xf32>
    %268 = vector.extract_strided_slice %250 {offsets = [0, 512], sizes = [8, 256], strides = [1, 1]} : vector<8x768xf32> to vector<8x256xf32>
    %269 = vector.extract_strided_slice %251 {offsets = [0, 512], sizes = [8, 256], strides = [1, 1]} : vector<8x768xf32> to vector<8x256xf32>
    %270 = vector.broadcast %5 : vector<1x256xf32> to vector<8x256xf32>
    %271 = arith.addf %269, %270 : vector<8x256xf32>
    %272 = arith.mulf %259, %271 : vector<8x256xf32>
    %273 = arith.addf %268, %272 : vector<8x256xf32>
    %274 = math.tanh %273 : vector<8x256xf32>
    %cst_64 = arith.constant 1.000000e+00 : f32
    %275 = vector.broadcast %cst_64 : f32 to vector<8x256xf32>
    %276 = arith.subf %275, %267 : vector<8x256xf32>
    %277 = arith.mulf %276, %274 : vector<8x256xf32>
    %278 = arith.mulf %267, %212 : vector<8x256xf32>
    %279 = arith.addf %277, %278 : vector<8x256xf32>
    %c4_i32 = arith.constant 4 : i32
    %280 = vector.broadcast %c4_i32 : i32 to vector<8x1xi32>
    %281 = arith.cmpi eq, %13, %280 : vector<8x1xi32>
    %282 = vector.shape_cast %281 : vector<8x1xi1> to vector<8x1xi1>
    %283 = vector.broadcast %282 : vector<8x1xi1> to vector<8x256xi1>
    %284 = arith.select %283, %279, %217 : vector<8x256xi1>, vector<8x256xf32>
    %c32 = arith.constant 32 : index
    %c0_65 = arith.constant 0 : index
    %285 = vector.load %arg12[%c32, %c0_65] : memref<64x768xf32, #tpu.memory_space<vmem>>, vector<8x768xf32>
    %cst_66 = arith.constant dense<0.000000e+00> : vector<8x768xf32>
    %286 = tpu.matmul %247, %2, %cst_66 {dimension_numbers = #tpu.dot_dimension_numbers<[1], [0], [0], [1], [0, 0, 1, 1], [], []>} : vector<8x256xf32>, vector<256x768xf32>, vector<8x768xf32> -> vector<8x768xf32>
    %287 = vector.extract_strided_slice %285 {offsets = [0, 0], sizes = [8, 256], strides = [1, 1]} : vector<8x768xf32> to vector<8x256xf32>
    %288 = vector.extract_strided_slice %286 {offsets = [0, 0], sizes = [8, 256], strides = [1, 1]} : vector<8x768xf32> to vector<8x256xf32>
    %289 = arith.addf %287, %288 : vector<8x256xf32>
    %290 = arith.negf %289 : vector<8x256xf32>
    %291 = math.exp %290 : vector<8x256xf32>
    %cst_67 = arith.constant 1.000000e+00 : f32
    %292 = vector.broadcast %cst_67 : f32 to vector<8x256xf32>
    %293 = arith.addf %292, %291 : vector<8x256xf32>
    %294 = arith.divf %292, %293 : vector<8x256xf32>
    %295 = vector.extract_strided_slice %285 {offsets = [0, 256], sizes = [8, 256], strides = [1, 1]} : vector<8x768xf32> to vector<8x256xf32>
    %296 = vector.extract_strided_slice %286 {offsets = [0, 256], sizes = [8, 256], strides = [1, 1]} : vector<8x768xf32> to vector<8x256xf32>
    %297 = arith.addf %295, %296 : vector<8x256xf32>
    %298 = arith.negf %297 : vector<8x256xf32>
    %299 = math.exp %298 : vector<8x256xf32>
    %cst_68 = arith.constant 1.000000e+00 : f32
    %300 = vector.broadcast %cst_68 : f32 to vector<8x256xf32>
    %301 = arith.addf %300, %299 : vector<8x256xf32>
    %302 = arith.divf %300, %301 : vector<8x256xf32>
    %303 = vector.extract_strided_slice %285 {offsets = [0, 512], sizes = [8, 256], strides = [1, 1]} : vector<8x768xf32> to vector<8x256xf32>
    %304 = vector.extract_strided_slice %286 {offsets = [0, 512], sizes = [8, 256], strides = [1, 1]} : vector<8x768xf32> to vector<8x256xf32>
    %305 = vector.broadcast %4 : vector<1x256xf32> to vector<8x256xf32>
    %306 = arith.addf %304, %305 : vector<8x256xf32>
    %307 = arith.mulf %294, %306 : vector<8x256xf32>
    %308 = arith.addf %303, %307 : vector<8x256xf32>
    %309 = math.tanh %308 : vector<8x256xf32>
    %cst_69 = arith.constant 1.000000e+00 : f32
    %310 = vector.broadcast %cst_69 : f32 to vector<8x256xf32>
    %311 = arith.subf %310, %302 : vector<8x256xf32>
    %312 = arith.mulf %311, %309 : vector<8x256xf32>
    %313 = arith.mulf %302, %247 : vector<8x256xf32>
    %314 = arith.addf %312, %313 : vector<8x256xf32>
    %cst_70 = arith.constant dense<0.000000e+00> : vector<8x768xf32>
    %315 = tpu.matmul %314, %6, %cst_70 {dimension_numbers = #tpu.dot_dimension_numbers<[1], [0], [0], [1], [0, 0, 1, 1], [], []>} : vector<8x256xf32>, vector<256x768xf32>, vector<8x768xf32> -> vector<8x768xf32>
    %316 = vector.broadcast %7 : vector<1x768xf32> to vector<8x768xf32>
    %317 = arith.addf %315, %316 : vector<8x768xf32>
    %cst_71 = arith.constant dense<0.000000e+00> : vector<8x768xf32>
    %318 = tpu.matmul %279, %3, %cst_71 {dimension_numbers = #tpu.dot_dimension_numbers<[1], [0], [0], [1], [0, 0, 1, 1], [], []>} : vector<8x256xf32>, vector<256x768xf32>, vector<8x768xf32> -> vector<8x768xf32>
    %319 = vector.extract_strided_slice %317 {offsets = [0, 0], sizes = [8, 256], strides = [1, 1]} : vector<8x768xf32> to vector<8x256xf32>
    %320 = vector.extract_strided_slice %318 {offsets = [0, 0], sizes = [8, 256], strides = [1, 1]} : vector<8x768xf32> to vector<8x256xf32>
    %321 = arith.addf %319, %320 : vector<8x256xf32>
    %322 = arith.negf %321 : vector<8x256xf32>
    %323 = math.exp %322 : vector<8x256xf32>
    %cst_72 = arith.constant 1.000000e+00 : f32
    %324 = vector.broadcast %cst_72 : f32 to vector<8x256xf32>
    %325 = arith.addf %324, %323 : vector<8x256xf32>
    %326 = arith.divf %324, %325 : vector<8x256xf32>
    %327 = vector.extract_strided_slice %317 {offsets = [0, 256], sizes = [8, 256], strides = [1, 1]} : vector<8x768xf32> to vector<8x256xf32>
    %328 = vector.extract_strided_slice %318 {offsets = [0, 256], sizes = [8, 256], strides = [1, 1]} : vector<8x768xf32> to vector<8x256xf32>
    %329 = arith.addf %327, %328 : vector<8x256xf32>
    %330 = arith.negf %329 : vector<8x256xf32>
    %331 = math.exp %330 : vector<8x256xf32>
    %cst_73 = arith.constant 1.000000e+00 : f32
    %332 = vector.broadcast %cst_73 : f32 to vector<8x256xf32>
    %333 = arith.addf %332, %331 : vector<8x256xf32>
    %334 = arith.divf %332, %333 : vector<8x256xf32>
    %335 = vector.extract_strided_slice %317 {offsets = [0, 512], sizes = [8, 256], strides = [1, 1]} : vector<8x768xf32> to vector<8x256xf32>
    %336 = vector.extract_strided_slice %318 {offsets = [0, 512], sizes = [8, 256], strides = [1, 1]} : vector<8x768xf32> to vector<8x256xf32>
    %337 = vector.broadcast %5 : vector<1x256xf32> to vector<8x256xf32>
    %338 = arith.addf %336, %337 : vector<8x256xf32>
    %339 = arith.mulf %326, %338 : vector<8x256xf32>
    %340 = arith.addf %335, %339 : vector<8x256xf32>
    %341 = math.tanh %340 : vector<8x256xf32>
    %cst_74 = arith.constant 1.000000e+00 : f32
    %342 = vector.broadcast %cst_74 : f32 to vector<8x256xf32>
    %343 = arith.subf %342, %334 : vector<8x256xf32>
    %344 = arith.mulf %343, %341 : vector<8x256xf32>
    %345 = arith.mulf %334, %279 : vector<8x256xf32>
    %346 = arith.addf %344, %345 : vector<8x256xf32>
    %c5_i32 = arith.constant 5 : i32
    %347 = vector.broadcast %c5_i32 : i32 to vector<8x1xi32>
    %348 = arith.cmpi eq, %13, %347 : vector<8x1xi32>
    %349 = vector.shape_cast %348 : vector<8x1xi1> to vector<8x1xi1>
    %350 = vector.broadcast %349 : vector<8x1xi1> to vector<8x256xi1>
    %351 = arith.select %350, %346, %284 : vector<8x256xi1>, vector<8x256xf32>
    %c40 = arith.constant 40 : index
    %c0_75 = arith.constant 0 : index
    %352 = vector.load %arg12[%c40, %c0_75] : memref<64x768xf32, #tpu.memory_space<vmem>>, vector<8x768xf32>
    %cst_76 = arith.constant dense<0.000000e+00> : vector<8x768xf32>
    %353 = tpu.matmul %314, %2, %cst_76 {dimension_numbers = #tpu.dot_dimension_numbers<[1], [0], [0], [1], [0, 0, 1, 1], [], []>} : vector<8x256xf32>, vector<256x768xf32>, vector<8x768xf32> -> vector<8x768xf32>
    %354 = vector.extract_strided_slice %352 {offsets = [0, 0], sizes = [8, 256], strides = [1, 1]} : vector<8x768xf32> to vector<8x256xf32>
    %355 = vector.extract_strided_slice %353 {offsets = [0, 0], sizes = [8, 256], strides = [1, 1]} : vector<8x768xf32> to vector<8x256xf32>
    %356 = arith.addf %354, %355 : vector<8x256xf32>
    %357 = arith.negf %356 : vector<8x256xf32>
    %358 = math.exp %357 : vector<8x256xf32>
    %cst_77 = arith.constant 1.000000e+00 : f32
    %359 = vector.broadcast %cst_77 : f32 to vector<8x256xf32>
    %360 = arith.addf %359, %358 : vector<8x256xf32>
    %361 = arith.divf %359, %360 : vector<8x256xf32>
    %362 = vector.extract_strided_slice %352 {offsets = [0, 256], sizes = [8, 256], strides = [1, 1]} : vector<8x768xf32> to vector<8x256xf32>
    %363 = vector.extract_strided_slice %353 {offsets = [0, 256], sizes = [8, 256], strides = [1, 1]} : vector<8x768xf32> to vector<8x256xf32>
    %364 = arith.addf %362, %363 : vector<8x256xf32>
    %365 = arith.negf %364 : vector<8x256xf32>
    %366 = math.exp %365 : vector<8x256xf32>
    %cst_78 = arith.constant 1.000000e+00 : f32
    %367 = vector.broadcast %cst_78 : f32 to vector<8x256xf32>
    %368 = arith.addf %367, %366 : vector<8x256xf32>
    %369 = arith.divf %367, %368 : vector<8x256xf32>
    %370 = vector.extract_strided_slice %352 {offsets = [0, 512], sizes = [8, 256], strides = [1, 1]} : vector<8x768xf32> to vector<8x256xf32>
    %371 = vector.extract_strided_slice %353 {offsets = [0, 512], sizes = [8, 256], strides = [1, 1]} : vector<8x768xf32> to vector<8x256xf32>
    %372 = vector.broadcast %4 : vector<1x256xf32> to vector<8x256xf32>
    %373 = arith.addf %371, %372 : vector<8x256xf32>
    %374 = arith.mulf %361, %373 : vector<8x256xf32>
    %375 = arith.addf %370, %374 : vector<8x256xf32>
    %376 = math.tanh %375 : vector<8x256xf32>
    %cst_79 = arith.constant 1.000000e+00 : f32
    %377 = vector.broadcast %cst_79 : f32 to vector<8x256xf32>
    %378 = arith.subf %377, %369 : vector<8x256xf32>
    %379 = arith.mulf %378, %376 : vector<8x256xf32>
    %380 = arith.mulf %369, %314 : vector<8x256xf32>
    %381 = arith.addf %379, %380 : vector<8x256xf32>
    %cst_80 = arith.constant dense<0.000000e+00> : vector<8x768xf32>
    %382 = tpu.matmul %381, %6, %cst_80 {dimension_numbers = #tpu.dot_dimension_numbers<[1], [0], [0], [1], [0, 0, 1, 1], [], []>} : vector<8x256xf32>, vector<256x768xf32>, vector<8x768xf32> -> vector<8x768xf32>
    %383 = vector.broadcast %7 : vector<1x768xf32> to vector<8x768xf32>
    %384 = arith.addf %382, %383 : vector<8x768xf32>
    %cst_81 = arith.constant dense<0.000000e+00> : vector<8x768xf32>
    %385 = tpu.matmul %346, %3, %cst_81 {dimension_numbers = #tpu.dot_dimension_numbers<[1], [0], [0], [1], [0, 0, 1, 1], [], []>} : vector<8x256xf32>, vector<256x768xf32>, vector<8x768xf32> -> vector<8x768xf32>
    %386 = vector.extract_strided_slice %384 {offsets = [0, 0], sizes = [8, 256], strides = [1, 1]} : vector<8x768xf32> to vector<8x256xf32>
    %387 = vector.extract_strided_slice %385 {offsets = [0, 0], sizes = [8, 256], strides = [1, 1]} : vector<8x768xf32> to vector<8x256xf32>
    %388 = arith.addf %386, %387 : vector<8x256xf32>
    %389 = arith.negf %388 : vector<8x256xf32>
    %390 = math.exp %389 : vector<8x256xf32>
    %cst_82 = arith.constant 1.000000e+00 : f32
    %391 = vector.broadcast %cst_82 : f32 to vector<8x256xf32>
    %392 = arith.addf %391, %390 : vector<8x256xf32>
    %393 = arith.divf %391, %392 : vector<8x256xf32>
    %394 = vector.extract_strided_slice %384 {offsets = [0, 256], sizes = [8, 256], strides = [1, 1]} : vector<8x768xf32> to vector<8x256xf32>
    %395 = vector.extract_strided_slice %385 {offsets = [0, 256], sizes = [8, 256], strides = [1, 1]} : vector<8x768xf32> to vector<8x256xf32>
    %396 = arith.addf %394, %395 : vector<8x256xf32>
    %397 = arith.negf %396 : vector<8x256xf32>
    %398 = math.exp %397 : vector<8x256xf32>
    %cst_83 = arith.constant 1.000000e+00 : f32
    %399 = vector.broadcast %cst_83 : f32 to vector<8x256xf32>
    %400 = arith.addf %399, %398 : vector<8x256xf32>
    %401 = arith.divf %399, %400 : vector<8x256xf32>
    %402 = vector.extract_strided_slice %384 {offsets = [0, 512], sizes = [8, 256], strides = [1, 1]} : vector<8x768xf32> to vector<8x256xf32>
    %403 = vector.extract_strided_slice %385 {offsets = [0, 512], sizes = [8, 256], strides = [1, 1]} : vector<8x768xf32> to vector<8x256xf32>
    %404 = vector.broadcast %5 : vector<1x256xf32> to vector<8x256xf32>
    %405 = arith.addf %403, %404 : vector<8x256xf32>
    %406 = arith.mulf %393, %405 : vector<8x256xf32>
    %407 = arith.addf %402, %406 : vector<8x256xf32>
    %408 = math.tanh %407 : vector<8x256xf32>
    %cst_84 = arith.constant 1.000000e+00 : f32
    %409 = vector.broadcast %cst_84 : f32 to vector<8x256xf32>
    %410 = arith.subf %409, %401 : vector<8x256xf32>
    %411 = arith.mulf %410, %408 : vector<8x256xf32>
    %412 = arith.mulf %401, %346 : vector<8x256xf32>
    %413 = arith.addf %411, %412 : vector<8x256xf32>
    %c6_i32 = arith.constant 6 : i32
    %414 = vector.broadcast %c6_i32 : i32 to vector<8x1xi32>
    %415 = arith.cmpi eq, %13, %414 : vector<8x1xi32>
    %416 = vector.shape_cast %415 : vector<8x1xi1> to vector<8x1xi1>
    %417 = vector.broadcast %416 : vector<8x1xi1> to vector<8x256xi1>
    %418 = arith.select %417, %413, %351 : vector<8x256xi1>, vector<8x256xf32>
    %c48 = arith.constant 48 : index
    %c0_85 = arith.constant 0 : index
    %419 = vector.load %arg12[%c48, %c0_85] : memref<64x768xf32, #tpu.memory_space<vmem>>, vector<8x768xf32>
    %cst_86 = arith.constant dense<0.000000e+00> : vector<8x768xf32>
    %420 = tpu.matmul %381, %2, %cst_86 {dimension_numbers = #tpu.dot_dimension_numbers<[1], [0], [0], [1], [0, 0, 1, 1], [], []>} : vector<8x256xf32>, vector<256x768xf32>, vector<8x768xf32> -> vector<8x768xf32>
    %421 = vector.extract_strided_slice %419 {offsets = [0, 0], sizes = [8, 256], strides = [1, 1]} : vector<8x768xf32> to vector<8x256xf32>
    %422 = vector.extract_strided_slice %420 {offsets = [0, 0], sizes = [8, 256], strides = [1, 1]} : vector<8x768xf32> to vector<8x256xf32>
    %423 = arith.addf %421, %422 : vector<8x256xf32>
    %424 = arith.negf %423 : vector<8x256xf32>
    %425 = math.exp %424 : vector<8x256xf32>
    %cst_87 = arith.constant 1.000000e+00 : f32
    %426 = vector.broadcast %cst_87 : f32 to vector<8x256xf32>
    %427 = arith.addf %426, %425 : vector<8x256xf32>
    %428 = arith.divf %426, %427 : vector<8x256xf32>
    %429 = vector.extract_strided_slice %419 {offsets = [0, 256], sizes = [8, 256], strides = [1, 1]} : vector<8x768xf32> to vector<8x256xf32>
    %430 = vector.extract_strided_slice %420 {offsets = [0, 256], sizes = [8, 256], strides = [1, 1]} : vector<8x768xf32> to vector<8x256xf32>
    %431 = arith.addf %429, %430 : vector<8x256xf32>
    %432 = arith.negf %431 : vector<8x256xf32>
    %433 = math.exp %432 : vector<8x256xf32>
    %cst_88 = arith.constant 1.000000e+00 : f32
    %434 = vector.broadcast %cst_88 : f32 to vector<8x256xf32>
    %435 = arith.addf %434, %433 : vector<8x256xf32>
    %436 = arith.divf %434, %435 : vector<8x256xf32>
    %437 = vector.extract_strided_slice %419 {offsets = [0, 512], sizes = [8, 256], strides = [1, 1]} : vector<8x768xf32> to vector<8x256xf32>
    %438 = vector.extract_strided_slice %420 {offsets = [0, 512], sizes = [8, 256], strides = [1, 1]} : vector<8x768xf32> to vector<8x256xf32>
    %439 = vector.broadcast %4 : vector<1x256xf32> to vector<8x256xf32>
    %440 = arith.addf %438, %439 : vector<8x256xf32>
    %441 = arith.mulf %428, %440 : vector<8x256xf32>
    %442 = arith.addf %437, %441 : vector<8x256xf32>
    %443 = math.tanh %442 : vector<8x256xf32>
    %cst_89 = arith.constant 1.000000e+00 : f32
    %444 = vector.broadcast %cst_89 : f32 to vector<8x256xf32>
    %445 = arith.subf %444, %436 : vector<8x256xf32>
    %446 = arith.mulf %445, %443 : vector<8x256xf32>
    %447 = arith.mulf %436, %381 : vector<8x256xf32>
    %448 = arith.addf %446, %447 : vector<8x256xf32>
    %cst_90 = arith.constant dense<0.000000e+00> : vector<8x768xf32>
    %449 = tpu.matmul %448, %6, %cst_90 {dimension_numbers = #tpu.dot_dimension_numbers<[1], [0], [0], [1], [0, 0, 1, 1], [], []>} : vector<8x256xf32>, vector<256x768xf32>, vector<8x768xf32> -> vector<8x768xf32>
    %450 = vector.broadcast %7 : vector<1x768xf32> to vector<8x768xf32>
    %451 = arith.addf %449, %450 : vector<8x768xf32>
    %cst_91 = arith.constant dense<0.000000e+00> : vector<8x768xf32>
    %452 = tpu.matmul %413, %3, %cst_91 {dimension_numbers = #tpu.dot_dimension_numbers<[1], [0], [0], [1], [0, 0, 1, 1], [], []>} : vector<8x256xf32>, vector<256x768xf32>, vector<8x768xf32> -> vector<8x768xf32>
    %453 = vector.extract_strided_slice %451 {offsets = [0, 0], sizes = [8, 256], strides = [1, 1]} : vector<8x768xf32> to vector<8x256xf32>
    %454 = vector.extract_strided_slice %452 {offsets = [0, 0], sizes = [8, 256], strides = [1, 1]} : vector<8x768xf32> to vector<8x256xf32>
    %455 = arith.addf %453, %454 : vector<8x256xf32>
    %456 = arith.negf %455 : vector<8x256xf32>
    %457 = math.exp %456 : vector<8x256xf32>
    %cst_92 = arith.constant 1.000000e+00 : f32
    %458 = vector.broadcast %cst_92 : f32 to vector<8x256xf32>
    %459 = arith.addf %458, %457 : vector<8x256xf32>
    %460 = arith.divf %458, %459 : vector<8x256xf32>
    %461 = vector.extract_strided_slice %451 {offsets = [0, 256], sizes = [8, 256], strides = [1, 1]} : vector<8x768xf32> to vector<8x256xf32>
    %462 = vector.extract_strided_slice %452 {offsets = [0, 256], sizes = [8, 256], strides = [1, 1]} : vector<8x768xf32> to vector<8x256xf32>
    %463 = arith.addf %461, %462 : vector<8x256xf32>
    %464 = arith.negf %463 : vector<8x256xf32>
    %465 = math.exp %464 : vector<8x256xf32>
    %cst_93 = arith.constant 1.000000e+00 : f32
    %466 = vector.broadcast %cst_93 : f32 to vector<8x256xf32>
    %467 = arith.addf %466, %465 : vector<8x256xf32>
    %468 = arith.divf %466, %467 : vector<8x256xf32>
    %469 = vector.extract_strided_slice %451 {offsets = [0, 512], sizes = [8, 256], strides = [1, 1]} : vector<8x768xf32> to vector<8x256xf32>
    %470 = vector.extract_strided_slice %452 {offsets = [0, 512], sizes = [8, 256], strides = [1, 1]} : vector<8x768xf32> to vector<8x256xf32>
    %471 = vector.broadcast %5 : vector<1x256xf32> to vector<8x256xf32>
    %472 = arith.addf %470, %471 : vector<8x256xf32>
    %473 = arith.mulf %460, %472 : vector<8x256xf32>
    %474 = arith.addf %469, %473 : vector<8x256xf32>
    %475 = math.tanh %474 : vector<8x256xf32>
    %cst_94 = arith.constant 1.000000e+00 : f32
    %476 = vector.broadcast %cst_94 : f32 to vector<8x256xf32>
    %477 = arith.subf %476, %468 : vector<8x256xf32>
    %478 = arith.mulf %477, %475 : vector<8x256xf32>
    %479 = arith.mulf %468, %413 : vector<8x256xf32>
    %480 = arith.addf %478, %479 : vector<8x256xf32>
    %c7_i32 = arith.constant 7 : i32
    %481 = vector.broadcast %c7_i32 : i32 to vector<8x1xi32>
    %482 = arith.cmpi eq, %13, %481 : vector<8x1xi32>
    %483 = vector.shape_cast %482 : vector<8x1xi1> to vector<8x1xi1>
    %484 = vector.broadcast %483 : vector<8x1xi1> to vector<8x256xi1>
    %485 = arith.select %484, %480, %418 : vector<8x256xi1>, vector<8x256xf32>
    %c56 = arith.constant 56 : index
    %c0_95 = arith.constant 0 : index
    %486 = vector.load %arg12[%c56, %c0_95] : memref<64x768xf32, #tpu.memory_space<vmem>>, vector<8x768xf32>
    %cst_96 = arith.constant dense<0.000000e+00> : vector<8x768xf32>
    %487 = tpu.matmul %448, %2, %cst_96 {dimension_numbers = #tpu.dot_dimension_numbers<[1], [0], [0], [1], [0, 0, 1, 1], [], []>} : vector<8x256xf32>, vector<256x768xf32>, vector<8x768xf32> -> vector<8x768xf32>
    %488 = vector.extract_strided_slice %486 {offsets = [0, 0], sizes = [8, 256], strides = [1, 1]} : vector<8x768xf32> to vector<8x256xf32>
    %489 = vector.extract_strided_slice %487 {offsets = [0, 0], sizes = [8, 256], strides = [1, 1]} : vector<8x768xf32> to vector<8x256xf32>
    %490 = arith.addf %488, %489 : vector<8x256xf32>
    %491 = arith.negf %490 : vector<8x256xf32>
    %492 = math.exp %491 : vector<8x256xf32>
    %cst_97 = arith.constant 1.000000e+00 : f32
    %493 = vector.broadcast %cst_97 : f32 to vector<8x256xf32>
    %494 = arith.addf %493, %492 : vector<8x256xf32>
    %495 = arith.divf %493, %494 : vector<8x256xf32>
    %496 = vector.extract_strided_slice %486 {offsets = [0, 256], sizes = [8, 256], strides = [1, 1]} : vector<8x768xf32> to vector<8x256xf32>
    %497 = vector.extract_strided_slice %487 {offsets = [0, 256], sizes = [8, 256], strides = [1, 1]} : vector<8x768xf32> to vector<8x256xf32>
    %498 = arith.addf %496, %497 : vector<8x256xf32>
    %499 = arith.negf %498 : vector<8x256xf32>
    %500 = math.exp %499 : vector<8x256xf32>
    %cst_98 = arith.constant 1.000000e+00 : f32
    %501 = vector.broadcast %cst_98 : f32 to vector<8x256xf32>
    %502 = arith.addf %501, %500 : vector<8x256xf32>
    %503 = arith.divf %501, %502 : vector<8x256xf32>
    %504 = vector.extract_strided_slice %486 {offsets = [0, 512], sizes = [8, 256], strides = [1, 1]} : vector<8x768xf32> to vector<8x256xf32>
    %505 = vector.extract_strided_slice %487 {offsets = [0, 512], sizes = [8, 256], strides = [1, 1]} : vector<8x768xf32> to vector<8x256xf32>
    %506 = vector.broadcast %4 : vector<1x256xf32> to vector<8x256xf32>
    %507 = arith.addf %505, %506 : vector<8x256xf32>
    %508 = arith.mulf %495, %507 : vector<8x256xf32>
    %509 = arith.addf %504, %508 : vector<8x256xf32>
    %510 = math.tanh %509 : vector<8x256xf32>
    %cst_99 = arith.constant 1.000000e+00 : f32
    %511 = vector.broadcast %cst_99 : f32 to vector<8x256xf32>
    %512 = arith.subf %511, %503 : vector<8x256xf32>
    %513 = arith.mulf %512, %510 : vector<8x256xf32>
    %514 = arith.mulf %503, %448 : vector<8x256xf32>
    %515 = arith.addf %513, %514 : vector<8x256xf32>
    %cst_100 = arith.constant dense<0.000000e+00> : vector<8x768xf32>
    %516 = tpu.matmul %515, %6, %cst_100 {dimension_numbers = #tpu.dot_dimension_numbers<[1], [0], [0], [1], [0, 0, 1, 1], [], []>} : vector<8x256xf32>, vector<256x768xf32>, vector<8x768xf32> -> vector<8x768xf32>
    %517 = vector.broadcast %7 : vector<1x768xf32> to vector<8x768xf32>
    %518 = arith.addf %516, %517 : vector<8x768xf32>
    %cst_101 = arith.constant dense<0.000000e+00> : vector<8x768xf32>
    %519 = tpu.matmul %480, %3, %cst_101 {dimension_numbers = #tpu.dot_dimension_numbers<[1], [0], [0], [1], [0, 0, 1, 1], [], []>} : vector<8x256xf32>, vector<256x768xf32>, vector<8x768xf32> -> vector<8x768xf32>
    %520 = vector.extract_strided_slice %518 {offsets = [0, 0], sizes = [8, 256], strides = [1, 1]} : vector<8x768xf32> to vector<8x256xf32>
    %521 = vector.extract_strided_slice %519 {offsets = [0, 0], sizes = [8, 256], strides = [1, 1]} : vector<8x768xf32> to vector<8x256xf32>
    %522 = arith.addf %520, %521 : vector<8x256xf32>
    %523 = arith.negf %522 : vector<8x256xf32>
    %524 = math.exp %523 : vector<8x256xf32>
    %cst_102 = arith.constant 1.000000e+00 : f32
    %525 = vector.broadcast %cst_102 : f32 to vector<8x256xf32>
    %526 = arith.addf %525, %524 : vector<8x256xf32>
    %527 = arith.divf %525, %526 : vector<8x256xf32>
    %528 = vector.extract_strided_slice %518 {offsets = [0, 256], sizes = [8, 256], strides = [1, 1]} : vector<8x768xf32> to vector<8x256xf32>
    %529 = vector.extract_strided_slice %519 {offsets = [0, 256], sizes = [8, 256], strides = [1, 1]} : vector<8x768xf32> to vector<8x256xf32>
    %530 = arith.addf %528, %529 : vector<8x256xf32>
    %531 = arith.negf %530 : vector<8x256xf32>
    %532 = math.exp %531 : vector<8x256xf32>
    %cst_103 = arith.constant 1.000000e+00 : f32
    %533 = vector.broadcast %cst_103 : f32 to vector<8x256xf32>
    %534 = arith.addf %533, %532 : vector<8x256xf32>
    %535 = arith.divf %533, %534 : vector<8x256xf32>
    %536 = vector.extract_strided_slice %518 {offsets = [0, 512], sizes = [8, 256], strides = [1, 1]} : vector<8x768xf32> to vector<8x256xf32>
    %537 = vector.extract_strided_slice %519 {offsets = [0, 512], sizes = [8, 256], strides = [1, 1]} : vector<8x768xf32> to vector<8x256xf32>
    %538 = vector.broadcast %5 : vector<1x256xf32> to vector<8x256xf32>
    %539 = arith.addf %537, %538 : vector<8x256xf32>
    %540 = arith.mulf %527, %539 : vector<8x256xf32>
    %541 = arith.addf %536, %540 : vector<8x256xf32>
    %542 = math.tanh %541 : vector<8x256xf32>
    %cst_104 = arith.constant 1.000000e+00 : f32
    %543 = vector.broadcast %cst_104 : f32 to vector<8x256xf32>
    %544 = arith.subf %543, %535 : vector<8x256xf32>
    %545 = arith.mulf %544, %542 : vector<8x256xf32>
    %546 = arith.mulf %535, %480 : vector<8x256xf32>
    %547 = arith.addf %545, %546 : vector<8x256xf32>
    %c8_i32 = arith.constant 8 : i32
    %548 = vector.broadcast %c8_i32 : i32 to vector<8x1xi32>
    %549 = arith.cmpi eq, %13, %548 : vector<8x1xi32>
    %550 = vector.shape_cast %549 : vector<8x1xi1> to vector<8x1xi1>
    %551 = vector.broadcast %550 : vector<8x1xi1> to vector<8x256xi1>
    %552 = arith.select %551, %547, %485 : vector<8x256xi1>, vector<8x256xf32>
    %c0_105 = arith.constant 0 : index
    %c0_106 = arith.constant 0 : index
    %553 = vector.load %arg11[%c0_105, %c0_106] : memref<8x256xf32, #tpu.memory_space<vmem>>, vector<8x256xf32>
    tpu.vector_store %arg11[%c0_105, %c0_106], %552 {strides = array<i32>} : memref<8x256xf32, #tpu.memory_space<vmem>>, vector<8x256xf32>,
    return
  }
  func.func @transform_0(%arg0: i32) -> (i32, i32) {
    %c0_i32 = arith.constant 0 : i32
    %c0_i32_0 = arith.constant 0 : i32
    %c0_i32_1 = arith.constant 0 : i32
    return %c0_i32, %c0_i32_0 : i32, i32
  }
  func.func @transform_1(%arg0: i32) -> (i32, i32) {
    %c0_i32 = arith.constant 0 : i32
    %c0_i32_0 = arith.constant 0 : i32
    %c0_i32_1 = arith.constant 0 : i32
    return %c0_i32, %c0_i32_0 : i32, i32
  }
  func.func @transform_2(%arg0: i32) -> (i32, i32) {
    %c0_i32 = arith.constant 0 : i32
    %c0_i32_0 = arith.constant 0 : i32
    %c0_i32_1 = arith.constant 0 : i32
    return %c0_i32, %c0_i32_0 : i32, i32
  }
  func.func @transform_3(%arg0: i32) -> (i32, i32) {
    %c0_i32 = arith.constant 0 : i32
    %c0_i32_0 = arith.constant 0 : i32
    %c0_i32_1 = arith.constant 0 : i32
    return %c0_i32, %c0_i32_0 : i32, i32
  }
  func.func @transform_4(%arg0: i32) -> (i32, i32) {
    %c0_i32 = arith.constant 0 : i32
    %c0_i32_0 = arith.constant 0 : i32
    %c0_i32_1 = arith.constant 0 : i32
    return %c0_i32, %c0_i32_0 : i32, i32
  }
  func.func @transform_5(%arg0: i32) -> (i32, i32) {
    %c0_i32 = arith.constant 0 : i32
    %c0_i32_0 = arith.constant 0 : i32
    %c0_i32_1 = arith.constant 0 : i32
    return %c0_i32, %c0_i32_0 : i32, i32
  }
  func.func @transform_6(%arg0: i32) -> (i32, i32) {
    %c0_i32 = arith.constant 0 : i32
    %c0_i32_0 = arith.constant 0 : i32
    %c0_i32_1 = arith.constant 0 : i32
    return %c0_i32, %c0_i32_0 : i32, i32
  }
  func.func @transform_7(%arg0: i32) -> (i32, i32) {
    %c0_i32 = arith.constant 0 : i32
    %c0_i32_0 = arith.constant 0 : i32
    %c0_i32_1 = arith.constant 0 : i32
    return %c0_i32, %c0_i32_0 : i32, i32
  }
  func.func @transform_8(%arg0: i32) -> (i32, i32) {
    %c0_i32 = arith.constant 0 : i32
    %c0_i32_0 = arith.constant 0 : i32
    %c0_i32_1 = arith.constant 0 : i32
    return %c0_i32, %c0_i32_0 : i32, i32
  }
  func.func @transform_9(%arg0: i32) -> (i32, i32) {
    %c0_i32 = arith.constant 0 : i32
    %c0_i32_0 = arith.constant 0 : i32
    %c0_i32_1 = arith.constant 0 : i32
    return %c0_i32, %c0_i32_0 : i32, i32
  }
  func.func @transform_10(%arg0: i32) -> (i32, i32) {
    %c0_i32 = arith.constant 0 : i32
    %c0_i32_0 = arith.constant 0 : i32
    %c0_i32_1 = arith.constant 0 : i32
    return %c0_i32, %c0_i32_0 : i32, i32
  }
}

</mosaic_0001>

<llo_original>
// kernel: tpu_custom_call.1
$region0: #{tpu_custom_call.1}
  #allocation0 [shape = 'u32[]', space=smem, size = 0x4, offset = 0x4, fixed_abs, tag = 'smem constant byte address 0x4 - core index']
  #allocation1 [shape = 'u32[144,128]{1,0:T(1,128)}', space=vmem, size = 0x12000, scoped, tag = 'internal scratch']
  #allocation2 [shape = 'f32[64,768]{1,0:T(8,128)}', space=vmem, size = 0x30000, scoped, tag = 'scratch operand']
  %s0 = inlined_call_operand.vmem [shape: f32[64,16], index: 0, kind: input, shape index: {}]
  %s1 = inlined_call_operand.vmem [shape: s32[8,1], index: 1, kind: input, shape index: {}]
  %s2 = inlined_call_operand.vmem [shape: f32[16,768], index: 2, kind: input, shape index: {}]
  %s3 = inlined_call_operand.hbm [shape: f32[1,768], index: 3, kind: input, shape index: {}]
  %s4 = inlined_call_operand.hbm [shape: f32[256,768], index: 4, kind: input, shape index: {}]
  %s5 = inlined_call_operand.vmem [shape: f32[1,256], index: 5, kind: input, shape index: {}]
  %s6 = inlined_call_operand.hbm [shape: f32[256,768], index: 6, kind: input, shape index: {}]
  %s7 = inlined_call_operand.vmem [shape: f32[1,768], index: 7, kind: input, shape index: {}]
  %s8 = inlined_call_operand.hbm [shape: f32[256,768], index: 8, kind: input, shape index: {}]
  %s9 = inlined_call_operand.vmem [shape: f32[1,256], index: 9, kind: input, shape index: {}]
  %s10 = inlined_call_operand.hbm [shape: f32[8,256], index: 10, kind: output, shape index: {}]
  %s11 = sld [smem:[#allocation0]]
  $region66: #{tpu_custom_call.1} parent=0
    _
  %s13 = ssub.s32 1, %s11
  %s14 = scalar_select 0, %s13, %s11
  $region1: #{tpu_custom_call.1} parent=0
    #allocation3 [shape = 'u8[3072]{0}', space=vmem, size = 0xc00, scoped, tag = 'input window, operand 3, single buffered']
    #allocation4 [shape = 's32[1]{0}', space=sflag, size = 0x4, scoped, tag = 'scoped memory for tpu_custom_call.1']
    #allocation5 [shape = 's32[1]{0}', space=sflag, size = 0x4, scoped, tag = 'scoped memory for tpu_custom_call.1']
    #allocation6 [shape = 'u8[786432]{0}', space=vmem, size = 0xc0000, scoped, tag = 'input window, operand 4, single buffered']
    #allocation7 [shape = 's32[1]{0}', space=sflag, size = 0x4, scoped, tag = 'scoped memory for tpu_custom_call.1']
    #allocation8 [shape = 'u8[786432]{0}', space=vmem, size = 0xc0000, scoped, tag = 'input window, operand 6, single buffered']
    #allocation9 [shape = 'u8[786432]{0}', space=vmem, size = 0xc0000, scoped, tag = 'input window, operand 8, single buffered']
    #allocation10 [shape = 's32[1]{0}', space=sflag, size = 0x4, scoped, tag = 'scoped memory for tpu_custom_call.1']
    #allocation11 [shape = 'u8[8192]{0}', space=vmem, size = 0x2000, scoped, tag = 'output window, operand 0, single buffered']
    %15 = vsyncpa [#allocation4], 0
    %16 = vsyncpa [#allocation7], 0
    %17 = vsyncpa [#allocation10], 0
    %18 = vsyncpa [#allocation5], 0
    // Predicated region
    $region2: #{tpu_custom_call.1} parent=1 // pred_check
      _
    $region3: #{tpu_custom_call.1} parent=1 // pred_check_branch
      %20 = sbr.rel (0) target = $region5
    $region4: #{tpu_custom_call.1} parent=1 // pred_region
      _
    $region5: #{tpu_custom_call.1} parent=1 // pred_fallthru
      _
    // Predicated region
    $region6: #{tpu_custom_call.1} parent=1 // pred_check
      _
    $region7: #{tpu_custom_call.1} parent=1 // pred_check_branch
      %22 = sbr.rel (0) target = $region9
    $region8: #{tpu_custom_call.1} parent=1 // pred_region
      _
    $region9: #{tpu_custom_call.1} parent=1 // pred_fallthru
      _
    // Predicated region
    $region10: #{tpu_custom_call.1} parent=1 // pred_check
      _
    $region11: #{tpu_custom_call.1} parent=1 // pred_check_branch
      %24 = sbr.rel (0) target = $region13
    $region12: #{tpu_custom_call.1} parent=1 // pred_region
      _
    $region13: #{tpu_custom_call.1} parent=1 // pred_fallthru
      _
    // Predicated region
    $region14: #{tpu_custom_call.1} parent=1 // pred_check
      _
    $region15: #{tpu_custom_call.1} parent=1 // pred_check_branch
      %26 = sbr.rel (0) target = $region17
    $region16: #{tpu_custom_call.1} parent=1 // pred_region
      %s28 = ssub.s32 96, 96
      %29 = vsyncadd [#allocation4], %s28
      %s31 = sshll.u32 [#allocation3], 4
      %s32 = int_to_ptr.vmem [resolvable:$true] %s31
      %34 = dma.hbm_to_vmem [thread:$0]  %s3, 96, %s32, [#allocation4]
    $region17: #{tpu_custom_call.1} parent=1 // pred_fallthru
      _
    // Predicated region
    $region18: #{tpu_custom_call.1} parent=1 // pred_check
      _
    $region19: #{tpu_custom_call.1} parent=1 // pred_check_branch
      %36 = sbr.rel (0) target = $region21
    $region20: #{tpu_custom_call.1} parent=1 // pred_region
      %s38 = ssub.s32 24576, 24576
      %39 = vsyncadd [#allocation7], %s38
      %s40 = sshll.u32 [#allocation6], 4
      %s41 = int_to_ptr.vmem [resolvable:$true] %s40
      %46 = dma.hbm_to_vmem [thread:$0]  %s4, 24576, %s41, [#allocation7], 768, 768, 48
    $region21: #{tpu_custom_call.1} parent=1 // pred_fallthru
      _
    // Predicated region
    $region22: #{tpu_custom_call.1} parent=1 // pred_check
      _
    $region23: #{tpu_custom_call.1} parent=1 // pred_check_branch
      %48 = sbr.rel (0) target = $region25
    $region24: #{tpu_custom_call.1} parent=1 // pred_region
      _
    $region25: #{tpu_custom_call.1} parent=1 // pred_fallthru
      _
    // Predicated region
    $region26: #{tpu_custom_call.1} parent=1 // pred_check
      _
    $region27: #{tpu_custom_call.1} parent=1 // pred_check_branch
      %50 = sbr.rel (0) target = $region29
    $region28: #{tpu_custom_call.1} parent=1 // pred_region
      %s52 = ssub.s32 24576, 24576
      %53 = vsyncadd [#allocation7], %s52
      %s54 = sshll.u32 [#allocation8], 4
      %s55 = int_to_ptr.vmem [resolvable:$true] %s54
      %60 = dma.hbm_to_vmem [thread:$0]  %s6, 24576, %s55, [#allocation7], 768, 768, 48
    $region29: #{tpu_custom_call.1} parent=1 // pred_fallthru
      _
    // Predicated region
    $region30: #{tpu_custom_call.1} parent=1 // pred_check
      _
    $region31: #{tpu_custom_call.1} parent=1 // pred_check_branch
      %62 = sbr.rel (0) target = $region33
    $region32: #{tpu_custom_call.1} parent=1 // pred_region
      _
    $region33: #{tpu_custom_call.1} parent=1 // pred_fallthru
      _
    // Predicated region
    $region34: #{tpu_custom_call.1} parent=1 // pred_check
      _
    $region35: #{tpu_custom_call.1} parent=1 // pred_check_branch
      %64 = sbr.rel (0) target = $region37
    $region36: #{tpu_custom_call.1} parent=1 // pred_region
      %s66 = ssub.s32 24576, 24576
      %67 = vsyncadd [#allocation10], %s66
      %s68 = sshll.u32 [#allocation9], 4
      %s69 = int_to_ptr.vmem [resolvable:$true] %s68
      %74 = dma.hbm_to_vmem [thread:$0]  %s8, 24576, %s69, [#allocation10], 768, 768, 48
    $region37: #{tpu_custom_call.1} parent=1 // pred_fallthru
      _
    // Predicated region
    $region38: #{tpu_custom_call.1} parent=1 // pred_check
      _
    $region39: #{tpu_custom_call.1} parent=1 // pred_check_branch
      %76 = sbr.rel (0) target = $region41
    $region40: #{tpu_custom_call.1} parent=1 // pred_region
      _
    $region41: #{tpu_custom_call.1} parent=1 // pred_fallthru
      _
    // Predicated region
    $region42: #{tpu_custom_call.1} parent=1 // pred_check
      _
    $region43: #{tpu_custom_call.1} parent=1 // pred_check_branch
      %78 = sbr.rel (0) target = $region45
    $region44: #{tpu_custom_call.1} parent=1 // pred_region
      %79 = dma.done [#allocation4], 96
    $region45: #{tpu_custom_call.1} parent=1 // pred_fallthru
      _
    // Predicated region
    $region46: #{tpu_custom_call.1} parent=1 // pred_check
      _
    $region47: #{tpu_custom_call.1} parent=1 // pred_check_branch
      %81 = sbr.rel (0) target = $region49
    $region48: #{tpu_custom_call.1} parent=1 // pred_region
      %82 = dma.done [#allocation7], 24576
    $region49: #{tpu_custom_call.1} parent=1 // pred_fallthru
      _
    // Predicated region
    $region50: #{tpu_custom_call.1} parent=1 // pred_check
      _
    $region51: #{tpu_custom_call.1} parent=1 // pred_check_branch
      %84 = sbr.rel (0) target = $region53
    $region52: #{tpu_custom_call.1} parent=1 // pred_region
      %85 = dma.done [#allocation7], 24576
    $region53: #{tpu_custom_call.1} parent=1 // pred_fallthru
      _
    // Predicated region
    $region54: #{tpu_custom_call.1} parent=1 // pred_check
      _
    $region55: #{tpu_custom_call.1} parent=1 // pred_check_branch
      %87 = sbr.rel (0) target = $region57
    $region56: #{tpu_custom_call.1} parent=1 // pred_region
      %88 = dma.done [#allocation10], 24576
    $region57: #{tpu_custom_call.1} parent=1 // pred_fallthru
      _
    %v89 = vld [vmem:[%s2] sm:$0xff]
    %v90 = vld [vmem:[%s2 + $0x8] sm:$0xff]
    %v91 = vld [vmem:[%s2 + $0x10] sm:$0xff]
    %v92 = vld [vmem:[%s2 + $0x18] sm:$0xff]
    %v93 = vld [vmem:[%s2 + $0x20] sm:$0xff]
    %v94 = vld [vmem:[%s2 + $0x28] sm:$0xff]
    %v95 = vld [vmem:[%s2 + $0x30] sm:$0xff]
    %v96 = vld [vmem:[%s2 + $0x38] sm:$0xff]
    %v97 = vld [vmem:[%s2 + $0x40] sm:$0xff]
    %v98 = vld [vmem:[%s2 + $0x48] sm:$0xff]
    %v99 = vld [vmem:[%s2 + $0x50] sm:$0xff]
    %v100 = vld [vmem:[%s2 + $0x58] sm:$0xff]
    %v101 = vld [vmem:[#allocation3] sm:$0x3f]
    %v102 = vld [vmem:[#allocation6] sm:$0xff]
    %v103 = vld [vmem:[#allocation6 + $0x8] sm:$0xff]
    %v104 = vld [vmem:[#allocation6 + $0x10] sm:$0xff]
    %v105 = vld [vmem:[#allocation6 + $0x18] sm:$0xff]
    %v106 = vld [vmem:[#allocation6 + $0x20] sm:$0xff]
    %v107 = vld [vmem:[#allocation6 + $0x28] sm:$0xff]
    %v108 = vld [vmem:[#allocation6 + $0x30] sm:$0xff]
    %v109 = vld [vmem:[#allocation6 + $0x38] sm:$0xff]
    %v110 = vld [vmem:[#allocation6 + $0x40] sm:$0xff]
    %v111 = vld [vmem:[#allocation6 + $0x48] sm:$0xff]
    %v112 = vld [vmem:[#allocation6 + $0x50] sm:$0xff]
    %v113 = vld [vmem:[#allocation6 + $0x58] sm:$0xff]
    %v114 = vld [vmem:[#allocation6 + $0x60] sm:$0xff]
    %v115 = vld [vmem:[#allocation6 + $0x68] sm:$0xff]
    %v116 = vld [vmem:[#allocation6 + $0x70] sm:$0xff]
    %v117 = vld [vmem:[#allocation6 + $0x78] sm:$0xff]
    %v118 = vld [vmem:[#allocation6 + $0x80] sm:$0xff]
    %v119 = vld [vmem:[#allocation6 + $0x88] sm:$0xff]
    %v120 = vld [vmem:[#allocation6 + $0x90] sm:$0xff]
    %v121 = vld [vmem:[#allocation6 + $0x98] sm:$0xff]
    %v122 = vld [vmem:[#allocation6 + $0xa0] sm:$0xff]
    %v123 = vld [vmem:[#allocation6 + $0xa8] sm:$0xff]
    %v124 = vld [vmem:[#allocation6 + $0xb0] sm:$0xff]
    %v125 = vld [vmem:[#allocation6 + $0xb8] sm:$0xff]
    %v126 = vld [vmem:[#allocation6 + $0xc0] sm:$0xff]
    %v127 = vld [vmem:[#allocation6 + $0xc8] sm:$0xff]
    %v128 = vld [vmem:[#allocation6 + $0xd0] sm:$0xff]
    %v129 = vld [vmem:[#allocation6 + $0xd8] sm:$0xff]
    %v130 = vld [vmem:[#allocation6 + $0xe0] sm:$0xff]
    %v131 = vld [vmem:[#allocation6 + $0xe8] sm:$0xff]
    %v132 = vld [vmem:[#allocation6 + $0xf0] sm:$0xff]
    %v133 = vld [vmem:[#allocation6 + $0xf8] sm:$0xff]
    %v134 = vld [vmem:[#allocation6 + $0x100] sm:$0xff]
    %v135 = vld [vmem:[#allocation6 + $0x108] sm:$0xff]
    %v136 = vld [vmem:[#allocation6 + $0x110] sm:$0xff]
    %v137 = vld [vmem:[#allocation6 + $0x118] sm:$0xff]
    %v138 = vld [vmem:[#allocation6 + $0x120] sm:$0xff]
    %v139 = vld [vmem:[#allocation6 + $0x128] sm:$0xff]
    %v140 = vld [vmem:[#allocation6 + $0x130] sm:$0xff]
    %v141 = vld [vmem:[#allocation6 + $0x138] sm:$0xff]
    %v142 = vld [vmem:[#allocation6 + $0x140] sm:$0xff]
    %v143 = vld [vmem:[#allocation6 + $0x148] sm:$0xff]
    %v144 = vld [vmem:[#allocation6 + $0x150] sm:$0xff]
    %v145 = vld [vmem:[#allocation6 + $0x158] sm:$0xff]
    %v146 = vld [vmem:[#allocation6 + $0x160] sm:$0xff]
    %v147 = vld [vmem:[#allocation6 + $0x168] sm:$0xff]
    %v148 = vld [vmem:[#allocation6 + $0x170] sm:$0xff]
    %v149 = vld [vmem:[#allocation6 + $0x178] sm:$0xff]
    %v150 = vld [vmem:[#allocation6 + $0x180] sm:$0xff]
    %v151 = vld [vmem:[#allocation6 + $0x188] sm:$0xff]
    %v152 = vld [vmem:[#allocation6 + $0x190] sm:$0xff]
    %v153 = vld [vmem:[#allocation6 + $0x198] sm:$0xff]
    %v154 = vld [vmem:[#allocation6 + $0x1a0] sm:$0xff]
    %v155 = vld [vmem:[#allocation6 + $0x1a8] sm:$0xff]
    %v156 = vld [vmem:[#allocation6 + $0x1b0] sm:$0xff]
    %v157 = vld [vmem:[#allocation6 + $0x1b8] sm:$0xff]
    %v158 = vld [vmem:[#allocation6 + $0x1c0] sm:$0xff]
    %v159 = vld [vmem:[#allocation6 + $0x1c8] sm:$0xff]
    %v160 = vld [vmem:[#allocation6 + $0x1d0] sm:$0xff]
    %v161 = vld [vmem:[#allocation6 + $0x1d8] sm:$0xff]
    %v162 = vld [vmem:[#allocation6 + $0x1e0] sm:$0xff]
    %v163 = vld [vmem:[#allocation6 + $0x1e8] sm:$0xff]
    %v164 = vld [vmem:[#allocation6 + $0x1f0] sm:$0xff]
    %v165 = vld [vmem:[#allocation6 + $0x1f8] sm:$0xff]
    %v166 = vld [vmem:[#allocation6 + $0x200] sm:$0xff]
    %v167 = vld [vmem:[#allocation6 + $0x208] sm:$0xff]
    %v168 = vld [vmem:[#allocation6 + $0x210] sm:$0xff]
    %v169 = vld [vmem:[#allocation6 + $0x218] sm:$0xff]
    %v170 = vld [vmem:[#allocation6 + $0x220] sm:$0xff]
    %v171 = vld [vmem:[#allocation6 + $0x228] sm:$0xff]
    %v172 = vld [vmem:[#allocation6 + $0x230] sm:$0xff]
    %v173 = vld [vmem:[#allocation6 + $0x238] sm:$0xff]
    %v174 = vld [vmem:[#allocation6 + $0x240] sm:$0xff]
    %v175 = vld [vmem:[#allocation6 + $0x248] sm:$0xff]
    %v176 = vld [vmem:[#allocation6 + $0x250] sm:$0xff]
    %v177 = vld [vmem:[#allocation6 + $0x258] sm:$0xff]
    %v178 = vld [vmem:[#allocation6 + $0x260] sm:$0xff]
    %v179 = vld [vmem:[#allocation6 + $0x268] sm:$0xff]
    %v180 = vld [vmem:[#allocation6 + $0x270] sm:$0xff]
    %v181 = vld [vmem:[#allocation6 + $0x278] sm:$0xff]
    %v182 = vld [vmem:[#allocation6 + $0x280] sm:$0xff]
    %v183 = vld [vmem:[#allocation6 + $0x288] sm:$0xff]
    %v184 = vld [vmem:[#allocation6 + $0x290] sm:$0xff]
    %v185 = vld [vmem:[#allocation6 + $0x298] sm:$0xff]
    %v186 = vld [vmem:[#allocation6 + $0x2a0] sm:$0xff]
    %v187 = vld [vmem:[#allocation6 + $0x2a8] sm:$0xff]
    %v188 = vld [vmem:[#allocation6 + $0x2b0] sm:$0xff]
    %v189 = vld [vmem:[#allocation6 + $0x2b8] sm:$0xff]
    %v190 = vld [vmem:[#allocation6 + $0x2c0] sm:$0xff]
    %v191 = vld [vmem:[#allocation6 + $0x2c8] sm:$0xff]
    %v192 = vld [vmem:[#allocation6 + $0x2d0] sm:$0xff]
    %v193 = vld [vmem:[#allocation6 + $0x2d8] sm:$0xff]
    %v194 = vld [vmem:[#allocation6 + $0x2e0] sm:$0xff]
    %v195 = vld [vmem:[#allocation6 + $0x2e8] sm:$0xff]
    %v196 = vld [vmem:[#allocation6 + $0x2f0] sm:$0xff]
    %v197 = vld [vmem:[#allocation6 + $0x2f8] sm:$0xff]
    %v198 = vld [vmem:[#allocation6 + $0x300] sm:$0xff]
    %v199 = vld [vmem:[#allocation6 + $0x308] sm:$0xff]
    %v200 = vld [vmem:[#allocation6 + $0x310] sm:$0xff]
    %v201 = vld [vmem:[#allocation6 + $0x318] sm:$0xff]
    %v202 = vld [vmem:[#allocation6 + $0x320] sm:$0xff]
    %v203 = vld [vmem:[#allocation6 + $0x328] sm:$0xff]
    %v204 = vld [vmem:[#allocation6 + $0x330] sm:$0xff]
    %v205 = vld [vmem:[#allocation6 + $0x338] sm:$0xff]
    %v206 = vld [vmem:[#allocation6 + $0x340] sm:$0xff]
    %v207 = vld [vmem:[#allocation6 + $0x348] sm:$0xff]
    %v208 = vld [vmem:[#allocation6 + $0x350] sm:$0xff]
    %v209 = vld [vmem:[#allocation6 + $0x358] sm:$0xff]
    %v210 = vld [vmem:[#allocation6 + $0x360] sm:$0xff]
    %v211 = vld [vmem:[#allocation6 + $0x368] sm:$0xff]
    %v212 = vld [vmem:[#allocation6 + $0x370] sm:$0xff]
    %v213 = vld [vmem:[#allocation6 + $0x378] sm:$0xff]
    %v214 = vld [vmem:[#allocation6 + $0x380] sm:$0xff]
    %v215 = vld [vmem:[#allocation6 + $0x388] sm:$0xff]
    %v216 = vld [vmem:[#allocation6 + $0x390] sm:$0xff]
    %v217 = vld [vmem:[#allocation6 + $0x398] sm:$0xff]
    %v218 = vld [vmem:[#allocation6 + $0x3a0] sm:$0xff]
    %v219 = vld [vmem:[#allocation6 + $0x3a8] sm:$0xff]
    %v220 = vld [vmem:[#allocation6 + $0x3b0] sm:$0xff]
    %v221 = vld [vmem:[#allocation6 + $0x3b8] sm:$0xff]
    %v222 = vld [vmem:[#allocation6 + $0x3c0] sm:$0xff]
    %v223 = vld [vmem:[#allocation6 + $0x3c8] sm:$0xff]
    %v224 = vld [vmem:[#allocation6 + $0x3d0] sm:$0xff]
    %v225 = vld [vmem:[#allocation6 + $0x3d8] sm:$0xff]
    %v226 = vld [vmem:[#allocation6 + $0x3e0] sm:$0xff]
    %v227 = vld [vmem:[#allocation6 + $0x3e8] sm:$0xff]
    %v228 = vld [vmem:[#allocation6 + $0x3f0] sm:$0xff]
    %v229 = vld [vmem:[#allocation6 + $0x3f8] sm:$0xff]
    %v230 = vld [vmem:[#allocation6 + $0x400] sm:$0xff]
    %v231 = vld [vmem:[#allocation6 + $0x408] sm:$0xff]
    %v232 = vld [vmem:[#allocation6 + $0x410] sm:$0xff]
    %v233 = vld [vmem:[#allocation6 + $0x418] sm:$0xff]
    %v234 = vld [vmem:[#allocation6 + $0x420] sm:$0xff]
    %v235 = vld [vmem:[#allocation6 + $0x428] sm:$0xff]
    %v236 = vld [vmem:[#allocation6 + $0x430] sm:$0xff]
    %v237 = vld [vmem:[#allocation6 + $0x438] sm:$0xff]
    %v238 = vld [vmem:[#allocation6 + $0x440] sm:$0xff]
    %v239 = vld [vmem:[#allocation6 + $0x448] sm:$0xff]
    %v240 = vld [vmem:[#allocation6 + $0x450] sm:$0xff]
    %v241 = vld [vmem:[#allocation6 + $0x458] sm:$0xff]
    %v242 = vld [vmem:[#allocation6 + $0x460] sm:$0xff]
    %v243 = vld [vmem:[#allocation6 + $0x468] sm:$0xff]
    %v244 = vld [vmem:[#allocation6 + $0x470] sm:$0xff]
    %v245 = vld [vmem:[#allocation6 + $0x478] sm:$0xff]
    %v246 = vld [vmem:[#allocation6 + $0x480] sm:$0xff]
    %v247 = vld [vmem:[#allocation6 + $0x488] sm:$0xff]
    %v248 = vld [vmem:[#allocation6 + $0x490] sm:$0xff]
    %v249 = vld [vmem:[#allocation6 + $0x498] sm:$0xff]
    %v250 = vld [vmem:[#allocation6 + $0x4a0] sm:$0xff]
    %v251 = vld [vmem:[#allocation6 + $0x4a8] sm:$0xff]
    %v252 = vld [vmem:[#allocation6 + $0x4b0] sm:$0xff]
    %v253 = vld [vmem:[#allocation6 + $0x4b8] sm:$0xff]
    %v254 = vld [vmem:[#allocation6 + $0x4c0] sm:$0xff]
    %v255 = vld [vmem:[#allocation6 + $0x4c8] sm:$0xff]
    %v256 = vld [vmem:[#allocation6 + $0x4d0] sm:$0xff]
    %v257 = vld [vmem:[#allocation6 + $0x4d8] sm:$0xff]
    %v258 = vld [vmem:[#allocation6 + $0x4e0] sm:$0xff]
    %v259 = vld [vmem:[#allocation6 + $0x4e8] sm:$0xff]
    %v260 = vld [vmem:[#allocation6 + $0x4f0] sm:$0xff]
    %v261 = vld [vmem:[#allocation6 + $0x4f8] sm:$0xff]
    %v262 = vld [vmem:[#allocation6 + $0x500] sm:$0xff]
    %v263 = vld [vmem:[#allocation6 + $0x508] sm:$0xff]
    %v264 = vld [vmem:[#allocation6 + $0x510] sm:$0xff]
    %v265 = vld [vmem:[#allocation6 + $0x518] sm:$0xff]
    %v266 = vld [vmem:[#allocation6 + $0x520] sm:$0xff]
    %v267 = vld [vmem:[#allocation6 + $0x528] sm:$0xff]
    %v268 = vld [vmem:[#allocation6 + $0x530] sm:$0xff]
    %v269 = vld [vmem:[#allocation6 + $0x538] sm:$0xff]
    %v270 = vld [vmem:[#allocation6 + $0x540] sm:$0xff]
    %v271 = vld [vmem:[#allocation6 + $0x548] sm:$0xff]
    %v272 = vld [vmem:[#allocation6 + $0x550] sm:$0xff]
    %v273 = vld [vmem:[#allocation6 + $0x558] sm:$0xff]
    %v274 = vld [vmem:[#allocation6 + $0x560] sm:$0xff]
    %v275 = vld [vmem:[#allocation6 + $0x568] sm:$0xff]
    %v276 = vld [vmem:[#allocation6 + $0x570] sm:$0xff]
    %v277 = vld [vmem:[#allocation6 + $0x578] sm:$0xff]
    %v278 = vld [vmem:[#allocation6 + $0x580] sm:$0xff]
    %v279 = vld [vmem:[#allocation6 + $0x588] sm:$0xff]
    %v280 = vld [vmem:[#allocation6 + $0x590] sm:$0xff]
    %v281 = vld [vmem:[#allocation6 + $0x598] sm:$0xff]
    %v282 = vld [vmem:[#allocation6 + $0x5a0] sm:$0xff]
    %v283 = vld [vmem:[#allocation6 + $0x5a8] sm:$0xff]
    %v284 = vld [vmem:[#allocation6 + $0x5b0] sm:$0xff]
    %v285 = vld [vmem:[#allocation6 + $0x5b8] sm:$0xff]
    %v286 = vld [vmem:[#allocation6 + $0x5c0] sm:$0xff]
    %v287 = vld [vmem:[#allocation6 + $0x5c8] sm:$0xff]
    %v288 = vld [vmem:[#allocation6 + $0x5d0] sm:$0xff]
    %v289 = vld [vmem:[#allocation6 + $0x5d8] sm:$0xff]
    %v290 = vld [vmem:[#allocation6 + $0x5e0] sm:$0xff]
    %v291 = vld [vmem:[#allocation6 + $0x5e8] sm:$0xff]
    %v292 = vld [vmem:[#allocation6 + $0x5f0] sm:$0xff]
    %v293 = vld [vmem:[#allocation6 + $0x5f8] sm:$0xff]
    %v294 = vld [vmem:[#allocation9] sm:$0xff]
    %v295 = vld [vmem:[#allocation9 + $0x8] sm:$0xff]
    %v296 = vld [vmem:[#allocation9 + $0x10] sm:$0xff]
    %v297 = vld [vmem:[#allocation9 + $0x18] sm:$0xff]
    %v298 = vld [vmem:[#allocation9 + $0x20] sm:$0xff]
    %v299 = vld [vmem:[#allocation9 + $0x28] sm:$0xff]
    %v300 = vld [vmem:[#allocation9 + $0x30] sm:$0xff]
    %v301 = vld [vmem:[#allocation9 + $0x38] sm:$0xff]
    %v302 = vld [vmem:[#allocation9 + $0x40] sm:$0xff]
    %v303 = vld [vmem:[#allocation9 + $0x48] sm:$0xff]
    %v304 = vld [vmem:[#allocation9 + $0x50] sm:$0xff]
    %v305 = vld [vmem:[#allocation9 + $0x58] sm:$0xff]
    %v306 = vld [vmem:[#allocation9 + $0x60] sm:$0xff]
    %v307 = vld [vmem:[#allocation9 + $0x68] sm:$0xff]
    %v308 = vld [vmem:[#allocation9 + $0x70] sm:$0xff]
    %v309 = vld [vmem:[#allocation9 + $0x78] sm:$0xff]
    %v310 = vld [vmem:[#allocation9 + $0x80] sm:$0xff]
    %v311 = vld [vmem:[#allocation9 + $0x88] sm:$0xff]
    %v312 = vld [vmem:[#allocation9 + $0x90] sm:$0xff]
    %v313 = vld [vmem:[#allocation9 + $0x98] sm:$0xff]
    %v314 = vld [vmem:[#allocation9 + $0xa0] sm:$0xff]
    %v315 = vld [vmem:[#allocation9 + $0xa8] sm:$0xff]
    %v316 = vld [vmem:[#allocation9 + $0xb0] sm:$0xff]
    %v317 = vld [vmem:[#allocation9 + $0xb8] sm:$0xff]
    %v318 = vld [vmem:[#allocation9 + $0xc0] sm:$0xff]
    %v319 = vld [vmem:[#allocation9 + $0xc8] sm:$0xff]
    %v320 = vld [vmem:[#allocation9 + $0xd0] sm:$0xff]
    %v321 = vld [vmem:[#allocation9 + $0xd8] sm:$0xff]
    %v322 = vld [vmem:[#allocation9 + $0xe0] sm:$0xff]
    %v323 = vld [vmem:[#allocation9 + $0xe8] sm:$0xff]
    %v324 = vld [vmem:[#allocation9 + $0xf0] sm:$0xff]
    %v325 = vld [vmem:[#allocation9 + $0xf8] sm:$0xff]
    %v326 = vld [vmem:[#allocation9 + $0x100] sm:$0xff]
    %v327 = vld [vmem:[#allocation9 + $0x108] sm:$0xff]
    %v328 = vld [vmem:[#allocation9 + $0x110] sm:$0xff]
    %v329 = vld [vmem:[#allocation9 + $0x118] sm:$0xff]
    %v330 = vld [vmem:[#allocation9 + $0x120] sm:$0xff]
    %v331 = vld [vmem:[#allocation9 + $0x128] sm:$0xff]
    %v332 = vld [vmem:[#allocation9 + $0x130] sm:$0xff]
    %v333 = vld [vmem:[#allocation9 + $0x138] sm:$0xff]
    %v334 = vld [vmem:[#allocation9 + $0x140] sm:$0xff]
    %v335 = vld [vmem:[#allocation9 + $0x148] sm:$0xff]
    %v336 = vld [vmem:[#allocation9 + $0x150] sm:$0xff]
    %v337 = vld [vmem:[#allocation9 + $0x158] sm:$0xff]
    %v338 = vld [vmem:[#allocation9 + $0x160] sm:$0xff]
    %v339 = vld [vmem:[#allocation9 + $0x168] sm:$0xff]
    %v340 = vld [vmem:[#allocation9 + $0x170] sm:$0xff]
    %v341 = vld [vmem:[#allocation9 + $0x178] sm:$0xff]
    %v342 = vld [vmem:[#allocation9 + $0x180] sm:$0xff]
    %v343 = vld [vmem:[#allocation9 + $0x188] sm:$0xff]
    %v344 = vld [vmem:[#allocation9 + $0x190] sm:$0xff]
    %v345 = vld [vmem:[#allocation9 + $0x198] sm:$0xff]
    %v346 = vld [vmem:[#allocation9 + $0x1a0] sm:$0xff]
    %v347 = vld [vmem:[#allocation9 + $0x1a8] sm:$0xff]
    %v348 = vld [vmem:[#allocation9 + $0x1b0] sm:$0xff]
    %v349 = vld [vmem:[#allocation9 + $0x1b8] sm:$0xff]
    %v350 = vld [vmem:[#allocation9 + $0x1c0] sm:$0xff]
    %v351 = vld [vmem:[#allocation9 + $0x1c8] sm:$0xff]
    %v352 = vld [vmem:[#allocation9 + $0x1d0] sm:$0xff]
    %v353 = vld [vmem:[#allocation9 + $0x1d8] sm:$0xff]
    %v354 = vld [vmem:[#allocation9 + $0x1e0] sm:$0xff]
    %v355 = vld [vmem:[#allocation9 + $0x1e8] sm:$0xff]
    %v356 = vld [vmem:[#allocation9 + $0x1f0] sm:$0xff]
    %v357 = vld [vmem:[#allocation9 + $0x1f8] sm:$0xff]
    %v358 = vld [vmem:[#allocation9 + $0x200] sm:$0xff]
    %v359 = vld [vmem:[#allocation9 + $0x208] sm:$0xff]
    %v360 = vld [vmem:[#allocation9 + $0x210] sm:$0xff]
    %v361 = vld [vmem:[#allocation9 + $0x218] sm:$0xff]
    %v362 = vld [vmem:[#allocation9 + $0x220] sm:$0xff]
    %v363 = vld [vmem:[#allocation9 + $0x228] sm:$0xff]
    %v364 = vld [vmem:[#allocation9 + $0x230] sm:$0xff]
    %v365 = vld [vmem:[#allocation9 + $0x238] sm:$0xff]
    %v366 = vld [vmem:[#allocation9 + $0x240] sm:$0xff]
    %v367 = vld [vmem:[#allocation9 + $0x248] sm:$0xff]
    %v368 = vld [vmem:[#allocation9 + $0x250] sm:$0xff]
    %v369 = vld [vmem:[#allocation9 + $0x258] sm:$0xff]
    %v370 = vld [vmem:[#allocation9 + $0x260] sm:$0xff]
    %v371 = vld [vmem:[#allocation9 + $0x268] sm:$0xff]
    %v372 = vld [vmem:[#allocation9 + $0x270] sm:$0xff]
    %v373 = vld [vmem:[#allocation9 + $0x278] sm:$0xff]
    %v374 = vld [vmem:[#allocation9 + $0x280] sm:$0xff]
    %v375 = vld [vmem:[#allocation9 + $0x288] sm:$0xff]
    %v376 = vld [vmem:[#allocation9 + $0x290] sm:$0xff]
    %v377 = vld [vmem:[#allocation9 + $0x298] sm:$0xff]
    %v378 = vld [vmem:[#allocation9 + $0x2a0] sm:$0xff]
    %v379 = vld [vmem:[#allocation9 + $0x2a8] sm:$0xff]
    %v380 = vld [vmem:[#allocation9 + $0x2b0] sm:$0xff]
    %v381 = vld [vmem:[#allocation9 + $0x2b8] sm:$0xff]
    %v382 = vld [vmem:[#allocation9 + $0x2c0] sm:$0xff]
    %v383 = vld [vmem:[#allocation9 + $0x2c8] sm:$0xff]
    %v384 = vld [vmem:[#allocation9 + $0x2d0] sm:$0xff]
    %v385 = vld [vmem:[#allocation9 + $0x2d8] sm:$0xff]
    %v386 = vld [vmem:[#allocation9 + $0x2e0] sm:$0xff]
    %v387 = vld [vmem:[#allocation9 + $0x2e8] sm:$0xff]
    %v388 = vld [vmem:[#allocation9 + $0x2f0] sm:$0xff]
    %v389 = vld [vmem:[#allocation9 + $0x2f8] sm:$0xff]
    %v390 = vld [vmem:[#allocation9 + $0x300] sm:$0xff]
    %v391 = vld [vmem:[#allocation9 + $0x308] sm:$0xff]
    %v392 = vld [vmem:[#allocation9 + $0x310] sm:$0xff]
    %v393 = vld [vmem:[#allocation9 + $0x318] sm:$0xff]
    %v394 = vld [vmem:[#allocation9 + $0x320] sm:$0xff]
    %v395 = vld [vmem:[#allocation9 + $0x328] sm:$0xff]
    %v396 = vld [vmem:[#allocation9 + $0x330] sm:$0xff]
    %v397 = vld [vmem:[#allocation9 + $0x338] sm:$0xff]
    %v398 = vld [vmem:[#allocation9 + $0x340] sm:$0xff]
    %v399 = vld [vmem:[#allocation9 + $0x348] sm:$0xff]
    %v400 = vld [vmem:[#allocation9 + $0x350] sm:$0xff]
    %v401 = vld [vmem:[#allocation9 + $0x358] sm:$0xff]
    %v402 = vld [vmem:[#allocation9 + $0x360] sm:$0xff]
    %v403 = vld [vmem:[#allocation9 + $0x368] sm:$0xff]
    %v404 = vld [vmem:[#allocation9 + $0x370] sm:$0xff]
    %v405 = vld [vmem:[#allocation9 + $0x378] sm:$0xff]
    %v406 = vld [vmem:[#allocation9 + $0x380] sm:$0xff]
    %v407 = vld [vmem:[#allocation9 + $0x388] sm:$0xff]
    %v408 = vld [vmem:[#allocation9 + $0x390] sm:$0xff]
    %v409 = vld [vmem:[#allocation9 + $0x398] sm:$0xff]
    %v410 = vld [vmem:[#allocation9 + $0x3a0] sm:$0xff]
    %v411 = vld [vmem:[#allocation9 + $0x3a8] sm:$0xff]
    %v412 = vld [vmem:[#allocation9 + $0x3b0] sm:$0xff]
    %v413 = vld [vmem:[#allocation9 + $0x3b8] sm:$0xff]
    %v414 = vld [vmem:[#allocation9 + $0x3c0] sm:$0xff]
    %v415 = vld [vmem:[#allocation9 + $0x3c8] sm:$0xff]
    %v416 = vld [vmem:[#allocation9 + $0x3d0] sm:$0xff]
    %v417 = vld [vmem:[#allocation9 + $0x3d8] sm:$0xff]
    %v418 = vld [vmem:[#allocation9 + $0x3e0] sm:$0xff]
    %v419 = vld [vmem:[#allocation9 + $0x3e8] sm:$0xff]
    %v420 = vld [vmem:[#allocation9 + $0x3f0] sm:$0xff]
    %v421 = vld [vmem:[#allocation9 + $0x3f8] sm:$0xff]
    %v422 = vld [vmem:[#allocation9 + $0x400] sm:$0xff]
    %v423 = vld [vmem:[#allocation9 + $0x408] sm:$0xff]
    %v424 = vld [vmem:[#allocation9 + $0x410] sm:$0xff]
    %v425 = vld [vmem:[#allocation9 + $0x418] sm:$0xff]
    %v426 = vld [vmem:[#allocation9 + $0x420] sm:$0xff]
    %v427 = vld [vmem:[#allocation9 + $0x428] sm:$0xff]
    %v428 = vld [vmem:[#allocation9 + $0x430] sm:$0xff]
    %v429 = vld [vmem:[#allocation9 + $0x438] sm:$0xff]
    %v430 = vld [vmem:[#allocation9 + $0x440] sm:$0xff]
    %v431 = vld [vmem:[#allocation9 + $0x448] sm:$0xff]
    %v432 = vld [vmem:[#allocation9 + $0x450] sm:$0xff]
    %v433 = vld [vmem:[#allocation9 + $0x458] sm:$0xff]
    %v434 = vld [vmem:[#allocation9 + $0x460] sm:$0xff]
    %v435 = vld [vmem:[#allocation9 + $0x468] sm:$0xff]
    %v436 = vld [vmem:[#allocation9 + $0x470] sm:$0xff]
    %v437 = vld [vmem:[#allocation9 + $0x478] sm:$0xff]
    %v438 = vld [vmem:[#allocation9 + $0x480] sm:$0xff]
    %v439 = vld [vmem:[#allocation9 + $0x488] sm:$0xff]
    %v440 = vld [vmem:[#allocation9 + $0x490] sm:$0xff]
    %v441 = vld [vmem:[#allocation9 + $0x498] sm:$0xff]
    %v442 = vld [vmem:[#allocation9 + $0x4a0] sm:$0xff]
    %v443 = vld [vmem:[#allocation9 + $0x4a8] sm:$0xff]
    %v444 = vld [vmem:[#allocation9 + $0x4b0] sm:$0xff]
    %v445 = vld [vmem:[#allocation9 + $0x4b8] sm:$0xff]
    %v446 = vld [vmem:[#allocation9 + $0x4c0] sm:$0xff]
    %v447 = vld [vmem:[#allocation9 + $0x4c8] sm:$0xff]
    %v448 = vld [vmem:[#allocation9 + $0x4d0] sm:$0xff]
    %v449 = vld [vmem:[#allocation9 + $0x4d8] sm:$0xff]
    %v450 = vld [vmem:[#allocation9 + $0x4e0] sm:$0xff]
    %v451 = vld [vmem:[#allocation9 + $0x4e8] sm:$0xff]
    %v452 = vld [vmem:[#allocation9 + $0x4f0] sm:$0xff]
    %v453 = vld [vmem:[#allocation9 + $0x4f8] sm:$0xff]
    %v454 = vld [vmem:[#allocation9 + $0x500] sm:$0xff]
    %v455 = vld [vmem:[#allocation9 + $0x508] sm:$0xff]
    %v456 = vld [vmem:[#allocation9 + $0x510] sm:$0xff]
    %v457 = vld [vmem:[#allocation9 + $0x518] sm:$0xff]
    %v458 = vld [vmem:[#allocation9 + $0x520] sm:$0xff]
    %v459 = vld [vmem:[#allocation9 + $0x528] sm:$0xff]
    %v460 = vld [vmem:[#allocation9 + $0x530] sm:$0xff]
    %v461 = vld [vmem:[#allocation9 + $0x538] sm:$0xff]
    %v462 = vld [vmem:[#allocation9 + $0x540] sm:$0xff]
    %v463 = vld [vmem:[#allocation9 + $0x548] sm:$0xff]
    %v464 = vld [vmem:[#allocation9 + $0x550] sm:$0xff]
    %v465 = vld [vmem:[#allocation9 + $0x558] sm:$0xff]
    %v466 = vld [vmem:[#allocation9 + $0x560] sm:$0xff]
    %v467 = vld [vmem:[#allocation9 + $0x568] sm:$0xff]
    %v468 = vld [vmem:[#allocation9 + $0x570] sm:$0xff]
    %v469 = vld [vmem:[#allocation9 + $0x578] sm:$0xff]
    %v470 = vld [vmem:[#allocation9 + $0x580] sm:$0xff]
    %v471 = vld [vmem:[#allocation9 + $0x588] sm:$0xff]
    %v472 = vld [vmem:[#allocation9 + $0x590] sm:$0xff]
    %v473 = vld [vmem:[#allocation9 + $0x598] sm:$0xff]
    %v474 = vld [vmem:[#allocation9 + $0x5a0] sm:$0xff]
    %v475 = vld [vmem:[#allocation9 + $0x5a8] sm:$0xff]
    %v476 = vld [vmem:[#allocation9 + $0x5b0] sm:$0xff]
    %v477 = vld [vmem:[#allocation9 + $0x5b8] sm:$0xff]
    %v478 = vld [vmem:[#allocation9 + $0x5c0] sm:$0xff]
    %v479 = vld [vmem:[#allocation9 + $0x5c8] sm:$0xff]
    %v480 = vld [vmem:[#allocation9 + $0x5d0] sm:$0xff]
    %v481 = vld [vmem:[#allocation9 + $0x5d8] sm:$0xff]
    %v482 = vld [vmem:[#allocation9 + $0x5e0] sm:$0xff]
    %v483 = vld [vmem:[#allocation9 + $0x5e8] sm:$0xff]
    %v484 = vld [vmem:[#allocation9 + $0x5f0] sm:$0xff]
    %v485 = vld [vmem:[#allocation9 + $0x5f8] sm:$0xff]
    %v486 = vld [vmem:[%s5] sm:$0x3]
    %v487 = vld [vmem:[%s9] sm:$0x3]
    %v488 = vld [vmem:[#allocation8] sm:$0xff]
    %v489 = vld [vmem:[#allocation8 + $0x8] sm:$0xff]
    %v490 = vld [vmem:[#allocation8 + $0x10] sm:$0xff]
    %v491 = vld [vmem:[#allocation8 + $0x18] sm:$0xff]
    %v492 = vld [vmem:[#allocation8 + $0x20] sm:$0xff]
    %v493 = vld [vmem:[#allocation8 + $0x28] sm:$0xff]
    %v494 = vld [vmem:[#allocation8 + $0x30] sm:$0xff]
    %v495 = vld [vmem:[#allocation8 + $0x38] sm:$0xff]
    %v496 = vld [vmem:[#allocation8 + $0x40] sm:$0xff]
    %v497 = vld [vmem:[#allocation8 + $0x48] sm:$0xff]
    %v498 = vld [vmem:[#allocation8 + $0x50] sm:$0xff]
    %v499 = vld [vmem:[#allocation8 + $0x58] sm:$0xff]
    %v500 = vld [vmem:[#allocation8 + $0x60] sm:$0xff]
    %v501 = vld [vmem:[#allocation8 + $0x68] sm:$0xff]
    %v502 = vld [vmem:[#allocation8 + $0x70] sm:$0xff]
    %v503 = vld [vmem:[#allocation8 + $0x78] sm:$0xff]
    %v504 = vld [vmem:[#allocation8 + $0x80] sm:$0xff]
    %v505 = vld [vmem:[#allocation8 + $0x88] sm:$0xff]
    %v506 = vld [vmem:[#allocation8 + $0x90] sm:$0xff]
    %v507 = vld [vmem:[#allocation8 + $0x98] sm:$0xff]
    %v508 = vld [vmem:[#allocation8 + $0xa0] sm:$0xff]
    %v509 = vld [vmem:[#allocation8 + $0xa8] sm:$0xff]
    %v510 = vld [vmem:[#allocation8 + $0xb0] sm:$0xff]
    %v511 = vld [vmem:[#allocation8 + $0xb8] sm:$0xff]
    %v512 = vld [vmem:[#allocation8 + $0xc0] sm:$0xff]
    %v513 = vld [vmem:[#allocation8 + $0xc8] sm:$0xff]
    %v514 = vld [vmem:[#allocation8 + $0xd0] sm:$0xff]
    %v515 = vld [vmem:[#allocation8 + $0xd8] sm:$0xff]
    %v516 = vld [vmem:[#allocation8 + $0xe0] sm:$0xff]
    %v517 = vld [vmem:[#allocation8 + $0xe8] sm:$0xff]
    %v518 = vld [vmem:[#allocation8 + $0xf0] sm:$0xff]
    %v519 = vld [vmem:[#allocation8 + $0xf8] sm:$0xff]
    %v520 = vld [vmem:[#allocation8 + $0x100] sm:$0xff]
    %v521 = vld [vmem:[#allocation8 + $0x108] sm:$0xff]
    %v522 = vld [vmem:[#allocation8 + $0x110] sm:$0xff]
    %v523 = vld [vmem:[#allocation8 + $0x118] sm:$0xff]
    %v524 = vld [vmem:[#allocation8 + $0x120] sm:$0xff]
    %v525 = vld [vmem:[#allocation8 + $0x128] sm:$0xff]
    %v526 = vld [vmem:[#allocation8 + $0x130] sm:$0xff]
    %v527 = vld [vmem:[#allocation8 + $0x138] sm:$0xff]
    %v528 = vld [vmem:[#allocation8 + $0x140] sm:$0xff]
    %v529 = vld [vmem:[#allocation8 + $0x148] sm:$0xff]
    %v530 = vld [vmem:[#allocation8 + $0x150] sm:$0xff]
    %v531 = vld [vmem:[#allocation8 + $0x158] sm:$0xff]
    %v532 = vld [vmem:[#allocation8 + $0x160] sm:$0xff]
    %v533 = vld [vmem:[#allocation8 + $0x168] sm:$0xff]
    %v534 = vld [vmem:[#allocation8 + $0x170] sm:$0xff]
    %v535 = vld [vmem:[#allocation8 + $0x178] sm:$0xff]
    %v536 = vld [vmem:[#allocation8 + $0x180] sm:$0xff]
    %v537 = vld [vmem:[#allocation8 + $0x188] sm:$0xff]
    %v538 = vld [vmem:[#allocation8 + $0x190] sm:$0xff]
    %v539 = vld [vmem:[#allocation8 + $0x198] sm:$0xff]
    %v540 = vld [vmem:[#allocation8 + $0x1a0] sm:$0xff]
    %v541 = vld [vmem:[#allocation8 + $0x1a8] sm:$0xff]
    %v542 = vld [vmem:[#allocation8 + $0x1b0] sm:$0xff]
    %v543 = vld [vmem:[#allocation8 + $0x1b8] sm:$0xff]
    %v544 = vld [vmem:[#allocation8 + $0x1c0] sm:$0xff]
    %v545 = vld [vmem:[#allocation8 + $0x1c8] sm:$0xff]
    %v546 = vld [vmem:[#allocation8 + $0x1d0] sm:$0xff]
    %v547 = vld [vmem:[#allocation8 + $0x1d8] sm:$0xff]
    %v548 = vld [vmem:[#allocation8 + $0x1e0] sm:$0xff]
    %v549 = vld [vmem:[#allocation8 + $0x1e8] sm:$0xff]
    %v550 = vld [vmem:[#allocation8 + $0x1f0] sm:$0xff]
    %v551 = vld [vmem:[#allocation8 + $0x1f8] sm:$0xff]
    %v552 = vld [vmem:[#allocation8 + $0x200] sm:$0xff]
    %v553 = vld [vmem:[#allocation8 + $0x208] sm:$0xff]
    %v554 = vld [vmem:[#allocation8 + $0x210] sm:$0xff]
    %v555 = vld [vmem:[#allocation8 + $0x218] sm:$0xff]
    %v556 = vld [vmem:[#allocation8 + $0x220] sm:$0xff]
    %v557 = vld [vmem:[#allocation8 + $0x228] sm:$0xff]
    %v558 = vld [vmem:[#allocation8 + $0x230] sm:$0xff]
    %v559 = vld [vmem:[#allocation8 + $0x238] sm:$0xff]
    %v560 = vld [vmem:[#allocation8 + $0x240] sm:$0xff]
    %v561 = vld [vmem:[#allocation8 + $0x248] sm:$0xff]
    %v562 = vld [vmem:[#allocation8 + $0x250] sm:$0xff]
    %v563 = vld [vmem:[#allocation8 + $0x258] sm:$0xff]
    %v564 = vld [vmem:[#allocation8 + $0x260] sm:$0xff]
    %v565 = vld [vmem:[#allocation8 + $0x268] sm:$0xff]
    %v566 = vld [vmem:[#allocation8 + $0x270] sm:$0xff]
    %v567 = vld [vmem:[#allocation8 + $0x278] sm:$0xff]
    %v568 = vld [vmem:[#allocation8 + $0x280] sm:$0xff]
    %v569 = vld [vmem:[#allocation8 + $0x288] sm:$0xff]
    %v570 = vld [vmem:[#allocation8 + $0x290] sm:$0xff]
    %v571 = vld [vmem:[#allocation8 + $0x298] sm:$0xff]
    %v572 = vld [vmem:[#allocation8 + $0x2a0] sm:$0xff]
    %v573 = vld [vmem:[#allocation8 + $0x2a8] sm:$0xff]
    %v574 = vld [vmem:[#allocation8 + $0x2b0] sm:$0xff]
    %v575 = vld [vmem:[#allocation8 + $0x2b8] sm:$0xff]
    %v576 = vld [vmem:[#allocation8 + $0x2c0] sm:$0xff]
    %v577 = vld [vmem:[#allocation8 + $0x2c8] sm:$0xff]
    %v578 = vld [vmem:[#allocation8 + $0x2d0] sm:$0xff]
    %v579 = vld [vmem:[#allocation8 + $0x2d8] sm:$0xff]
    %v580 = vld [vmem:[#allocation8 + $0x2e0] sm:$0xff]
    %v581 = vld [vmem:[#allocation8 + $0x2e8] sm:$0xff]
    %v582 = vld [vmem:[#allocation8 + $0x2f0] sm:$0xff]
    %v583 = vld [vmem:[#allocation8 + $0x2f8] sm:$0xff]
    %v584 = vld [vmem:[#allocation8 + $0x300] sm:$0xff]
    %v585 = vld [vmem:[#allocation8 + $0x308] sm:$0xff]
    %v586 = vld [vmem:[#allocation8 + $0x310] sm:$0xff]
    %v587 = vld [vmem:[#allocation8 + $0x318] sm:$0xff]
    %v588 = vld [vmem:[#allocation8 + $0x320] sm:$0xff]
    %v589 = vld [vmem:[#allocation8 + $0x328] sm:$0xff]
    %v590 = vld [vmem:[#allocation8 + $0x330] sm:$0xff]
    %v591 = vld [vmem:[#allocation8 + $0x338] sm:$0xff]
    %v592 = vld [vmem:[#allocation8 + $0x340] sm:$0xff]
    %v593 = vld [vmem:[#allocation8 + $0x348] sm:$0xff]
    %v594 = vld [vmem:[#allocation8 + $0x350] sm:$0xff]
    %v595 = vld [vmem:[#allocation8 + $0x358] sm:$0xff]
    %v596 = vld [vmem:[#allocation8 + $0x360] sm:$0xff]
    %v597 = vld [vmem:[#allocation8 + $0x368] sm:$0xff]
    %v598 = vld [vmem:[#allocation8 + $0x370] sm:$0xff]
    %v599 = vld [vmem:[#allocation8 + $0x378] sm:$0xff]
    %v600 = vld [vmem:[#allocation8 + $0x380] sm:$0xff]
    %v601 = vld [vmem:[#allocation8 + $0x388] sm:$0xff]
    %v602 = vld [vmem:[#allocation8 + $0x390] sm:$0xff]
    %v603 = vld [vmem:[#allocation8 + $0x398] sm:$0xff]
    %v604 = vld [vmem:[#allocation8 + $0x3a0] sm:$0xff]
    %v605 = vld [vmem:[#allocation8 + $0x3a8] sm:$0xff]
    %v606 = vld [vmem:[#allocation8 + $0x3b0] sm:$0xff]
    %v607 = vld [vmem:[#allocation8 + $0x3b8] sm:$0xff]
    %v608 = vld [vmem:[#allocation8 + $0x3c0] sm:$0xff]
    %v609 = vld [vmem:[#allocation8 + $0x3c8] sm:$0xff]
    %v610 = vld [vmem:[#allocation8 + $0x3d0] sm:$0xff]
    %v611 = vld [vmem:[#allocation8 + $0x3d8] sm:$0xff]
    %v612 = vld [vmem:[#allocation8 + $0x3e0] sm:$0xff]
    %v613 = vld [vmem:[#allocation8 + $0x3e8] sm:$0xff]
    %v614 = vld [vmem:[#allocation8 + $0x3f0] sm:$0xff]
    %v615 = vld [vmem:[#allocation8 + $0x3f8] sm:$0xff]
    %v616 = vld [vmem:[#allocation8 + $0x400] sm:$0xff]
    %v617 = vld [vmem:[#allocation8 + $0x408] sm:$0xff]
    %v618 = vld [vmem:[#allocation8 + $0x410] sm:$0xff]
    %v619 = vld [vmem:[#allocation8 + $0x418] sm:$0xff]
    %v620 = vld [vmem:[#allocation8 + $0x420] sm:$0xff]
    %v621 = vld [vmem:[#allocation8 + $0x428] sm:$0xff]
    %v622 = vld [vmem:[#allocation8 + $0x430] sm:$0xff]
    %v623 = vld [vmem:[#allocation8 + $0x438] sm:$0xff]
    %v624 = vld [vmem:[#allocation8 + $0x440] sm:$0xff]
    %v625 = vld [vmem:[#allocation8 + $0x448] sm:$0xff]
    %v626 = vld [vmem:[#allocation8 + $0x450] sm:$0xff]
    %v627 = vld [vmem:[#allocation8 + $0x458] sm:$0xff]
    %v628 = vld [vmem:[#allocation8 + $0x460] sm:$0xff]
    %v629 = vld [vmem:[#allocation8 + $0x468] sm:$0xff]
    %v630 = vld [vmem:[#allocation8 + $0x470] sm:$0xff]
    %v631 = vld [vmem:[#allocation8 + $0x478] sm:$0xff]
    %v632 = vld [vmem:[#allocation8 + $0x480] sm:$0xff]
    %v633 = vld [vmem:[#allocation8 + $0x488] sm:$0xff]
    %v634 = vld [vmem:[#allocation8 + $0x490] sm:$0xff]
    %v635 = vld [vmem:[#allocation8 + $0x498] sm:$0xff]
    %v636 = vld [vmem:[#allocation8 + $0x4a0] sm:$0xff]
    %v637 = vld [vmem:[#allocation8 + $0x4a8] sm:$0xff]
    %v638 = vld [vmem:[#allocation8 + $0x4b0] sm:$0xff]
    %v639 = vld [vmem:[#allocation8 + $0x4b8] sm:$0xff]
    %v640 = vld [vmem:[#allocation8 + $0x4c0] sm:$0xff]
    %v641 = vld [vmem:[#allocation8 + $0x4c8] sm:$0xff]
    %v642 = vld [vmem:[#allocation8 + $0x4d0] sm:$0xff]
    %v643 = vld [vmem:[#allocation8 + $0x4d8] sm:$0xff]
    %v644 = vld [vmem:[#allocation8 + $0x4e0] sm:$0xff]
    %v645 = vld [vmem:[#allocation8 + $0x4e8] sm:$0xff]
    %v646 = vld [vmem:[#allocation8 + $0x4f0] sm:$0xff]
    %v647 = vld [vmem:[#allocation8 + $0x4f8] sm:$0xff]
    %v648 = vld [vmem:[#allocation8 + $0x500] sm:$0xff]
    %v649 = vld [vmem:[#allocation8 + $0x508] sm:$0xff]
    %v650 = vld [vmem:[#allocation8 + $0x510] sm:$0xff]
    %v651 = vld [vmem:[#allocation8 + $0x518] sm:$0xff]
    %v652 = vld [vmem:[#allocation8 + $0x520] sm:$0xff]
    %v653 = vld [vmem:[#allocation8 + $0x528] sm:$0xff]
    %v654 = vld [vmem:[#allocation8 + $0x530] sm:$0xff]
    %v655 = vld [vmem:[#allocation8 + $0x538] sm:$0xff]
    %v656 = vld [vmem:[#allocation8 + $0x540] sm:$0xff]
    %v657 = vld [vmem:[#allocation8 + $0x548] sm:$0xff]
    %v658 = vld [vmem:[#allocation8 + $0x550] sm:$0xff]
    %v659 = vld [vmem:[#allocation8 + $0x558] sm:$0xff]
    %v660 = vld [vmem:[#allocation8 + $0x560] sm:$0xff]
    %v661 = vld [vmem:[#allocation8 + $0x568] sm:$0xff]
    %v662 = vld [vmem:[#allocation8 + $0x570] sm:$0xff]
    %v663 = vld [vmem:[#allocation8 + $0x578] sm:$0xff]
    %v664 = vld [vmem:[#allocation8 + $0x580] sm:$0xff]
    %v665 = vld [vmem:[#allocation8 + $0x588] sm:$0xff]
    %v666 = vld [vmem:[#allocation8 + $0x590] sm:$0xff]
    %v667 = vld [vmem:[#allocation8 + $0x598] sm:$0xff]
    %v668 = vld [vmem:[#allocation8 + $0x5a0] sm:$0xff]
    %v669 = vld [vmem:[#allocation8 + $0x5a8] sm:$0xff]
    %v670 = vld [vmem:[#allocation8 + $0x5b0] sm:$0xff]
    %v671 = vld [vmem:[#allocation8 + $0x5b8] sm:$0xff]
    %v672 = vld [vmem:[#allocation8 + $0x5c0] sm:$0xff]
    %v673 = vld [vmem:[#allocation8 + $0x5c8] sm:$0xff]
    %v674 = vld [vmem:[#allocation8 + $0x5d0] sm:$0xff]
    %v675 = vld [vmem:[#allocation8 + $0x5d8] sm:$0xff]
    %v676 = vld [vmem:[#allocation8 + $0x5e0] sm:$0xff]
    %v677 = vld [vmem:[#allocation8 + $0x5e8] sm:$0xff]
    %v678 = vld [vmem:[#allocation8 + $0x5f0] sm:$0xff]
    %v679 = vld [vmem:[#allocation8 + $0x5f8] sm:$0xff]
    %v680 = vld [vmem:[%s7] sm:$0x3f]
    %v681 = vld [vmem:[%s0] sm:$0xff]
    %v682 = vld [vmem:[%s0 + $0x8] sm:$0xff]
    %v683 = vld [vmem:[%s0 + $0x10] sm:$0xff]
    %v684 = vld [vmem:[%s0 + $0x18] sm:$0xff]
    %v685 = vld [vmem:[%s0 + $0x20] sm:$0xff]
    %v686 = vld [vmem:[%s0 + $0x28] sm:$0xff]
    %v687 = vld [vmem:[%s0 + $0x30] sm:$0xff]
    %v688 = vld [vmem:[%s0 + $0x38] sm:$0xff]
    %v690 = vlaneseq
    %v691 = vshrl.u32 %v690, 7
    %v692 = vsub.s32 0, %v691
    %v693 = vrot.slane %v101, %v692
    %v694 = vlaneseq
    %v695 = vshrl.u32 %v694, 7
    %v696 = vsub.s32 1, %v695
    %v697 = vrot.slane %v101, %v696
    %v698 = vlaneseq
    %v699 = vshrl.u32 %v698, 7
    %v700 = vsub.s32 2, %v699
    %v701 = vrot.slane %v101, %v700
    %v702 = vlaneseq
    %v703 = vshrl.u32 %v702, 7
    %v704 = vsub.s32 3, %v703
    %v705 = vrot.slane %v101, %v704
    %v706 = vlaneseq
    %v707 = vshrl.u32 %v706, 7
    %v708 = vsub.s32 4, %v707
    %v709 = vrot.slane %v101, %v708
    %v710 = vlaneseq
    %v711 = vshrl.u32 %v710, 7
    %v712 = vsub.s32 5, %v711
    %v713 = vrot.slane %v101, %v712
    %vm720 = vcmask 130048
    %v722 = vsel %vm720, %v681, 0
    %v725 = vsel %vm720, %v682, 0
    %v728 = vsel %vm720, %v683, 0
    %v731 = vsel %vm720, %v684, 0
    %v734 = vsel %vm720, %v685, 0
    %v737 = vsel %vm720, %v686, 0
    %v740 = vsel %vm720, %v687, 0
    %v743 = vsel %vm720, %v688, 0
    %745 = vmatprep.subr.mxu0 %v90
    %746 = vmatpush1.msra.mxu0 %v89
    %747 = vmatprep.subr.mxu0 %v96
    %748 = vmatpush1.msra.mxu0 %v95
    %749 = vmatprep.subr.mxu0 0.0
    %750 = vmatpush1.msra.mxu0 0.0
    %751 = vmatprep.subr.mxu0 0.0
    %752 = vmatpush1.msra.mxu0 0.0
    %753 = vmatprep.subr.mxu0 0.0
    %754 = vmatpush1.msra.mxu0 0.0
    %755 = vmatprep.subr.mxu0 0.0
    %756 = vmatpush1.msra.mxu0 0.0
    %757 = vmatprep.subr.mxu0 0.0
    %758 = vmatpush1.msra.mxu0 0.0
    %759 = vmatprep.subr.mxu0 0.0
    %760 = vmatpush1.msra.mxu0 0.0
    %761 = vmatprep.subr.mxu0 0.0
    %762 = vmatpush1.msra.mxu0 0.0
    %763 = vmatprep.subr.mxu0 0.0
    %764 = vmatpush1.msra.mxu0 0.0
    %765 = vmatprep.subr.mxu0 0.0
    %766 = vmatpush1.msra.mxu0 0.0
    %767 = vmatprep.subr.mxu0 0.0
    %768 = vmatpush1.msra.mxu0 0.0
    %769 = vmatprep.subr.mxu0 0.0
    %770 = vmatpush1.msra.mxu0 0.0
    %771 = vmatprep.subr.mxu0 0.0
    %772 = vmatpush1.msra.mxu0 0.0
    %773 = vmatprep.subr.mxu0 0.0
    %774 = vmatpush1.msra.mxu0 0.0
    %775 = vmatprep.subr.mxu0 0.0
    %776 = vmatpush1.msra.mxu0 0.0
    %777 = vmatprep.subr.mxu0 0.0
    %778 = vmatpush1.msra.mxu0 0.0
    %779 = vmatprep.subr.mxu0 0.0
    %780 = vmatpush1.msra.mxu0 0.0
    %781 = vmatprep.subr.mxu0 0.0
    %782 = vmatpush1.msra.mxu0 0.0
    %783 = vmatprep.subr.mxu0 0.0
    %784 = vmatpush1.msra.mxu0 0.0
    %785 = vmatprep.subr.mxu0 0.0
    %786 = vmatpush1.msra.mxu0 0.0
    %787 = vmatprep.subr.mxu0 0.0
    %788 = vmatpush1.msra.mxu0 0.0
    %789 = vmatprep.subr.mxu0 0.0
    %790 = vmatpush1.msra.mxu0 0.0
    %791 = vmatprep.subr.mxu0 0.0
    %792 = vmatpush1.msra.mxu0 0.0
    %793 = vmatprep.subr.mxu0 0.0
    %794 = vmatpush1.msra.mxu0 0.0
    %795 = vmatprep.subr.mxu0 0.0
    %796 = vmatpush1.msra.mxu0 0.0
    %797 = vmatprep.subr.mxu0 0.0
    %798 = vmatpush1.msra.mxu0 0.0
    %799 = vmatprep.subr.mxu0 0.0
    %800 = vmatpush1.msra.mxu0 0.0
    %801 = vmatprep.subr.mxu0 0.0
    %802 = vmatpush1.msra.mxu0 0.0
    %803 = vmatprep.subr.mxu0 0.0
    %804 = vmatpush1.msra.mxu0 0.0
    %805 = vmatprep.subr.mxu0 0.0
    %806 = vmatpush1.msra.mxu0 0.0
    %807 = vmatprep.subr.mxu0 0.0
    %808 = vmatpush1.msra.mxu0 0.0
    %809 = vmatprep.mubr.f32.mxu0 0.0
    %810 = vmatmul.mubr.f32.gmra.mrb[0].mxu0 %v722
    %v811 = vpop.f32.mrb[0].mxu0
    %v812 = vadd.f32 %v693, %v811
    %v813 = vpop.f32.mrb[0].mxu0
    %v814 = vadd.f32 %v697, %v813
    %815 = vmatprep.mubr.f32.mxu0 0.0
    %816 = vmatmul.mubr.f32.gmra.mrb[0].mxu0 %v725
    %v817 = vpop.f32.mrb[0].mxu0
    %v818 = vadd.f32 %v693, %v817
    %v819 = vpop.f32.mrb[0].mxu0
    %v820 = vadd.f32 %v697, %v819
    %821 = vmatprep.mubr.f32.mxu0 0.0
    %822 = vmatmul.mubr.f32.gmra.mrb[0].mxu0 %v728
    %v823 = vpop.f32.mrb[0].mxu0
    %v824 = vadd.f32 %v693, %v823
    %v825 = vpop.f32.mrb[0].mxu0
    %v826 = vadd.f32 %v697, %v825
    %827 = vmatprep.mubr.f32.mxu0 0.0
    %828 = vmatmul.mubr.f32.gmra.mrb[0].mxu0 %v731
    %v829 = vpop.f32.mrb[0].mxu0
    %v830 = vadd.f32 %v693, %v829
    %v831 = vpop.f32.mrb[0].mxu0
    %v832 = vadd.f32 %v697, %v831
    %833 = vmatprep.mubr.f32.mxu0 0.0
    %834 = vmatmul.mubr.f32.gmra.mrb[0].mxu0 %v734
    %v835 = vpop.f32.mrb[0].mxu0
    %v836 = vadd.f32 %v693, %v835
    %v837 = vpop.f32.mrb[0].mxu0
    %v838 = vadd.f32 %v697, %v837
    %839 = vmatprep.mubr.f32.mxu0 0.0
    %840 = vmatmul.mubr.f32.gmra.mrb[0].mxu0 %v737
    %v841 = vpop.f32.mrb[0].mxu0
    %v842 = vadd.f32 %v693, %v841
    %v843 = vpop.f32.mrb[0].mxu0
    %v844 = vadd.f32 %v697, %v843
    %845 = vmatprep.mubr.f32.mxu0 0.0
    %846 = vmatmul.mubr.f32.gmra.mrb[0].mxu0 %v740
    %v847 = vpop.f32.mrb[0].mxu0
    %v848 = vadd.f32 %v693, %v847
    %v849 = vpop.f32.mrb[0].mxu0
    %v850 = vadd.f32 %v697, %v849
    %851 = vmatprep.mubr.f32.mxu0 0.0
    %852 = vmatmul.mubr.f32.gmra.mrb[0].mxu0 %v743
    %v853 = vpop.f32.mrb[0].mxu0
    %v854 = vadd.f32 %v693, %v853
    %v855 = vpop.f32.mrb[0].mxu0
    %v856 = vadd.f32 %v697, %v855
    %857 = vdwg.mxu0
    %858 = vmatprep.subr.mxu0 %v92
    %859 = vmatpush1.msra.mxu0 %v91
    %860 = vmatprep.subr.mxu0 %v98
    %861 = vmatpush1.msra.mxu0 %v97
    %862 = vmatprep.subr.mxu0 0.0
    %863 = vmatpush1.msra.mxu0 0.0
    %864 = vmatprep.subr.mxu0 0.0
    %865 = vmatpush1.msra.mxu0 0.0
    %866 = vmatprep.subr.mxu0 0.0
    %867 = vmatpush1.msra.mxu0 0.0
    %868 = vmatprep.subr.mxu0 0.0
    %869 = vmatpush1.msra.mxu0 0.0
    %870 = vmatprep.subr.mxu0 0.0
    %871 = vmatpush1.msra.mxu0 0.0
    %872 = vmatprep.subr.mxu0 0.0
    %873 = vmatpush1.msra.mxu0 0.0
    %874 = vmatprep.subr.mxu0 0.0
    %875 = vmatpush1.msra.mxu0 0.0
    %876 = vmatprep.subr.mxu0 0.0
    %877 = vmatpush1.msra.mxu0 0.0
    %878 = vmatprep.subr.mxu0 0.0
    %879 = vmatpush1.msra.mxu0 0.0
    %880 = vmatprep.subr.mxu0 0.0
    %881 = vmatpush1.msra.mxu0 0.0
    %882 = vmatprep.subr.mxu0 0.0
    %883 = vmatpush1.msra.mxu0 0.0
    %884 = vmatprep.subr.mxu0 0.0
    %885 = vmatpush1.msra.mxu0 0.0
    %886 = vmatprep.subr.mxu0 0.0
    %887 = vmatpush1.msra.mxu0 0.0
    %888 = vmatprep.subr.mxu0 0.0
    %889 = vmatpush1.msra.mxu0 0.0
    %890 = vmatprep.subr.mxu0 0.0
    %891 = vmatpush1.msra.mxu0 0.0
    %892 = vmatprep.subr.mxu0 0.0
    %893 = vmatpush1.msra.mxu0 0.0
    %894 = vmatprep.subr.mxu0 0.0
    %895 = vmatpush1.msra.mxu0 0.0
    %896 = vmatprep.subr.mxu0 0.0
    %897 = vmatpush1.msra.mxu0 0.0
    %898 = vmatprep.subr.mxu0 0.0
    %899 = vmatpush1.msra.mxu0 0.0
    %900 = vmatprep.subr.mxu0 0.0
    %901 = vmatpush1.msra.mxu0 0.0
    %902 = vmatprep.subr.mxu0 0.0
    %903 = vmatpush1.msra.mxu0 0.0
    %904 = vmatprep.subr.mxu0 0.0
    %905 = vmatpush1.msra.mxu0 0.0
    %906 = vmatprep.subr.mxu0 0.0
    %907 = vmatpush1.msra.mxu0 0.0
    %908 = vmatprep.subr.mxu0 0.0
    %909 = vmatpush1.msra.mxu0 0.0
    %910 = vmatprep.subr.mxu0 0.0
    %911 = vmatpush1.msra.mxu0 0.0
    %912 = vmatprep.subr.mxu0 0.0
    %913 = vmatpush1.msra.mxu0 0.0
    %914 = vmatprep.subr.mxu0 0.0
    %915 = vmatpush1.msra.mxu0 0.0
    %916 = vmatprep.subr.mxu0 0.0
    %917 = vmatpush1.msra.mxu0 0.0
    %918 = vmatprep.subr.mxu0 0.0
    %919 = vmatpush1.msra.mxu0 0.0
    %920 = vmatprep.subr.mxu0 0.0
    %921 = vmatpush1.msra.mxu0 0.0
    %922 = vmatprep.mubr.f32.mxu0 0.0
    %923 = vmatmul.mubr.f32.gmra.mrb[0].mxu0 %v722
    %v924 = vpop.f32.mrb[0].mxu0
    %v925 = vadd.f32 %v701, %v924
    %v926 = vpop.f32.mrb[0].mxu0
    %v927 = vadd.f32 %v705, %v926
    %928 = vmatprep.mubr.f32.mxu0 0.0
    %929 = vmatmul.mubr.f32.gmra.mrb[0].mxu0 %v725
    %v930 = vpop.f32.mrb[0].mxu0
    %v931 = vadd.f32 %v701, %v930
    %v932 = vpop.f32.mrb[0].mxu0
    %v933 = vadd.f32 %v705, %v932
    %934 = vmatprep.mubr.f32.mxu0 0.0
    %935 = vmatmul.mubr.f32.gmra.mrb[0].mxu0 %v728
    %v936 = vpop.f32.mrb[0].mxu0
    %v937 = vadd.f32 %v701, %v936
    %v938 = vpop.f32.mrb[0].mxu0
    %v939 = vadd.f32 %v705, %v938
    %940 = vmatprep.mubr.f32.mxu0 0.0
    %941 = vmatmul.mubr.f32.gmra.mrb[0].mxu0 %v731
    %v942 = vpop.f32.mrb[0].mxu0
    %v943 = vadd.f32 %v701, %v942
    %v944 = vpop.f32.mrb[0].mxu0
    %v945 = vadd.f32 %v705, %v944
    %946 = vmatprep.mubr.f32.mxu0 0.0
    %947 = vmatmul.mubr.f32.gmra.mrb[0].mxu0 %v734
    %v948 = vpop.f32.mrb[0].mxu0
    %v949 = vadd.f32 %v701, %v948
    %v950 = vpop.f32.mrb[0].mxu0
    %v951 = vadd.f32 %v705, %v950
    %952 = vmatprep.mubr.f32.mxu0 0.0
    %953 = vmatmul.mubr.f32.gmra.mrb[0].mxu0 %v737
    %v954 = vpop.f32.mrb[0].mxu0
    %v955 = vadd.f32 %v701, %v954
    %v956 = vpop.f32.mrb[0].mxu0
    %v957 = vadd.f32 %v705, %v956
    %958 = vmatprep.mubr.f32.mxu0 0.0
    %959 = vmatmul.mubr.f32.gmra.mrb[0].mxu0 %v740
    %v960 = vpop.f32.mrb[0].mxu0
    %v961 = vadd.f32 %v701, %v960
    %v962 = vpop.f32.mrb[0].mxu0
    %v963 = vadd.f32 %v705, %v962
    %964 = vmatprep.mubr.f32.mxu0 0.0
    %965 = vmatmul.mubr.f32.gmra.mrb[0].mxu0 %v743
    %v966 = vpop.f32.mrb[0].mxu0
    %v967 = vadd.f32 %v701, %v966
    %v968 = vpop.f32.mrb[0].mxu0
    %v969 = vadd.f32 %v705, %v968
    %970 = vdwg.mxu0
    %971 = vmatprep.subr.mxu0 %v94
    %972 = vmatpush1.msra.mxu0 %v93
    %973 = vmatprep.subr.mxu0 %v100
    %974 = vmatpush1.msra.mxu0 %v99
    %975 = vmatprep.subr.mxu0 0.0
    %976 = vmatpush1.msra.mxu0 0.0
    %977 = vmatprep.subr.mxu0 0.0
    %978 = vmatpush1.msra.mxu0 0.0
    %979 = vmatprep.subr.mxu0 0.0
    %980 = vmatpush1.msra.mxu0 0.0
    %981 = vmatprep.subr.mxu0 0.0
    %982 = vmatpush1.msra.mxu0 0.0
    %983 = vmatprep.subr.mxu0 0.0
    %984 = vmatpush1.msra.mxu0 0.0
    %985 = vmatprep.subr.mxu0 0.0
    %986 = vmatpush1.msra.mxu0 0.0
    %987 = vmatprep.subr.mxu0 0.0
    %988 = vmatpush1.msra.mxu0 0.0
    %989 = vmatprep.subr.mxu0 0.0
    %990 = vmatpush1.msra.mxu0 0.0
    %991 = vmatprep.subr.mxu0 0.0
    %992 = vmatpush1.msra.mxu0 0.0
    %993 = vmatprep.subr.mxu0 0.0
    %994 = vmatpush1.msra.mxu0 0.0
    %995 = vmatprep.subr.mxu0 0.0
    %996 = vmatpush1.msra.mxu0 0.0
    %997 = vmatprep.subr.mxu0 0.0
    %998 = vmatpush1.msra.mxu0 0.0
    %999 = vmatprep.subr.mxu0 0.0
    %1000 = vmatpush1.msra.mxu0 0.0
    %1001 = vmatprep.subr.mxu0 0.0
    %1002 = vmatpush1.msra.mxu0 0.0
    %1003 = vmatprep.subr.mxu0 0.0
    %1004 = vmatpush1.msra.mxu0 0.0
    %1005 = vmatprep.subr.mxu0 0.0
    %1006 = vmatpush1.msra.mxu0 0.0
    %1007 = vmatprep.subr.mxu0 0.0
    %1008 = vmatpush1.msra.mxu0 0.0
    %1009 = vmatprep.subr.mxu0 0.0
    %1010 = vmatpush1.msra.mxu0 0.0
    %1011 = vmatprep.subr.mxu0 0.0
    %1012 = vmatpush1.msra.mxu0 0.0
    %1013 = vmatprep.subr.mxu0 0.0
    %1014 = vmatpush1.msra.mxu0 0.0
    %1015 = vmatprep.subr.mxu0 0.0
    %1016 = vmatpush1.msra.mxu0 0.0
    %1017 = vmatprep.subr.mxu0 0.0
    %1018 = vmatpush1.msra.mxu0 0.0
    %1019 = vmatprep.subr.mxu0 0.0
    %1020 = vmatpush1.msra.mxu0 0.0
    %1021 = vmatprep.subr.mxu0 0.0
    %1022 = vmatpush1.msra.mxu0 0.0
    %1023 = vmatprep.subr.mxu0 0.0
    %1024 = vmatpush1.msra.mxu0 0.0
    %1025 = vmatprep.subr.mxu0 0.0
    %1026 = vmatpush1.msra.mxu0 0.0
    %1027 = vmatprep.subr.mxu0 0.0
    %1028 = vmatpush1.msra.mxu0 0.0
    %1029 = vmatprep.subr.mxu0 0.0
    %1030 = vmatpush1.msra.mxu0 0.0
    %1031 = vmatprep.subr.mxu0 0.0
    %1032 = vmatpush1.msra.mxu0 0.0
    %1033 = vmatprep.subr.mxu0 0.0
    %1034 = vmatpush1.msra.mxu0 0.0
    %1035 = vmatprep.mubr.f32.mxu0 0.0
    %1036 = vmatmul.mubr.f32.gmra.mrb[0].mxu0 %v722
    %v1037 = vpop.f32.mrb[0].mxu0
    %v1038 = vadd.f32 %v709, %v1037
    %v1039 = vpop.f32.mrb[0].mxu0
    %v1040 = vadd.f32 %v713, %v1039
    %1041 = vmatprep.mubr.f32.mxu0 0.0
    %1042 = vmatmul.mubr.f32.gmra.mrb[0].mxu0 %v725
    %v1043 = vpop.f32.mrb[0].mxu0
    %v1044 = vadd.f32 %v709, %v1043
    %v1045 = vpop.f32.mrb[0].mxu0
    %v1046 = vadd.f32 %v713, %v1045
    %1047 = vmatprep.mubr.f32.mxu0 0.0
    %1048 = vmatmul.mubr.f32.gmra.mrb[0].mxu0 %v728
    %v1049 = vpop.f32.mrb[0].mxu0
    %v1050 = vadd.f32 %v709, %v1049
    %v1051 = vpop.f32.mrb[0].mxu0
    %v1052 = vadd.f32 %v713, %v1051
    %1053 = vmatprep.mubr.f32.mxu0 0.0
    %1054 = vmatmul.mubr.f32.gmra.mrb[0].mxu0 %v731
    %v1055 = vpop.f32.mrb[0].mxu0
    %v1056 = vadd.f32 %v709, %v1055
    %v1057 = vpop.f32.mrb[0].mxu0
    %v1058 = vadd.f32 %v713, %v1057
    %1059 = vmatprep.mubr.f32.mxu0 0.0
    %1060 = vmatmul.mubr.f32.gmra.mrb[0].mxu0 %v734
    %v1061 = vpop.f32.mrb[0].mxu0
    %v1062 = vadd.f32 %v709, %v1061
    %v1063 = vpop.f32.mrb[0].mxu0
    %v1064 = vadd.f32 %v713, %v1063
    %1065 = vmatprep.mubr.f32.mxu0 0.0
    %1066 = vmatmul.mubr.f32.gmra.mrb[0].mxu0 %v737
    %v1067 = vpop.f32.mrb[0].mxu0
    %v1068 = vadd.f32 %v709, %v1067
    %v1069 = vpop.f32.mrb[0].mxu0
    %v1070 = vadd.f32 %v713, %v1069
    %1071 = vmatprep.mubr.f32.mxu0 0.0
    %1072 = vmatmul.mubr.f32.gmra.mrb[0].mxu0 %v740
    %v1073 = vpop.f32.mrb[0].mxu0
    %v1074 = vadd.f32 %v709, %v1073
    %v1075 = vpop.f32.mrb[0].mxu0
    %v1076 = vadd.f32 %v713, %v1075
    %1077 = vmatprep.mubr.f32.mxu0 0.0
    %1078 = vmatmul.mubr.f32.gmra.mrb[0].mxu0 %v743
    %v1079 = vpop.f32.mrb[0].mxu0
    %v1080 = vadd.f32 %v709, %v1079
    %v1081 = vpop.f32.mrb[0].mxu0
    %v1082 = vadd.f32 %v713, %v1081
    %1083 = vdwg.mxu0
    %1084 = vst [vmem:[#allocation2] sm:$0xff] %v812
    %1085 = vst [vmem:[#allocation2 + $0x8] sm:$0xff] %v814
    %1086 = vst [vmem:[#allocation2 + $0x10] sm:$0xff] %v925
    %1087 = vst [vmem:[#allocation2 + $0x18] sm:$0xff] %v927
    %1088 = vst [vmem:[#allocation2 + $0x20] sm:$0xff] %v1038
    %1089 = vst [vmem:[#allocation2 + $0x28] sm:$0xff] %v1040
    %1090 = vst [vmem:[#allocation2 + $0x30] sm:$0xff] %v818
    %1091 = vst [vmem:[#allocation2 + $0x38] sm:$0xff] %v820
    %1092 = vst [vmem:[#allocation2 + $0x40] sm:$0xff] %v931
    %1093 = vst [vmem:[#allocation2 + $0x48] sm:$0xff] %v933
    %1094 = vst [vmem:[#allocation2 + $0x50] sm:$0xff] %v1044
    %1095 = vst [vmem:[#allocation2 + $0x58] sm:$0xff] %v1046
    %1096 = vst [vmem:[#allocation2 + $0x60] sm:$0xff] %v824
    %1097 = vst [vmem:[#allocation2 + $0x68] sm:$0xff] %v826
    %1098 = vst [vmem:[#allocation2 + $0x70] sm:$0xff] %v937
    %1099 = vst [vmem:[#allocation2 + $0x78] sm:$0xff] %v939
    %1100 = vst [vmem:[#allocation2 + $0x80] sm:$0xff] %v1050
    %1101 = vst [vmem:[#allocation2 + $0x88] sm:$0xff] %v1052
    %1102 = vst [vmem:[#allocation2 + $0x90] sm:$0xff] %v830
    %1103 = vst [vmem:[#allocation2 + $0x98] sm:$0xff] %v832
    %1104 = vst [vmem:[#allocation2 + $0xa0] sm:$0xff] %v943
    %1105 = vst [vmem:[#allocation2 + $0xa8] sm:$0xff] %v945
    %1106 = vst [vmem:[#allocation2 + $0xb0] sm:$0xff] %v1056
    %1107 = vst [vmem:[#allocation2 + $0xb8] sm:$0xff] %v1058
    %1108 = vst [vmem:[#allocation2 + $0xc0] sm:$0xff] %v836
    %1109 = vst [vmem:[#allocation2 + $0xc8] sm:$0xff] %v838
    %1110 = vst [vmem:[#allocation2 + $0xd0] sm:$0xff] %v949
    %1111 = vst [vmem:[#allocation2 + $0xd8] sm:$0xff] %v951
    %1112 = vst [vmem:[#allocation2 + $0xe0] sm:$0xff] %v1062
    %1113 = vst [vmem:[#allocation2 + $0xe8] sm:$0xff] %v1064
    %1114 = vst [vmem:[#allocation2 + $0xf0] sm:$0xff] %v842
    %1115 = vst [vmem:[#allocation2 + $0xf8] sm:$0xff] %v844
    %1116 = vst [vmem:[#allocation2 + $0x100] sm:$0xff] %v955
    %1117 = vst [vmem:[#allocation2 + $0x108] sm:$0xff] %v957
    %1118 = vst [vmem:[#allocation2 + $0x110] sm:$0xff] %v1068
    %1119 = vst [vmem:[#allocation2 + $0x118] sm:$0xff] %v1070
    %1120 = vst [vmem:[#allocation2 + $0x120] sm:$0xff] %v848
    %1121 = vst [vmem:[#allocation2 + $0x128] sm:$0xff] %v850
    %1122 = vst [vmem:[#allocation2 + $0x130] sm:$0xff] %v961
    %1123 = vst [vmem:[#allocation2 + $0x138] sm:$0xff] %v963
    %1124 = vst [vmem:[#allocation2 + $0x140] sm:$0xff] %v1074
    %1125 = vst [vmem:[#allocation2 + $0x148] sm:$0xff] %v1076
    %1126 = vst [vmem:[#allocation2 + $0x150] sm:$0xff] %v854
    %1127 = vst [vmem:[#allocation2 + $0x158] sm:$0xff] %v856
    %1128 = vst [vmem:[#allocation2 + $0x160] sm:$0xff] %v967
    %1129 = vst [vmem:[#allocation2 + $0x168] sm:$0xff] %v969
    %1130 = vst [vmem:[#allocation2 + $0x170] sm:$0xff] %v1080
    %1131 = vst [vmem:[#allocation2 + $0x178] sm:$0xff] %v1082
    %v1132 = vld [vmem:[%s1] sm:$0xff]
    %v1133 = vld [vmem:[#allocation2] sm:$0xff]
    %v1134 = vld [vmem:[#allocation2 + $0x8] sm:$0xff]
    %v1135 = vld [vmem:[#allocation2 + $0x10] sm:$0xff]
    %v1136 = vld [vmem:[#allocation2 + $0x18] sm:$0xff]
    %v1137 = vld [vmem:[#allocation2 + $0x20] sm:$0xff]
    %v1138 = vld [vmem:[#allocation2 + $0x28] sm:$0xff]
    %1139 = vmatprep.subr.mxu0 %v103
    %1140 = vmatpush1.msra.mxu0 %v102
    %1141 = vmatprep.subr.mxu0 %v109
    %1142 = vmatpush1.msra.mxu0 %v108
    %1143 = vmatprep.subr.mxu0 %v115
    %1144 = vmatpush1.msra.mxu0 %v114
    %1145 = vmatprep.subr.mxu0 %v121
    %1146 = vmatpush1.msra.mxu0 %v120
    %1147 = vmatprep.subr.mxu0 %v127
    %1148 = vmatpush1.msra.mxu0 %v126
    %1149 = vmatprep.subr.mxu0 %v133
    %1150 = vmatpush1.msra.mxu0 %v132
    %1151 = vmatprep.subr.mxu0 %v139
    %1152 = vmatpush1.msra.mxu0 %v138
    %1153 = vmatprep.subr.mxu0 %v145
    %1154 = vmatpush1.msra.mxu0 %v144
    %1155 = vmatprep.subr.mxu0 %v151
    %1156 = vmatpush1.msra.mxu0 %v150
    %1157 = vmatprep.subr.mxu0 %v157
    %1158 = vmatpush1.msra.mxu0 %v156
    %1159 = vmatprep.subr.mxu0 %v163
    %1160 = vmatpush1.msra.mxu0 %v162
    %1161 = vmatprep.subr.mxu0 %v169
    %1162 = vmatpush1.msra.mxu0 %v168
    %1163 = vmatprep.subr.mxu0 %v175
    %1164 = vmatpush1.msra.mxu0 %v174
    %1165 = vmatprep.subr.mxu0 %v181
    %1166 = vmatpush1.msra.mxu0 %v180
    %1167 = vmatprep.subr.mxu0 %v187
    %1168 = vmatpush1.msra.mxu0 %v186
    %1169 = vmatprep.subr.mxu0 %v193
    %1170 = vmatpush1.msra.mxu0 %v192
    %1171 = vmatprep.subr.mxu0 %v199
    %1172 = vmatpush1.msra.mxu0 %v198
    %1173 = vmatprep.subr.mxu0 %v205
    %1174 = vmatpush1.msra.mxu0 %v204
    %1175 = vmatprep.subr.mxu0 %v211
    %1176 = vmatpush1.msra.mxu0 %v210
    %1177 = vmatprep.subr.mxu0 %v217
    %1178 = vmatpush1.msra.mxu0 %v216
    %1179 = vmatprep.subr.mxu0 %v223
    %1180 = vmatpush1.msra.mxu0 %v222
    %1181 = vmatprep.subr.mxu0 %v229
    %1182 = vmatpush1.msra.mxu0 %v228
    %1183 = vmatprep.subr.mxu0 %v235
    %1184 = vmatpush1.msra.mxu0 %v234
    %1185 = vmatprep.subr.mxu0 %v241
    %1186 = vmatpush1.msra.mxu0 %v240
    %1187 = vmatprep.subr.mxu0 %v247
    %1188 = vmatpush1.msra.mxu0 %v246
    %1189 = vmatprep.subr.mxu0 %v253
    %1190 = vmatpush1.msra.mxu0 %v252
    %1191 = vmatprep.subr.mxu0 %v259
    %1192 = vmatpush1.msra.mxu0 %v258
    %1193 = vmatprep.subr.mxu0 %v265
    %1194 = vmatpush1.msra.mxu0 %v264
    %1195 = vmatprep.subr.mxu0 %v271
    %1196 = vmatpush1.msra.mxu0 %v270
    %1197 = vmatprep.subr.mxu0 %v277
    %1198 = vmatpush1.msra.mxu0 %v276
    %1199 = vmatprep.subr.mxu0 %v283
    %1200 = vmatpush1.msra.mxu0 %v282
    %1201 = vmatprep.subr.mxu0 %v289
    %1202 = vmatpush1.msra.mxu0 %v288
    %1203 = vmatprep.mubr.f32.mxu0 0.0
    %1204 = vmatmul.mubr.f32.gmra.mrb[0].mxu0 0.0
    %v1205 = vpop.f32.mrb[0].mxu0
    %v1206 = vadd.f32 0.0, %v1205
    %v1207 = vpop.f32.mrb[0].mxu0
    %v1208 = vadd.f32 0.0, %v1207
    %1209 = vdwg.mxu0
    %1210 = vmatprep.subr.mxu0 %v105
    %1211 = vmatpush1.msra.mxu0 %v104
    %1212 = vmatprep.subr.mxu0 %v111
    %1213 = vmatpush1.msra.mxu0 %v110
    %1214 = vmatprep.subr.mxu0 %v117
    %1215 = vmatpush1.msra.mxu0 %v116
    %1216 = vmatprep.subr.mxu0 %v123
    %1217 = vmatpush1.msra.mxu0 %v122
    %1218 = vmatprep.subr.mxu0 %v129
    %1219 = vmatpush1.msra.mxu0 %v128
    %1220 = vmatprep.subr.mxu0 %v135
    %1221 = vmatpush1.msra.mxu0 %v134
    %1222 = vmatprep.subr.mxu0 %v141
    %1223 = vmatpush1.msra.mxu0 %v140
    %1224 = vmatprep.subr.mxu0 %v147
    %1225 = vmatpush1.msra.mxu0 %v146
    %1226 = vmatprep.subr.mxu0 %v153
    %1227 = vmatpush1.msra.mxu0 %v152
    %1228 = vmatprep.subr.mxu0 %v159
    %1229 = vmatpush1.msra.mxu0 %v158
    %1230 = vmatprep.subr.mxu0 %v165
    %1231 = vmatpush1.msra.mxu0 %v164
    %1232 = vmatprep.subr.mxu0 %v171
    %1233 = vmatpush1.msra.mxu0 %v170
    %1234 = vmatprep.subr.mxu0 %v177
    %1235 = vmatpush1.msra.mxu0 %v176
    %1236 = vmatprep.subr.mxu0 %v183
    %1237 = vmatpush1.msra.mxu0 %v182
    %1238 = vmatprep.subr.mxu0 %v189
    %1239 = vmatpush1.msra.mxu0 %v188
    %1240 = vmatprep.subr.mxu0 %v195
    %1241 = vmatpush1.msra.mxu0 %v194
    %1242 = vmatprep.subr.mxu0 %v201
    %1243 = vmatpush1.msra.mxu0 %v200
    %1244 = vmatprep.subr.mxu0 %v207
    %1245 = vmatpush1.msra.mxu0 %v206
    %1246 = vmatprep.subr.mxu0 %v213
    %1247 = vmatpush1.msra.mxu0 %v212
    %1248 = vmatprep.subr.mxu0 %v219
    %1249 = vmatpush1.msra.mxu0 %v218
    %1250 = vmatprep.subr.mxu0 %v225
    %1251 = vmatpush1.msra.mxu0 %v224
    %1252 = vmatprep.subr.mxu0 %v231
    %1253 = vmatpush1.msra.mxu0 %v230
    %1254 = vmatprep.subr.mxu0 %v237
    %1255 = vmatpush1.msra.mxu0 %v236
    %1256 = vmatprep.subr.mxu0 %v243
    %1257 = vmatpush1.msra.mxu0 %v242
    %1258 = vmatprep.subr.mxu0 %v249
    %1259 = vmatpush1.msra.mxu0 %v248
    %1260 = vmatprep.subr.mxu0 %v255
    %1261 = vmatpush1.msra.mxu0 %v254
    %1262 = vmatprep.subr.mxu0 %v261
    %1263 = vmatpush1.msra.mxu0 %v260
    %1264 = vmatprep.subr.mxu0 %v267
    %1265 = vmatpush1.msra.mxu0 %v266
    %1266 = vmatprep.subr.mxu0 %v273
    %1267 = vmatpush1.msra.mxu0 %v272
    %1268 = vmatprep.subr.mxu0 %v279
    %1269 = vmatpush1.msra.mxu0 %v278
    %1270 = vmatprep.subr.mxu0 %v285
    %1271 = vmatpush1.msra.mxu0 %v284
    %1272 = vmatprep.subr.mxu0 %v291
    %1273 = vmatpush1.msra.mxu0 %v290
    %1274 = vmatprep.mubr.f32.mxu0 0.0
    %1275 = vmatmul.mubr.f32.gmra.mrb[0].mxu0 0.0
    %v1276 = vpop.f32.mrb[0].mxu0
    %v1277 = vadd.f32 0.0, %v1276
    %v1278 = vpop.f32.mrb[0].mxu0
    %v1279 = vadd.f32 0.0, %v1278
    %1280 = vdwg.mxu0
    %1281 = vmatprep.subr.mxu0 %v107
    %1282 = vmatpush1.msra.mxu0 %v106
    %1283 = vmatprep.subr.mxu0 %v113
    %1284 = vmatpush1.msra.mxu0 %v112
    %1285 = vmatprep.subr.mxu0 %v119
    %1286 = vmatpush1.msra.mxu0 %v118
    %1287 = vmatprep.subr.mxu0 %v125
    %1288 = vmatpush1.msra.mxu0 %v124
    %1289 = vmatprep.subr.mxu0 %v131
    %1290 = vmatpush1.msra.mxu0 %v130
    %1291 = vmatprep.subr.mxu0 %v137
    %1292 = vmatpush1.msra.mxu0 %v136
    %1293 = vmatprep.subr.mxu0 %v143
    %1294 = vmatpush1.msra.mxu0 %v142
    %1295 = vmatprep.subr.mxu0 %v149
    %1296 = vmatpush1.msra.mxu0 %v148
    %1297 = vmatprep.subr.mxu0 %v155
    %1298 = vmatpush1.msra.mxu0 %v154
    %1299 = vmatprep.subr.mxu0 %v161
    %1300 = vmatpush1.msra.mxu0 %v160
    %1301 = vmatprep.subr.mxu0 %v167
    %1302 = vmatpush1.msra.mxu0 %v166
    %1303 = vmatprep.subr.mxu0 %v173
    %1304 = vmatpush1.msra.mxu0 %v172
    %1305 = vmatprep.subr.mxu0 %v179
    %1306 = vmatpush1.msra.mxu0 %v178
    %1307 = vmatprep.subr.mxu0 %v185
    %1308 = vmatpush1.msra.mxu0 %v184
    %1309 = vmatprep.subr.mxu0 %v191
    %1310 = vmatpush1.msra.mxu0 %v190
    %1311 = vmatprep.subr.mxu0 %v197
    %1312 = vmatpush1.msra.mxu0 %v196
    %1313 = vmatprep.subr.mxu0 %v203
    %1314 = vmatpush1.msra.mxu0 %v202
    %1315 = vmatprep.subr.mxu0 %v209
    %1316 = vmatpush1.msra.mxu0 %v208
    %1317 = vmatprep.subr.mxu0 %v215
    %1318 = vmatpush1.msra.mxu0 %v214
    %1319 = vmatprep.subr.mxu0 %v221
    %1320 = vmatpush1.msra.mxu0 %v220
    %1321 = vmatprep.subr.mxu0 %v227
    %1322 = vmatpush1.msra.mxu0 %v226
    %1323 = vmatprep.subr.mxu0 %v233
    %1324 = vmatpush1.msra.mxu0 %v232
    %1325 = vmatprep.subr.mxu0 %v239
    %1326 = vmatpush1.msra.mxu0 %v238
    %1327 = vmatprep.subr.mxu0 %v245
    %1328 = vmatpush1.msra.mxu0 %v244
    %1329 = vmatprep.subr.mxu0 %v251
    %1330 = vmatpush1.msra.mxu0 %v250
    %1331 = vmatprep.subr.mxu0 %v257
    %1332 = vmatpush1.msra.mxu0 %v256
    %1333 = vmatprep.subr.mxu0 %v263
    %1334 = vmatpush1.msra.mxu0 %v262
    %1335 = vmatprep.subr.mxu0 %v269
    %1336 = vmatpush1.msra.mxu0 %v268
    %1337 = vmatprep.subr.mxu0 %v275
    %1338 = vmatpush1.msra.mxu0 %v274
    %1339 = vmatprep.subr.mxu0 %v281
    %1340 = vmatpush1.msra.mxu0 %v280
    %1341 = vmatprep.subr.mxu0 %v287
    %1342 = vmatpush1.msra.mxu0 %v286
    %1343 = vmatprep.subr.mxu0 %v293
    %1344 = vmatpush1.msra.mxu0 %v292
    %1345 = vmatprep.mubr.f32.mxu0 0.0
    %1346 = vmatmul.mubr.f32.gmra.mrb[0].mxu0 0.0
    %v1347 = vpop.f32.mrb[0].mxu0
    %v1348 = vadd.f32 0.0, %v1347
    %v1349 = vpop.f32.mrb[0].mxu0
    %v1350 = vadd.f32 0.0, %v1349
    %1351 = vdwg.mxu0
    %v1352 = vadd.f32 %v1133, %v1206
    %v1353 = vadd.f32 %v1134, %v1208
    %v1354 = vxor.u32 %v1352, 2147483648
    %v1355 = vxor.u32 %v1353, 2147483648
    %v1356 = vmul.f32 %v1354, 1.442695
    %v1357 = vpow.pop %v1356
    %v1358 = vmul.f32 %v1355, 1.442695
    %v1359 = vpow.pop %v1358
    %v1360 = vadd.f32 %v1357, 1.0
    %v1361 = vadd.f32 %v1359, 1.0
    %v1362 = vrcp.pop %v1360
    %v1363 = vmul.f32 1.0, %v1362
    %v1364 = vrcp.pop %v1361
    %v1365 = vmul.f32 1.0, %v1364
    %v1366 = vadd.f32 %v1135, %v1277
    %v1367 = vadd.f32 %v1136, %v1279
    %v1368 = vxor.u32 %v1366, 2147483648
    %v1369 = vxor.u32 %v1367, 2147483648
    %v1370 = vmul.f32 %v1368, 1.442695
    %v1371 = vpow.pop %v1370
    %v1372 = vmul.f32 %v1369, 1.442695
    %v1373 = vpow.pop %v1372
    %v1374 = vadd.f32 %v1371, 1.0
    %v1375 = vadd.f32 %v1373, 1.0
    %v1376 = vrcp.pop %v1374
    %v1377 = vmul.f32 1.0, %v1376
    %v1378 = vrcp.pop %v1375
    %v1379 = vmul.f32 1.0, %v1378
    %v1381 = vlaneseq
    %v1382 = vshrl.u32 %v1381, 7
    %v1383 = vsub.s32 0, %v1382
    %v1384 = vrot.slane %v486, %v1383
    %v1385 = vlaneseq
    %v1386 = vshrl.u32 %v1385, 7
    %v1387 = vsub.s32 1, %v1386
    %v1388 = vrot.slane %v486, %v1387
    %v1391 = vadd.f32 %v1348, %v1384
    %v1392 = vadd.f32 %v1350, %v1388
    %v1393 = vmul.f32 %v1363, %v1391
    %v1394 = vmul.f32 %v1365, %v1392
    %v1395 = vadd.f32 %v1137, %v1393
    %v1396 = vadd.f32 %v1138, %v1394
    %v1397 = vtanh.pop %v1395
    %v1398 = vtanh.pop %v1396
    %v1399 = vsub.f32 1.0, %v1377
    %v1400 = vsub.f32 1.0, %v1379
    %v1401 = vmul.f32 %v1399, %v1397
    %v1402 = vmul.f32 %v1400, %v1398
    %v1403 = vmul.f32 %v1377, 0.0
    %v1404 = vmul.f32 %v1379, 0.0
    %v1405 = vadd.f32 %v1401, %v1403
    %v1406 = vadd.f32 %v1402, %v1404
    %v1408 = vlaneseq
    %v1409 = vshrl.u32 %v1408, 7
    %v1410 = vsub.s32 0, %v1409
    %v1411 = vrot.slane %v680, %v1410
    %v1412 = vlaneseq
    %v1413 = vshrl.u32 %v1412, 7
    %v1414 = vsub.s32 1, %v1413
    %v1415 = vrot.slane %v680, %v1414
    %v1416 = vlaneseq
    %v1417 = vshrl.u32 %v1416, 7
    %v1418 = vsub.s32 2, %v1417
    %v1419 = vrot.slane %v680, %v1418
    %v1420 = vlaneseq
    %v1421 = vshrl.u32 %v1420, 7
    %v1422 = vsub.s32 3, %v1421
    %v1423 = vrot.slane %v680, %v1422
    %v1424 = vlaneseq
    %v1425 = vshrl.u32 %v1424, 7
    %v1426 = vsub.s32 4, %v1425
    %v1427 = vrot.slane %v680, %v1426
    %v1428 = vlaneseq
    %v1429 = vshrl.u32 %v1428, 7
    %v1430 = vsub.s32 5, %v1429
    %v1431 = vrot.slane %v680, %v1430
    %1438 = vmatprep.subr.mxu0 %v489
    %1439 = vmatpush1.msra.mxu0 %v488
    %1440 = vmatprep.subr.mxu0 %v495
    %1441 = vmatpush1.msra.mxu0 %v494
    %1442 = vmatprep.subr.mxu0 %v501
    %1443 = vmatpush1.msra.mxu0 %v500
    %1444 = vmatprep.subr.mxu0 %v507
    %1445 = vmatpush1.msra.mxu0 %v506
    %1446 = vmatprep.subr.mxu0 %v513
    %1447 = vmatpush1.msra.mxu0 %v512
    %1448 = vmatprep.subr.mxu0 %v519
    %1449 = vmatpush1.msra.mxu0 %v518
    %1450 = vmatprep.subr.mxu0 %v525
    %1451 = vmatpush1.msra.mxu0 %v524
    %1452 = vmatprep.subr.mxu0 %v531
    %1453 = vmatpush1.msra.mxu0 %v530
    %1454 = vmatprep.subr.mxu0 %v537
    %1455 = vmatpush1.msra.mxu0 %v536
    %1456 = vmatprep.subr.mxu0 %v543
    %1457 = vmatpush1.msra.mxu0 %v542
    %1458 = vmatprep.subr.mxu0 %v549
    %1459 = vmatpush1.msra.mxu0 %v548
    %1460 = vmatprep.subr.mxu0 %v555
    %1461 = vmatpush1.msra.mxu0 %v554
    %1462 = vmatprep.subr.mxu0 %v561
    %1463 = vmatpush1.msra.mxu0 %v560
    %1464 = vmatprep.subr.mxu0 %v567
    %1465 = vmatpush1.msra.mxu0 %v566
    %1466 = vmatprep.subr.mxu0 %v573
    %1467 = vmatpush1.msra.mxu0 %v572
    %1468 = vmatprep.subr.mxu0 %v579
    %1469 = vmatpush1.msra.mxu0 %v578
    %1470 = vmatprep.subr.mxu0 %v585
    %1471 = vmatpush1.msra.mxu0 %v584
    %1472 = vmatprep.subr.mxu0 %v591
    %1473 = vmatpush1.msra.mxu0 %v590
    %1474 = vmatprep.subr.mxu0 %v597
    %1475 = vmatpush1.msra.mxu0 %v596
    %1476 = vmatprep.subr.mxu0 %v603
    %1477 = vmatpush1.msra.mxu0 %v602
    %1478 = vmatprep.subr.mxu0 %v609
    %1479 = vmatpush1.msra.mxu0 %v608
    %1480 = vmatprep.subr.mxu0 %v615
    %1481 = vmatpush1.msra.mxu0 %v614
    %1482 = vmatprep.subr.mxu0 %v621
    %1483 = vmatpush1.msra.mxu0 %v620
    %1484 = vmatprep.subr.mxu0 %v627
    %1485 = vmatpush1.msra.mxu0 %v626
    %1486 = vmatprep.subr.mxu0 %v633
    %1487 = vmatpush1.msra.mxu0 %v632
    %1488 = vmatprep.subr.mxu0 %v639
    %1489 = vmatpush1.msra.mxu0 %v638
    %1490 = vmatprep.subr.mxu0 %v645
    %1491 = vmatpush1.msra.mxu0 %v644
    %1492 = vmatprep.subr.mxu0 %v651
    %1493 = vmatpush1.msra.mxu0 %v650
    %1494 = vmatprep.subr.mxu0 %v657
    %1495 = vmatpush1.msra.mxu0 %v656
    %1496 = vmatprep.subr.mxu0 %v663
    %1497 = vmatpush1.msra.mxu0 %v662
    %1498 = vmatprep.subr.mxu0 %v669
    %1499 = vmatpush1.msra.mxu0 %v668
    %1500 = vmatprep.subr.mxu0 %v675
    %1501 = vmatpush1.msra.mxu0 %v674
    %1502 = vmatprep.mubr.f32.mxu0 %v1406
    %1503 = vmatmul.mubr.f32.gmra.mrb[0].mxu0 %v1405
    %v1504 = vpop.f32.mrb[0].mxu0
    %v1505 = vadd.f32 %v1411, %v1504
    %v1506 = vpop.f32.mrb[0].mxu0
    %v1507 = vadd.f32 %v1415, %v1506
    %1508 = vdwg.mxu0
    %1509 = vmatprep.subr.mxu0 %v491
    %1510 = vmatpush1.msra.mxu0 %v490
    %1511 = vmatprep.subr.mxu0 %v497
    %1512 = vmatpush1.msra.mxu0 %v496
    %1513 = vmatprep.subr.mxu0 %v503
    %1514 = vmatpush1.msra.mxu0 %v502
    %1515 = vmatprep.subr.mxu0 %v509
    %1516 = vmatpush1.msra.mxu0 %v508
    %1517 = vmatprep.subr.mxu0 %v515
    %1518 = vmatpush1.msra.mxu0 %v514
    %1519 = vmatprep.subr.mxu0 %v521
    %1520 = vmatpush1.msra.mxu0 %v520
    %1521 = vmatprep.subr.mxu0 %v527
    %1522 = vmatpush1.msra.mxu0 %v526
    %1523 = vmatprep.subr.mxu0 %v533
    %1524 = vmatpush1.msra.mxu0 %v532
    %1525 = vmatprep.subr.mxu0 %v539
    %1526 = vmatpush1.msra.mxu0 %v538
    %1527 = vmatprep.subr.mxu0 %v545
    %1528 = vmatpush1.msra.mxu0 %v544
    %1529 = vmatprep.subr.mxu0 %v551
    %1530 = vmatpush1.msra.mxu0 %v550
    %1531 = vmatprep.subr.mxu0 %v557
    %1532 = vmatpush1.msra.mxu0 %v556
    %1533 = vmatprep.subr.mxu0 %v563
    %1534 = vmatpush1.msra.mxu0 %v562
    %1535 = vmatprep.subr.mxu0 %v569
    %1536 = vmatpush1.msra.mxu0 %v568
    %1537 = vmatprep.subr.mxu0 %v575
    %1538 = vmatpush1.msra.mxu0 %v574
    %1539 = vmatprep.subr.mxu0 %v581
    %1540 = vmatpush1.msra.mxu0 %v580
    %1541 = vmatprep.subr.mxu0 %v587
    %1542 = vmatpush1.msra.mxu0 %v586
    %1543 = vmatprep.subr.mxu0 %v593
    %1544 = vmatpush1.msra.mxu0 %v592
    %1545 = vmatprep.subr.mxu0 %v599
    %1546 = vmatpush1.msra.mxu0 %v598
    %1547 = vmatprep.subr.mxu0 %v605
    %1548 = vmatpush1.msra.mxu0 %v604
    %1549 = vmatprep.subr.mxu0 %v611
    %1550 = vmatpush1.msra.mxu0 %v610
    %1551 = vmatprep.subr.mxu0 %v617
    %1552 = vmatpush1.msra.mxu0 %v616
    %1553 = vmatprep.subr.mxu0 %v623
    %1554 = vmatpush1.msra.mxu0 %v622
    %1555 = vmatprep.subr.mxu0 %v629
    %1556 = vmatpush1.msra.mxu0 %v628
    %1557 = vmatprep.subr.mxu0 %v635
    %1558 = vmatpush1.msra.mxu0 %v634
    %1559 = vmatprep.subr.mxu0 %v641
    %1560 = vmatpush1.msra.mxu0 %v640
    %1561 = vmatprep.subr.mxu0 %v647
    %1562 = vmatpush1.msra.mxu0 %v646
    %1563 = vmatprep.subr.mxu0 %v653
    %1564 = vmatpush1.msra.mxu0 %v652
    %1565 = vmatprep.subr.mxu0 %v659
    %1566 = vmatpush1.msra.mxu0 %v658
    %1567 = vmatprep.subr.mxu0 %v665
    %1568 = vmatpush1.msra.mxu0 %v664
    %1569 = vmatprep.subr.mxu0 %v671
    %1570 = vmatpush1.msra.mxu0 %v670
    %1571 = vmatprep.subr.mxu0 %v677
    %1572 = vmatpush1.msra.mxu0 %v676
    %1573 = vmatprep.mubr.f32.mxu0 %v1406
    %1574 = vmatmul.mubr.f32.gmra.mrb[0].mxu0 %v1405
    %v1575 = vpop.f32.mrb[0].mxu0
    %v1576 = vadd.f32 %v1419, %v1575
    %v1577 = vpop.f32.mrb[0].mxu0
    %v1578 = vadd.f32 %v1423, %v1577
    %1579 = vdwg.mxu0
    %1580 = vmatprep.subr.mxu0 %v493
    %1581 = vmatpush1.msra.mxu0 %v492
    %1582 = vmatprep.subr.mxu0 %v499
    %1583 = vmatpush1.msra.mxu0 %v498
    %1584 = vmatprep.subr.mxu0 %v505
    %1585 = vmatpush1.msra.mxu0 %v504
    %1586 = vmatprep.subr.mxu0 %v511
    %1587 = vmatpush1.msra.mxu0 %v510
    %1588 = vmatprep.subr.mxu0 %v517
    %1589 = vmatpush1.msra.mxu0 %v516
    %1590 = vmatprep.subr.mxu0 %v523
    %1591 = vmatpush1.msra.mxu0 %v522
    %1592 = vmatprep.subr.mxu0 %v529
    %1593 = vmatpush1.msra.mxu0 %v528
    %1594 = vmatprep.subr.mxu0 %v535
    %1595 = vmatpush1.msra.mxu0 %v534
    %1596 = vmatprep.subr.mxu0 %v541
    %1597 = vmatpush1.msra.mxu0 %v540
    %1598 = vmatprep.subr.mxu0 %v547
    %1599 = vmatpush1.msra.mxu0 %v546
    %1600 = vmatprep.subr.mxu0 %v553
    %1601 = vmatpush1.msra.mxu0 %v552
    %1602 = vmatprep.subr.mxu0 %v559
    %1603 = vmatpush1.msra.mxu0 %v558
    %1604 = vmatprep.subr.mxu0 %v565
    %1605 = vmatpush1.msra.mxu0 %v564
    %1606 = vmatprep.subr.mxu0 %v571
    %1607 = vmatpush1.msra.mxu0 %v570
    %1608 = vmatprep.subr.mxu0 %v577
    %1609 = vmatpush1.msra.mxu0 %v576
    %1610 = vmatprep.subr.mxu0 %v583
    %1611 = vmatpush1.msra.mxu0 %v582
    %1612 = vmatprep.subr.mxu0 %v589
    %1613 = vmatpush1.msra.mxu0 %v588
    %1614 = vmatprep.subr.mxu0 %v595
    %1615 = vmatpush1.msra.mxu0 %v594
    %1616 = vmatprep.subr.mxu0 %v601
    %1617 = vmatpush1.msra.mxu0 %v600
    %1618 = vmatprep.subr.mxu0 %v607
    %1619 = vmatpush1.msra.mxu0 %v606
    %1620 = vmatprep.subr.mxu0 %v613
    %1621 = vmatpush1.msra.mxu0 %v612
    %1622 = vmatprep.subr.mxu0 %v619
    %1623 = vmatpush1.msra.mxu0 %v618
    %1624 = vmatprep.subr.mxu0 %v625
    %1625 = vmatpush1.msra.mxu0 %v624
    %1626 = vmatprep.subr.mxu0 %v631
    %1627 = vmatpush1.msra.mxu0 %v630
    %1628 = vmatprep.subr.mxu0 %v637
    %1629 = vmatpush1.msra.mxu0 %v636
    %1630 = vmatprep.subr.mxu0 %v643
    %1631 = vmatpush1.msra.mxu0 %v642
    %1632 = vmatprep.subr.mxu0 %v649
    %1633 = vmatpush1.msra.mxu0 %v648
    %1634 = vmatprep.subr.mxu0 %v655
    %1635 = vmatpush1.msra.mxu0 %v654
    %1636 = vmatprep.subr.mxu0 %v661
    %1637 = vmatpush1.msra.mxu0 %v660
    %1638 = vmatprep.subr.mxu0 %v667
    %1639 = vmatpush1.msra.mxu0 %v666
    %1640 = vmatprep.subr.mxu0 %v673
    %1641 = vmatpush1.msra.mxu0 %v672
    %1642 = vmatprep.subr.mxu0 %v679
    %1643 = vmatpush1.msra.mxu0 %v678
    %1644 = vmatprep.mubr.f32.mxu0 %v1406
    %1645 = vmatmul.mubr.f32.gmra.mrb[0].mxu0 %v1405
    %v1646 = vpop.f32.mrb[0].mxu0
    %v1647 = vadd.f32 %v1427, %v1646
    %v1648 = vpop.f32.mrb[0].mxu0
    %v1649 = vadd.f32 %v1431, %v1648
    %1650 = vdwg.mxu0
    %1651 = vmatprep.subr.mxu0 %v295
    %1652 = vmatpush1.msra.mxu0 %v294
    %1653 = vmatprep.subr.mxu0 %v301
    %1654 = vmatpush1.msra.mxu0 %v300
    %1655 = vmatprep.subr.mxu0 %v307
    %1656 = vmatpush1.msra.mxu0 %v306
    %1657 = vmatprep.subr.mxu0 %v313
    %1658 = vmatpush1.msra.mxu0 %v312
    %1659 = vmatprep.subr.mxu0 %v319
    %1660 = vmatpush1.msra.mxu0 %v318
    %1661 = vmatprep.subr.mxu0 %v325
    %1662 = vmatpush1.msra.mxu0 %v324
    %1663 = vmatprep.subr.mxu0 %v331
    %1664 = vmatpush1.msra.mxu0 %v330
    %1665 = vmatprep.subr.mxu0 %v337
    %1666 = vmatpush1.msra.mxu0 %v336
    %1667 = vmatprep.subr.mxu0 %v343
    %1668 = vmatpush1.msra.mxu0 %v342
    %1669 = vmatprep.subr.mxu0 %v349
    %1670 = vmatpush1.msra.mxu0 %v348
    %1671 = vmatprep.subr.mxu0 %v355
    %1672 = vmatpush1.msra.mxu0 %v354
    %1673 = vmatprep.subr.mxu0 %v361
    %1674 = vmatpush1.msra.mxu0 %v360
    %1675 = vmatprep.subr.mxu0 %v367
    %1676 = vmatpush1.msra.mxu0 %v366
    %1677 = vmatprep.subr.mxu0 %v373
    %1678 = vmatpush1.msra.mxu0 %v372
    %1679 = vmatprep.subr.mxu0 %v379
    %1680 = vmatpush1.msra.mxu0 %v378
    %1681 = vmatprep.subr.mxu0 %v385
    %1682 = vmatpush1.msra.mxu0 %v384
    %1683 = vmatprep.subr.mxu0 %v391
    %1684 = vmatpush1.msra.mxu0 %v390
    %1685 = vmatprep.subr.mxu0 %v397
    %1686 = vmatpush1.msra.mxu0 %v396
    %1687 = vmatprep.subr.mxu0 %v403
    %1688 = vmatpush1.msra.mxu0 %v402
    %1689 = vmatprep.subr.mxu0 %v409
    %1690 = vmatpush1.msra.mxu0 %v408
    %1691 = vmatprep.subr.mxu0 %v415
    %1692 = vmatpush1.msra.mxu0 %v414
    %1693 = vmatprep.subr.mxu0 %v421
    %1694 = vmatpush1.msra.mxu0 %v420
    %1695 = vmatprep.subr.mxu0 %v427
    %1696 = vmatpush1.msra.mxu0 %v426
    %1697 = vmatprep.subr.mxu0 %v433
    %1698 = vmatpush1.msra.mxu0 %v432
    %1699 = vmatprep.subr.mxu0 %v439
    %1700 = vmatpush1.msra.mxu0 %v438
    %1701 = vmatprep.subr.mxu0 %v445
    %1702 = vmatpush1.msra.mxu0 %v444
    %1703 = vmatprep.subr.mxu0 %v451
    %1704 = vmatpush1.msra.mxu0 %v450
    %1705 = vmatprep.subr.mxu0 %v457
    %1706 = vmatpush1.msra.mxu0 %v456
    %1707 = vmatprep.subr.mxu0 %v463
    %1708 = vmatpush1.msra.mxu0 %v462
    %1709 = vmatprep.subr.mxu0 %v469
    %1710 = vmatpush1.msra.mxu0 %v468
    %1711 = vmatprep.subr.mxu0 %v475
    %1712 = vmatpush1.msra.mxu0 %v474
    %1713 = vmatprep.subr.mxu0 %v481
    %1714 = vmatpush1.msra.mxu0 %v480
    %1715 = vmatprep.mubr.f32.mxu0 0.0
    %1716 = vmatmul.mubr.f32.gmra.mrb[0].mxu0 0.0
    %v1717 = vpop.f32.mrb[0].mxu0
    %v1718 = vadd.f32 0.0, %v1717
    %v1719 = vpop.f32.mrb[0].mxu0
    %v1720 = vadd.f32 0.0, %v1719
    %1721 = vdwg.mxu0
    %1722 = vmatprep.subr.mxu0 %v297
    %1723 = vmatpush1.msra.mxu0 %v296
    %1724 = vmatprep.subr.mxu0 %v303
    %1725 = vmatpush1.msra.mxu0 %v302
    %1726 = vmatprep.subr.mxu0 %v309
    %1727 = vmatpush1.msra.mxu0 %v308
    %1728 = vmatprep.subr.mxu0 %v315
    %1729 = vmatpush1.msra.mxu0 %v314
    %1730 = vmatprep.subr.mxu0 %v321
    %1731 = vmatpush1.msra.mxu0 %v320
    %1732 = vmatprep.subr.mxu0 %v327
    %1733 = vmatpush1.msra.mxu0 %v326
    %1734 = vmatprep.subr.mxu0 %v333
    %1735 = vmatpush1.msra.mxu0 %v332
    %1736 = vmatprep.subr.mxu0 %v339
    %1737 = vmatpush1.msra.mxu0 %v338
    %1738 = vmatprep.subr.mxu0 %v345
    %1739 = vmatpush1.msra.mxu0 %v344
    %1740 = vmatprep.subr.mxu0 %v351
    %1741 = vmatpush1.msra.mxu0 %v350
    %1742 = vmatprep.subr.mxu0 %v357
    %1743 = vmatpush1.msra.mxu0 %v356
    %1744 = vmatprep.subr.mxu0 %v363
    %1745 = vmatpush1.msra.mxu0 %v362
    %1746 = vmatprep.subr.mxu0 %v369
    %1747 = vmatpush1.msra.mxu0 %v368
    %1748 = vmatprep.subr.mxu0 %v375
    %1749 = vmatpush1.msra.mxu0 %v374
    %1750 = vmatprep.subr.mxu0 %v381
    %1751 = vmatpush1.msra.mxu0 %v380
    %1752 = vmatprep.subr.mxu0 %v387
    %1753 = vmatpush1.msra.mxu0 %v386
    %1754 = vmatprep.subr.mxu0 %v393
    %1755 = vmatpush1.msra.mxu0 %v392
    %1756 = vmatprep.subr.mxu0 %v399
    %1757 = vmatpush1.msra.mxu0 %v398
    %1758 = vmatprep.subr.mxu0 %v405
    %1759 = vmatpush1.msra.mxu0 %v404
    %1760 = vmatprep.subr.mxu0 %v411
    %1761 = vmatpush1.msra.mxu0 %v410
    %1762 = vmatprep.subr.mxu0 %v417
    %1763 = vmatpush1.msra.mxu0 %v416
    %1764 = vmatprep.subr.mxu0 %v423
    %1765 = vmatpush1.msra.mxu0 %v422
    %1766 = vmatprep.subr.mxu0 %v429
    %1767 = vmatpush1.msra.mxu0 %v428
    %1768 = vmatprep.subr.mxu0 %v435
    %1769 = vmatpush1.msra.mxu0 %v434
    %1770 = vmatprep.subr.mxu0 %v441
    %1771 = vmatpush1.msra.mxu0 %v440
    %1772 = vmatprep.subr.mxu0 %v447
    %1773 = vmatpush1.msra.mxu0 %v446
    %1774 = vmatprep.subr.mxu0 %v453
    %1775 = vmatpush1.msra.mxu0 %v452
    %1776 = vmatprep.subr.mxu0 %v459
    %1777 = vmatpush1.msra.mxu0 %v458
    %1778 = vmatprep.subr.mxu0 %v465
    %1779 = vmatpush1.msra.mxu0 %v464
    %1780 = vmatprep.subr.mxu0 %v471
    %1781 = vmatpush1.msra.mxu0 %v470
    %1782 = vmatprep.subr.mxu0 %v477
    %1783 = vmatpush1.msra.mxu0 %v476
    %1784 = vmatprep.subr.mxu0 %v483
    %1785 = vmatpush1.msra.mxu0 %v482
    %1786 = vmatprep.mubr.f32.mxu0 0.0
    %1787 = vmatmul.mubr.f32.gmra.mrb[0].mxu0 0.0
    %v1788 = vpop.f32.mrb[0].mxu0
    %v1789 = vadd.f32 0.0, %v1788
    %v1790 = vpop.f32.mrb[0].mxu0
    %v1791 = vadd.f32 0.0, %v1790
    %1792 = vdwg.mxu0
    %1793 = vmatprep.subr.mxu0 %v299
    %1794 = vmatpush1.msra.mxu0 %v298
    %1795 = vmatprep.subr.mxu0 %v305
    %1796 = vmatpush1.msra.mxu0 %v304
    %1797 = vmatprep.subr.mxu0 %v311
    %1798 = vmatpush1.msra.mxu0 %v310
    %1799 = vmatprep.subr.mxu0 %v317
    %1800 = vmatpush1.msra.mxu0 %v316
    %1801 = vmatprep.subr.mxu0 %v323
    %1802 = vmatpush1.msra.mxu0 %v322
    %1803 = vmatprep.subr.mxu0 %v329
    %1804 = vmatpush1.msra.mxu0 %v328
    %1805 = vmatprep.subr.mxu0 %v335
    %1806 = vmatpush1.msra.mxu0 %v334
    %1807 = vmatprep.subr.mxu0 %v341
    %1808 = vmatpush1.msra.mxu0 %v340
    %1809 = vmatprep.subr.mxu0 %v347
    %1810 = vmatpush1.msra.mxu0 %v346
    %1811 = vmatprep.subr.mxu0 %v353
    %1812 = vmatpush1.msra.mxu0 %v352
    %1813 = vmatprep.subr.mxu0 %v359
    %1814 = vmatpush1.msra.mxu0 %v358
    %1815 = vmatprep.subr.mxu0 %v365
    %1816 = vmatpush1.msra.mxu0 %v364
    %1817 = vmatprep.subr.mxu0 %v371
    %1818 = vmatpush1.msra.mxu0 %v370
    %1819 = vmatprep.subr.mxu0 %v377
    %1820 = vmatpush1.msra.mxu0 %v376
    %1821 = vmatprep.subr.mxu0 %v383
    %1822 = vmatpush1.msra.mxu0 %v382
    %1823 = vmatprep.subr.mxu0 %v389
    %1824 = vmatpush1.msra.mxu0 %v388
    %1825 = vmatprep.subr.mxu0 %v395
    %1826 = vmatpush1.msra.mxu0 %v394
    %1827 = vmatprep.subr.mxu0 %v401
    %1828 = vmatpush1.msra.mxu0 %v400
    %1829 = vmatprep.subr.mxu0 %v407
    %1830 = vmatpush1.msra.mxu0 %v406
    %1831 = vmatprep.subr.mxu0 %v413
    %1832 = vmatpush1.msra.mxu0 %v412
    %1833 = vmatprep.subr.mxu0 %v419
    %1834 = vmatpush1.msra.mxu0 %v418
    %1835 = vmatprep.subr.mxu0 %v425
    %1836 = vmatpush1.msra.mxu0 %v424
    %1837 = vmatprep.subr.mxu0 %v431
    %1838 = vmatpush1.msra.mxu0 %v430
    %1839 = vmatprep.subr.mxu0 %v437
    %1840 = vmatpush1.msra.mxu0 %v436
    %1841 = vmatprep.subr.mxu0 %v443
    %1842 = vmatpush1.msra.mxu0 %v442
    %1843 = vmatprep.subr.mxu0 %v449
    %1844 = vmatpush1.msra.mxu0 %v448
    %1845 = vmatprep.subr.mxu0 %v455
    %1846 = vmatpush1.msra.mxu0 %v454
    %1847 = vmatprep.subr.mxu0 %v461
    %1848 = vmatpush1.msra.mxu0 %v460
    %1849 = vmatprep.subr.mxu0 %v467
    %1850 = vmatpush1.msra.mxu0 %v466
    %1851 = vmatprep.subr.mxu0 %v473
    %1852 = vmatpush1.msra.mxu0 %v472
    %1853 = vmatprep.subr.mxu0 %v479
    %1854 = vmatpush1.msra.mxu0 %v478
    %1855 = vmatprep.subr.mxu0 %v485
    %1856 = vmatpush1.msra.mxu0 %v484
    %1857 = vmatprep.mubr.f32.mxu0 0.0
    %1858 = vmatmul.mubr.f32.gmra.mrb[0].mxu0 0.0
    %v1859 = vpop.f32.mrb[0].mxu0
    %v1860 = vadd.f32 0.0, %v1859
    %v1861 = vpop.f32.mrb[0].mxu0
    %v1862 = vadd.f32 0.0, %v1861
    %1863 = vdwg.mxu0
    %v1864 = vadd.f32 %v1505, %v1718
    %v1865 = vadd.f32 %v1507, %v1720
    %v1866 = vxor.u32 %v1864, 2147483648
    %v1867 = vxor.u32 %v1865, 2147483648
    %v1868 = vmul.f32 %v1866, 1.442695
    %v1869 = vpow.pop %v1868
    %v1870 = vmul.f32 %v1867, 1.442695
    %v1871 = vpow.pop %v1870
    %v1872 = vadd.f32 %v1869, 1.0
    %v1873 = vadd.f32 %v1871, 1.0
    %v1874 = vrcp.pop %v1872
    %v1875 = vmul.f32 1.0, %v1874
    %v1876 = vrcp.pop %v1873
    %v1877 = vmul.f32 1.0, %v1876
    %v1878 = vadd.f32 %v1576, %v1789
    %v1879 = vadd.f32 %v1578, %v1791
    %v1880 = vxor.u32 %v1878, 2147483648
    %v1881 = vxor.u32 %v1879, 2147483648
    %v1882 = vmul.f32 %v1880, 1.442695
    %v1883 = vpow.pop %v1882
    %v1884 = vmul.f32 %v1881, 1.442695
    %v1885 = vpow.pop %v1884
    %v1886 = vadd.f32 %v1883, 1.0
    %v1887 = vadd.f32 %v1885, 1.0
    %v1888 = vrcp.pop %v1886
    %v1889 = vmul.f32 1.0, %v1888
    %v1890 = vrcp.pop %v1887
    %v1891 = vmul.f32 1.0, %v1890
    %v1893 = vlaneseq
    %v1894 = vshrl.u32 %v1893, 7
    %v1895 = vsub.s32 0, %v1894
    %v1896 = vrot.slane %v487, %v1895
    %v1897 = vlaneseq
    %v1898 = vshrl.u32 %v1897, 7
    %v1899 = vsub.s32 1, %v1898
    %v1900 = vrot.slane %v487, %v1899
    %v1903 = vadd.f32 %v1860, %v1896
    %v1904 = vadd.f32 %v1862, %v1900
    %v1905 = vmul.f32 %v1875, %v1903
    %v1906 = vmul.f32 %v1877, %v1904
    %v1907 = vadd.f32 %v1647, %v1905
    %v1908 = vadd.f32 %v1649, %v1906
    %v1909 = vtanh.pop %v1907
    %v1910 = vtanh.pop %v1908
    %v1911 = vsub.f32 1.0, %v1889
    %v1912 = vsub.f32 1.0, %v1891
    %v1913 = vmul.f32 %v1911, %v1909
    %v1914 = vmul.f32 %v1912, %v1910
    %v1915 = vmul.f32 %v1889, 0.0
    %v1916 = vmul.f32 %v1891, 0.0
    %v1917 = vadd.f32 %v1913, %v1915
    %v1918 = vadd.f32 %v1914, %v1916
    %vm1919 = vcmp.eq.s32.totalorder %v1132, 1
    %v1920 = vsel %vm1919, 1, 0
    %1921 = vset.pattern.permute.xlu0 0
    %1922 = vperm.xlu0 %1921, %v1920
    %v1923 = vpop.permute.xlu0 %1922
    %vm1924 = vcmp.eq.s32.totalorder %v1923, 1
    %v1925 = vsel %vm1924, %v1917, 0.0
    %v1926 = vsel %vm1924, %v1918, 0.0
    %v1927 = vld [vmem:[#allocation2 + $0x30] sm:$0xff]
    %v1928 = vld [vmem:[#allocation2 + $0x38] sm:$0xff]
    %v1929 = vld [vmem:[#allocation2 + $0x40] sm:$0xff]
    %v1930 = vld [vmem:[#allocation2 + $0x48] sm:$0xff]
    %v1931 = vld [vmem:[#allocation2 + $0x50] sm:$0xff]
    %v1932 = vld [vmem:[#allocation2 + $0x58] sm:$0xff]
    %1933 = vmatprep.subr.mxu0 %v103
    %1934 = vmatpush1.msra.mxu0 %v102
    %1935 = vmatprep.subr.mxu0 %v109
    %1936 = vmatpush1.msra.mxu0 %v108
    %1937 = vmatprep.subr.mxu0 %v115
    %1938 = vmatpush1.msra.mxu0 %v114
    %1939 = vmatprep.subr.mxu0 %v121
    %1940 = vmatpush1.msra.mxu0 %v120
    %1941 = vmatprep.subr.mxu0 %v127
    %1942 = vmatpush1.msra.mxu0 %v126
    %1943 = vmatprep.subr.mxu0 %v133
    %1944 = vmatpush1.msra.mxu0 %v132
    %1945 = vmatprep.subr.mxu0 %v139
    %1946 = vmatpush1.msra.mxu0 %v138
    %1947 = vmatprep.subr.mxu0 %v145
    %1948 = vmatpush1.msra.mxu0 %v144
    %1949 = vmatprep.subr.mxu0 %v151
    %1950 = vmatpush1.msra.mxu0 %v150
    %1951 = vmatprep.subr.mxu0 %v157
    %1952 = vmatpush1.msra.mxu0 %v156
    %1953 = vmatprep.subr.mxu0 %v163
    %1954 = vmatpush1.msra.mxu0 %v162
    %1955 = vmatprep.subr.mxu0 %v169
    %1956 = vmatpush1.msra.mxu0 %v168
    %1957 = vmatprep.subr.mxu0 %v175
    %1958 = vmatpush1.msra.mxu0 %v174
    %1959 = vmatprep.subr.mxu0 %v181
    %1960 = vmatpush1.msra.mxu0 %v180
    %1961 = vmatprep.subr.mxu0 %v187
    %1962 = vmatpush1.msra.mxu0 %v186
    %1963 = vmatprep.subr.mxu0 %v193
    %1964 = vmatpush1.msra.mxu0 %v192
    %1965 = vmatprep.subr.mxu0 %v199
    %1966 = vmatpush1.msra.mxu0 %v198
    %1967 = vmatprep.subr.mxu0 %v205
    %1968 = vmatpush1.msra.mxu0 %v204
    %1969 = vmatprep.subr.mxu0 %v211
    %1970 = vmatpush1.msra.mxu0 %v210
    %1971 = vmatprep.subr.mxu0 %v217
    %1972 = vmatpush1.msra.mxu0 %v216
    %1973 = vmatprep.subr.mxu0 %v223
    %1974 = vmatpush1.msra.mxu0 %v222
    %1975 = vmatprep.subr.mxu0 %v229
    %1976 = vmatpush1.msra.mxu0 %v228
    %1977 = vmatprep.subr.mxu0 %v235
    %1978 = vmatpush1.msra.mxu0 %v234
    %1979 = vmatprep.subr.mxu0 %v241
    %1980 = vmatpush1.msra.mxu0 %v240
    %1981 = vmatprep.subr.mxu0 %v247
    %1982 = vmatpush1.msra.mxu0 %v246
    %1983 = vmatprep.subr.mxu0 %v253
    %1984 = vmatpush1.msra.mxu0 %v252
    %1985 = vmatprep.subr.mxu0 %v259
    %1986 = vmatpush1.msra.mxu0 %v258
    %1987 = vmatprep.subr.mxu0 %v265
    %1988 = vmatpush1.msra.mxu0 %v264
    %1989 = vmatprep.subr.mxu0 %v271
    %1990 = vmatpush1.msra.mxu0 %v270
    %1991 = vmatprep.subr.mxu0 %v277
    %1992 = vmatpush1.msra.mxu0 %v276
    %1993 = vmatprep.subr.mxu0 %v283
    %1994 = vmatpush1.msra.mxu0 %v282
    %1995 = vmatprep.subr.mxu0 %v289
    %1996 = vmatpush1.msra.mxu0 %v288
    %1997 = vmatprep.mubr.f32.mxu0 %v1406
    %1998 = vmatmul.mubr.f32.gmra.mrb[0].mxu0 %v1405
    %v1999 = vpop.f32.mrb[0].mxu0
    %v2000 = vadd.f32 0.0, %v1999
    %v2001 = vpop.f32.mrb[0].mxu0
    %v2002 = vadd.f32 0.0, %v2001
    %2003 = vdwg.mxu0
    %2004 = vmatprep.subr.mxu0 %v105
    %2005 = vmatpush1.msra.mxu0 %v104
    %2006 = vmatprep.subr.mxu0 %v111
    %2007 = vmatpush1.msra.mxu0 %v110
    %2008 = vmatprep.subr.mxu0 %v117
    %2009 = vmatpush1.msra.mxu0 %v116
    %2010 = vmatprep.subr.mxu0 %v123
    %2011 = vmatpush1.msra.mxu0 %v122
    %2012 = vmatprep.subr.mxu0 %v129
    %2013 = vmatpush1.msra.mxu0 %v128
    %2014 = vmatprep.subr.mxu0 %v135
    %2015 = vmatpush1.msra.mxu0 %v134
    %2016 = vmatprep.subr.mxu0 %v141
    %2017 = vmatpush1.msra.mxu0 %v140
    %2018 = vmatprep.subr.mxu0 %v147
    %2019 = vmatpush1.msra.mxu0 %v146
    %2020 = vmatprep.subr.mxu0 %v153
    %2021 = vmatpush1.msra.mxu0 %v152
    %2022 = vmatprep.subr.mxu0 %v159
    %2023 = vmatpush1.msra.mxu0 %v158
    %2024 = vmatprep.subr.mxu0 %v165
    %2025 = vmatpush1.msra.mxu0 %v164
    %2026 = vmatprep.subr.mxu0 %v171
    %2027 = vmatpush1.msra.mxu0 %v170
    %2028 = vmatprep.subr.mxu0 %v177
    %2029 = vmatpush1.msra.mxu0 %v176
    %2030 = vmatprep.subr.mxu0 %v183
    %2031 = vmatpush1.msra.mxu0 %v182
    %2032 = vmatprep.subr.mxu0 %v189
    %2033 = vmatpush1.msra.mxu0 %v188
    %2034 = vmatprep.subr.mxu0 %v195
    %2035 = vmatpush1.msra.mxu0 %v194
    %2036 = vmatprep.subr.mxu0 %v201
    %2037 = vmatpush1.msra.mxu0 %v200
    %2038 = vmatprep.subr.mxu0 %v207
    %2039 = vmatpush1.msra.mxu0 %v206
    %2040 = vmatprep.subr.mxu0 %v213
    %2041 = vmatpush1.msra.mxu0 %v212
    %2042 = vmatprep.subr.mxu0 %v219
    %2043 = vmatpush1.msra.mxu0 %v218
    %2044 = vmatprep.subr.mxu0 %v225
    %2045 = vmatpush1.msra.mxu0 %v224
    %2046 = vmatprep.subr.mxu0 %v231
    %2047 = vmatpush1.msra.mxu0 %v230
    %2048 = vmatprep.subr.mxu0 %v237
    %2049 = vmatpush1.msra.mxu0 %v236
    %2050 = vmatprep.subr.mxu0 %v243
    %2051 = vmatpush1.msra.mxu0 %v242
    %2052 = vmatprep.subr.mxu0 %v249
    %2053 = vmatpush1.msra.mxu0 %v248
    %2054 = vmatprep.subr.mxu0 %v255
    %2055 = vmatpush1.msra.mxu0 %v254
    %2056 = vmatprep.subr.mxu0 %v261
    %2057 = vmatpush1.msra.mxu0 %v260
    %2058 = vmatprep.subr.mxu0 %v267
    %2059 = vmatpush1.msra.mxu0 %v266
    %2060 = vmatprep.subr.mxu0 %v273
    %2061 = vmatpush1.msra.mxu0 %v272
    %2062 = vmatprep.subr.mxu0 %v279
    %2063 = vmatpush1.msra.mxu0 %v278
    %2064 = vmatprep.subr.mxu0 %v285
    %2065 = vmatpush1.msra.mxu0 %v284
    %2066 = vmatprep.subr.mxu0 %v291
    %2067 = vmatpush1.msra.mxu0 %v290
    %2068 = vmatprep.mubr.f32.mxu0 %v1406
    %2069 = vmatmul.mubr.f32.gmra.mrb[0].mxu0 %v1405
    %v2070 = vpop.f32.mrb[0].mxu0
    %v2071 = vadd.f32 0.0, %v2070
    %v2072 = vpop.f32.mrb[0].mxu0
    %v2073 = vadd.f32 0.0, %v2072
    %2074 = vdwg.mxu0
    %2075 = vmatprep.subr.mxu0 %v107
    %2076 = vmatpush1.msra.mxu0 %v106
    %2077 = vmatprep.subr.mxu0 %v113
    %2078 = vmatpush1.msra.mxu0 %v112
    %2079 = vmatprep.subr.mxu0 %v119
    %2080 = vmatpush1.msra.mxu0 %v118
    %2081 = vmatprep.subr.mxu0 %v125
    %2082 = vmatpush1.msra.mxu0 %v124
    %2083 = vmatprep.subr.mxu0 %v131
    %2084 = vmatpush1.msra.mxu0 %v130
    %2085 = vmatprep.subr.mxu0 %v137
    %2086 = vmatpush1.msra.mxu0 %v136
    %2087 = vmatprep.subr.mxu0 %v143
    %2088 = vmatpush1.msra.mxu0 %v142
    %2089 = vmatprep.subr.mxu0 %v149
    %2090 = vmatpush1.msra.mxu0 %v148
    %2091 = vmatprep.subr.mxu0 %v155
    %2092 = vmatpush1.msra.mxu0 %v154
    %2093 = vmatprep.subr.mxu0 %v161
    %2094 = vmatpush1.msra.mxu0 %v160
    %2095 = vmatprep.subr.mxu0 %v167
    %2096 = vmatpush1.msra.mxu0 %v166
    %2097 = vmatprep.subr.mxu0 %v173
    %2098 = vmatpush1.msra.mxu0 %v172
    %2099 = vmatprep.subr.mxu0 %v179
    %2100 = vmatpush1.msra.mxu0 %v178
    %2101 = vmatprep.subr.mxu0 %v185
    %2102 = vmatpush1.msra.mxu0 %v184
    %2103 = vmatprep.subr.mxu0 %v191
    %2104 = vmatpush1.msra.mxu0 %v190
    %2105 = vmatprep.subr.mxu0 %v197
    %2106 = vmatpush1.msra.mxu0 %v196
    %2107 = vmatprep.subr.mxu0 %v203
    %2108 = vmatpush1.msra.mxu0 %v202
    %2109 = vmatprep.subr.mxu0 %v209
    %2110 = vmatpush1.msra.mxu0 %v208
    %2111 = vmatprep.subr.mxu0 %v215
    %2112 = vmatpush1.msra.mxu0 %v214
    %2113 = vmatprep.subr.mxu0 %v221
    %2114 = vmatpush1.msra.mxu0 %v220
    %2115 = vmatprep.subr.mxu0 %v227
    %2116 = vmatpush1.msra.mxu0 %v226
    %2117 = vmatprep.subr.mxu0 %v233
    %2118 = vmatpush1.msra.mxu0 %v232
    %2119 = vmatprep.subr.mxu0 %v239
    %2120 = vmatpush1.msra.mxu0 %v238
    %2121 = vmatprep.subr.mxu0 %v245
    %2122 = vmatpush1.msra.mxu0 %v244
    %2123 = vmatprep.subr.mxu0 %v251
    %2124 = vmatpush1.msra.mxu0 %v250
    %2125 = vmatprep.subr.mxu0 %v257
    %2126 = vmatpush1.msra.mxu0 %v256
    %2127 = vmatprep.subr.mxu0 %v263
    %2128 = vmatpush1.msra.mxu0 %v262
    %2129 = vmatprep.subr.mxu0 %v269
    %2130 = vmatpush1.msra.mxu0 %v268
    %2131 = vmatprep.subr.mxu0 %v275
    %2132 = vmatpush1.msra.mxu0 %v274
    %2133 = vmatprep.subr.mxu0 %v281
    %2134 = vmatpush1.msra.mxu0 %v280
    %2135 = vmatprep.subr.mxu0 %v287
    %2136 = vmatpush1.msra.mxu0 %v286
    %2137 = vmatprep.subr.mxu0 %v293
    %2138 = vmatpush1.msra.mxu0 %v292
    %2139 = vmatprep.mubr.f32.mxu0 %v1406
    %2140 = vmatmul.mubr.f32.gmra.mrb[0].mxu0 %v1405
    %v2141 = vpop.f32.mrb[0].mxu0
    %v2142 = vadd.f32 0.0, %v2141
    %v2143 = vpop.f32.mrb[0].mxu0
    %v2144 = vadd.f32 0.0, %v2143
    %2145 = vdwg.mxu0
    %v2146 = vadd.f32 %v1927, %v2000
    %v2147 = vadd.f32 %v1928, %v2002
    %v2148 = vxor.u32 %v2146, 2147483648
    %v2149 = vxor.u32 %v2147, 2147483648
    %v2150 = vmul.f32 %v2148, 1.442695
    %v2151 = vpow.pop %v2150
    %v2152 = vmul.f32 %v2149, 1.442695
    %v2153 = vpow.pop %v2152
    %v2154 = vadd.f32 %v2151, 1.0
    %v2155 = vadd.f32 %v2153, 1.0
    %v2156 = vrcp.pop %v2154
    %v2157 = vmul.f32 1.0, %v2156
    %v2158 = vrcp.pop %v2155
    %v2159 = vmul.f32 1.0, %v2158
    %v2160 = vadd.f32 %v1929, %v2071
    %v2161 = vadd.f32 %v1930, %v2073
    %v2162 = vxor.u32 %v2160, 2147483648
    %v2163 = vxor.u32 %v2161, 2147483648
    %v2164 = vmul.f32 %v2162, 1.442695
    %v2165 = vpow.pop %v2164
    %v2166 = vmul.f32 %v2163, 1.442695
    %v2167 = vpow.pop %v2166
    %v2168 = vadd.f32 %v2165, 1.0
    %v2169 = vadd.f32 %v2167, 1.0
    %v2170 = vrcp.pop %v2168
    %v2171 = vmul.f32 1.0, %v2170
    %v2172 = vrcp.pop %v2169
    %v2173 = vmul.f32 1.0, %v2172
    %v2174 = vadd.f32 %v2142, %v1384
    %v2175 = vadd.f32 %v2144, %v1388
    %v2176 = vmul.f32 %v2157, %v2174
    %v2177 = vmul.f32 %v2159, %v2175
    %v2178 = vadd.f32 %v1931, %v2176
    %v2179 = vadd.f32 %v1932, %v2177
    %v2180 = vtanh.pop %v2178
    %v2181 = vtanh.pop %v2179
    %v2182 = vsub.f32 1.0, %v2171
    %v2183 = vsub.f32 1.0, %v2173
    %v2184 = vmul.f32 %v2182, %v2180
    %v2185 = vmul.f32 %v2183, %v2181
    %v2186 = vmul.f32 %v2171, %v1405
    %v2187 = vmul.f32 %v2173, %v1406
    %v2188 = vadd.f32 %v2184, %v2186
    %v2189 = vadd.f32 %v2185, %v2187
    %2190 = vmatprep.subr.mxu0 %v489
    %2191 = vmatpush1.msra.mxu0 %v488
    %2192 = vmatprep.subr.mxu0 %v495
    %2193 = vmatpush1.msra.mxu0 %v494
    %2194 = vmatprep.subr.mxu0 %v501
    %2195 = vmatpush1.msra.mxu0 %v500
    %2196 = vmatprep.subr.mxu0 %v507
    %2197 = vmatpush1.msra.mxu0 %v506
    %2198 = vmatprep.subr.mxu0 %v513
    %2199 = vmatpush1.msra.mxu0 %v512
    %2200 = vmatprep.subr.mxu0 %v519
    %2201 = vmatpush1.msra.mxu0 %v518
    %2202 = vmatprep.subr.mxu0 %v525
    %2203 = vmatpush1.msra.mxu0 %v524
    %2204 = vmatprep.subr.mxu0 %v531
    %2205 = vmatpush1.msra.mxu0 %v530
    %2206 = vmatprep.subr.mxu0 %v537
    %2207 = vmatpush1.msra.mxu0 %v536
    %2208 = vmatprep.subr.mxu0 %v543
    %2209 = vmatpush1.msra.mxu0 %v542
    %2210 = vmatprep.subr.mxu0 %v549
    %2211 = vmatpush1.msra.mxu0 %v548
    %2212 = vmatprep.subr.mxu0 %v555
    %2213 = vmatpush1.msra.mxu0 %v554
    %2214 = vmatprep.subr.mxu0 %v561
    %2215 = vmatpush1.msra.mxu0 %v560
    %2216 = vmatprep.subr.mxu0 %v567
    %2217 = vmatpush1.msra.mxu0 %v566
    %2218 = vmatprep.subr.mxu0 %v573
    %2219 = vmatpush1.msra.mxu0 %v572
    %2220 = vmatprep.subr.mxu0 %v579
    %2221 = vmatpush1.msra.mxu0 %v578
    %2222 = vmatprep.subr.mxu0 %v585
    %2223 = vmatpush1.msra.mxu0 %v584
    %2224 = vmatprep.subr.mxu0 %v591
    %2225 = vmatpush1.msra.mxu0 %v590
    %2226 = vmatprep.subr.mxu0 %v597
    %2227 = vmatpush1.msra.mxu0 %v596
    %2228 = vmatprep.subr.mxu0 %v603
    %2229 = vmatpush1.msra.mxu0 %v602
    %2230 = vmatprep.subr.mxu0 %v609
    %2231 = vmatpush1.msra.mxu0 %v608
    %2232 = vmatprep.subr.mxu0 %v615
    %2233 = vmatpush1.msra.mxu0 %v614
    %2234 = vmatprep.subr.mxu0 %v621
    %2235 = vmatpush1.msra.mxu0 %v620
    %2236 = vmatprep.subr.mxu0 %v627
    %2237 = vmatpush1.msra.mxu0 %v626
    %2238 = vmatprep.subr.mxu0 %v633
    %2239 = vmatpush1.msra.mxu0 %v632
    %2240 = vmatprep.subr.mxu0 %v639
    %2241 = vmatpush1.msra.mxu0 %v638
    %2242 = vmatprep.subr.mxu0 %v645
    %2243 = vmatpush1.msra.mxu0 %v644
    %2244 = vmatprep.subr.mxu0 %v651
    %2245 = vmatpush1.msra.mxu0 %v650
    %2246 = vmatprep.subr.mxu0 %v657
    %2247 = vmatpush1.msra.mxu0 %v656
    %2248 = vmatprep.subr.mxu0 %v663
    %2249 = vmatpush1.msra.mxu0 %v662
    %2250 = vmatprep.subr.mxu0 %v669
    %2251 = vmatpush1.msra.mxu0 %v668
    %2252 = vmatprep.subr.mxu0 %v675
    %2253 = vmatpush1.msra.mxu0 %v674
    %2254 = vmatprep.mubr.f32.mxu0 %v2189
    %2255 = vmatmul.mubr.f32.gmra.mrb[0].mxu0 %v2188
    %v2256 = vpop.f32.mrb[0].mxu0
    %v2257 = vadd.f32 %v1411, %v2256
    %v2258 = vpop.f32.mrb[0].mxu0
    %v2259 = vadd.f32 %v1415, %v2258
    %2260 = vdwg.mxu0
    %2261 = vmatprep.subr.mxu0 %v491
    %2262 = vmatpush1.msra.mxu0 %v490
    %2263 = vmatprep.subr.mxu0 %v497
    %2264 = vmatpush1.msra.mxu0 %v496
    %2265 = vmatprep.subr.mxu0 %v503
    %2266 = vmatpush1.msra.mxu0 %v502
    %2267 = vmatprep.subr.mxu0 %v509
    %2268 = vmatpush1.msra.mxu0 %v508
    %2269 = vmatprep.subr.mxu0 %v515
    %2270 = vmatpush1.msra.mxu0 %v514
    %2271 = vmatprep.subr.mxu0 %v521
    %2272 = vmatpush1.msra.mxu0 %v520
    %2273 = vmatprep.subr.mxu0 %v527
    %2274 = vmatpush1.msra.mxu0 %v526
    %2275 = vmatprep.subr.mxu0 %v533
    %2276 = vmatpush1.msra.mxu0 %v532
    %2277 = vmatprep.subr.mxu0 %v539
    %2278 = vmatpush1.msra.mxu0 %v538
    %2279 = vmatprep.subr.mxu0 %v545
    %2280 = vmatpush1.msra.mxu0 %v544
    %2281 = vmatprep.subr.mxu0 %v551
    %2282 = vmatpush1.msra.mxu0 %v550
    %2283 = vmatprep.subr.mxu0 %v557
    %2284 = vmatpush1.msra.mxu0 %v556
    %2285 = vmatprep.subr.mxu0 %v563
    %2286 = vmatpush1.msra.mxu0 %v562
    %2287 = vmatprep.subr.mxu0 %v569
    %2288 = vmatpush1.msra.mxu0 %v568
    %2289 = vmatprep.subr.mxu0 %v575
    %2290 = vmatpush1.msra.mxu0 %v574
    %2291 = vmatprep.subr.mxu0 %v581
    %2292 = vmatpush1.msra.mxu0 %v580
    %2293 = vmatprep.subr.mxu0 %v587
    %2294 = vmatpush1.msra.mxu0 %v586
    %2295 = vmatprep.subr.mxu0 %v593
    %2296 = vmatpush1.msra.mxu0 %v592
    %2297 = vmatprep.subr.mxu0 %v599
    %2298 = vmatpush1.msra.mxu0 %v598
    %2299 = vmatprep.subr.mxu0 %v605
    %2300 = vmatpush1.msra.mxu0 %v604
    %2301 = vmatprep.subr.mxu0 %v611
    %2302 = vmatpush1.msra.mxu0 %v610
    %2303 = vmatprep.subr.mxu0 %v617
    %2304 = vmatpush1.msra.mxu0 %v616
    %2305 = vmatprep.subr.mxu0 %v623
    %2306 = vmatpush1.msra.mxu0 %v622
    %2307 = vmatprep.subr.mxu0 %v629
    %2308 = vmatpush1.msra.mxu0 %v628
    %2309 = vmatprep.subr.mxu0 %v635
    %2310 = vmatpush1.msra.mxu0 %v634
    %2311 = vmatprep.subr.mxu0 %v641
    %2312 = vmatpush1.msra.mxu0 %v640
    %2313 = vmatprep.subr.mxu0 %v647
    %2314 = vmatpush1.msra.mxu0 %v646
    %2315 = vmatprep.subr.mxu0 %v653
    %2316 = vmatpush1.msra.mxu0 %v652
    %2317 = vmatprep.subr.mxu0 %v659
    %2318 = vmatpush1.msra.mxu0 %v658
    %2319 = vmatprep.subr.mxu0 %v665
    %2320 = vmatpush1.msra.mxu0 %v664
    %2321 = vmatprep.subr.mxu0 %v671
    %2322 = vmatpush1.msra.mxu0 %v670
    %2323 = vmatprep.subr.mxu0 %v677
    %2324 = vmatpush1.msra.mxu0 %v676
    %2325 = vmatprep.mubr.f32.mxu0 %v2189
    %2326 = vmatmul.mubr.f32.gmra.mrb[0].mxu0 %v2188
    %v2327 = vpop.f32.mrb[0].mxu0
    %v2328 = vadd.f32 %v1419, %v2327
    %v2329 = vpop.f32.mrb[0].mxu0
    %v2330 = vadd.f32 %v1423, %v2329
    %2331 = vdwg.mxu0
    %2332 = vmatprep.subr.mxu0 %v493
    %2333 = vmatpush1.msra.mxu0 %v492
    %2334 = vmatprep.subr.mxu0 %v499
    %2335 = vmatpush1.msra.mxu0 %v498
    %2336 = vmatprep.subr.mxu0 %v505
    %2337 = vmatpush1.msra.mxu0 %v504
    %2338 = vmatprep.subr.mxu0 %v511
    %2339 = vmatpush1.msra.mxu0 %v510
    %2340 = vmatprep.subr.mxu0 %v517
    %2341 = vmatpush1.msra.mxu0 %v516
    %2342 = vmatprep.subr.mxu0 %v523
    %2343 = vmatpush1.msra.mxu0 %v522
    %2344 = vmatprep.subr.mxu0 %v529
    %2345 = vmatpush1.msra.mxu0 %v528
    %2346 = vmatprep.subr.mxu0 %v535
    %2347 = vmatpush1.msra.mxu0 %v534
    %2348 = vmatprep.subr.mxu0 %v541
    %2349 = vmatpush1.msra.mxu0 %v540
    %2350 = vmatprep.subr.mxu0 %v547
    %2351 = vmatpush1.msra.mxu0 %v546
    %2352 = vmatprep.subr.mxu0 %v553
    %2353 = vmatpush1.msra.mxu0 %v552
    %2354 = vmatprep.subr.mxu0 %v559
    %2355 = vmatpush1.msra.mxu0 %v558
    %2356 = vmatprep.subr.mxu0 %v565
    %2357 = vmatpush1.msra.mxu0 %v564
    %2358 = vmatprep.subr.mxu0 %v571
    %2359 = vmatpush1.msra.mxu0 %v570
    %2360 = vmatprep.subr.mxu0 %v577
    %2361 = vmatpush1.msra.mxu0 %v576
    %2362 = vmatprep.subr.mxu0 %v583
    %2363 = vmatpush1.msra.mxu0 %v582
    %2364 = vmatprep.subr.mxu0 %v589
    %2365 = vmatpush1.msra.mxu0 %v588
    %2366 = vmatprep.subr.mxu0 %v595
    %2367 = vmatpush1.msra.mxu0 %v594
    %2368 = vmatprep.subr.mxu0 %v601
    %2369 = vmatpush1.msra.mxu0 %v600
    %2370 = vmatprep.subr.mxu0 %v607
    %2371 = vmatpush1.msra.mxu0 %v606
    %2372 = vmatprep.subr.mxu0 %v613
    %2373 = vmatpush1.msra.mxu0 %v612
    %2374 = vmatprep.subr.mxu0 %v619
    %2375 = vmatpush1.msra.mxu0 %v618
    %2376 = vmatprep.subr.mxu0 %v625
    %2377 = vmatpush1.msra.mxu0 %v624
    %2378 = vmatprep.subr.mxu0 %v631
    %2379 = vmatpush1.msra.mxu0 %v630
    %2380 = vmatprep.subr.mxu0 %v637
    %2381 = vmatpush1.msra.mxu0 %v636
    %2382 = vmatprep.subr.mxu0 %v643
    %2383 = vmatpush1.msra.mxu0 %v642
    %2384 = vmatprep.subr.mxu0 %v649
    %2385 = vmatpush1.msra.mxu0 %v648
    %2386 = vmatprep.subr.mxu0 %v655
    %2387 = vmatpush1.msra.mxu0 %v654
    %2388 = vmatprep.subr.mxu0 %v661
    %2389 = vmatpush1.msra.mxu0 %v660
    %2390 = vmatprep.subr.mxu0 %v667
    %2391 = vmatpush1.msra.mxu0 %v666
    %2392 = vmatprep.subr.mxu0 %v673
    %2393 = vmatpush1.msra.mxu0 %v672
    %2394 = vmatprep.subr.mxu0 %v679
    %2395 = vmatpush1.msra.mxu0 %v678
    %2396 = vmatprep.mubr.f32.mxu0 %v2189
    %2397 = vmatmul.mubr.f32.gmra.mrb[0].mxu0 %v2188
    %v2398 = vpop.f32.mrb[0].mxu0
    %v2399 = vadd.f32 %v1427, %v2398
    %v2400 = vpop.f32.mrb[0].mxu0
    %v2401 = vadd.f32 %v1431, %v2400
    %2402 = vdwg.mxu0
    %2403 = vmatprep.subr.mxu0 %v295
    %2404 = vmatpush1.msra.mxu0 %v294
    %2405 = vmatprep.subr.mxu0 %v301
    %2406 = vmatpush1.msra.mxu0 %v300
    %2407 = vmatprep.subr.mxu0 %v307
    %2408 = vmatpush1.msra.mxu0 %v306
    %2409 = vmatprep.subr.mxu0 %v313
    %2410 = vmatpush1.msra.mxu0 %v312
    %2411 = vmatprep.subr.mxu0 %v319
    %2412 = vmatpush1.msra.mxu0 %v318
    %2413 = vmatprep.subr.mxu0 %v325
    %2414 = vmatpush1.msra.mxu0 %v324
    %2415 = vmatprep.subr.mxu0 %v331
    %2416 = vmatpush1.msra.mxu0 %v330
    %2417 = vmatprep.subr.mxu0 %v337
    %2418 = vmatpush1.msra.mxu0 %v336
    %2419 = vmatprep.subr.mxu0 %v343
    %2420 = vmatpush1.msra.mxu0 %v342
    %2421 = vmatprep.subr.mxu0 %v349
    %2422 = vmatpush1.msra.mxu0 %v348
    %2423 = vmatprep.subr.mxu0 %v355
    %2424 = vmatpush1.msra.mxu0 %v354
    %2425 = vmatprep.subr.mxu0 %v361
    %2426 = vmatpush1.msra.mxu0 %v360
    %2427 = vmatprep.subr.mxu0 %v367
    %2428 = vmatpush1.msra.mxu0 %v366
    %2429 = vmatprep.subr.mxu0 %v373
    %2430 = vmatpush1.msra.mxu0 %v372
    %2431 = vmatprep.subr.mxu0 %v379
    %2432 = vmatpush1.msra.mxu0 %v378
    %2433 = vmatprep.subr.mxu0 %v385
    %2434 = vmatpush1.msra.mxu0 %v384
    %2435 = vmatprep.subr.mxu0 %v391
    %2436 = vmatpush1.msra.mxu0 %v390
    %2437 = vmatprep.subr.mxu0 %v397
    %2438 = vmatpush1.msra.mxu0 %v396
    %2439 = vmatprep.subr.mxu0 %v403
    %2440 = vmatpush1.msra.mxu0 %v402
    %2441 = vmatprep.subr.mxu0 %v409
    %2442 = vmatpush1.msra.mxu0 %v408
    %2443 = vmatprep.subr.mxu0 %v415
    %2444 = vmatpush1.msra.mxu0 %v414
    %2445 = vmatprep.subr.mxu0 %v421
    %2446 = vmatpush1.msra.mxu0 %v420
    %2447 = vmatprep.subr.mxu0 %v427
    %2448 = vmatpush1.msra.mxu0 %v426
    %2449 = vmatprep.subr.mxu0 %v433
    %2450 = vmatpush1.msra.mxu0 %v432
    %2451 = vmatprep.subr.mxu0 %v439
    %2452 = vmatpush1.msra.mxu0 %v438
    %2453 = vmatprep.subr.mxu0 %v445
    %2454 = vmatpush1.msra.mxu0 %v444
    %2455 = vmatprep.subr.mxu0 %v451
    %2456 = vmatpush1.msra.mxu0 %v450
    %2457 = vmatprep.subr.mxu0 %v457
    %2458 = vmatpush1.msra.mxu0 %v456
    %2459 = vmatprep.subr.mxu0 %v463
    %2460 = vmatpush1.msra.mxu0 %v462
    %2461 = vmatprep.subr.mxu0 %v469
    %2462 = vmatpush1.msra.mxu0 %v468
    %2463 = vmatprep.subr.mxu0 %v475
    %2464 = vmatpush1.msra.mxu0 %v474
    %2465 = vmatprep.subr.mxu0 %v481
    %2466 = vmatpush1.msra.mxu0 %v480
    %2467 = vmatprep.mubr.f32.mxu0 %v1918
    %2468 = vmatmul.mubr.f32.gmra.mrb[0].mxu0 %v1917
    %v2469 = vpop.f32.mrb[0].mxu0
    %v2470 = vadd.f32 0.0, %v2469
    %v2471 = vpop.f32.mrb[0].mxu0
    %v2472 = vadd.f32 0.0, %v2471
    %2473 = vdwg.mxu0
    %2474 = vmatprep.subr.mxu0 %v297
    %2475 = vmatpush1.msra.mxu0 %v296
    %2476 = vmatprep.subr.mxu0 %v303
    %2477 = vmatpush1.msra.mxu0 %v302
    %2478 = vmatprep.subr.mxu0 %v309
    %2479 = vmatpush1.msra.mxu0 %v308
    %2480 = vmatprep.subr.mxu0 %v315
    %2481 = vmatpush1.msra.mxu0 %v314
    %2482 = vmatprep.subr.mxu0 %v321
    %2483 = vmatpush1.msra.mxu0 %v320
    %2484 = vmatprep.subr.mxu0 %v327
    %2485 = vmatpush1.msra.mxu0 %v326
    %2486 = vmatprep.subr.mxu0 %v333
    %2487 = vmatpush1.msra.mxu0 %v332
    %2488 = vmatprep.subr.mxu0 %v339
    %2489 = vmatpush1.msra.mxu0 %v338
    %2490 = vmatprep.subr.mxu0 %v345
    %2491 = vmatpush1.msra.mxu0 %v344
    %2492 = vmatprep.subr.mxu0 %v351
    %2493 = vmatpush1.msra.mxu0 %v350
    %2494 = vmatprep.subr.mxu0 %v357
    %2495 = vmatpush1.msra.mxu0 %v356
    %2496 = vmatprep.subr.mxu0 %v363
    %2497 = vmatpush1.msra.mxu0 %v362
    %2498 = vmatprep.subr.mxu0 %v369
    %2499 = vmatpush1.msra.mxu0 %v368
    %2500 = vmatprep.subr.mxu0 %v375
    %2501 = vmatpush1.msra.mxu0 %v374
    %2502 = vmatprep.subr.mxu0 %v381
    %2503 = vmatpush1.msra.mxu0 %v380
    %2504 = vmatprep.subr.mxu0 %v387
    %2505 = vmatpush1.msra.mxu0 %v386
    %2506 = vmatprep.subr.mxu0 %v393
    %2507 = vmatpush1.msra.mxu0 %v392
    %2508 = vmatprep.subr.mxu0 %v399
    %2509 = vmatpush1.msra.mxu0 %v398
    %2510 = vmatprep.subr.mxu0 %v405
    %2511 = vmatpush1.msra.mxu0 %v404
    %2512 = vmatprep.subr.mxu0 %v411
    %2513 = vmatpush1.msra.mxu0 %v410
    %2514 = vmatprep.subr.mxu0 %v417
    %2515 = vmatpush1.msra.mxu0 %v416
    %2516 = vmatprep.subr.mxu0 %v423
    %2517 = vmatpush1.msra.mxu0 %v422
    %2518 = vmatprep.subr.mxu0 %v429
    %2519 = vmatpush1.msra.mxu0 %v428
    %2520 = vmatprep.subr.mxu0 %v435
    %2521 = vmatpush1.msra.mxu0 %v434
    %2522 = vmatprep.subr.mxu0 %v441
    %2523 = vmatpush1.msra.mxu0 %v440
    %2524 = vmatprep.subr.mxu0 %v447
    %2525 = vmatpush1.msra.mxu0 %v446
    %2526 = vmatprep.subr.mxu0 %v453
    %2527 = vmatpush1.msra.mxu0 %v452
    %2528 = vmatprep.subr.mxu0 %v459
    %2529 = vmatpush1.msra.mxu0 %v458
    %2530 = vmatprep.subr.mxu0 %v465
    %2531 = vmatpush1.msra.mxu0 %v464
    %2532 = vmatprep.subr.mxu0 %v471
    %2533 = vmatpush1.msra.mxu0 %v470
    %2534 = vmatprep.subr.mxu0 %v477
    %2535 = vmatpush1.msra.mxu0 %v476
    %2536 = vmatprep.subr.mxu0 %v483
    %2537 = vmatpush1.msra.mxu0 %v482
    %2538 = vmatprep.mubr.f32.mxu0 %v1918
    %2539 = vmatmul.mubr.f32.gmra.mrb[0].mxu0 %v1917
    %v2540 = vpop.f32.mrb[0].mxu0
    %v2541 = vadd.f32 0.0, %v2540
    %v2542 = vpop.f32.mrb[0].mxu0
    %v2543 = vadd.f32 0.0, %v2542
    %2544 = vdwg.mxu0
    %2545 = vmatprep.subr.mxu0 %v299
    %2546 = vmatpush1.msra.mxu0 %v298
    %2547 = vmatprep.subr.mxu0 %v305
    %2548 = vmatpush1.msra.mxu0 %v304
    %2549 = vmatprep.subr.mxu0 %v311
    %2550 = vmatpush1.msra.mxu0 %v310
    %2551 = vmatprep.subr.mxu0 %v317
    %2552 = vmatpush1.msra.mxu0 %v316
    %2553 = vmatprep.subr.mxu0 %v323
    %2554 = vmatpush1.msra.mxu0 %v322
    %2555 = vmatprep.subr.mxu0 %v329
    %2556 = vmatpush1.msra.mxu0 %v328
    %2557 = vmatprep.subr.mxu0 %v335
    %2558 = vmatpush1.msra.mxu0 %v334
    %2559 = vmatprep.subr.mxu0 %v341
    %2560 = vmatpush1.msra.mxu0 %v340
    %2561 = vmatprep.subr.mxu0 %v347
    %2562 = vmatpush1.msra.mxu0 %v346
    %2563 = vmatprep.subr.mxu0 %v353
    %2564 = vmatpush1.msra.mxu0 %v352
    %2565 = vmatprep.subr.mxu0 %v359
    %2566 = vmatpush1.msra.mxu0 %v358
    %2567 = vmatprep.subr.mxu0 %v365
    %2568 = vmatpush1.msra.mxu0 %v364
    %2569 = vmatprep.subr.mxu0 %v371
    %2570 = vmatpush1.msra.mxu0 %v370
    %2571 = vmatprep.subr.mxu0 %v377
    %2572 = vmatpush1.msra.mxu0 %v376
    %2573 = vmatprep.subr.mxu0 %v383
    %2574 = vmatpush1.msra.mxu0 %v382
    %2575 = vmatprep.subr.mxu0 %v389
    %2576 = vmatpush1.msra.mxu0 %v388
    %2577 = vmatprep.subr.mxu0 %v395
    %2578 = vmatpush1.msra.mxu0 %v394
    %2579 = vmatprep.subr.mxu0 %v401
    %2580 = vmatpush1.msra.mxu0 %v400
    %2581 = vmatprep.subr.mxu0 %v407
    %2582 = vmatpush1.msra.mxu0 %v406
    %2583 = vmatprep.subr.mxu0 %v413
    %2584 = vmatpush1.msra.mxu0 %v412
    %2585 = vmatprep.subr.mxu0 %v419
    %2586 = vmatpush1.msra.mxu0 %v418
    %2587 = vmatprep.subr.mxu0 %v425
    %2588 = vmatpush1.msra.mxu0 %v424
    %2589 = vmatprep.subr.mxu0 %v431
    %2590 = vmatpush1.msra.mxu0 %v430
    %2591 = vmatprep.subr.mxu0 %v437
    %2592 = vmatpush1.msra.mxu0 %v436
    %2593 = vmatprep.subr.mxu0 %v443
    %2594 = vmatpush1.msra.mxu0 %v442
    %2595 = vmatprep.subr.mxu0 %v449
    %2596 = vmatpush1.msra.mxu0 %v448
    %2597 = vmatprep.subr.mxu0 %v455
    %2598 = vmatpush1.msra.mxu0 %v454
    %2599 = vmatprep.subr.mxu0 %v461
    %2600 = vmatpush1.msra.mxu0 %v460
    %2601 = vmatprep.subr.mxu0 %v467
    %2602 = vmatpush1.msra.mxu0 %v466
    %2603 = vmatprep.subr.mxu0 %v473
    %2604 = vmatpush1.msra.mxu0 %v472
    %2605 = vmatprep.subr.mxu0 %v479
    %2606 = vmatpush1.msra.mxu0 %v478
    %2607 = vmatprep.subr.mxu0 %v485
    %2608 = vmatpush1.msra.mxu0 %v484
    %2609 = vmatprep.mubr.f32.mxu0 %v1918
    %2610 = vmatmul.mubr.f32.gmra.mrb[0].mxu0 %v1917
    %v2611 = vpop.f32.mrb[0].mxu0
    %v2612 = vadd.f32 0.0, %v2611
    %v2613 = vpop.f32.mrb[0].mxu0
    %v2614 = vadd.f32 0.0, %v2613
    %2615 = vdwg.mxu0
    %v2616 = vadd.f32 %v2257, %v2470
    %v2617 = vadd.f32 %v2259, %v2472
    %v2618 = vxor.u32 %v2616, 2147483648
    %v2619 = vxor.u32 %v2617, 2147483648
    %v2620 = vmul.f32 %v2618, 1.442695
    %v2621 = vpow.pop %v2620
    %v2622 = vmul.f32 %v2619, 1.442695
    %v2623 = vpow.pop %v2622
    %v2624 = vadd.f32 %v2621, 1.0
    %v2625 = vadd.f32 %v2623, 1.0
    %v2626 = vrcp.pop %v2624
    %v2627 = vmul.f32 1.0, %v2626
    %v2628 = vrcp.pop %v2625
    %v2629 = vmul.f32 1.0, %v2628
    %v2630 = vadd.f32 %v2328, %v2541
    %v2631 = vadd.f32 %v2330, %v2543
    %v2632 = vxor.u32 %v2630, 2147483648
    %v2633 = vxor.u32 %v2631, 2147483648
    %v2634 = vmul.f32 %v2632, 1.442695
    %v2635 = vpow.pop %v2634
    %v2636 = vmul.f32 %v2633, 1.442695
    %v2637 = vpow.pop %v2636
    %v2638 = vadd.f32 %v2635, 1.0
    %v2639 = vadd.f32 %v2637, 1.0
    %v2640 = vrcp.pop %v2638
    %v2641 = vmul.f32 1.0, %v2640
    %v2642 = vrcp.pop %v2639
    %v2643 = vmul.f32 1.0, %v2642
    %v2644 = vadd.f32 %v2612, %v1896
    %v2645 = vadd.f32 %v2614, %v1900
    %v2646 = vmul.f32 %v2627, %v2644
    %v2647 = vmul.f32 %v2629, %v2645
    %v2648 = vadd.f32 %v2399, %v2646
    %v2649 = vadd.f32 %v2401, %v2647
    %v2650 = vtanh.pop %v2648
    %v2651 = vtanh.pop %v2649
    %v2652 = vsub.f32 1.0, %v2641
    %v2653 = vsub.f32 1.0, %v2643
    %v2654 = vmul.f32 %v2652, %v2650
    %v2655 = vmul.f32 %v2653, %v2651
    %v2656 = vmul.f32 %v2641, %v1917
    %v2657 = vmul.f32 %v2643, %v1918
    %v2658 = vadd.f32 %v2654, %v2656
    %v2659 = vadd.f32 %v2655, %v2657
    %vm2660 = vcmp.eq.s32.totalorder %v1132, 2
    %v2661 = vsel %vm2660, 1, 0
    %2662 = vset.pattern.permute.xlu0 0
    %2663 = vperm.xlu0 %2662, %v2661
    %v2664 = vpop.permute.xlu0 %2663
    %vm2665 = vcmp.eq.s32.totalorder %v2664, 1
    %v2666 = vsel %vm2665, %v2658, %v1925
    %v2667 = vsel %vm2665, %v2659, %v1926
    %v2668 = vld [vmem:[#allocation2 + $0x60] sm:$0xff]
    %v2669 = vld [vmem:[#allocation2 + $0x68] sm:$0xff]
    %v2670 = vld [vmem:[#allocation2 + $0x70] sm:$0xff]
    %v2671 = vld [vmem:[#allocation2 + $0x78] sm:$0xff]
    %v2672 = vld [vmem:[#allocation2 + $0x80] sm:$0xff]
    %v2673 = vld [vmem:[#allocation2 + $0x88] sm:$0xff]
    %2674 = vmatprep.subr.mxu0 %v103
    %2675 = vmatpush1.msra.mxu0 %v102
    %2676 = vmatprep.subr.mxu0 %v109
    %2677 = vmatpush1.msra.mxu0 %v108
    %2678 = vmatprep.subr.mxu0 %v115
    %2679 = vmatpush1.msra.mxu0 %v114
    %2680 = vmatprep.subr.mxu0 %v121
    %2681 = vmatpush1.msra.mxu0 %v120
    %2682 = vmatprep.subr.mxu0 %v127
    %2683 = vmatpush1.msra.mxu0 %v126
    %2684 = vmatprep.subr.mxu0 %v133
    %2685 = vmatpush1.msra.mxu0 %v132
    %2686 = vmatprep.subr.mxu0 %v139
    %2687 = vmatpush1.msra.mxu0 %v138
    %2688 = vmatprep.subr.mxu0 %v145
    %2689 = vmatpush1.msra.mxu0 %v144
    %2690 = vmatprep.subr.mxu0 %v151
    %2691 = vmatpush1.msra.mxu0 %v150
    %2692 = vmatprep.subr.mxu0 %v157
    %2693 = vmatpush1.msra.mxu0 %v156
    %2694 = vmatprep.subr.mxu0 %v163
    %2695 = vmatpush1.msra.mxu0 %v162
    %2696 = vmatprep.subr.mxu0 %v169
    %2697 = vmatpush1.msra.mxu0 %v168
    %2698 = vmatprep.subr.mxu0 %v175
    %2699 = vmatpush1.msra.mxu0 %v174
    %2700 = vmatprep.subr.mxu0 %v181
    %2701 = vmatpush1.msra.mxu0 %v180
    %2702 = vmatprep.subr.mxu0 %v187
    %2703 = vmatpush1.msra.mxu0 %v186
    %2704 = vmatprep.subr.mxu0 %v193
    %2705 = vmatpush1.msra.mxu0 %v192
    %2706 = vmatprep.subr.mxu0 %v199
    %2707 = vmatpush1.msra.mxu0 %v198
    %2708 = vmatprep.subr.mxu0 %v205
    %2709 = vmatpush1.msra.mxu0 %v204
    %2710 = vmatprep.subr.mxu0 %v211
    %2711 = vmatpush1.msra.mxu0 %v210
    %2712 = vmatprep.subr.mxu0 %v217
    %2713 = vmatpush1.msra.mxu0 %v216
    %2714 = vmatprep.subr.mxu0 %v223
    %2715 = vmatpush1.msra.mxu0 %v222
    %2716 = vmatprep.subr.mxu0 %v229
    %2717 = vmatpush1.msra.mxu0 %v228
    %2718 = vmatprep.subr.mxu0 %v235
    %2719 = vmatpush1.msra.mxu0 %v234
    %2720 = vmatprep.subr.mxu0 %v241
    %2721 = vmatpush1.msra.mxu0 %v240
    %2722 = vmatprep.subr.mxu0 %v247
    %2723 = vmatpush1.msra.mxu0 %v246
    %2724 = vmatprep.subr.mxu0 %v253
    %2725 = vmatpush1.msra.mxu0 %v252
    %2726 = vmatprep.subr.mxu0 %v259
    %2727 = vmatpush1.msra.mxu0 %v258
    %2728 = vmatprep.subr.mxu0 %v265
    %2729 = vmatpush1.msra.mxu0 %v264
    %2730 = vmatprep.subr.mxu0 %v271
    %2731 = vmatpush1.msra.mxu0 %v270
    %2732 = vmatprep.subr.mxu0 %v277
    %2733 = vmatpush1.msra.mxu0 %v276
    %2734 = vmatprep.subr.mxu0 %v283
    %2735 = vmatpush1.msra.mxu0 %v282
    %2736 = vmatprep.subr.mxu0 %v289
    %2737 = vmatpush1.msra.mxu0 %v288
    %2738 = vmatprep.mubr.f32.mxu0 %v2189
    %2739 = vmatmul.mubr.f32.gmra.mrb[0].mxu0 %v2188
    %v2740 = vpop.f32.mrb[0].mxu0
    %v2741 = vadd.f32 0.0, %v2740
    %v2742 = vpop.f32.mrb[0].mxu0
    %v2743 = vadd.f32 0.0, %v2742
    %2744 = vdwg.mxu0
    %2745 = vmatprep.subr.mxu0 %v105
    %2746 = vmatpush1.msra.mxu0 %v104
    %2747 = vmatprep.subr.mxu0 %v111
    %2748 = vmatpush1.msra.mxu0 %v110
    %2749 = vmatprep.subr.mxu0 %v117
    %2750 = vmatpush1.msra.mxu0 %v116
    %2751 = vmatprep.subr.mxu0 %v123
    %2752 = vmatpush1.msra.mxu0 %v122
    %2753 = vmatprep.subr.mxu0 %v129
    %2754 = vmatpush1.msra.mxu0 %v128
    %2755 = vmatprep.subr.mxu0 %v135
    %2756 = vmatpush1.msra.mxu0 %v134
    %2757 = vmatprep.subr.mxu0 %v141
    %2758 = vmatpush1.msra.mxu0 %v140
    %2759 = vmatprep.subr.mxu0 %v147
    %2760 = vmatpush1.msra.mxu0 %v146
    %2761 = vmatprep.subr.mxu0 %v153
    %2762 = vmatpush1.msra.mxu0 %v152
    %2763 = vmatprep.subr.mxu0 %v159
    %2764 = vmatpush1.msra.mxu0 %v158
    %2765 = vmatprep.subr.mxu0 %v165
    %2766 = vmatpush1.msra.mxu0 %v164
    %2767 = vmatprep.subr.mxu0 %v171
    %2768 = vmatpush1.msra.mxu0 %v170
    %2769 = vmatprep.subr.mxu0 %v177
    %2770 = vmatpush1.msra.mxu0 %v176
    %2771 = vmatprep.subr.mxu0 %v183
    %2772 = vmatpush1.msra.mxu0 %v182
    %2773 = vmatprep.subr.mxu0 %v189
    %2774 = vmatpush1.msra.mxu0 %v188
    %2775 = vmatprep.subr.mxu0 %v195
    %2776 = vmatpush1.msra.mxu0 %v194
    %2777 = vmatprep.subr.mxu0 %v201
    %2778 = vmatpush1.msra.mxu0 %v200
    %2779 = vmatprep.subr.mxu0 %v207
    %2780 = vmatpush1.msra.mxu0 %v206
    %2781 = vmatprep.subr.mxu0 %v213
    %2782 = vmatpush1.msra.mxu0 %v212
    %2783 = vmatprep.subr.mxu0 %v219
    %2784 = vmatpush1.msra.mxu0 %v218
    %2785 = vmatprep.subr.mxu0 %v225
    %2786 = vmatpush1.msra.mxu0 %v224
    %2787 = vmatprep.subr.mxu0 %v231
    %2788 = vmatpush1.msra.mxu0 %v230
    %2789 = vmatprep.subr.mxu0 %v237
    %2790 = vmatpush1.msra.mxu0 %v236
    %2791 = vmatprep.subr.mxu0 %v243
    %2792 = vmatpush1.msra.mxu0 %v242
    %2793 = vmatprep.subr.mxu0 %v249
    %2794 = vmatpush1.msra.mxu0 %v248
    %2795 = vmatprep.subr.mxu0 %v255
    %2796 = vmatpush1.msra.mxu0 %v254
    %2797 = vmatprep.subr.mxu0 %v261
    %2798 = vmatpush1.msra.mxu0 %v260
    %2799 = vmatprep.subr.mxu0 %v267
    %2800 = vmatpush1.msra.mxu0 %v266
    %2801 = vmatprep.subr.mxu0 %v273
    %2802 = vmatpush1.msra.mxu0 %v272
    %2803 = vmatprep.subr.mxu0 %v279
    %2804 = vmatpush1.msra.mxu0 %v278
    %2805 = vmatprep.subr.mxu0 %v285
    %2806 = vmatpush1.msra.mxu0 %v284
    %2807 = vmatprep.subr.mxu0 %v291
    %2808 = vmatpush1.msra.mxu0 %v290
    %2809 = vmatprep.mubr.f32.mxu0 %v2189
    %2810 = vmatmul.mubr.f32.gmra.mrb[0].mxu0 %v2188
    %v2811 = vpop.f32.mrb[0].mxu0
    %v2812 = vadd.f32 0.0, %v2811
    %v2813 = vpop.f32.mrb[0].mxu0
    %v2814 = vadd.f32 0.0, %v2813
    %2815 = vdwg.mxu0
    %2816 = vmatprep.subr.mxu0 %v107
    %2817 = vmatpush1.msra.mxu0 %v106
    %2818 = vmatprep.subr.mxu0 %v113
    %2819 = vmatpush1.msra.mxu0 %v112
    %2820 = vmatprep.subr.mxu0 %v119
    %2821 = vmatpush1.msra.mxu0 %v118
    %2822 = vmatprep.subr.mxu0 %v125
    %2823 = vmatpush1.msra.mxu0 %v124
    %2824 = vmatprep.subr.mxu0 %v131
    %2825 = vmatpush1.msra.mxu0 %v130
    %2826 = vmatprep.subr.mxu0 %v137
    %2827 = vmatpush1.msra.mxu0 %v136
    %2828 = vmatprep.subr.mxu0 %v143
    %2829 = vmatpush1.msra.mxu0 %v142
    %2830 = vmatprep.subr.mxu0 %v149
    %2831 = vmatpush1.msra.mxu0 %v148
    %2832 = vmatprep.subr.mxu0 %v155
    %2833 = vmatpush1.msra.mxu0 %v154
    %2834 = vmatprep.subr.mxu0 %v161
    %2835 = vmatpush1.msra.mxu0 %v160
    %2836 = vmatprep.subr.mxu0 %v167
    %2837 = vmatpush1.msra.mxu0 %v166
    %2838 = vmatprep.subr.mxu0 %v173
    %2839 = vmatpush1.msra.mxu0 %v172
    %2840 = vmatprep.subr.mxu0 %v179
    %2841 = vmatpush1.msra.mxu0 %v178
    %2842 = vmatprep.subr.mxu0 %v185
    %2843 = vmatpush1.msra.mxu0 %v184
    %2844 = vmatprep.subr.mxu0 %v191
    %2845 = vmatpush1.msra.mxu0 %v190
    %2846 = vmatprep.subr.mxu0 %v197
    %2847 = vmatpush1.msra.mxu0 %v196
    %2848 = vmatprep.subr.mxu0 %v203
    %2849 = vmatpush1.msra.mxu0 %v202
    %2850 = vmatprep.subr.mxu0 %v209
    %2851 = vmatpush1.msra.mxu0 %v208
    %2852 = vmatprep.subr.mxu0 %v215
    %2853 = vmatpush1.msra.mxu0 %v214
    %2854 = vmatprep.subr.mxu0 %v221
    %2855 = vmatpush1.msra.mxu0 %v220
    %2856 = vmatprep.subr.mxu0 %v227
    %2857 = vmatpush1.msra.mxu0 %v226
    %2858 = vmatprep.subr.mxu0 %v233
    %2859 = vmatpush1.msra.mxu0 %v232
    %2860 = vmatprep.subr.mxu0 %v239
    %2861 = vmatpush1.msra.mxu0 %v238
    %2862 = vmatprep.subr.mxu0 %v245
    %2863 = vmatpush1.msra.mxu0 %v244
    %2864 = vmatprep.subr.mxu0 %v251
    %2865 = vmatpush1.msra.mxu0 %v250
    %2866 = vmatprep.subr.mxu0 %v257
    %2867 = vmatpush1.msra.mxu0 %v256
    %2868 = vmatprep.subr.mxu0 %v263
    %2869 = vmatpush1.msra.mxu0 %v262
    %2870 = vmatprep.subr.mxu0 %v269
    %2871 = vmatpush1.msra.mxu0 %v268
    %2872 = vmatprep.subr.mxu0 %v275
    %2873 = vmatpush1.msra.mxu0 %v274
    %2874 = vmatprep.subr.mxu0 %v281
    %2875 = vmatpush1.msra.mxu0 %v280
    %2876 = vmatprep.subr.mxu0 %v287
    %2877 = vmatpush1.msra.mxu0 %v286
    %2878 = vmatprep.subr.mxu0 %v293
    %2879 = vmatpush1.msra.mxu0 %v292
    %2880 = vmatprep.mubr.f32.mxu0 %v2189
    %2881 = vmatmul.mubr.f32.gmra.mrb[0].mxu0 %v2188
    %v2882 = vpop.f32.mrb[0].mxu0
    %v2883 = vadd.f32 0.0, %v2882
    %v2884 = vpop.f32.mrb[0].mxu0
    %v2885 = vadd.f32 0.0, %v2884
    %2886 = vdwg.mxu0
    %v2887 = vadd.f32 %v2668, %v2741
    %v2888 = vadd.f32 %v2669, %v2743
    %v2889 = vxor.u32 %v2887, 2147483648
    %v2890 = vxor.u32 %v2888, 2147483648
    %v2891 = vmul.f32 %v2889, 1.442695
    %v2892 = vpow.pop %v2891
    %v2893 = vmul.f32 %v2890, 1.442695
    %v2894 = vpow.pop %v2893
    %v2895 = vadd.f32 %v2892, 1.0
    %v2896 = vadd.f32 %v2894, 1.0
    %v2897 = vrcp.pop %v2895
    %v2898 = vmul.f32 1.0, %v2897
    %v2899 = vrcp.pop %v2896
    %v2900 = vmul.f32 1.0, %v2899
    %v2901 = vadd.f32 %v2670, %v2812
    %v2902 = vadd.f32 %v2671, %v2814
    %v2903 = vxor.u32 %v2901, 2147483648
    %v2904 = vxor.u32 %v2902, 2147483648
    %v2905 = vmul.f32 %v2903, 1.442695
    %v2906 = vpow.pop %v2905
    %v2907 = vmul.f32 %v2904, 1.442695
    %v2908 = vpow.pop %v2907
    %v2909 = vadd.f32 %v2906, 1.0
    %v2910 = vadd.f32 %v2908, 1.0
    %v2911 = vrcp.pop %v2909
    %v2912 = vmul.f32 1.0, %v2911
    %v2913 = vrcp.pop %v2910
    %v2914 = vmul.f32 1.0, %v2913
    %v2915 = vadd.f32 %v2883, %v1384
    %v2916 = vadd.f32 %v2885, %v1388
    %v2917 = vmul.f32 %v2898, %v2915
    %v2918 = vmul.f32 %v2900, %v2916
    %v2919 = vadd.f32 %v2672, %v2917
    %v2920 = vadd.f32 %v2673, %v2918
    %v2921 = vtanh.pop %v2919
    %v2922 = vtanh.pop %v2920
    %v2923 = vsub.f32 1.0, %v2912
    %v2924 = vsub.f32 1.0, %v2914
    %v2925 = vmul.f32 %v2923, %v2921
    %v2926 = vmul.f32 %v2924, %v2922
    %v2927 = vmul.f32 %v2912, %v2188
    %v2928 = vmul.f32 %v2914, %v2189
    %v2929 = vadd.f32 %v2925, %v2927
    %v2930 = vadd.f32 %v2926, %v2928
    %2931 = vmatprep.subr.mxu0 %v489
    %2932 = vmatpush1.msra.mxu0 %v488
    %2933 = vmatprep.subr.mxu0 %v495
    %2934 = vmatpush1.msra.mxu0 %v494
    %2935 = vmatprep.subr.mxu0 %v501
    %2936 = vmatpush1.msra.mxu0 %v500
    %2937 = vmatprep.subr.mxu0 %v507
    %2938 = vmatpush1.msra.mxu0 %v506
    %2939 = vmatprep.subr.mxu0 %v513
    %2940 = vmatpush1.msra.mxu0 %v512
    %2941 = vmatprep.subr.mxu0 %v519
    %2942 = vmatpush1.msra.mxu0 %v518
    %2943 = vmatprep.subr.mxu0 %v525
    %2944 = vmatpush1.msra.mxu0 %v524
    %2945 = vmatprep.subr.mxu0 %v531
    %2946 = vmatpush1.msra.mxu0 %v530
    %2947 = vmatprep.subr.mxu0 %v537
    %2948 = vmatpush1.msra.mxu0 %v536
    %2949 = vmatprep.subr.mxu0 %v543
    %2950 = vmatpush1.msra.mxu0 %v542
    %2951 = vmatprep.subr.mxu0 %v549
    %2952 = vmatpush1.msra.mxu0 %v548
    %2953 = vmatprep.subr.mxu0 %v555
    %2954 = vmatpush1.msra.mxu0 %v554
    %2955 = vmatprep.subr.mxu0 %v561
    %2956 = vmatpush1.msra.mxu0 %v560
    %2957 = vmatprep.subr.mxu0 %v567
    %2958 = vmatpush1.msra.mxu0 %v566
    %2959 = vmatprep.subr.mxu0 %v573
    %2960 = vmatpush1.msra.mxu0 %v572
    %2961 = vmatprep.subr.mxu0 %v579
    %2962 = vmatpush1.msra.mxu0 %v578
    %2963 = vmatprep.subr.mxu0 %v585
    %2964 = vmatpush1.msra.mxu0 %v584
    %2965 = vmatprep.subr.mxu0 %v591
    %2966 = vmatpush1.msra.mxu0 %v590
    %2967 = vmatprep.subr.mxu0 %v597
    %2968 = vmatpush1.msra.mxu0 %v596
    %2969 = vmatprep.subr.mxu0 %v603
    %2970 = vmatpush1.msra.mxu0 %v602
    %2971 = vmatprep.subr.mxu0 %v609
    %2972 = vmatpush1.msra.mxu0 %v608
    %2973 = vmatprep.subr.mxu0 %v615
    %2974 = vmatpush1.msra.mxu0 %v614
    %2975 = vmatprep.subr.mxu0 %v621
    %2976 = vmatpush1.msra.mxu0 %v620
    %2977 = vmatprep.subr.mxu0 %v627
    %2978 = vmatpush1.msra.mxu0 %v626
    %2979 = vmatprep.subr.mxu0 %v633
    %2980 = vmatpush1.msra.mxu0 %v632
    %2981 = vmatprep.subr.mxu0 %v639
    %2982 = vmatpush1.msra.mxu0 %v638
    %2983 = vmatprep.subr.mxu0 %v645
    %2984 = vmatpush1.msra.mxu0 %v644
    %2985 = vmatprep.subr.mxu0 %v651
    %2986 = vmatpush1.msra.mxu0 %v650
    %2987 = vmatprep.subr.mxu0 %v657
    %2988 = vmatpush1.msra.mxu0 %v656
    %2989 = vmatprep.subr.mxu0 %v663
    %2990 = vmatpush1.msra.mxu0 %v662
    %2991 = vmatprep.subr.mxu0 %v669
    %2992 = vmatpush1.msra.mxu0 %v668
    %2993 = vmatprep.subr.mxu0 %v675
    %2994 = vmatpush1.msra.mxu0 %v674
    %2995 = vmatprep.mubr.f32.mxu0 %v2930
    %2996 = vmatmul.mubr.f32.gmra.mrb[0].mxu0 %v2929
    %v2997 = vpop.f32.mrb[0].mxu0
    %v2998 = vadd.f32 %v1411, %v2997
    %v2999 = vpop.f32.mrb[0].mxu0
    %v3000 = vadd.f32 %v1415, %v2999
    %3001 = vdwg.mxu0
    %3002 = vmatprep.subr.mxu0 %v491
    %3003 = vmatpush1.msra.mxu0 %v490
    %3004 = vmatprep.subr.mxu0 %v497
    %3005 = vmatpush1.msra.mxu0 %v496
    %3006 = vmatprep.subr.mxu0 %v503
    %3007 = vmatpush1.msra.mxu0 %v502
    %3008 = vmatprep.subr.mxu0 %v509
    %3009 = vmatpush1.msra.mxu0 %v508
    %3010 = vmatprep.subr.mxu0 %v515
    %3011 = vmatpush1.msra.mxu0 %v514
    %3012 = vmatprep.subr.mxu0 %v521
    %3013 = vmatpush1.msra.mxu0 %v520
    %3014 = vmatprep.subr.mxu0 %v527
    %3015 = vmatpush1.msra.mxu0 %v526
    %3016 = vmatprep.subr.mxu0 %v533
    %3017 = vmatpush1.msra.mxu0 %v532
    %3018 = vmatprep.subr.mxu0 %v539
    %3019 = vmatpush1.msra.mxu0 %v538
    %3020 = vmatprep.subr.mxu0 %v545
    %3021 = vmatpush1.msra.mxu0 %v544
    %3022 = vmatprep.subr.mxu0 %v551
    %3023 = vmatpush1.msra.mxu0 %v550
    %3024 = vmatprep.subr.mxu0 %v557
    %3025 = vmatpush1.msra.mxu0 %v556
    %3026 = vmatprep.subr.mxu0 %v563
    %3027 = vmatpush1.msra.mxu0 %v562
    %3028 = vmatprep.subr.mxu0 %v569
    %3029 = vmatpush1.msra.mxu0 %v568
    %3030 = vmatprep.subr.mxu0 %v575
    %3031 = vmatpush1.msra.mxu0 %v574
    %3032 = vmatprep.subr.mxu0 %v581
    %3033 = vmatpush1.msra.mxu0 %v580
    %3034 = vmatprep.subr.mxu0 %v587
    %3035 = vmatpush1.msra.mxu0 %v586
    %3036 = vmatprep.subr.mxu0 %v593
    %3037 = vmatpush1.msra.mxu0 %v592
    %3038 = vmatprep.subr.mxu0 %v599
    %3039 = vmatpush1.msra.mxu0 %v598
    %3040 = vmatprep.subr.mxu0 %v605
    %3041 = vmatpush1.msra.mxu0 %v604
    %3042 = vmatprep.subr.mxu0 %v611
    %3043 = vmatpush1.msra.mxu0 %v610
    %3044 = vmatprep.subr.mxu0 %v617
    %3045 = vmatpush1.msra.mxu0 %v616
    %3046 = vmatprep.subr.mxu0 %v623
    %3047 = vmatpush1.msra.mxu0 %v622
    %3048 = vmatprep.subr.mxu0 %v629
    %3049 = vmatpush1.msra.mxu0 %v628
    %3050 = vmatprep.subr.mxu0 %v635
    %3051 = vmatpush1.msra.mxu0 %v634
    %3052 = vmatprep.subr.mxu0 %v641
    %3053 = vmatpush1.msra.mxu0 %v640
    %3054 = vmatprep.subr.mxu0 %v647
    %3055 = vmatpush1.msra.mxu0 %v646
    %3056 = vmatprep.subr.mxu0 %v653
    %3057 = vmatpush1.msra.mxu0 %v652
    %3058 = vmatprep.subr.mxu0 %v659
    %3059 = vmatpush1.msra.mxu0 %v658
    %3060 = vmatprep.subr.mxu0 %v665
    %3061 = vmatpush1.msra.mxu0 %v664
    %3062 = vmatprep.subr.mxu0 %v671
    %3063 = vmatpush1.msra.mxu0 %v670
    %3064 = vmatprep.subr.mxu0 %v677
    %3065 = vmatpush1.msra.mxu0 %v676
    %3066 = vmatprep.mubr.f32.mxu0 %v2930
    %3067 = vmatmul.mubr.f32.gmra.mrb[0].mxu0 %v2929
    %v3068 = vpop.f32.mrb[0].mxu0
    %v3069 = vadd.f32 %v1419, %v3068
    %v3070 = vpop.f32.mrb[0].mxu0
    %v3071 = vadd.f32 %v1423, %v3070
    %3072 = vdwg.mxu0
    %3073 = vmatprep.subr.mxu0 %v493
    %3074 = vmatpush1.msra.mxu0 %v492
    %3075 = vmatprep.subr.mxu0 %v499
    %3076 = vmatpush1.msra.mxu0 %v498
    %3077 = vmatprep.subr.mxu0 %v505
    %3078 = vmatpush1.msra.mxu0 %v504
    %3079 = vmatprep.subr.mxu0 %v511
    %3080 = vmatpush1.msra.mxu0 %v510
    %3081 = vmatprep.subr.mxu0 %v517
    %3082 = vmatpush1.msra.mxu0 %v516
    %3083 = vmatprep.subr.mxu0 %v523
    %3084 = vmatpush1.msra.mxu0 %v522
    %3085 = vmatprep.subr.mxu0 %v529
    %3086 = vmatpush1.msra.mxu0 %v528
    %3087 = vmatprep.subr.mxu0 %v535
    %3088 = vmatpush1.msra.mxu0 %v534
    %3089 = vmatprep.subr.mxu0 %v541
    %3090 = vmatpush1.msra.mxu0 %v540
    %3091 = vmatprep.subr.mxu0 %v547
    %3092 = vmatpush1.msra.mxu0 %v546
    %3093 = vmatprep.subr.mxu0 %v553
    %3094 = vmatpush1.msra.mxu0 %v552
    %3095 = vmatprep.subr.mxu0 %v559
    %3096 = vmatpush1.msra.mxu0 %v558
    %3097 = vmatprep.subr.mxu0 %v565
    %3098 = vmatpush1.msra.mxu0 %v564
    %3099 = vmatprep.subr.mxu0 %v571
    %3100 = vmatpush1.msra.mxu0 %v570
    %3101 = vmatprep.subr.mxu0 %v577
    %3102 = vmatpush1.msra.mxu0 %v576
    %3103 = vmatprep.subr.mxu0 %v583
    %3104 = vmatpush1.msra.mxu0 %v582
    %3105 = vmatprep.subr.mxu0 %v589
    %3106 = vmatpush1.msra.mxu0 %v588
    %3107 = vmatprep.subr.mxu0 %v595
    %3108 = vmatpush1.msra.mxu0 %v594
    %3109 = vmatprep.subr.mxu0 %v601
    %3110 = vmatpush1.msra.mxu0 %v600
    %3111 = vmatprep.subr.mxu0 %v607
    %3112 = vmatpush1.msra.mxu0 %v606
    %3113 = vmatprep.subr.mxu0 %v613
    %3114 = vmatpush1.msra.mxu0 %v612
    %3115 = vmatprep.subr.mxu0 %v619
    %3116 = vmatpush1.msra.mxu0 %v618
    %3117 = vmatprep.subr.mxu0 %v625
    %3118 = vmatpush1.msra.mxu0 %v624
    %3119 = vmatprep.subr.mxu0 %v631
    %3120 = vmatpush1.msra.mxu0 %v630
    %3121 = vmatprep.subr.mxu0 %v637
    %3122 = vmatpush1.msra.mxu0 %v636
    %3123 = vmatprep.subr.mxu0 %v643
    %3124 = vmatpush1.msra.mxu0 %v642
    %3125 = vmatprep.subr.mxu0 %v649
    %3126 = vmatpush1.msra.mxu0 %v648
    %3127 = vmatprep.subr.mxu0 %v655
    %3128 = vmatpush1.msra.mxu0 %v654
    %3129 = vmatprep.subr.mxu0 %v661
    %3130 = vmatpush1.msra.mxu0 %v660
    %3131 = vmatprep.subr.mxu0 %v667
    %3132 = vmatpush1.msra.mxu0 %v666
    %3133 = vmatprep.subr.mxu0 %v673
    %3134 = vmatpush1.msra.mxu0 %v672
    %3135 = vmatprep.subr.mxu0 %v679
    %3136 = vmatpush1.msra.mxu0 %v678
    %3137 = vmatprep.mubr.f32.mxu0 %v2930
    %3138 = vmatmul.mubr.f32.gmra.mrb[0].mxu0 %v2929
    %v3139 = vpop.f32.mrb[0].mxu0
    %v3140 = vadd.f32 %v1427, %v3139
    %v3141 = vpop.f32.mrb[0].mxu0
    %v3142 = vadd.f32 %v1431, %v3141
    %3143 = vdwg.mxu0
    %3144 = vmatprep.subr.mxu0 %v295
    %3145 = vmatpush1.msra.mxu0 %v294
    %3146 = vmatprep.subr.mxu0 %v301
    %3147 = vmatpush1.msra.mxu0 %v300
    %3148 = vmatprep.subr.mxu0 %v307
    %3149 = vmatpush1.msra.mxu0 %v306
    %3150 = vmatprep.subr.mxu0 %v313
    %3151 = vmatpush1.msra.mxu0 %v312
    %3152 = vmatprep.subr.mxu0 %v319
    %3153 = vmatpush1.msra.mxu0 %v318
    %3154 = vmatprep.subr.mxu0 %v325
    %3155 = vmatpush1.msra.mxu0 %v324
    %3156 = vmatprep.subr.mxu0 %v331
    %3157 = vmatpush1.msra.mxu0 %v330
    %3158 = vmatprep.subr.mxu0 %v337
    %3159 = vmatpush1.msra.mxu0 %v336
    %3160 = vmatprep.subr.mxu0 %v343
    %3161 = vmatpush1.msra.mxu0 %v342
    %3162 = vmatprep.subr.mxu0 %v349
    %3163 = vmatpush1.msra.mxu0 %v348
    %3164 = vmatprep.subr.mxu0 %v355
    %3165 = vmatpush1.msra.mxu0 %v354
    %3166 = vmatprep.subr.mxu0 %v361
    %3167 = vmatpush1.msra.mxu0 %v360
    %3168 = vmatprep.subr.mxu0 %v367
    %3169 = vmatpush1.msra.mxu0 %v366
    %3170 = vmatprep.subr.mxu0 %v373
    %3171 = vmatpush1.msra.mxu0 %v372
    %3172 = vmatprep.subr.mxu0 %v379
    %3173 = vmatpush1.msra.mxu0 %v378
    %3174 = vmatprep.subr.mxu0 %v385
    %3175 = vmatpush1.msra.mxu0 %v384
    %3176 = vmatprep.subr.mxu0 %v391
    %3177 = vmatpush1.msra.mxu0 %v390
    %3178 = vmatprep.subr.mxu0 %v397
    %3179 = vmatpush1.msra.mxu0 %v396
    %3180 = vmatprep.subr.mxu0 %v403
    %3181 = vmatpush1.msra.mxu0 %v402
    %3182 = vmatprep.subr.mxu0 %v409
    %3183 = vmatpush1.msra.mxu0 %v408
    %3184 = vmatprep.subr.mxu0 %v415
    %3185 = vmatpush1.msra.mxu0 %v414
    %3186 = vmatprep.subr.mxu0 %v421
    %3187 = vmatpush1.msra.mxu0 %v420
    %3188 = vmatprep.subr.mxu0 %v427
    %3189 = vmatpush1.msra.mxu0 %v426
    %3190 = vmatprep.subr.mxu0 %v433
    %3191 = vmatpush1.msra.mxu0 %v432
    %3192 = vmatprep.subr.mxu0 %v439
    %3193 = vmatpush1.msra.mxu0 %v438
    %3194 = vmatprep.subr.mxu0 %v445
    %3195 = vmatpush1.msra.mxu0 %v444
    %3196 = vmatprep.subr.mxu0 %v451
    %3197 = vmatpush1.msra.mxu0 %v450
    %3198 = vmatprep.subr.mxu0 %v457
    %3199 = vmatpush1.msra.mxu0 %v456
    %3200 = vmatprep.subr.mxu0 %v463
    %3201 = vmatpush1.msra.mxu0 %v462
    %3202 = vmatprep.subr.mxu0 %v469
    %3203 = vmatpush1.msra.mxu0 %v468
    %3204 = vmatprep.subr.mxu0 %v475
    %3205 = vmatpush1.msra.mxu0 %v474
    %3206 = vmatprep.subr.mxu0 %v481
    %3207 = vmatpush1.msra.mxu0 %v480
    %3208 = vmatprep.mubr.f32.mxu0 %v2659
    %3209 = vmatmul.mubr.f32.gmra.mrb[0].mxu0 %v2658
    %v3210 = vpop.f32.mrb[0].mxu0
    %v3211 = vadd.f32 0.0, %v3210
    %v3212 = vpop.f32.mrb[0].mxu0
    %v3213 = vadd.f32 0.0, %v3212
    %3214 = vdwg.mxu0
    %3215 = vmatprep.subr.mxu0 %v297
    %3216 = vmatpush1.msra.mxu0 %v296
    %3217 = vmatprep.subr.mxu0 %v303
    %3218 = vmatpush1.msra.mxu0 %v302
    %3219 = vmatprep.subr.mxu0 %v309
    %3220 = vmatpush1.msra.mxu0 %v308
    %3221 = vmatprep.subr.mxu0 %v315
    %3222 = vmatpush1.msra.mxu0 %v314
    %3223 = vmatprep.subr.mxu0 %v321
    %3224 = vmatpush1.msra.mxu0 %v320
    %3225 = vmatprep.subr.mxu0 %v327
    %3226 = vmatpush1.msra.mxu0 %v326
    %3227 = vmatprep.subr.mxu0 %v333
    %3228 = vmatpush1.msra.mxu0 %v332
    %3229 = vmatprep.subr.mxu0 %v339
    %3230 = vmatpush1.msra.mxu0 %v338
    %3231 = vmatprep.subr.mxu0 %v345
    %3232 = vmatpush1.msra.mxu0 %v344
    %3233 = vmatprep.subr.mxu0 %v351
    %3234 = vmatpush1.msra.mxu0 %v350
    %3235 = vmatprep.subr.mxu0 %v357
    %3236 = vmatpush1.msra.mxu0 %v356
    %3237 = vmatprep.subr.mxu0 %v363
    %3238 = vmatpush1.msra.mxu0 %v362
    %3239 = vmatprep.subr.mxu0 %v369
    %3240 = vmatpush1.msra.mxu0 %v368
    %3241 = vmatprep.subr.mxu0 %v375
    %3242 = vmatpush1.msra.mxu0 %v374
    %3243 = vmatprep.subr.mxu0 %v381
    %3244 = vmatpush1.msra.mxu0 %v380
    %3245 = vmatprep.subr.mxu0 %v387
    %3246 = vmatpush1.msra.mxu0 %v386
    %3247 = vmatprep.subr.mxu0 %v393
    %3248 = vmatpush1.msra.mxu0 %v392
    %3249 = vmatprep.subr.mxu0 %v399
    %3250 = vmatpush1.msra.mxu0 %v398
    %3251 = vmatprep.subr.mxu0 %v405
    %3252 = vmatpush1.msra.mxu0 %v404
    %3253 = vmatprep.subr.mxu0 %v411
    %3254 = vmatpush1.msra.mxu0 %v410
    %3255 = vmatprep.subr.mxu0 %v417
    %3256 = vmatpush1.msra.mxu0 %v416
    %3257 = vmatprep.subr.mxu0 %v423
    %3258 = vmatpush1.msra.mxu0 %v422
    %3259 = vmatprep.subr.mxu0 %v429
    %3260 = vmatpush1.msra.mxu0 %v428
    %3261 = vmatprep.subr.mxu0 %v435
    %3262 = vmatpush1.msra.mxu0 %v434
    %3263 = vmatprep.subr.mxu0 %v441
    %3264 = vmatpush1.msra.mxu0 %v440
    %3265 = vmatprep.subr.mxu0 %v447
    %3266 = vmatpush1.msra.mxu0 %v446
    %3267 = vmatprep.subr.mxu0 %v453
    %3268 = vmatpush1.msra.mxu0 %v452
    %3269 = vmatprep.subr.mxu0 %v459
    %3270 = vmatpush1.msra.mxu0 %v458
    %3271 = vmatprep.subr.mxu0 %v465
    %3272 = vmatpush1.msra.mxu0 %v464
    %3273 = vmatprep.subr.mxu0 %v471
    %3274 = vmatpush1.msra.mxu0 %v470
    %3275 = vmatprep.subr.mxu0 %v477
    %3276 = vmatpush1.msra.mxu0 %v476
    %3277 = vmatprep.subr.mxu0 %v483
    %3278 = vmatpush1.msra.mxu0 %v482
    %3279 = vmatprep.mubr.f32.mxu0 %v2659
    %3280 = vmatmul.mubr.f32.gmra.mrb[0].mxu0 %v2658
    %v3281 = vpop.f32.mrb[0].mxu0
    %v3282 = vadd.f32 0.0, %v3281
    %v3283 = vpop.f32.mrb[0].mxu0
    %v3284 = vadd.f32 0.0, %v3283
    %3285 = vdwg.mxu0
    %3286 = vmatprep.subr.mxu0 %v299
    %3287 = vmatpush1.msra.mxu0 %v298
    %3288 = vmatprep.subr.mxu0 %v305
    %3289 = vmatpush1.msra.mxu0 %v304
    %3290 = vmatprep.subr.mxu0 %v311
    %3291 = vmatpush1.msra.mxu0 %v310
    %3292 = vmatprep.subr.mxu0 %v317
    %3293 = vmatpush1.msra.mxu0 %v316
    %3294 = vmatprep.subr.mxu0 %v323
    %3295 = vmatpush1.msra.mxu0 %v322
    %3296 = vmatprep.subr.mxu0 %v329
    %3297 = vmatpush1.msra.mxu0 %v328
    %3298 = vmatprep.subr.mxu0 %v335
    %3299 = vmatpush1.msra.mxu0 %v334
    %3300 = vmatprep.subr.mxu0 %v341
    %3301 = vmatpush1.msra.mxu0 %v340
    %3302 = vmatprep.subr.mxu0 %v347
    %3303 = vmatpush1.msra.mxu0 %v346
    %3304 = vmatprep.subr.mxu0 %v353
    %3305 = vmatpush1.msra.mxu0 %v352
    %3306 = vmatprep.subr.mxu0 %v359
    %3307 = vmatpush1.msra.mxu0 %v358
    %3308 = vmatprep.subr.mxu0 %v365
    %3309 = vmatpush1.msra.mxu0 %v364
    %3310 = vmatprep.subr.mxu0 %v371
    %3311 = vmatpush1.msra.mxu0 %v370
    %3312 = vmatprep.subr.mxu0 %v377
    %3313 = vmatpush1.msra.mxu0 %v376
    %3314 = vmatprep.subr.mxu0 %v383
    %3315 = vmatpush1.msra.mxu0 %v382
    %3316 = vmatprep.subr.mxu0 %v389
    %3317 = vmatpush1.msra.mxu0 %v388
    %3318 = vmatprep.subr.mxu0 %v395
    %3319 = vmatpush1.msra.mxu0 %v394
    %3320 = vmatprep.subr.mxu0 %v401
    %3321 = vmatpush1.msra.mxu0 %v400
    %3322 = vmatprep.subr.mxu0 %v407
    %3323 = vmatpush1.msra.mxu0 %v406
    %3324 = vmatprep.subr.mxu0 %v413
    %3325 = vmatpush1.msra.mxu0 %v412
    %3326 = vmatprep.subr.mxu0 %v419
    %3327 = vmatpush1.msra.mxu0 %v418
    %3328 = vmatprep.subr.mxu0 %v425
    %3329 = vmatpush1.msra.mxu0 %v424
    %3330 = vmatprep.subr.mxu0 %v431
    %3331 = vmatpush1.msra.mxu0 %v430
    %3332 = vmatprep.subr.mxu0 %v437
    %3333 = vmatpush1.msra.mxu0 %v436
    %3334 = vmatprep.subr.mxu0 %v443
    %3335 = vmatpush1.msra.mxu0 %v442
    %3336 = vmatprep.subr.mxu0 %v449
    %3337 = vmatpush1.msra.mxu0 %v448
    %3338 = vmatprep.subr.mxu0 %v455
    %3339 = vmatpush1.msra.mxu0 %v454
    %3340 = vmatprep.subr.mxu0 %v461
    %3341 = vmatpush1.msra.mxu0 %v460
    %3342 = vmatprep.subr.mxu0 %v467
    %3343 = vmatpush1.msra.mxu0 %v466
    %3344 = vmatprep.subr.mxu0 %v473
    %3345 = vmatpush1.msra.mxu0 %v472
    %3346 = vmatprep.subr.mxu0 %v479
    %3347 = vmatpush1.msra.mxu0 %v478
    %3348 = vmatprep.subr.mxu0 %v485
    %3349 = vmatpush1.msra.mxu0 %v484
    %3350 = vmatprep.mubr.f32.mxu0 %v2659
    %3351 = vmatmul.mubr.f32.gmra.mrb[0].mxu0 %v2658
    %v3352 = vpop.f32.mrb[0].mxu0
    %v3353 = vadd.f32 0.0, %v3352
    %v3354 = vpop.f32.mrb[0].mxu0
    %v3355 = vadd.f32 0.0, %v3354
    %3356 = vdwg.mxu0
    %v3357 = vadd.f32 %v2998, %v3211
    %v3358 = vadd.f32 %v3000, %v3213
    %v3359 = vxor.u32 %v3357, 2147483648
    %v3360 = vxor.u32 %v3358, 2147483648
    %v3361 = vmul.f32 %v3359, 1.442695
    %v3362 = vpow.pop %v3361
    %v3363 = vmul.f32 %v3360, 1.442695
    %v3364 = vpow.pop %v3363
    %v3365 = vadd.f32 %v3362, 1.0
    %v3366 = vadd.f32 %v3364, 1.0
    %v3367 = vrcp.pop %v3365
    %v3368 = vmul.f32 1.0, %v3367
    %v3369 = vrcp.pop %v3366
    %v3370 = vmul.f32 1.0, %v3369
    %v3371 = vadd.f32 %v3069, %v3282
    %v3372 = vadd.f32 %v3071, %v3284
    %v3373 = vxor.u32 %v3371, 2147483648
    %v3374 = vxor.u32 %v3372, 2147483648
    %v3375 = vmul.f32 %v3373, 1.442695
    %v3376 = vpow.pop %v3375
    %v3377 = vmul.f32 %v3374, 1.442695
    %v3378 = vpow.pop %v3377
    %v3379 = vadd.f32 %v3376, 1.0
    %v3380 = vadd.f32 %v3378, 1.0
    %v3381 = vrcp.pop %v3379
    %v3382 = vmul.f32 1.0, %v3381
    %v3383 = vrcp.pop %v3380
    %v3384 = vmul.f32 1.0, %v3383
    %v3385 = vadd.f32 %v3353, %v1896
    %v3386 = vadd.f32 %v3355, %v1900
    %v3387 = vmul.f32 %v3368, %v3385
    %v3388 = vmul.f32 %v3370, %v3386
    %v3389 = vadd.f32 %v3140, %v3387
    %v3390 = vadd.f32 %v3142, %v3388
    %v3391 = vtanh.pop %v3389
    %v3392 = vtanh.pop %v3390
    %v3393 = vsub.f32 1.0, %v3382
    %v3394 = vsub.f32 1.0, %v3384
    %v3395 = vmul.f32 %v3393, %v3391
    %v3396 = vmul.f32 %v3394, %v3392
    %v3397 = vmul.f32 %v3382, %v2658
    %v3398 = vmul.f32 %v3384, %v2659
    %v3399 = vadd.f32 %v3395, %v3397
    %v3400 = vadd.f32 %v3396, %v3398
    %vm3401 = vcmp.eq.s32.totalorder %v1132, 3
    %v3402 = vsel %vm3401, 1, 0
    %3403 = vset.pattern.permute.xlu0 0
    %3404 = vperm.xlu0 %3403, %v3402
    %v3405 = vpop.permute.xlu0 %3404
    %vm3406 = vcmp.eq.s32.totalorder %v3405, 1
    %v3407 = vsel %vm3406, %v3399, %v2666
    %v3408 = vsel %vm3406, %v3400, %v2667
    %v3409 = vld [vmem:[#allocation2 + $0x90] sm:$0xff]
    %v3410 = vld [vmem:[#allocation2 + $0x98] sm:$0xff]
    %v3411 = vld [vmem:[#allocation2 + $0xa0] sm:$0xff]
    %v3412 = vld [vmem:[#allocation2 + $0xa8] sm:$0xff]
    %v3413 = vld [vmem:[#allocation2 + $0xb0] sm:$0xff]
    %v3414 = vld [vmem:[#allocation2 + $0xb8] sm:$0xff]
    %3415 = vmatprep.subr.mxu0 %v103
    %3416 = vmatpush1.msra.mxu0 %v102
    %3417 = vmatprep.subr.mxu0 %v109
    %3418 = vmatpush1.msra.mxu0 %v108
    %3419 = vmatprep.subr.mxu0 %v115
    %3420 = vmatpush1.msra.mxu0 %v114
    %3421 = vmatprep.subr.mxu0 %v121
    %3422 = vmatpush1.msra.mxu0 %v120
    %3423 = vmatprep.subr.mxu0 %v127
    %3424 = vmatpush1.msra.mxu0 %v126
    %3425 = vmatprep.subr.mxu0 %v133
    %3426 = vmatpush1.msra.mxu0 %v132
    %3427 = vmatprep.subr.mxu0 %v139
    %3428 = vmatpush1.msra.mxu0 %v138
    %3429 = vmatprep.subr.mxu0 %v145
    %3430 = vmatpush1.msra.mxu0 %v144
    %3431 = vmatprep.subr.mxu0 %v151
    %3432 = vmatpush1.msra.mxu0 %v150
    %3433 = vmatprep.subr.mxu0 %v157
    %3434 = vmatpush1.msra.mxu0 %v156
    %3435 = vmatprep.subr.mxu0 %v163
    %3436 = vmatpush1.msra.mxu0 %v162
    %3437 = vmatprep.subr.mxu0 %v169
    %3438 = vmatpush1.msra.mxu0 %v168
    %3439 = vmatprep.subr.mxu0 %v175
    %3440 = vmatpush1.msra.mxu0 %v174
    %3441 = vmatprep.subr.mxu0 %v181
    %3442 = vmatpush1.msra.mxu0 %v180
    %3443 = vmatprep.subr.mxu0 %v187
    %3444 = vmatpush1.msra.mxu0 %v186
    %3445 = vmatprep.subr.mxu0 %v193
    %3446 = vmatpush1.msra.mxu0 %v192
    %3447 = vmatprep.subr.mxu0 %v199
    %3448 = vmatpush1.msra.mxu0 %v198
    %3449 = vmatprep.subr.mxu0 %v205
    %3450 = vmatpush1.msra.mxu0 %v204
    %3451 = vmatprep.subr.mxu0 %v211
    %3452 = vmatpush1.msra.mxu0 %v210
    %3453 = vmatprep.subr.mxu0 %v217
    %3454 = vmatpush1.msra.mxu0 %v216
    %3455 = vmatprep.subr.mxu0 %v223
    %3456 = vmatpush1.msra.mxu0 %v222
    %3457 = vmatprep.subr.mxu0 %v229
    %3458 = vmatpush1.msra.mxu0 %v228
    %3459 = vmatprep.subr.mxu0 %v235
    %3460 = vmatpush1.msra.mxu0 %v234
    %3461 = vmatprep.subr.mxu0 %v241
    %3462 = vmatpush1.msra.mxu0 %v240
    %3463 = vmatprep.subr.mxu0 %v247
    %3464 = vmatpush1.msra.mxu0 %v246
    %3465 = vmatprep.subr.mxu0 %v253
    %3466 = vmatpush1.msra.mxu0 %v252
    %3467 = vmatprep.subr.mxu0 %v259
    %3468 = vmatpush1.msra.mxu0 %v258
    %3469 = vmatprep.subr.mxu0 %v265
    %3470 = vmatpush1.msra.mxu0 %v264
    %3471 = vmatprep.subr.mxu0 %v271
    %3472 = vmatpush1.msra.mxu0 %v270
    %3473 = vmatprep.subr.mxu0 %v277
    %3474 = vmatpush1.msra.mxu0 %v276
    %3475 = vmatprep.subr.mxu0 %v283
    %3476 = vmatpush1.msra.mxu0 %v282
    %3477 = vmatprep.subr.mxu0 %v289
    %3478 = vmatpush1.msra.mxu0 %v288
    %3479 = vmatprep.mubr.f32.mxu0 %v2930
    %3480 = vmatmul.mubr.f32.gmra.mrb[0].mxu0 %v2929
    %v3481 = vpop.f32.mrb[0].mxu0
    %v3482 = vadd.f32 0.0, %v3481
    %v3483 = vpop.f32.mrb[0].mxu0
    %v3484 = vadd.f32 0.0, %v3483
    %3485 = vdwg.mxu0
    %3486 = vmatprep.subr.mxu0 %v105
    %3487 = vmatpush1.msra.mxu0 %v104
    %3488 = vmatprep.subr.mxu0 %v111
    %3489 = vmatpush1.msra.mxu0 %v110
    %3490 = vmatprep.subr.mxu0 %v117
    %3491 = vmatpush1.msra.mxu0 %v116
    %3492 = vmatprep.subr.mxu0 %v123
    %3493 = vmatpush1.msra.mxu0 %v122
    %3494 = vmatprep.subr.mxu0 %v129
    %3495 = vmatpush1.msra.mxu0 %v128
    %3496 = vmatprep.subr.mxu0 %v135
    %3497 = vmatpush1.msra.mxu0 %v134
    %3498 = vmatprep.subr.mxu0 %v141
    %3499 = vmatpush1.msra.mxu0 %v140
    %3500 = vmatprep.subr.mxu0 %v147
    %3501 = vmatpush1.msra.mxu0 %v146
    %3502 = vmatprep.subr.mxu0 %v153
    %3503 = vmatpush1.msra.mxu0 %v152
    %3504 = vmatprep.subr.mxu0 %v159
    %3505 = vmatpush1.msra.mxu0 %v158
    %3506 = vmatprep.subr.mxu0 %v165
    %3507 = vmatpush1.msra.mxu0 %v164
    %3508 = vmatprep.subr.mxu0 %v171
    %3509 = vmatpush1.msra.mxu0 %v170
    %3510 = vmatprep.subr.mxu0 %v177
    %3511 = vmatpush1.msra.mxu0 %v176
    %3512 = vmatprep.subr.mxu0 %v183
    %3513 = vmatpush1.msra.mxu0 %v182
    %3514 = vmatprep.subr.mxu0 %v189
    %3515 = vmatpush1.msra.mxu0 %v188
    %3516 = vmatprep.subr.mxu0 %v195
    %3517 = vmatpush1.msra.mxu0 %v194
    %3518 = vmatprep.subr.mxu0 %v201
    %3519 = vmatpush1.msra.mxu0 %v200
    %3520 = vmatprep.subr.mxu0 %v207
    %3521 = vmatpush1.msra.mxu0 %v206
    %3522 = vmatprep.subr.mxu0 %v213
    %3523 = vmatpush1.msra.mxu0 %v212
    %3524 = vmatprep.subr.mxu0 %v219
    %3525 = vmatpush1.msra.mxu0 %v218
    %3526 = vmatprep.subr.mxu0 %v225
    %3527 = vmatpush1.msra.mxu0 %v224
    %3528 = vmatprep.subr.mxu0 %v231
    %3529 = vmatpush1.msra.mxu0 %v230
    %3530 = vmatprep.subr.mxu0 %v237
    %3531 = vmatpush1.msra.mxu0 %v236
    %3532 = vmatprep.subr.mxu0 %v243
    %3533 = vmatpush1.msra.mxu0 %v242
    %3534 = vmatprep.subr.mxu0 %v249
    %3535 = vmatpush1.msra.mxu0 %v248
    %3536 = vmatprep.subr.mxu0 %v255
    %3537 = vmatpush1.msra.mxu0 %v254
    %3538 = vmatprep.subr.mxu0 %v261
    %3539 = vmatpush1.msra.mxu0 %v260
    %3540 = vmatprep.subr.mxu0 %v267
    %3541 = vmatpush1.msra.mxu0 %v266
    %3542 = vmatprep.subr.mxu0 %v273
    %3543 = vmatpush1.msra.mxu0 %v272
    %3544 = vmatprep.subr.mxu0 %v279
    %3545 = vmatpush1.msra.mxu0 %v278
    %3546 = vmatprep.subr.mxu0 %v285
    %3547 = vmatpush1.msra.mxu0 %v284
    %3548 = vmatprep.subr.mxu0 %v291
    %3549 = vmatpush1.msra.mxu0 %v290
    %3550 = vmatprep.mubr.f32.mxu0 %v2930
    %3551 = vmatmul.mubr.f32.gmra.mrb[0].mxu0 %v2929
    %v3552 = vpop.f32.mrb[0].mxu0
    %v3553 = vadd.f32 0.0, %v3552
    %v3554 = vpop.f32.mrb[0].mxu0
    %v3555 = vadd.f32 0.0, %v3554
    %3556 = vdwg.mxu0
    %3557 = vmatprep.subr.mxu0 %v107
    %3558 = vmatpush1.msra.mxu0 %v106
    %3559 = vmatprep.subr.mxu0 %v113
    %3560 = vmatpush1.msra.mxu0 %v112
    %3561 = vmatprep.subr.mxu0 %v119
    %3562 = vmatpush1.msra.mxu0 %v118
    %3563 = vmatprep.subr.mxu0 %v125
    %3564 = vmatpush1.msra.mxu0 %v124
    %3565 = vmatprep.subr.mxu0 %v131
    %3566 = vmatpush1.msra.mxu0 %v130
    %3567 = vmatprep.subr.mxu0 %v137
    %3568 = vmatpush1.msra.mxu0 %v136
    %3569 = vmatprep.subr.mxu0 %v143
    %3570 = vmatpush1.msra.mxu0 %v142
    %3571 = vmatprep.subr.mxu0 %v149
    %3572 = vmatpush1.msra.mxu0 %v148
    %3573 = vmatprep.subr.mxu0 %v155
    %3574 = vmatpush1.msra.mxu0 %v154
    %3575 = vmatprep.subr.mxu0 %v161
    %3576 = vmatpush1.msra.mxu0 %v160
    %3577 = vmatprep.subr.mxu0 %v167
    %3578 = vmatpush1.msra.mxu0 %v166
    %3579 = vmatprep.subr.mxu0 %v173
    %3580 = vmatpush1.msra.mxu0 %v172
    %3581 = vmatprep.subr.mxu0 %v179
    %3582 = vmatpush1.msra.mxu0 %v178
    %3583 = vmatprep.subr.mxu0 %v185
    %3584 = vmatpush1.msra.mxu0 %v184
    %3585 = vmatprep.subr.mxu0 %v191
    %3586 = vmatpush1.msra.mxu0 %v190
    %3587 = vmatprep.subr.mxu0 %v197
    %3588 = vmatpush1.msra.mxu0 %v196
    %3589 = vmatprep.subr.mxu0 %v203
    %3590 = vmatpush1.msra.mxu0 %v202
    %3591 = vmatprep.subr.mxu0 %v209
    %3592 = vmatpush1.msra.mxu0 %v208
    %3593 = vmatprep.subr.mxu0 %v215
    %3594 = vmatpush1.msra.mxu0 %v214
    %3595 = vmatprep.subr.mxu0 %v221
    %3596 = vmatpush1.msra.mxu0 %v220
    %3597 = vmatprep.subr.mxu0 %v227
    %3598 = vmatpush1.msra.mxu0 %v226
    %3599 = vmatprep.subr.mxu0 %v233
    %3600 = vmatpush1.msra.mxu0 %v232
    %3601 = vmatprep.subr.mxu0 %v239
    %3602 = vmatpush1.msra.mxu0 %v238
    %3603 = vmatprep.subr.mxu0 %v245
    %3604 = vmatpush1.msra.mxu0 %v244
    %3605 = vmatprep.subr.mxu0 %v251
    %3606 = vmatpush1.msra.mxu0 %v250
    %3607 = vmatprep.subr.mxu0 %v257
    %3608 = vmatpush1.msra.mxu0 %v256
    %3609 = vmatprep.subr.mxu0 %v263
    %3610 = vmatpush1.msra.mxu0 %v262
    %3611 = vmatprep.subr.mxu0 %v269
    %3612 = vmatpush1.msra.mxu0 %v268
    %3613 = vmatprep.subr.mxu0 %v275
    %3614 = vmatpush1.msra.mxu0 %v274
    %3615 = vmatprep.subr.mxu0 %v281
    %3616 = vmatpush1.msra.mxu0 %v280
    %3617 = vmatprep.subr.mxu0 %v287
    %3618 = vmatpush1.msra.mxu0 %v286
    %3619 = vmatprep.subr.mxu0 %v293
    %3620 = vmatpush1.msra.mxu0 %v292
    %3621 = vmatprep.mubr.f32.mxu0 %v2930
    %3622 = vmatmul.mubr.f32.gmra.mrb[0].mxu0 %v2929
    %v3623 = vpop.f32.mrb[0].mxu0
    %v3624 = vadd.f32 0.0, %v3623
    %v3625 = vpop.f32.mrb[0].mxu0
    %v3626 = vadd.f32 0.0, %v3625
    %3627 = vdwg.mxu0
    %v3628 = vadd.f32 %v3409, %v3482
    %v3629 = vadd.f32 %v3410, %v3484
    %v3630 = vxor.u32 %v3628, 2147483648
    %v3631 = vxor.u32 %v3629, 2147483648
    %v3632 = vmul.f32 %v3630, 1.442695
    %v3633 = vpow.pop %v3632
    %v3634 = vmul.f32 %v3631, 1.442695
    %v3635 = vpow.pop %v3634
    %v3636 = vadd.f32 %v3633, 1.0
    %v3637 = vadd.f32 %v3635, 1.0
    %v3638 = vrcp.pop %v3636
    %v3639 = vmul.f32 1.0, %v3638
    %v3640 = vrcp.pop %v3637
    %v3641 = vmul.f32 1.0, %v3640
    %v3642 = vadd.f32 %v3411, %v3553
    %v3643 = vadd.f32 %v3412, %v3555
    %v3644 = vxor.u32 %v3642, 2147483648
    %v3645 = vxor.u32 %v3643, 2147483648
    %v3646 = vmul.f32 %v3644, 1.442695
    %v3647 = vpow.pop %v3646
    %v3648 = vmul.f32 %v3645, 1.442695
    %v3649 = vpow.pop %v3648
    %v3650 = vadd.f32 %v3647, 1.0
    %v3651 = vadd.f32 %v3649, 1.0
    %v3652 = vrcp.pop %v3650
    %v3653 = vmul.f32 1.0, %v3652
    %v3654 = vrcp.pop %v3651
    %v3655 = vmul.f32 1.0, %v3654
    %v3656 = vadd.f32 %v3624, %v1384
    %v3657 = vadd.f32 %v3626, %v1388
    %v3658 = vmul.f32 %v3639, %v3656
    %v3659 = vmul.f32 %v3641, %v3657
    %v3660 = vadd.f32 %v3413, %v3658
    %v3661 = vadd.f32 %v3414, %v3659
    %v3662 = vtanh.pop %v3660
    %v3663 = vtanh.pop %v3661
    %v3664 = vsub.f32 1.0, %v3653
    %v3665 = vsub.f32 1.0, %v3655
    %v3666 = vmul.f32 %v3664, %v3662
    %v3667 = vmul.f32 %v3665, %v3663
    %v3668 = vmul.f32 %v3653, %v2929
    %v3669 = vmul.f32 %v3655, %v2930
    %v3670 = vadd.f32 %v3666, %v3668
    %v3671 = vadd.f32 %v3667, %v3669
    %3672 = vmatprep.subr.mxu0 %v489
    %3673 = vmatpush1.msra.mxu0 %v488
    %3674 = vmatprep.subr.mxu0 %v495
    %3675 = vmatpush1.msra.mxu0 %v494
    %3676 = vmatprep.subr.mxu0 %v501
    %3677 = vmatpush1.msra.mxu0 %v500
    %3678 = vmatprep.subr.mxu0 %v507
    %3679 = vmatpush1.msra.mxu0 %v506
    %3680 = vmatprep.subr.mxu0 %v513
    %3681 = vmatpush1.msra.mxu0 %v512
    %3682 = vmatprep.subr.mxu0 %v519
    %3683 = vmatpush1.msra.mxu0 %v518
    %3684 = vmatprep.subr.mxu0 %v525
    %3685 = vmatpush1.msra.mxu0 %v524
    %3686 = vmatprep.subr.mxu0 %v531
    %3687 = vmatpush1.msra.mxu0 %v530
    %3688 = vmatprep.subr.mxu0 %v537
    %3689 = vmatpush1.msra.mxu0 %v536
    %3690 = vmatprep.subr.mxu0 %v543
    %3691 = vmatpush1.msra.mxu0 %v542
    %3692 = vmatprep.subr.mxu0 %v549
    %3693 = vmatpush1.msra.mxu0 %v548
    %3694 = vmatprep.subr.mxu0 %v555
    %3695 = vmatpush1.msra.mxu0 %v554
    %3696 = vmatprep.subr.mxu0 %v561
    %3697 = vmatpush1.msra.mxu0 %v560
    %3698 = vmatprep.subr.mxu0 %v567
    %3699 = vmatpush1.msra.mxu0 %v566
    %3700 = vmatprep.subr.mxu0 %v573
    %3701 = vmatpush1.msra.mxu0 %v572
    %3702 = vmatprep.subr.mxu0 %v579
    %3703 = vmatpush1.msra.mxu0 %v578
    %3704 = vmatprep.subr.mxu0 %v585
    %3705 = vmatpush1.msra.mxu0 %v584
    %3706 = vmatprep.subr.mxu0 %v591
    %3707 = vmatpush1.msra.mxu0 %v590
    %3708 = vmatprep.subr.mxu0 %v597
    %3709 = vmatpush1.msra.mxu0 %v596
    %3710 = vmatprep.subr.mxu0 %v603
    %3711 = vmatpush1.msra.mxu0 %v602
    %3712 = vmatprep.subr.mxu0 %v609
    %3713 = vmatpush1.msra.mxu0 %v608
    %3714 = vmatprep.subr.mxu0 %v615
    %3715 = vmatpush1.msra.mxu0 %v614
    %3716 = vmatprep.subr.mxu0 %v621
    %3717 = vmatpush1.msra.mxu0 %v620
    %3718 = vmatprep.subr.mxu0 %v627
    %3719 = vmatpush1.msra.mxu0 %v626
    %3720 = vmatprep.subr.mxu0 %v633
    %3721 = vmatpush1.msra.mxu0 %v632
    %3722 = vmatprep.subr.mxu0 %v639
    %3723 = vmatpush1.msra.mxu0 %v638
    %3724 = vmatprep.subr.mxu0 %v645
    %3725 = vmatpush1.msra.mxu0 %v644
    %3726 = vmatprep.subr.mxu0 %v651
    %3727 = vmatpush1.msra.mxu0 %v650
    %3728 = vmatprep.subr.mxu0 %v657
    %3729 = vmatpush1.msra.mxu0 %v656
    %3730 = vmatprep.subr.mxu0 %v663
    %3731 = vmatpush1.msra.mxu0 %v662
    %3732 = vmatprep.subr.mxu0 %v669
    %3733 = vmatpush1.msra.mxu0 %v668
    %3734 = vmatprep.subr.mxu0 %v675
    %3735 = vmatpush1.msra.mxu0 %v674
    %3736 = vmatprep.mubr.f32.mxu0 %v3671
    %3737 = vmatmul.mubr.f32.gmra.mrb[0].mxu0 %v3670
    %v3738 = vpop.f32.mrb[0].mxu0
    %v3739 = vadd.f32 %v1411, %v3738
    %v3740 = vpop.f32.mrb[0].mxu0
    %v3741 = vadd.f32 %v1415, %v3740
    %3742 = vdwg.mxu0
    %3743 = vmatprep.subr.mxu0 %v491
    %3744 = vmatpush1.msra.mxu0 %v490
    %3745 = vmatprep.subr.mxu0 %v497
    %3746 = vmatpush1.msra.mxu0 %v496
    %3747 = vmatprep.subr.mxu0 %v503
    %3748 = vmatpush1.msra.mxu0 %v502
    %3749 = vmatprep.subr.mxu0 %v509
    %3750 = vmatpush1.msra.mxu0 %v508
    %3751 = vmatprep.subr.mxu0 %v515
    %3752 = vmatpush1.msra.mxu0 %v514
    %3753 = vmatprep.subr.mxu0 %v521
    %3754 = vmatpush1.msra.mxu0 %v520
    %3755 = vmatprep.subr.mxu0 %v527
    %3756 = vmatpush1.msra.mxu0 %v526
    %3757 = vmatprep.subr.mxu0 %v533
    %3758 = vmatpush1.msra.mxu0 %v532
    %3759 = vmatprep.subr.mxu0 %v539
    %3760 = vmatpush1.msra.mxu0 %v538
    %3761 = vmatprep.subr.mxu0 %v545
    %3762 = vmatpush1.msra.mxu0 %v544
    %3763 = vmatprep.subr.mxu0 %v551
    %3764 = vmatpush1.msra.mxu0 %v550
    %3765 = vmatprep.subr.mxu0 %v557
    %3766 = vmatpush1.msra.mxu0 %v556
    %3767 = vmatprep.subr.mxu0 %v563
    %3768 = vmatpush1.msra.mxu0 %v562
    %3769 = vmatprep.subr.mxu0 %v569
    %3770 = vmatpush1.msra.mxu0 %v568
    %3771 = vmatprep.subr.mxu0 %v575
    %3772 = vmatpush1.msra.mxu0 %v574
    %3773 = vmatprep.subr.mxu0 %v581
    %3774 = vmatpush1.msra.mxu0 %v580
    %3775 = vmatprep.subr.mxu0 %v587
    %3776 = vmatpush1.msra.mxu0 %v586
    %3777 = vmatprep.subr.mxu0 %v593
    %3778 = vmatpush1.msra.mxu0 %v592
    %3779 = vmatprep.subr.mxu0 %v599
    %3780 = vmatpush1.msra.mxu0 %v598
    %3781 = vmatprep.subr.mxu0 %v605
    %3782 = vmatpush1.msra.mxu0 %v604
    %3783 = vmatprep.subr.mxu0 %v611
    %3784 = vmatpush1.msra.mxu0 %v610
    %3785 = vmatprep.subr.mxu0 %v617
    %3786 = vmatpush1.msra.mxu0 %v616
    %3787 = vmatprep.subr.mxu0 %v623
    %3788 = vmatpush1.msra.mxu0 %v622
    %3789 = vmatprep.subr.mxu0 %v629
    %3790 = vmatpush1.msra.mxu0 %v628
    %3791 = vmatprep.subr.mxu0 %v635
    %3792 = vmatpush1.msra.mxu0 %v634
    %3793 = vmatprep.subr.mxu0 %v641
    %3794 = vmatpush1.msra.mxu0 %v640
    %3795 = vmatprep.subr.mxu0 %v647
    %3796 = vmatpush1.msra.mxu0 %v646
    %3797 = vmatprep.subr.mxu0 %v653
    %3798 = vmatpush1.msra.mxu0 %v652
    %3799 = vmatprep.subr.mxu0 %v659
    %3800 = vmatpush1.msra.mxu0 %v658
    %3801 = vmatprep.subr.mxu0 %v665
    %3802 = vmatpush1.msra.mxu0 %v664
    %3803 = vmatprep.subr.mxu0 %v671
    %3804 = vmatpush1.msra.mxu0 %v670
    %3805 = vmatprep.subr.mxu0 %v677
    %3806 = vmatpush1.msra.mxu0 %v676
    %3807 = vmatprep.mubr.f32.mxu0 %v3671
    %3808 = vmatmul.mubr.f32.gmra.mrb[0].mxu0 %v3670
    %v3809 = vpop.f32.mrb[0].mxu0
    %v3810 = vadd.f32 %v1419, %v3809
    %v3811 = vpop.f32.mrb[0].mxu0
    %v3812 = vadd.f32 %v1423, %v3811
    %3813 = vdwg.mxu0
    %3814 = vmatprep.subr.mxu0 %v493
    %3815 = vmatpush1.msra.mxu0 %v492
    %3816 = vmatprep.subr.mxu0 %v499
    %3817 = vmatpush1.msra.mxu0 %v498
    %3818 = vmatprep.subr.mxu0 %v505
    %3819 = vmatpush1.msra.mxu0 %v504
    %3820 = vmatprep.subr.mxu0 %v511
    %3821 = vmatpush1.msra.mxu0 %v510
    %3822 = vmatprep.subr.mxu0 %v517
    %3823 = vmatpush1.msra.mxu0 %v516
    %3824 = vmatprep.subr.mxu0 %v523
    %3825 = vmatpush1.msra.mxu0 %v522
    %3826 = vmatprep.subr.mxu0 %v529
    %3827 = vmatpush1.msra.mxu0 %v528
    %3828 = vmatprep.subr.mxu0 %v535
    %3829 = vmatpush1.msra.mxu0 %v534
    %3830 = vmatprep.subr.mxu0 %v541
    %3831 = vmatpush1.msra.mxu0 %v540
    %3832 = vmatprep.subr.mxu0 %v547
    %3833 = vmatpush1.msra.mxu0 %v546
    %3834 = vmatprep.subr.mxu0 %v553
    %3835 = vmatpush1.msra.mxu0 %v552
    %3836 = vmatprep.subr.mxu0 %v559
    %3837 = vmatpush1.msra.mxu0 %v558
    %3838 = vmatprep.subr.mxu0 %v565
    %3839 = vmatpush1.msra.mxu0 %v564
    %3840 = vmatprep.subr.mxu0 %v571
    %3841 = vmatpush1.msra.mxu0 %v570
    %3842 = vmatprep.subr.mxu0 %v577
    %3843 = vmatpush1.msra.mxu0 %v576
    %3844 = vmatprep.subr.mxu0 %v583
    %3845 = vmatpush1.msra.mxu0 %v582
    %3846 = vmatprep.subr.mxu0 %v589
    %3847 = vmatpush1.msra.mxu0 %v588
    %3848 = vmatprep.subr.mxu0 %v595
    %3849 = vmatpush1.msra.mxu0 %v594
    %3850 = vmatprep.subr.mxu0 %v601
    %3851 = vmatpush1.msra.mxu0 %v600
    %3852 = vmatprep.subr.mxu0 %v607
    %3853 = vmatpush1.msra.mxu0 %v606
    %3854 = vmatprep.subr.mxu0 %v613
    %3855 = vmatpush1.msra.mxu0 %v612
    %3856 = vmatprep.subr.mxu0 %v619
    %3857 = vmatpush1.msra.mxu0 %v618
    %3858 = vmatprep.subr.mxu0 %v625
    %3859 = vmatpush1.msra.mxu0 %v624
    %3860 = vmatprep.subr.mxu0 %v631
    %3861 = vmatpush1.msra.mxu0 %v630
    %3862 = vmatprep.subr.mxu0 %v637
    %3863 = vmatpush1.msra.mxu0 %v636
    %3864 = vmatprep.subr.mxu0 %v643
    %3865 = vmatpush1.msra.mxu0 %v642
    %3866 = vmatprep.subr.mxu0 %v649
    %3867 = vmatpush1.msra.mxu0 %v648
    %3868 = vmatprep.subr.mxu0 %v655
    %3869 = vmatpush1.msra.mxu0 %v654
    %3870 = vmatprep.subr.mxu0 %v661
    %3871 = vmatpush1.msra.mxu0 %v660
    %3872 = vmatprep.subr.mxu0 %v667
    %3873 = vmatpush1.msra.mxu0 %v666
    %3874 = vmatprep.subr.mxu0 %v673
    %3875 = vmatpush1.msra.mxu0 %v672
    %3876 = vmatprep.subr.mxu0 %v679
    %3877 = vmatpush1.msra.mxu0 %v678
    %3878 = vmatprep.mubr.f32.mxu0 %v3671
    %3879 = vmatmul.mubr.f32.gmra.mrb[0].mxu0 %v3670
    %v3880 = vpop.f32.mrb[0].mxu0
    %v3881 = vadd.f32 %v1427, %v3880
    %v3882 = vpop.f32.mrb[0].mxu0
    %v3883 = vadd.f32 %v1431, %v3882
    %3884 = vdwg.mxu0
    %3885 = vmatprep.subr.mxu0 %v295
    %3886 = vmatpush1.msra.mxu0 %v294
    %3887 = vmatprep.subr.mxu0 %v301
    %3888 = vmatpush1.msra.mxu0 %v300
    %3889 = vmatprep.subr.mxu0 %v307
    %3890 = vmatpush1.msra.mxu0 %v306
    %3891 = vmatprep.subr.mxu0 %v313
    %3892 = vmatpush1.msra.mxu0 %v312
    %3893 = vmatprep.subr.mxu0 %v319
    %3894 = vmatpush1.msra.mxu0 %v318
    %3895 = vmatprep.subr.mxu0 %v325
    %3896 = vmatpush1.msra.mxu0 %v324
    %3897 = vmatprep.subr.mxu0 %v331
    %3898 = vmatpush1.msra.mxu0 %v330
    %3899 = vmatprep.subr.mxu0 %v337
    %3900 = vmatpush1.msra.mxu0 %v336
    %3901 = vmatprep.subr.mxu0 %v343
    %3902 = vmatpush1.msra.mxu0 %v342
    %3903 = vmatprep.subr.mxu0 %v349
    %3904 = vmatpush1.msra.mxu0 %v348
    %3905 = vmatprep.subr.mxu0 %v355
    %3906 = vmatpush1.msra.mxu0 %v354
    %3907 = vmatprep.subr.mxu0 %v361
    %3908 = vmatpush1.msra.mxu0 %v360
    %3909 = vmatprep.subr.mxu0 %v367
    %3910 = vmatpush1.msra.mxu0 %v366
    %3911 = vmatprep.subr.mxu0 %v373
    %3912 = vmatpush1.msra.mxu0 %v372
    %3913 = vmatprep.subr.mxu0 %v379
    %3914 = vmatpush1.msra.mxu0 %v378
    %3915 = vmatprep.subr.mxu0 %v385
    %3916 = vmatpush1.msra.mxu0 %v384
    %3917 = vmatprep.subr.mxu0 %v391
    %3918 = vmatpush1.msra.mxu0 %v390
    %3919 = vmatprep.subr.mxu0 %v397
    %3920 = vmatpush1.msra.mxu0 %v396
    %3921 = vmatprep.subr.mxu0 %v403
    %3922 = vmatpush1.msra.mxu0 %v402
    %3923 = vmatprep.subr.mxu0 %v409
    %3924 = vmatpush1.msra.mxu0 %v408
    %3925 = vmatprep.subr.mxu0 %v415
    %3926 = vmatpush1.msra.mxu0 %v414
    %3927 = vmatprep.subr.mxu0 %v421
    %3928 = vmatpush1.msra.mxu0 %v420
    %3929 = vmatprep.subr.mxu0 %v427
    %3930 = vmatpush1.msra.mxu0 %v426
    %3931 = vmatprep.subr.mxu0 %v433
    %3932 = vmatpush1.msra.mxu0 %v432
    %3933 = vmatprep.subr.mxu0 %v439
    %3934 = vmatpush1.msra.mxu0 %v438
    %3935 = vmatprep.subr.mxu0 %v445
    %3936 = vmatpush1.msra.mxu0 %v444
    %3937 = vmatprep.subr.mxu0 %v451
    %3938 = vmatpush1.msra.mxu0 %v450
    %3939 = vmatprep.subr.mxu0 %v457
    %3940 = vmatpush1.msra.mxu0 %v456
    %3941 = vmatprep.subr.mxu0 %v463
    %3942 = vmatpush1.msra.mxu0 %v462
    %3943 = vmatprep.subr.mxu0 %v469
    %3944 = vmatpush1.msra.mxu0 %v468
    %3945 = vmatprep.subr.mxu0 %v475
    %3946 = vmatpush1.msra.mxu0 %v474
    %3947 = vmatprep.subr.mxu0 %v481
    %3948 = vmatpush1.msra.mxu0 %v480
    %3949 = vmatprep.mubr.f32.mxu0 %v3400
    %3950 = vmatmul.mubr.f32.gmra.mrb[0].mxu0 %v3399
    %v3951 = vpop.f32.mrb[0].mxu0
    %v3952 = vadd.f32 0.0, %v3951
    %v3953 = vpop.f32.mrb[0].mxu0
    %v3954 = vadd.f32 0.0, %v3953
    %3955 = vdwg.mxu0
    %3956 = vmatprep.subr.mxu0 %v297
    %3957 = vmatpush1.msra.mxu0 %v296
    %3958 = vmatprep.subr.mxu0 %v303
    %3959 = vmatpush1.msra.mxu0 %v302
    %3960 = vmatprep.subr.mxu0 %v309
    %3961 = vmatpush1.msra.mxu0 %v308
    %3962 = vmatprep.subr.mxu0 %v315
    %3963 = vmatpush1.msra.mxu0 %v314
    %3964 = vmatprep.subr.mxu0 %v321
    %3965 = vmatpush1.msra.mxu0 %v320
    %3966 = vmatprep.subr.mxu0 %v327
    %3967 = vmatpush1.msra.mxu0 %v326
    %3968 = vmatprep.subr.mxu0 %v333
    %3969 = vmatpush1.msra.mxu0 %v332
    %3970 = vmatprep.subr.mxu0 %v339
    %3971 = vmatpush1.msra.mxu0 %v338
    %3972 = vmatprep.subr.mxu0 %v345
    %3973 = vmatpush1.msra.mxu0 %v344
    %3974 = vmatprep.subr.mxu0 %v351
    %3975 = vmatpush1.msra.mxu0 %v350
    %3976 = vmatprep.subr.mxu0 %v357
    %3977 = vmatpush1.msra.mxu0 %v356
    %3978 = vmatprep.subr.mxu0 %v363
    %3979 = vmatpush1.msra.mxu0 %v362
    %3980 = vmatprep.subr.mxu0 %v369
    %3981 = vmatpush1.msra.mxu0 %v368
    %3982 = vmatprep.subr.mxu0 %v375
    %3983 = vmatpush1.msra.mxu0 %v374
    %3984 = vmatprep.subr.mxu0 %v381
    %3985 = vmatpush1.msra.mxu0 %v380
    %3986 = vmatprep.subr.mxu0 %v387
    %3987 = vmatpush1.msra.mxu0 %v386
    %3988 = vmatprep.subr.mxu0 %v393
    %3989 = vmatpush1.msra.mxu0 %v392
    %3990 = vmatprep.subr.mxu0 %v399
    %3991 = vmatpush1.msra.mxu0 %v398
    %3992 = vmatprep.subr.mxu0 %v405
    %3993 = vmatpush1.msra.mxu0 %v404
    %3994 = vmatprep.subr.mxu0 %v411
    %3995 = vmatpush1.msra.mxu0 %v410
    %3996 = vmatprep.subr.mxu0 %v417
    %3997 = vmatpush1.msra.mxu0 %v416
    %3998 = vmatprep.subr.mxu0 %v423
    %3999 = vmatpush1.msra.mxu0 %v422
    %4000 = vmatprep.subr.mxu0 %v429
    %4001 = vmatpush1.msra.mxu0 %v428
    %4002 = vmatprep.subr.mxu0 %v435
    %4003 = vmatpush1.msra.mxu0 %v434
    %4004 = vmatprep.subr.mxu0 %v441
    %4005 = vmatpush1.msra.mxu0 %v440
    %4006 = vmatprep.subr.mxu0 %v447
    %4007 = vmatpush1.msra.mxu0 %v446
    %4008 = vmatprep.subr.mxu0 %v453
    %4009 = vmatpush1.msra.mxu0 %v452
    %4010 = vmatprep.subr.mxu0 %v459
    %4011 = vmatpush1.msra.mxu0 %v458
    %4012 = vmatprep.subr.mxu0 %v465
    %4013 = vmatpush1.msra.mxu0 %v464
    %4014 = vmatprep.subr.mxu0 %v471
    %4015 = vmatpush1.msra.mxu0 %v470
    %4016 = vmatprep.subr.mxu0 %v477
    %4017 = vmatpush1.msra.mxu0 %v476
    %4018 = vmatprep.subr.mxu0 %v483
    %4019 = vmatpush1.msra.mxu0 %v482
    %4020 = vmatprep.mubr.f32.mxu0 %v3400
    %4021 = vmatmul.mubr.f32.gmra.mrb[0].mxu0 %v3399
    %v4022 = vpop.f32.mrb[0].mxu0
    %v4023 = vadd.f32 0.0, %v4022
    %v4024 = vpop.f32.mrb[0].mxu0
    %v4025 = vadd.f32 0.0, %v4024
    %4026 = vdwg.mxu0
    %4027 = vmatprep.subr.mxu0 %v299
    %4028 = vmatpush1.msra.mxu0 %v298
    %4029 = vmatprep.subr.mxu0 %v305
    %4030 = vmatpush1.msra.mxu0 %v304
    %4031 = vmatprep.subr.mxu0 %v311
    %4032 = vmatpush1.msra.mxu0 %v310
    %4033 = vmatprep.subr.mxu0 %v317
    %4034 = vmatpush1.msra.mxu0 %v316
    %4035 = vmatprep.subr.mxu0 %v323
    %4036 = vmatpush1.msra.mxu0 %v322
    %4037 = vmatprep.subr.mxu0 %v329
    %4038 = vmatpush1.msra.mxu0 %v328
    %4039 = vmatprep.subr.mxu0 %v335
    %4040 = vmatpush1.msra.mxu0 %v334
    %4041 = vmatprep.subr.mxu0 %v341
    %4042 = vmatpush1.msra.mxu0 %v340
    %4043 = vmatprep.subr.mxu0 %v347
    %4044 = vmatpush1.msra.mxu0 %v346
    %4045 = vmatprep.subr.mxu0 %v353
    %4046 = vmatpush1.msra.mxu0 %v352
    %4047 = vmatprep.subr.mxu0 %v359
    %4048 = vmatpush1.msra.mxu0 %v358
    %4049 = vmatprep.subr.mxu0 %v365
    %4050 = vmatpush1.msra.mxu0 %v364
    %4051 = vmatprep.subr.mxu0 %v371
    %4052 = vmatpush1.msra.mxu0 %v370
    %4053 = vmatprep.subr.mxu0 %v377
    %4054 = vmatpush1.msra.mxu0 %v376
    %4055 = vmatprep.subr.mxu0 %v383
    %4056 = vmatpush1.msra.mxu0 %v382
    %4057 = vmatprep.subr.mxu0 %v389
    %4058 = vmatpush1.msra.mxu0 %v388
    %4059 = vmatprep.subr.mxu0 %v395
    %4060 = vmatpush1.msra.mxu0 %v394
    %4061 = vmatprep.subr.mxu0 %v401
    %4062 = vmatpush1.msra.mxu0 %v400
    %4063 = vmatprep.subr.mxu0 %v407
    %4064 = vmatpush1.msra.mxu0 %v406
    %4065 = vmatprep.subr.mxu0 %v413
    %4066 = vmatpush1.msra.mxu0 %v412
    %4067 = vmatprep.subr.mxu0 %v419
    %4068 = vmatpush1.msra.mxu0 %v418
    %4069 = vmatprep.subr.mxu0 %v425
    %4070 = vmatpush1.msra.mxu0 %v424
    %4071 = vmatprep.subr.mxu0 %v431
    %4072 = vmatpush1.msra.mxu0 %v430
    %4073 = vmatprep.subr.mxu0 %v437
    %4074 = vmatpush1.msra.mxu0 %v436
    %4075 = vmatprep.subr.mxu0 %v443
    %4076 = vmatpush1.msra.mxu0 %v442
    %4077 = vmatprep.subr.mxu0 %v449
    %4078 = vmatpush1.msra.mxu0 %v448
    %4079 = vmatprep.subr.mxu0 %v455
    %4080 = vmatpush1.msra.mxu0 %v454
    %4081 = vmatprep.subr.mxu0 %v461
    %4082 = vmatpush1.msra.mxu0 %v460
    %4083 = vmatprep.subr.mxu0 %v467
    %4084 = vmatpush1.msra.mxu0 %v466
    %4085 = vmatprep.subr.mxu0 %v473
    %4086 = vmatpush1.msra.mxu0 %v472
    %4087 = vmatprep.subr.mxu0 %v479
    %4088 = vmatpush1.msra.mxu0 %v478
    %4089 = vmatprep.subr.mxu0 %v485
    %4090 = vmatpush1.msra.mxu0 %v484
    %4091 = vmatprep.mubr.f32.mxu0 %v3400
    %4092 = vmatmul.mubr.f32.gmra.mrb[0].mxu0 %v3399
    %v4093 = vpop.f32.mrb[0].mxu0
    %v4094 = vadd.f32 0.0, %v4093
    %v4095 = vpop.f32.mrb[0].mxu0
    %v4096 = vadd.f32 0.0, %v4095
    %4097 = vdwg.mxu0
    %v4098 = vadd.f32 %v3739, %v3952
    %v4099 = vadd.f32 %v3741, %v3954
    %v4100 = vxor.u32 %v4098, 2147483648
    %v4101 = vxor.u32 %v4099, 2147483648
    %v4102 = vmul.f32 %v4100, 1.442695
    %v4103 = vpow.pop %v4102
    %v4104 = vmul.f32 %v4101, 1.442695
    %v4105 = vpow.pop %v4104
    %v4106 = vadd.f32 %v4103, 1.0
    %v4107 = vadd.f32 %v4105, 1.0
    %v4108 = vrcp.pop %v4106
    %v4109 = vmul.f32 1.0, %v4108
    %v4110 = vrcp.pop %v4107
    %v4111 = vmul.f32 1.0, %v4110
    %v4112 = vadd.f32 %v3810, %v4023
    %v4113 = vadd.f32 %v3812, %v4025
    %v4114 = vxor.u32 %v4112, 2147483648
    %v4115 = vxor.u32 %v4113, 2147483648
    %v4116 = vmul.f32 %v4114, 1.442695
    %v4117 = vpow.pop %v4116
    %v4118 = vmul.f32 %v4115, 1.442695
    %v4119 = vpow.pop %v4118
    %v4120 = vadd.f32 %v4117, 1.0
    %v4121 = vadd.f32 %v4119, 1.0
    %v4122 = vrcp.pop %v4120
    %v4123 = vmul.f32 1.0, %v4122
    %v4124 = vrcp.pop %v4121
    %v4125 = vmul.f32 1.0, %v4124
    %v4126 = vadd.f32 %v4094, %v1896
    %v4127 = vadd.f32 %v4096, %v1900
    %v4128 = vmul.f32 %v4109, %v4126
    %v4129 = vmul.f32 %v4111, %v4127
    %v4130 = vadd.f32 %v3881, %v4128
    %v4131 = vadd.f32 %v3883, %v4129
    %v4132 = vtanh.pop %v4130
    %v4133 = vtanh.pop %v4131
    %v4134 = vsub.f32 1.0, %v4123
    %v4135 = vsub.f32 1.0, %v4125
    %v4136 = vmul.f32 %v4134, %v4132
    %v4137 = vmul.f32 %v4135, %v4133
    %v4138 = vmul.f32 %v4123, %v3399
    %v4139 = vmul.f32 %v4125, %v3400
    %v4140 = vadd.f32 %v4136, %v4138
    %v4141 = vadd.f32 %v4137, %v4139
    %vm4142 = vcmp.eq.s32.totalorder %v1132, 4
    %v4143 = vsel %vm4142, 1, 0
    %4144 = vset.pattern.permute.xlu0 0
    %4145 = vperm.xlu0 %4144, %v4143
    %v4146 = vpop.permute.xlu0 %4145
    %vm4147 = vcmp.eq.s32.totalorder %v4146, 1
    %v4148 = vsel %vm4147, %v4140, %v3407
    %v4149 = vsel %vm4147, %v4141, %v3408
    %v4150 = vld [vmem:[#allocation2 + $0xc0] sm:$0xff]
    %v4151 = vld [vmem:[#allocation2 + $0xc8] sm:$0xff]
    %v4152 = vld [vmem:[#allocation2 + $0xd0] sm:$0xff]
    %v4153 = vld [vmem:[#allocation2 + $0xd8] sm:$0xff]
    %v4154 = vld [vmem:[#allocation2 + $0xe0] sm:$0xff]
    %v4155 = vld [vmem:[#allocation2 + $0xe8] sm:$0xff]
    %4156 = vmatprep.subr.mxu0 %v103
    %4157 = vmatpush1.msra.mxu0 %v102
    %4158 = vmatprep.subr.mxu0 %v109
    %4159 = vmatpush1.msra.mxu0 %v108
    %4160 = vmatprep.subr.mxu0 %v115
    %4161 = vmatpush1.msra.mxu0 %v114
    %4162 = vmatprep.subr.mxu0 %v121
    %4163 = vmatpush1.msra.mxu0 %v120
    %4164 = vmatprep.subr.mxu0 %v127
    %4165 = vmatpush1.msra.mxu0 %v126
    %4166 = vmatprep.subr.mxu0 %v133
    %4167 = vmatpush1.msra.mxu0 %v132
    %4168 = vmatprep.subr.mxu0 %v139
    %4169 = vmatpush1.msra.mxu0 %v138
    %4170 = vmatprep.subr.mxu0 %v145
    %4171 = vmatpush1.msra.mxu0 %v144
    %4172 = vmatprep.subr.mxu0 %v151
    %4173 = vmatpush1.msra.mxu0 %v150
    %4174 = vmatprep.subr.mxu0 %v157
    %4175 = vmatpush1.msra.mxu0 %v156
    %4176 = vmatprep.subr.mxu0 %v163
    %4177 = vmatpush1.msra.mxu0 %v162
    %4178 = vmatprep.subr.mxu0 %v169
    %4179 = vmatpush1.msra.mxu0 %v168
    %4180 = vmatprep.subr.mxu0 %v175
    %4181 = vmatpush1.msra.mxu0 %v174
    %4182 = vmatprep.subr.mxu0 %v181
    %4183 = vmatpush1.msra.mxu0 %v180
    %4184 = vmatprep.subr.mxu0 %v187
    %4185 = vmatpush1.msra.mxu0 %v186
    %4186 = vmatprep.subr.mxu0 %v193
    %4187 = vmatpush1.msra.mxu0 %v192
    %4188 = vmatprep.subr.mxu0 %v199
    %4189 = vmatpush1.msra.mxu0 %v198
    %4190 = vmatprep.subr.mxu0 %v205
    %4191 = vmatpush1.msra.mxu0 %v204
    %4192 = vmatprep.subr.mxu0 %v211
    %4193 = vmatpush1.msra.mxu0 %v210
    %4194 = vmatprep.subr.mxu0 %v217
    %4195 = vmatpush1.msra.mxu0 %v216
    %4196 = vmatprep.subr.mxu0 %v223
    %4197 = vmatpush1.msra.mxu0 %v222
    %4198 = vmatprep.subr.mxu0 %v229
    %4199 = vmatpush1.msra.mxu0 %v228
    %4200 = vmatprep.subr.mxu0 %v235
    %4201 = vmatpush1.msra.mxu0 %v234
    %4202 = vmatprep.subr.mxu0 %v241
    %4203 = vmatpush1.msra.mxu0 %v240
    %4204 = vmatprep.subr.mxu0 %v247
    %4205 = vmatpush1.msra.mxu0 %v246
    %4206 = vmatprep.subr.mxu0 %v253
    %4207 = vmatpush1.msra.mxu0 %v252
    %4208 = vmatprep.subr.mxu0 %v259
    %4209 = vmatpush1.msra.mxu0 %v258
    %4210 = vmatprep.subr.mxu0 %v265
    %4211 = vmatpush1.msra.mxu0 %v264
    %4212 = vmatprep.subr.mxu0 %v271
    %4213 = vmatpush1.msra.mxu0 %v270
    %4214 = vmatprep.subr.mxu0 %v277
    %4215 = vmatpush1.msra.mxu0 %v276
    %4216 = vmatprep.subr.mxu0 %v283
    %4217 = vmatpush1.msra.mxu0 %v282
    %4218 = vmatprep.subr.mxu0 %v289
    %4219 = vmatpush1.msra.mxu0 %v288
    %4220 = vmatprep.mubr.f32.mxu0 %v3671
    %4221 = vmatmul.mubr.f32.gmra.mrb[0].mxu0 %v3670
    %v4222 = vpop.f32.mrb[0].mxu0
    %v4223 = vadd.f32 0.0, %v4222
    %v4224 = vpop.f32.mrb[0].mxu0
    %v4225 = vadd.f32 0.0, %v4224
    %4226 = vdwg.mxu0
    %4227 = vmatprep.subr.mxu0 %v105
    %4228 = vmatpush1.msra.mxu0 %v104
    %4229 = vmatprep.subr.mxu0 %v111
    %4230 = vmatpush1.msra.mxu0 %v110
    %4231 = vmatprep.subr.mxu0 %v117
    %4232 = vmatpush1.msra.mxu0 %v116
    %4233 = vmatprep.subr.mxu0 %v123
    %4234 = vmatpush1.msra.mxu0 %v122
    %4235 = vmatprep.subr.mxu0 %v129
    %4236 = vmatpush1.msra.mxu0 %v128
    %4237 = vmatprep.subr.mxu0 %v135
    %4238 = vmatpush1.msra.mxu0 %v134
    %4239 = vmatprep.subr.mxu0 %v141
    %4240 = vmatpush1.msra.mxu0 %v140
    %4241 = vmatprep.subr.mxu0 %v147
    %4242 = vmatpush1.msra.mxu0 %v146
    %4243 = vmatprep.subr.mxu0 %v153
    %4244 = vmatpush1.msra.mxu0 %v152
    %4245 = vmatprep.subr.mxu0 %v159
    %4246 = vmatpush1.msra.mxu0 %v158
    %4247 = vmatprep.subr.mxu0 %v165
    %4248 = vmatpush1.msra.mxu0 %v164
    %4249 = vmatprep.subr.mxu0 %v171
    %4250 = vmatpush1.msra.mxu0 %v170
    %4251 = vmatprep.subr.mxu0 %v177
    %4252 = vmatpush1.msra.mxu0 %v176
    %4253 = vmatprep.subr.mxu0 %v183
    %4254 = vmatpush1.msra.mxu0 %v182
    %4255 = vmatprep.subr.mxu0 %v189
    %4256 = vmatpush1.msra.mxu0 %v188
    %4257 = vmatprep.subr.mxu0 %v195
    %4258 = vmatpush1.msra.mxu0 %v194
    %4259 = vmatprep.subr.mxu0 %v201
    %4260 = vmatpush1.msra.mxu0 %v200
    %4261 = vmatprep.subr.mxu0 %v207
    %4262 = vmatpush1.msra.mxu0 %v206
    %4263 = vmatprep.subr.mxu0 %v213
    %4264 = vmatpush1.msra.mxu0 %v212
    %4265 = vmatprep.subr.mxu0 %v219
    %4266 = vmatpush1.msra.mxu0 %v218
    %4267 = vmatprep.subr.mxu0 %v225
    %4268 = vmatpush1.msra.mxu0 %v224
    %4269 = vmatprep.subr.mxu0 %v231
    %4270 = vmatpush1.msra.mxu0 %v230
    %4271 = vmatprep.subr.mxu0 %v237
    %4272 = vmatpush1.msra.mxu0 %v236
    %4273 = vmatprep.subr.mxu0 %v243
    %4274 = vmatpush1.msra.mxu0 %v242
    %4275 = vmatprep.subr.mxu0 %v249
    %4276 = vmatpush1.msra.mxu0 %v248
    %4277 = vmatprep.subr.mxu0 %v255
    %4278 = vmatpush1.msra.mxu0 %v254
    %4279 = vmatprep.subr.mxu0 %v261
    %4280 = vmatpush1.msra.mxu0 %v260
    %4281 = vmatprep.subr.mxu0 %v267
    %4282 = vmatpush1.msra.mxu0 %v266
    %4283 = vmatprep.subr.mxu0 %v273
    %4284 = vmatpush1.msra.mxu0 %v272
    %4285 = vmatprep.subr.mxu0 %v279
    %4286 = vmatpush1.msra.mxu0 %v278
    %4287 = vmatprep.subr.mxu0 %v285
    %4288 = vmatpush1.msra.mxu0 %v284
    %4289 = vmatprep.subr.mxu0 %v291
    %4290 = vmatpush1.msra.mxu0 %v290
    %4291 = vmatprep.mubr.f32.mxu0 %v3671
    %4292 = vmatmul.mubr.f32.gmra.mrb[0].mxu0 %v3670
    %v4293 = vpop.f32.mrb[0].mxu0
    %v4294 = vadd.f32 0.0, %v4293
    %v4295 = vpop.f32.mrb[0].mxu0
    %v4296 = vadd.f32 0.0, %v4295
    %4297 = vdwg.mxu0
    %4298 = vmatprep.subr.mxu0 %v107
    %4299 = vmatpush1.msra.mxu0 %v106
    %4300 = vmatprep.subr.mxu0 %v113
    %4301 = vmatpush1.msra.mxu0 %v112
    %4302 = vmatprep.subr.mxu0 %v119
    %4303 = vmatpush1.msra.mxu0 %v118
    %4304 = vmatprep.subr.mxu0 %v125
    %4305 = vmatpush1.msra.mxu0 %v124
    %4306 = vmatprep.subr.mxu0 %v131
    %4307 = vmatpush1.msra.mxu0 %v130
    %4308 = vmatprep.subr.mxu0 %v137
    %4309 = vmatpush1.msra.mxu0 %v136
    %4310 = vmatprep.subr.mxu0 %v143
    %4311 = vmatpush1.msra.mxu0 %v142
    %4312 = vmatprep.subr.mxu0 %v149
    %4313 = vmatpush1.msra.mxu0 %v148
    %4314 = vmatprep.subr.mxu0 %v155
    %4315 = vmatpush1.msra.mxu0 %v154
    %4316 = vmatprep.subr.mxu0 %v161
    %4317 = vmatpush1.msra.mxu0 %v160
    %4318 = vmatprep.subr.mxu0 %v167
    %4319 = vmatpush1.msra.mxu0 %v166
    %4320 = vmatprep.subr.mxu0 %v173
    %4321 = vmatpush1.msra.mxu0 %v172
    %4322 = vmatprep.subr.mxu0 %v179
    %4323 = vmatpush1.msra.mxu0 %v178
    %4324 = vmatprep.subr.mxu0 %v185
    %4325 = vmatpush1.msra.mxu0 %v184
    %4326 = vmatprep.subr.mxu0 %v191
    %4327 = vmatpush1.msra.mxu0 %v190
    %4328 = vmatprep.subr.mxu0 %v197
    %4329 = vmatpush1.msra.mxu0 %v196
    %4330 = vmatprep.subr.mxu0 %v203
    %4331 = vmatpush1.msra.mxu0 %v202
    %4332 = vmatprep.subr.mxu0 %v209
    %4333 = vmatpush1.msra.mxu0 %v208
    %4334 = vmatprep.subr.mxu0 %v215
    %4335 = vmatpush1.msra.mxu0 %v214
    %4336 = vmatprep.subr.mxu0 %v221
    %4337 = vmatpush1.msra.mxu0 %v220
    %4338 = vmatprep.subr.mxu0 %v227
    %4339 = vmatpush1.msra.mxu0 %v226
    %4340 = vmatprep.subr.mxu0 %v233
    %4341 = vmatpush1.msra.mxu0 %v232
    %4342 = vmatprep.subr.mxu0 %v239
    %4343 = vmatpush1.msra.mxu0 %v238
    %4344 = vmatprep.subr.mxu0 %v245
    %4345 = vmatpush1.msra.mxu0 %v244
    %4346 = vmatprep.subr.mxu0 %v251
    %4347 = vmatpush1.msra.mxu0 %v250
    %4348 = vmatprep.subr.mxu0 %v257
    %4349 = vmatpush1.msra.mxu0 %v256
    %4350 = vmatprep.subr.mxu0 %v263
    %4351 = vmatpush1.msra.mxu0 %v262
    %4352 = vmatprep.subr.mxu0 %v269
    %4353 = vmatpush1.msra.mxu0 %v268
    %4354 = vmatprep.subr.mxu0 %v275
    %4355 = vmatpush1.msra.mxu0 %v274
    %4356 = vmatprep.subr.mxu0 %v281
    %4357 = vmatpush1.msra.mxu0 %v280
    %4358 = vmatprep.subr.mxu0 %v287
    %4359 = vmatpush1.msra.mxu0 %v286
    %4360 = vmatprep.subr.mxu0 %v293
    %4361 = vmatpush1.msra.mxu0 %v292
    %4362 = vmatprep.mubr.f32.mxu0 %v3671
    %4363 = vmatmul.mubr.f32.gmra.mrb[0].mxu0 %v3670
    %v4364 = vpop.f32.mrb[0].mxu0
    %v4365 = vadd.f32 0.0, %v4364
    %v4366 = vpop.f32.mrb[0].mxu0
    %v4367 = vadd.f32 0.0, %v4366
    %4368 = vdwg.mxu0
    %v4369 = vadd.f32 %v4150, %v4223
    %v4370 = vadd.f32 %v4151, %v4225
    %v4371 = vxor.u32 %v4369, 2147483648
    %v4372 = vxor.u32 %v4370, 2147483648
    %v4373 = vmul.f32 %v4371, 1.442695
    %v4374 = vpow.pop %v4373
    %v4375 = vmul.f32 %v4372, 1.442695
    %v4376 = vpow.pop %v4375
    %v4377 = vadd.f32 %v4374, 1.0
    %v4378 = vadd.f32 %v4376, 1.0
    %v4379 = vrcp.pop %v4377
    %v4380 = vmul.f32 1.0, %v4379
    %v4381 = vrcp.pop %v4378
    %v4382 = vmul.f32 1.0, %v4381
    %v4383 = vadd.f32 %v4152, %v4294
    %v4384 = vadd.f32 %v4153, %v4296
    %v4385 = vxor.u32 %v4383, 2147483648
    %v4386 = vxor.u32 %v4384, 2147483648
    %v4387 = vmul.f32 %v4385, 1.442695
    %v4388 = vpow.pop %v4387
    %v4389 = vmul.f32 %v4386, 1.442695
    %v4390 = vpow.pop %v4389
    %v4391 = vadd.f32 %v4388, 1.0
    %v4392 = vadd.f32 %v4390, 1.0
    %v4393 = vrcp.pop %v4391
    %v4394 = vmul.f32 1.0, %v4393
    %v4395 = vrcp.pop %v4392
    %v4396 = vmul.f32 1.0, %v4395
    %v4397 = vadd.f32 %v4365, %v1384
    %v4398 = vadd.f32 %v4367, %v1388
    %v4399 = vmul.f32 %v4380, %v4397
    %v4400 = vmul.f32 %v4382, %v4398
    %v4401 = vadd.f32 %v4154, %v4399
    %v4402 = vadd.f32 %v4155, %v4400
    %v4403 = vtanh.pop %v4401
    %v4404 = vtanh.pop %v4402
    %v4405 = vsub.f32 1.0, %v4394
    %v4406 = vsub.f32 1.0, %v4396
    %v4407 = vmul.f32 %v4405, %v4403
    %v4408 = vmul.f32 %v4406, %v4404
    %v4409 = vmul.f32 %v4394, %v3670
    %v4410 = vmul.f32 %v4396, %v3671
    %v4411 = vadd.f32 %v4407, %v4409
    %v4412 = vadd.f32 %v4408, %v4410
    %4413 = vmatprep.subr.mxu0 %v489
    %4414 = vmatpush1.msra.mxu0 %v488
    %4415 = vmatprep.subr.mxu0 %v495
    %4416 = vmatpush1.msra.mxu0 %v494
    %4417 = vmatprep.subr.mxu0 %v501
    %4418 = vmatpush1.msra.mxu0 %v500
    %4419 = vmatprep.subr.mxu0 %v507
    %4420 = vmatpush1.msra.mxu0 %v506
    %4421 = vmatprep.subr.mxu0 %v513
    %4422 = vmatpush1.msra.mxu0 %v512
    %4423 = vmatprep.subr.mxu0 %v519
    %4424 = vmatpush1.msra.mxu0 %v518
    %4425 = vmatprep.subr.mxu0 %v525
    %4426 = vmatpush1.msra.mxu0 %v524
    %4427 = vmatprep.subr.mxu0 %v531
    %4428 = vmatpush1.msra.mxu0 %v530
    %4429 = vmatprep.subr.mxu0 %v537
    %4430 = vmatpush1.msra.mxu0 %v536
    %4431 = vmatprep.subr.mxu0 %v543
    %4432 = vmatpush1.msra.mxu0 %v542
    %4433 = vmatprep.subr.mxu0 %v549
    %4434 = vmatpush1.msra.mxu0 %v548
    %4435 = vmatprep.subr.mxu0 %v555
    %4436 = vmatpush1.msra.mxu0 %v554
    %4437 = vmatprep.subr.mxu0 %v561
    %4438 = vmatpush1.msra.mxu0 %v560
    %4439 = vmatprep.subr.mxu0 %v567
    %4440 = vmatpush1.msra.mxu0 %v566
    %4441 = vmatprep.subr.mxu0 %v573
    %4442 = vmatpush1.msra.mxu0 %v572
    %4443 = vmatprep.subr.mxu0 %v579
    %4444 = vmatpush1.msra.mxu0 %v578
    %4445 = vmatprep.subr.mxu0 %v585
    %4446 = vmatpush1.msra.mxu0 %v584
    %4447 = vmatprep.subr.mxu0 %v591
    %4448 = vmatpush1.msra.mxu0 %v590
    %4449 = vmatprep.subr.mxu0 %v597
    %4450 = vmatpush1.msra.mxu0 %v596
    %4451 = vmatprep.subr.mxu0 %v603
    %4452 = vmatpush1.msra.mxu0 %v602
    %4453 = vmatprep.subr.mxu0 %v609
    %4454 = vmatpush1.msra.mxu0 %v608
    %4455 = vmatprep.subr.mxu0 %v615
    %4456 = vmatpush1.msra.mxu0 %v614
    %4457 = vmatprep.subr.mxu0 %v621
    %4458 = vmatpush1.msra.mxu0 %v620
    %4459 = vmatprep.subr.mxu0 %v627
    %4460 = vmatpush1.msra.mxu0 %v626
    %4461 = vmatprep.subr.mxu0 %v633
    %4462 = vmatpush1.msra.mxu0 %v632
    %4463 = vmatprep.subr.mxu0 %v639
    %4464 = vmatpush1.msra.mxu0 %v638
    %4465 = vmatprep.subr.mxu0 %v645
    %4466 = vmatpush1.msra.mxu0 %v644
    %4467 = vmatprep.subr.mxu0 %v651
    %4468 = vmatpush1.msra.mxu0 %v650
    %4469 = vmatprep.subr.mxu0 %v657
    %4470 = vmatpush1.msra.mxu0 %v656
    %4471 = vmatprep.subr.mxu0 %v663
    %4472 = vmatpush1.msra.mxu0 %v662
    %4473 = vmatprep.subr.mxu0 %v669
    %4474 = vmatpush1.msra.mxu0 %v668
    %4475 = vmatprep.subr.mxu0 %v675
    %4476 = vmatpush1.msra.mxu0 %v674
    %4477 = vmatprep.mubr.f32.mxu0 %v4412
    %4478 = vmatmul.mubr.f32.gmra.mrb[0].mxu0 %v4411
    %v4479 = vpop.f32.mrb[0].mxu0
    %v4480 = vadd.f32 %v1411, %v4479
    %v4481 = vpop.f32.mrb[0].mxu0
    %v4482 = vadd.f32 %v1415, %v4481
    %4483 = vdwg.mxu0
    %4484 = vmatprep.subr.mxu0 %v491
    %4485 = vmatpush1.msra.mxu0 %v490
    %4486 = vmatprep.subr.mxu0 %v497
    %4487 = vmatpush1.msra.mxu0 %v496
    %4488 = vmatprep.subr.mxu0 %v503
    %4489 = vmatpush1.msra.mxu0 %v502
    %4490 = vmatprep.subr.mxu0 %v509
    %4491 = vmatpush1.msra.mxu0 %v508
    %4492 = vmatprep.subr.mxu0 %v515
    %4493 = vmatpush1.msra.mxu0 %v514
    %4494 = vmatprep.subr.mxu0 %v521
    %4495 = vmatpush1.msra.mxu0 %v520
    %4496 = vmatprep.subr.mxu0 %v527
    %4497 = vmatpush1.msra.mxu0 %v526
    %4498 = vmatprep.subr.mxu0 %v533
    %4499 = vmatpush1.msra.mxu0 %v532
    %4500 = vmatprep.subr.mxu0 %v539
    %4501 = vmatpush1.msra.mxu0 %v538
    %4502 = vmatprep.subr.mxu0 %v545
    %4503 = vmatpush1.msra.mxu0 %v544
    %4504 = vmatprep.subr.mxu0 %v551
    %4505 = vmatpush1.msra.mxu0 %v550
    %4506 = vmatprep.subr.mxu0 %v557
    %4507 = vmatpush1.msra.mxu0 %v556
    %4508 = vmatprep.subr.mxu0 %v563
    %4509 = vmatpush1.msra.mxu0 %v562
    %4510 = vmatprep.subr.mxu0 %v569
    %4511 = vmatpush1.msra.mxu0 %v568
    %4512 = vmatprep.subr.mxu0 %v575
    %4513 = vmatpush1.msra.mxu0 %v574
    %4514 = vmatprep.subr.mxu0 %v581
    %4515 = vmatpush1.msra.mxu0 %v580
    %4516 = vmatprep.subr.mxu0 %v587
    %4517 = vmatpush1.msra.mxu0 %v586
    %4518 = vmatprep.subr.mxu0 %v593
    %4519 = vmatpush1.msra.mxu0 %v592
    %4520 = vmatprep.subr.mxu0 %v599
    %4521 = vmatpush1.msra.mxu0 %v598
    %4522 = vmatprep.subr.mxu0 %v605
    %4523 = vmatpush1.msra.mxu0 %v604
    %4524 = vmatprep.subr.mxu0 %v611
    %4525 = vmatpush1.msra.mxu0 %v610
    %4526 = vmatprep.subr.mxu0 %v617
    %4527 = vmatpush1.msra.mxu0 %v616
    %4528 = vmatprep.subr.mxu0 %v623
    %4529 = vmatpush1.msra.mxu0 %v622
    %4530 = vmatprep.subr.mxu0 %v629
    %4531 = vmatpush1.msra.mxu0 %v628
    %4532 = vmatprep.subr.mxu0 %v635
    %4533 = vmatpush1.msra.mxu0 %v634
    %4534 = vmatprep.subr.mxu0 %v641
    %4535 = vmatpush1.msra.mxu0 %v640
    %4536 = vmatprep.subr.mxu0 %v647
    %4537 = vmatpush1.msra.mxu0 %v646
    %4538 = vmatprep.subr.mxu0 %v653
    %4539 = vmatpush1.msra.mxu0 %v652
    %4540 = vmatprep.subr.mxu0 %v659
    %4541 = vmatpush1.msra.mxu0 %v658
    %4542 = vmatprep.subr.mxu0 %v665
    %4543 = vmatpush1.msra.mxu0 %v664
    %4544 = vmatprep.subr.mxu0 %v671
    %4545 = vmatpush1.msra.mxu0 %v670
    %4546 = vmatprep.subr.mxu0 %v677
    %4547 = vmatpush1.msra.mxu0 %v676
    %4548 = vmatprep.mubr.f32.mxu0 %v4412
    %4549 = vmatmul.mubr.f32.gmra.mrb[0].mxu0 %v4411
    %v4550 = vpop.f32.mrb[0].mxu0
    %v4551 = vadd.f32 %v1419, %v4550
    %v4552 = vpop.f32.mrb[0].mxu0
    %v4553 = vadd.f32 %v1423, %v4552
    %4554 = vdwg.mxu0
    %4555 = vmatprep.subr.mxu0 %v493
    %4556 = vmatpush1.msra.mxu0 %v492
    %4557 = vmatprep.subr.mxu0 %v499
    %4558 = vmatpush1.msra.mxu0 %v498
    %4559 = vmatprep.subr.mxu0 %v505
    %4560 = vmatpush1.msra.mxu0 %v504
    %4561 = vmatprep.subr.mxu0 %v511
    %4562 = vmatpush1.msra.mxu0 %v510
    %4563 = vmatprep.subr.mxu0 %v517
    %4564 = vmatpush1.msra.mxu0 %v516
    %4565 = vmatprep.subr.mxu0 %v523
    %4566 = vmatpush1.msra.mxu0 %v522
    %4567 = vmatprep.subr.mxu0 %v529
    %4568 = vmatpush1.msra.mxu0 %v528
    %4569 = vmatprep.subr.mxu0 %v535
    %4570 = vmatpush1.msra.mxu0 %v534
    %4571 = vmatprep.subr.mxu0 %v541
    %4572 = vmatpush1.msra.mxu0 %v540
    %4573 = vmatprep.subr.mxu0 %v547
    %4574 = vmatpush1.msra.mxu0 %v546
    %4575 = vmatprep.subr.mxu0 %v553
    %4576 = vmatpush1.msra.mxu0 %v552
    %4577 = vmatprep.subr.mxu0 %v559
    %4578 = vmatpush1.msra.mxu0 %v558
    %4579 = vmatprep.subr.mxu0 %v565
    %4580 = vmatpush1.msra.mxu0 %v564
    %4581 = vmatprep.subr.mxu0 %v571
    %4582 = vmatpush1.msra.mxu0 %v570
    %4583 = vmatprep.subr.mxu0 %v577
    %4584 = vmatpush1.msra.mxu0 %v576
    %4585 = vmatprep.subr.mxu0 %v583
    %4586 = vmatpush1.msra.mxu0 %v582
    %4587 = vmatprep.subr.mxu0 %v589
    %4588 = vmatpush1.msra.mxu0 %v588
    %4589 = vmatprep.subr.mxu0 %v595
    %4590 = vmatpush1.msra.mxu0 %v594
    %4591 = vmatprep.subr.mxu0 %v601
    %4592 = vmatpush1.msra.mxu0 %v600
    %4593 = vmatprep.subr.mxu0 %v607
    %4594 = vmatpush1.msra.mxu0 %v606
    %4595 = vmatprep.subr.mxu0 %v613
    %4596 = vmatpush1.msra.mxu0 %v612
    %4597 = vmatprep.subr.mxu0 %v619
    %4598 = vmatpush1.msra.mxu0 %v618
    %4599 = vmatprep.subr.mxu0 %v625
    %4600 = vmatpush1.msra.mxu0 %v624
    %4601 = vmatprep.subr.mxu0 %v631
    %4602 = vmatpush1.msra.mxu0 %v630
    %4603 = vmatprep.subr.mxu0 %v637
    %4604 = vmatpush1.msra.mxu0 %v636
    %4605 = vmatprep.subr.mxu0 %v643
    %4606 = vmatpush1.msra.mxu0 %v642
    %4607 = vmatprep.subr.mxu0 %v649
    %4608 = vmatpush1.msra.mxu0 %v648
    %4609 = vmatprep.subr.mxu0 %v655
    %4610 = vmatpush1.msra.mxu0 %v654
    %4611 = vmatprep.subr.mxu0 %v661
    %4612 = vmatpush1.msra.mxu0 %v660
    %4613 = vmatprep.subr.mxu0 %v667
    %4614 = vmatpush1.msra.mxu0 %v666
    %4615 = vmatprep.subr.mxu0 %v673
    %4616 = vmatpush1.msra.mxu0 %v672
    %4617 = vmatprep.subr.mxu0 %v679
    %4618 = vmatpush1.msra.mxu0 %v678
    %4619 = vmatprep.mubr.f32.mxu0 %v4412
    %4620 = vmatmul.mubr.f32.gmra.mrb[0].mxu0 %v4411
    %v4621 = vpop.f32.mrb[0].mxu0
    %v4622 = vadd.f32 %v1427, %v4621
    %v4623 = vpop.f32.mrb[0].mxu0
    %v4624 = vadd.f32 %v1431, %v4623
    %4625 = vdwg.mxu0
    %4626 = vmatprep.subr.mxu0 %v295
    %4627 = vmatpush1.msra.mxu0 %v294
    %4628 = vmatprep.subr.mxu0 %v301
    %4629 = vmatpush1.msra.mxu0 %v300
    %4630 = vmatprep.subr.mxu0 %v307
    %4631 = vmatpush1.msra.mxu0 %v306
    %4632 = vmatprep.subr.mxu0 %v313
    %4633 = vmatpush1.msra.mxu0 %v312
    %4634 = vmatprep.subr.mxu0 %v319
    %4635 = vmatpush1.msra.mxu0 %v318
    %4636 = vmatprep.subr.mxu0 %v325
    %4637 = vmatpush1.msra.mxu0 %v324
    %4638 = vmatprep.subr.mxu0 %v331
    %4639 = vmatpush1.msra.mxu0 %v330
    %4640 = vmatprep.subr.mxu0 %v337
    %4641 = vmatpush1.msra.mxu0 %v336
    %4642 = vmatprep.subr.mxu0 %v343
    %4643 = vmatpush1.msra.mxu0 %v342
    %4644 = vmatprep.subr.mxu0 %v349
    %4645 = vmatpush1.msra.mxu0 %v348
    %4646 = vmatprep.subr.mxu0 %v355
    %4647 = vmatpush1.msra.mxu0 %v354
    %4648 = vmatprep.subr.mxu0 %v361
    %4649 = vmatpush1.msra.mxu0 %v360
    %4650 = vmatprep.subr.mxu0 %v367
    %4651 = vmatpush1.msra.mxu0 %v366
    %4652 = vmatprep.subr.mxu0 %v373
    %4653 = vmatpush1.msra.mxu0 %v372
    %4654 = vmatprep.subr.mxu0 %v379
    %4655 = vmatpush1.msra.mxu0 %v378
    %4656 = vmatprep.subr.mxu0 %v385
    %4657 = vmatpush1.msra.mxu0 %v384
    %4658 = vmatprep.subr.mxu0 %v391
    %4659 = vmatpush1.msra.mxu0 %v390
    %4660 = vmatprep.subr.mxu0 %v397
    %4661 = vmatpush1.msra.mxu0 %v396
    %4662 = vmatprep.subr.mxu0 %v403
    %4663 = vmatpush1.msra.mxu0 %v402
    %4664 = vmatprep.subr.mxu0 %v409
    %4665 = vmatpush1.msra.mxu0 %v408
    %4666 = vmatprep.subr.mxu0 %v415
    %4667 = vmatpush1.msra.mxu0 %v414
    %4668 = vmatprep.subr.mxu0 %v421
    %4669 = vmatpush1.msra.mxu0 %v420
    %4670 = vmatprep.subr.mxu0 %v427
    %4671 = vmatpush1.msra.mxu0 %v426
    %4672 = vmatprep.subr.mxu0 %v433
    %4673 = vmatpush1.msra.mxu0 %v432
    %4674 = vmatprep.subr.mxu0 %v439
    %4675 = vmatpush1.msra.mxu0 %v438
    %4676 = vmatprep.subr.mxu0 %v445
    %4677 = vmatpush1.msra.mxu0 %v444
    %4678 = vmatprep.subr.mxu0 %v451
    %4679 = vmatpush1.msra.mxu0 %v450
    %4680 = vmatprep.subr.mxu0 %v457
    %4681 = vmatpush1.msra.mxu0 %v456
    %4682 = vmatprep.subr.mxu0 %v463
    %4683 = vmatpush1.msra.mxu0 %v462
    %4684 = vmatprep.subr.mxu0 %v469
    %4685 = vmatpush1.msra.mxu0 %v468
    %4686 = vmatprep.subr.mxu0 %v475
    %4687 = vmatpush1.msra.mxu0 %v474
    %4688 = vmatprep.subr.mxu0 %v481
    %4689 = vmatpush1.msra.mxu0 %v480
    %4690 = vmatprep.mubr.f32.mxu0 %v4141
    %4691 = vmatmul.mubr.f32.gmra.mrb[0].mxu0 %v4140
    %v4692 = vpop.f32.mrb[0].mxu0
    %v4693 = vadd.f32 0.0, %v4692
    %v4694 = vpop.f32.mrb[0].mxu0
    %v4695 = vadd.f32 0.0, %v4694
    %4696 = vdwg.mxu0
    %4697 = vmatprep.subr.mxu0 %v297
    %4698 = vmatpush1.msra.mxu0 %v296
    %4699 = vmatprep.subr.mxu0 %v303
    %4700 = vmatpush1.msra.mxu0 %v302
    %4701 = vmatprep.subr.mxu0 %v309
    %4702 = vmatpush1.msra.mxu0 %v308
    %4703 = vmatprep.subr.mxu0 %v315
    %4704 = vmatpush1.msra.mxu0 %v314
    %4705 = vmatprep.subr.mxu0 %v321
    %4706 = vmatpush1.msra.mxu0 %v320
    %4707 = vmatprep.subr.mxu0 %v327
    %4708 = vmatpush1.msra.mxu0 %v326
    %4709 = vmatprep.subr.mxu0 %v333
    %4710 = vmatpush1.msra.mxu0 %v332
    %4711 = vmatprep.subr.mxu0 %v339
    %4712 = vmatpush1.msra.mxu0 %v338
    %4713 = vmatprep.subr.mxu0 %v345
    %4714 = vmatpush1.msra.mxu0 %v344
    %4715 = vmatprep.subr.mxu0 %v351
    %4716 = vmatpush1.msra.mxu0 %v350
    %4717 = vmatprep.subr.mxu0 %v357
    %4718 = vmatpush1.msra.mxu0 %v356
    %4719 = vmatprep.subr.mxu0 %v363
    %4720 = vmatpush1.msra.mxu0 %v362
    %4721 = vmatprep.subr.mxu0 %v369
    %4722 = vmatpush1.msra.mxu0 %v368
    %4723 = vmatprep.subr.mxu0 %v375
    %4724 = vmatpush1.msra.mxu0 %v374
    %4725 = vmatprep.subr.mxu0 %v381
    %4726 = vmatpush1.msra.mxu0 %v380
    %4727 = vmatprep.subr.mxu0 %v387
    %4728 = vmatpush1.msra.mxu0 %v386
    %4729 = vmatprep.subr.mxu0 %v393
    %4730 = vmatpush1.msra.mxu0 %v392
    %4731 = vmatprep.subr.mxu0 %v399
    %4732 = vmatpush1.msra.mxu0 %v398
    %4733 = vmatprep.subr.mxu0 %v405
    %4734 = vmatpush1.msra.mxu0 %v404
    %4735 = vmatprep.subr.mxu0 %v411
    %4736 = vmatpush1.msra.mxu0 %v410
    %4737 = vmatprep.subr.mxu0 %v417
    %4738 = vmatpush1.msra.mxu0 %v416
    %4739 = vmatprep.subr.mxu0 %v423
    %4740 = vmatpush1.msra.mxu0 %v422
    %4741 = vmatprep.subr.mxu0 %v429
    %4742 = vmatpush1.msra.mxu0 %v428
    %4743 = vmatprep.subr.mxu0 %v435
    %4744 = vmatpush1.msra.mxu0 %v434
    %4745 = vmatprep.subr.mxu0 %v441
    %4746 = vmatpush1.msra.mxu0 %v440
    %4747 = vmatprep.subr.mxu0 %v447
    %4748 = vmatpush1.msra.mxu0 %v446
    %4749 = vmatprep.subr.mxu0 %v453
    %4750 = vmatpush1.msra.mxu0 %v452
    %4751 = vmatprep.subr.mxu0 %v459
    %4752 = vmatpush1.msra.mxu0 %v458
    %4753 = vmatprep.subr.mxu0 %v465
    %4754 = vmatpush1.msra.mxu0 %v464
    %4755 = vmatprep.subr.mxu0 %v471
    %4756 = vmatpush1.msra.mxu0 %v470
    %4757 = vmatprep.subr.mxu0 %v477
    %4758 = vmatpush1.msra.mxu0 %v476
    %4759 = vmatprep.subr.mxu0 %v483
    %4760 = vmatpush1.msra.mxu0 %v482
    %4761 = vmatprep.mubr.f32.mxu0 %v4141
    %4762 = vmatmul.mubr.f32.gmra.mrb[0].mxu0 %v4140
    %v4763 = vpop.f32.mrb[0].mxu0
    %v4764 = vadd.f32 0.0, %v4763
    %v4765 = vpop.f32.mrb[0].mxu0
    %v4766 = vadd.f32 0.0, %v4765
    %4767 = vdwg.mxu0
    %4768 = vmatprep.subr.mxu0 %v299
    %4769 = vmatpush1.msra.mxu0 %v298
    %4770 = vmatprep.subr.mxu0 %v305
    %4771 = vmatpush1.msra.mxu0 %v304
    %4772 = vmatprep.subr.mxu0 %v311
    %4773 = vmatpush1.msra.mxu0 %v310
    %4774 = vmatprep.subr.mxu0 %v317
    %4775 = vmatpush1.msra.mxu0 %v316
    %4776 = vmatprep.subr.mxu0 %v323
    %4777 = vmatpush1.msra.mxu0 %v322
    %4778 = vmatprep.subr.mxu0 %v329
    %4779 = vmatpush1.msra.mxu0 %v328
    %4780 = vmatprep.subr.mxu0 %v335
    %4781 = vmatpush1.msra.mxu0 %v334
    %4782 = vmatprep.subr.mxu0 %v341
    %4783 = vmatpush1.msra.mxu0 %v340
    %4784 = vmatprep.subr.mxu0 %v347
    %4785 = vmatpush1.msra.mxu0 %v346
    %4786 = vmatprep.subr.mxu0 %v353
    %4787 = vmatpush1.msra.mxu0 %v352
    %4788 = vmatprep.subr.mxu0 %v359
    %4789 = vmatpush1.msra.mxu0 %v358
    %4790 = vmatprep.subr.mxu0 %v365
    %4791 = vmatpush1.msra.mxu0 %v364
    %4792 = vmatprep.subr.mxu0 %v371
    %4793 = vmatpush1.msra.mxu0 %v370
    %4794 = vmatprep.subr.mxu0 %v377
    %4795 = vmatpush1.msra.mxu0 %v376
    %4796 = vmatprep.subr.mxu0 %v383
    %4797 = vmatpush1.msra.mxu0 %v382
    %4798 = vmatprep.subr.mxu0 %v389
    %4799 = vmatpush1.msra.mxu0 %v388
    %4800 = vmatprep.subr.mxu0 %v395
    %4801 = vmatpush1.msra.mxu0 %v394
    %4802 = vmatprep.subr.mxu0 %v401
    %4803 = vmatpush1.msra.mxu0 %v400
    %4804 = vmatprep.subr.mxu0 %v407
    %4805 = vmatpush1.msra.mxu0 %v406
    %4806 = vmatprep.subr.mxu0 %v413
    %4807 = vmatpush1.msra.mxu0 %v412
    %4808 = vmatprep.subr.mxu0 %v419
    %4809 = vmatpush1.msra.mxu0 %v418
    %4810 = vmatprep.subr.mxu0 %v425
    %4811 = vmatpush1.msra.mxu0 %v424
    %4812 = vmatprep.subr.mxu0 %v431
    %4813 = vmatpush1.msra.mxu0 %v430
    %4814 = vmatprep.subr.mxu0 %v437
    %4815 = vmatpush1.msra.mxu0 %v436
    %4816 = vmatprep.subr.mxu0 %v443
    %4817 = vmatpush1.msra.mxu0 %v442
    %4818 = vmatprep.subr.mxu0 %v449
    %4819 = vmatpush1.msra.mxu0 %v448
    %4820 = vmatprep.subr.mxu0 %v455
    %4821 = vmatpush1.msra.mxu0 %v454
    %4822 = vmatprep.subr.mxu0 %v461
    %4823 = vmatpush1.msra.mxu0 %v460
    %4824 = vmatprep.subr.mxu0 %v467
    %4825 = vmatpush1.msra.mxu0 %v466
    %4826 = vmatprep.subr.mxu0 %v473
    %4827 = vmatpush1.msra.mxu0 %v472
    %4828 = vmatprep.subr.mxu0 %v479
    %4829 = vmatpush1.msra.mxu0 %v478
    %4830 = vmatprep.subr.mxu0 %v485
    %4831 = vmatpush1.msra.mxu0 %v484
    %4832 = vmatprep.mubr.f32.mxu0 %v4141
    %4833 = vmatmul.mubr.f32.gmra.mrb[0].mxu0 %v4140
    %v4834 = vpop.f32.mrb[0].mxu0
    %v4835 = vadd.f32 0.0, %v4834
    %v4836 = vpop.f32.mrb[0].mxu0
    %v4837 = vadd.f32 0.0, %v4836
    %4838 = vdwg.mxu0
    %v4839 = vadd.f32 %v4480, %v4693
    %v4840 = vadd.f32 %v4482, %v4695
    %v4841 = vxor.u32 %v4839, 2147483648
    %v4842 = vxor.u32 %v4840, 2147483648
    %v4843 = vmul.f32 %v4841, 1.442695
    %v4844 = vpow.pop %v4843
    %v4845 = vmul.f32 %v4842, 1.442695
    %v4846 = vpow.pop %v4845
    %v4847 = vadd.f32 %v4844, 1.0
    %v4848 = vadd.f32 %v4846, 1.0
    %v4849 = vrcp.pop %v4847
    %v4850 = vmul.f32 1.0, %v4849
    %v4851 = vrcp.pop %v4848
    %v4852 = vmul.f32 1.0, %v4851
    %v4853 = vadd.f32 %v4551, %v4764
    %v4854 = vadd.f32 %v4553, %v4766
    %v4855 = vxor.u32 %v4853, 2147483648
    %v4856 = vxor.u32 %v4854, 2147483648
    %v4857 = vmul.f32 %v4855, 1.442695
    %v4858 = vpow.pop %v4857
    %v4859 = vmul.f32 %v4856, 1.442695
    %v4860 = vpow.pop %v4859
    %v4861 = vadd.f32 %v4858, 1.0
    %v4862 = vadd.f32 %v4860, 1.0
    %v4863 = vrcp.pop %v4861
    %v4864 = vmul.f32 1.0, %v4863
    %v4865 = vrcp.pop %v4862
    %v4866 = vmul.f32 1.0, %v4865
    %v4867 = vadd.f32 %v4835, %v1896
    %v4868 = vadd.f32 %v4837, %v1900
    %v4869 = vmul.f32 %v4850, %v4867
    %v4870 = vmul.f32 %v4852, %v4868
    %v4871 = vadd.f32 %v4622, %v4869
    %v4872 = vadd.f32 %v4624, %v4870
    %v4873 = vtanh.pop %v4871
    %v4874 = vtanh.pop %v4872
    %v4875 = vsub.f32 1.0, %v4864
    %v4876 = vsub.f32 1.0, %v4866
    %v4877 = vmul.f32 %v4875, %v4873
    %v4878 = vmul.f32 %v4876, %v4874
    %v4879 = vmul.f32 %v4864, %v4140
    %v4880 = vmul.f32 %v4866, %v4141
    %v4881 = vadd.f32 %v4877, %v4879
    %v4882 = vadd.f32 %v4878, %v4880
    %vm4883 = vcmp.eq.s32.totalorder %v1132, 5
    %v4884 = vsel %vm4883, 1, 0
    %4885 = vset.pattern.permute.xlu0 0
    %4886 = vperm.xlu0 %4885, %v4884
    %v4887 = vpop.permute.xlu0 %4886
    %vm4888 = vcmp.eq.s32.totalorder %v4887, 1
    %v4889 = vsel %vm4888, %v4881, %v4148
    %v4890 = vsel %vm4888, %v4882, %v4149
    %v4891 = vld [vmem:[#allocation2 + $0xf0] sm:$0xff]
    %v4892 = vld [vmem:[#allocation2 + $0xf8] sm:$0xff]
    %v4893 = vld [vmem:[#allocation2 + $0x100] sm:$0xff]
    %v4894 = vld [vmem:[#allocation2 + $0x108] sm:$0xff]
    %v4895 = vld [vmem:[#allocation2 + $0x110] sm:$0xff]
    %v4896 = vld [vmem:[#allocation2 + $0x118] sm:$0xff]
    %4897 = vmatprep.subr.mxu0 %v103
    %4898 = vmatpush1.msra.mxu0 %v102
    %4899 = vmatprep.subr.mxu0 %v109
    %4900 = vmatpush1.msra.mxu0 %v108
    %4901 = vmatprep.subr.mxu0 %v115
    %4902 = vmatpush1.msra.mxu0 %v114
    %4903 = vmatprep.subr.mxu0 %v121
    %4904 = vmatpush1.msra.mxu0 %v120
    %4905 = vmatprep.subr.mxu0 %v127
    %4906 = vmatpush1.msra.mxu0 %v126
    %4907 = vmatprep.subr.mxu0 %v133
    %4908 = vmatpush1.msra.mxu0 %v132
    %4909 = vmatprep.subr.mxu0 %v139
    %4910 = vmatpush1.msra.mxu0 %v138
    %4911 = vmatprep.subr.mxu0 %v145
    %4912 = vmatpush1.msra.mxu0 %v144
    %4913 = vmatprep.subr.mxu0 %v151
    %4914 = vmatpush1.msra.mxu0 %v150
    %4915 = vmatprep.subr.mxu0 %v157
    %4916 = vmatpush1.msra.mxu0 %v156
    %4917 = vmatprep.subr.mxu0 %v163
    %4918 = vmatpush1.msra.mxu0 %v162
    %4919 = vmatprep.subr.mxu0 %v169
    %4920 = vmatpush1.msra.mxu0 %v168
    %4921 = vmatprep.subr.mxu0 %v175
    %4922 = vmatpush1.msra.mxu0 %v174
    %4923 = vmatprep.subr.mxu0 %v181
    %4924 = vmatpush1.msra.mxu0 %v180
    %4925 = vmatprep.subr.mxu0 %v187
    %4926 = vmatpush1.msra.mxu0 %v186
    %4927 = vmatprep.subr.mxu0 %v193
    %4928 = vmatpush1.msra.mxu0 %v192
    %4929 = vmatprep.subr.mxu0 %v199
    %4930 = vmatpush1.msra.mxu0 %v198
    %4931 = vmatprep.subr.mxu0 %v205
    %4932 = vmatpush1.msra.mxu0 %v204
    %4933 = vmatprep.subr.mxu0 %v211
    %4934 = vmatpush1.msra.mxu0 %v210
    %4935 = vmatprep.subr.mxu0 %v217
    %4936 = vmatpush1.msra.mxu0 %v216
    %4937 = vmatprep.subr.mxu0 %v223
    %4938 = vmatpush1.msra.mxu0 %v222
    %4939 = vmatprep.subr.mxu0 %v229
    %4940 = vmatpush1.msra.mxu0 %v228
    %4941 = vmatprep.subr.mxu0 %v235
    %4942 = vmatpush1.msra.mxu0 %v234
    %4943 = vmatprep.subr.mxu0 %v241
    %4944 = vmatpush1.msra.mxu0 %v240
    %4945 = vmatprep.subr.mxu0 %v247
    %4946 = vmatpush1.msra.mxu0 %v246
    %4947 = vmatprep.subr.mxu0 %v253
    %4948 = vmatpush1.msra.mxu0 %v252
    %4949 = vmatprep.subr.mxu0 %v259
    %4950 = vmatpush1.msra.mxu0 %v258
    %4951 = vmatprep.subr.mxu0 %v265
    %4952 = vmatpush1.msra.mxu0 %v264
    %4953 = vmatprep.subr.mxu0 %v271
    %4954 = vmatpush1.msra.mxu0 %v270
    %4955 = vmatprep.subr.mxu0 %v277
    %4956 = vmatpush1.msra.mxu0 %v276
    %4957 = vmatprep.subr.mxu0 %v283
    %4958 = vmatpush1.msra.mxu0 %v282
    %4959 = vmatprep.subr.mxu0 %v289
    %4960 = vmatpush1.msra.mxu0 %v288
    %4961 = vmatprep.mubr.f32.mxu0 %v4412
    %4962 = vmatmul.mubr.f32.gmra.mrb[0].mxu0 %v4411
    %v4963 = vpop.f32.mrb[0].mxu0
    %v4964 = vadd.f32 0.0, %v4963
    %v4965 = vpop.f32.mrb[0].mxu0
    %v4966 = vadd.f32 0.0, %v4965
    %4967 = vdwg.mxu0
    %4968 = vmatprep.subr.mxu0 %v105
    %4969 = vmatpush1.msra.mxu0 %v104
    %4970 = vmatprep.subr.mxu0 %v111
    %4971 = vmatpush1.msra.mxu0 %v110
    %4972 = vmatprep.subr.mxu0 %v117
    %4973 = vmatpush1.msra.mxu0 %v116
    %4974 = vmatprep.subr.mxu0 %v123
    %4975 = vmatpush1.msra.mxu0 %v122
    %4976 = vmatprep.subr.mxu0 %v129
    %4977 = vmatpush1.msra.mxu0 %v128
    %4978 = vmatprep.subr.mxu0 %v135
    %4979 = vmatpush1.msra.mxu0 %v134
    %4980 = vmatprep.subr.mxu0 %v141
    %4981 = vmatpush1.msra.mxu0 %v140
    %4982 = vmatprep.subr.mxu0 %v147
    %4983 = vmatpush1.msra.mxu0 %v146
    %4984 = vmatprep.subr.mxu0 %v153
    %4985 = vmatpush1.msra.mxu0 %v152
    %4986 = vmatprep.subr.mxu0 %v159
    %4987 = vmatpush1.msra.mxu0 %v158
    %4988 = vmatprep.subr.mxu0 %v165
    %4989 = vmatpush1.msra.mxu0 %v164
    %4990 = vmatprep.subr.mxu0 %v171
    %4991 = vmatpush1.msra.mxu0 %v170
    %4992 = vmatprep.subr.mxu0 %v177
    %4993 = vmatpush1.msra.mxu0 %v176
    %4994 = vmatprep.subr.mxu0 %v183
    %4995 = vmatpush1.msra.mxu0 %v182
    %4996 = vmatprep.subr.mxu0 %v189
    %4997 = vmatpush1.msra.mxu0 %v188
    %4998 = vmatprep.subr.mxu0 %v195
    %4999 = vmatpush1.msra.mxu0 %v194
    %5000 = vmatprep.subr.mxu0 %v201
    %5001 = vmatpush1.msra.mxu0 %v200
    %5002 = vmatprep.subr.mxu0 %v207
    %5003 = vmatpush1.msra.mxu0 %v206
    %5004 = vmatprep.subr.mxu0 %v213
    %5005 = vmatpush1.msra.mxu0 %v212
    %5006 = vmatprep.subr.mxu0 %v219
    %5007 = vmatpush1.msra.mxu0 %v218
    %5008 = vmatprep.subr.mxu0 %v225
    %5009 = vmatpush1.msra.mxu0 %v224
    %5010 = vmatprep.subr.mxu0 %v231
    %5011 = vmatpush1.msra.mxu0 %v230
    %5012 = vmatprep.subr.mxu0 %v237
    %5013 = vmatpush1.msra.mxu0 %v236
    %5014 = vmatprep.subr.mxu0 %v243
    %5015 = vmatpush1.msra.mxu0 %v242
    %5016 = vmatprep.subr.mxu0 %v249
    %5017 = vmatpush1.msra.mxu0 %v248
    %5018 = vmatprep.subr.mxu0 %v255
    %5019 = vmatpush1.msra.mxu0 %v254
    %5020 = vmatprep.subr.mxu0 %v261
    %5021 = vmatpush1.msra.mxu0 %v260
    %5022 = vmatprep.subr.mxu0 %v267
    %5023 = vmatpush1.msra.mxu0 %v266
    %5024 = vmatprep.subr.mxu0 %v273
    %5025 = vmatpush1.msra.mxu0 %v272
    %5026 = vmatprep.subr.mxu0 %v279
    %5027 = vmatpush1.msra.mxu0 %v278
    %5028 = vmatprep.subr.mxu0 %v285
    %5029 = vmatpush1.msra.mxu0 %v284
    %5030 = vmatprep.subr.mxu0 %v291
    %5031 = vmatpush1.msra.mxu0 %v290
    %5032 = vmatprep.mubr.f32.mxu0 %v4412
    %5033 = vmatmul.mubr.f32.gmra.mrb[0].mxu0 %v4411
    %v5034 = vpop.f32.mrb[0].mxu0
    %v5035 = vadd.f32 0.0, %v5034
    %v5036 = vpop.f32.mrb[0].mxu0
    %v5037 = vadd.f32 0.0, %v5036
    %5038 = vdwg.mxu0
    %5039 = vmatprep.subr.mxu0 %v107
    %5040 = vmatpush1.msra.mxu0 %v106
    %5041 = vmatprep.subr.mxu0 %v113
    %5042 = vmatpush1.msra.mxu0 %v112
    %5043 = vmatprep.subr.mxu0 %v119
    %5044 = vmatpush1.msra.mxu0 %v118
    %5045 = vmatprep.subr.mxu0 %v125
    %5046 = vmatpush1.msra.mxu0 %v124
    %5047 = vmatprep.subr.mxu0 %v131
    %5048 = vmatpush1.msra.mxu0 %v130
    %5049 = vmatprep.subr.mxu0 %v137
    %5050 = vmatpush1.msra.mxu0 %v136
    %5051 = vmatprep.subr.mxu0 %v143
    %5052 = vmatpush1.msra.mxu0 %v142
    %5053 = vmatprep.subr.mxu0 %v149
    %5054 = vmatpush1.msra.mxu0 %v148
    %5055 = vmatprep.subr.mxu0 %v155
    %5056 = vmatpush1.msra.mxu0 %v154
    %5057 = vmatprep.subr.mxu0 %v161
    %5058 = vmatpush1.msra.mxu0 %v160
    %5059 = vmatprep.subr.mxu0 %v167
    %5060 = vmatpush1.msra.mxu0 %v166
    %5061 = vmatprep.subr.mxu0 %v173
    %5062 = vmatpush1.msra.mxu0 %v172
    %5063 = vmatprep.subr.mxu0 %v179
    %5064 = vmatpush1.msra.mxu0 %v178
    %5065 = vmatprep.subr.mxu0 %v185
    %5066 = vmatpush1.msra.mxu0 %v184
    %5067 = vmatprep.subr.mxu0 %v191
    %5068 = vmatpush1.msra.mxu0 %v190
    %5069 = vmatprep.subr.mxu0 %v197
    %5070 = vmatpush1.msra.mxu0 %v196
    %5071 = vmatprep.subr.mxu0 %v203
    %5072 = vmatpush1.msra.mxu0 %v202
    %5073 = vmatprep.subr.mxu0 %v209
    %5074 = vmatpush1.msra.mxu0 %v208
    %5075 = vmatprep.subr.mxu0 %v215
    %5076 = vmatpush1.msra.mxu0 %v214
    %5077 = vmatprep.subr.mxu0 %v221
    %5078 = vmatpush1.msra.mxu0 %v220
    %5079 = vmatprep.subr.mxu0 %v227
    %5080 = vmatpush1.msra.mxu0 %v226
    %5081 = vmatprep.subr.mxu0 %v233
    %5082 = vmatpush1.msra.mxu0 %v232
    %5083 = vmatprep.subr.mxu0 %v239
    %5084 = vmatpush1.msra.mxu0 %v238
    %5085 = vmatprep.subr.mxu0 %v245
    %5086 = vmatpush1.msra.mxu0 %v244
    %5087 = vmatprep.subr.mxu0 %v251
    %5088 = vmatpush1.msra.mxu0 %v250
    %5089 = vmatprep.subr.mxu0 %v257
    %5090 = vmatpush1.msra.mxu0 %v256
    %5091 = vmatprep.subr.mxu0 %v263
    %5092 = vmatpush1.msra.mxu0 %v262
    %5093 = vmatprep.subr.mxu0 %v269
    %5094 = vmatpush1.msra.mxu0 %v268
    %5095 = vmatprep.subr.mxu0 %v275
    %5096 = vmatpush1.msra.mxu0 %v274
    %5097 = vmatprep.subr.mxu0 %v281
    %5098 = vmatpush1.msra.mxu0 %v280
    %5099 = vmatprep.subr.mxu0 %v287
    %5100 = vmatpush1.msra.mxu0 %v286
    %5101 = vmatprep.subr.mxu0 %v293
    %5102 = vmatpush1.msra.mxu0 %v292
    %5103 = vmatprep.mubr.f32.mxu0 %v4412
    %5104 = vmatmul.mubr.f32.gmra.mrb[0].mxu0 %v4411
    %v5105 = vpop.f32.mrb[0].mxu0
    %v5106 = vadd.f32 0.0, %v5105
    %v5107 = vpop.f32.mrb[0].mxu0
    %v5108 = vadd.f32 0.0, %v5107
    %5109 = vdwg.mxu0
    %v5110 = vadd.f32 %v4891, %v4964
    %v5111 = vadd.f32 %v4892, %v4966
    %v5112 = vxor.u32 %v5110, 2147483648
    %v5113 = vxor.u32 %v5111, 2147483648
    %v5114 = vmul.f32 %v5112, 1.442695
    %v5115 = vpow.pop %v5114
    %v5116 = vmul.f32 %v5113, 1.442695
    %v5117 = vpow.pop %v5116
    %v5118 = vadd.f32 %v5115, 1.0
    %v5119 = vadd.f32 %v5117, 1.0
    %v5120 = vrcp.pop %v5118
    %v5121 = vmul.f32 1.0, %v5120
    %v5122 = vrcp.pop %v5119
    %v5123 = vmul.f32 1.0, %v5122
    %v5124 = vadd.f32 %v4893, %v5035
    %v5125 = vadd.f32 %v4894, %v5037
    %v5126 = vxor.u32 %v5124, 2147483648
    %v5127 = vxor.u32 %v5125, 2147483648
    %v5128 = vmul.f32 %v5126, 1.442695
    %v5129 = vpow.pop %v5128
    %v5130 = vmul.f32 %v5127, 1.442695
    %v5131 = vpow.pop %v5130
    %v5132 = vadd.f32 %v5129, 1.0
    %v5133 = vadd.f32 %v5131, 1.0
    %v5134 = vrcp.pop %v5132
    %v5135 = vmul.f32 1.0, %v5134
    %v5136 = vrcp.pop %v5133
    %v5137 = vmul.f32 1.0, %v5136
    %v5138 = vadd.f32 %v5106, %v1384
    %v5139 = vadd.f32 %v5108, %v1388
    %v5140 = vmul.f32 %v5121, %v5138
    %v5141 = vmul.f32 %v5123, %v5139
    %v5142 = vadd.f32 %v4895, %v5140
    %v5143 = vadd.f32 %v4896, %v5141
    %v5144 = vtanh.pop %v5142
    %v5145 = vtanh.pop %v5143
    %v5146 = vsub.f32 1.0, %v5135
    %v5147 = vsub.f32 1.0, %v5137
    %v5148 = vmul.f32 %v5146, %v5144
    %v5149 = vmul.f32 %v5147, %v5145
    %v5150 = vmul.f32 %v5135, %v4411
    %v5151 = vmul.f32 %v5137, %v4412
    %v5152 = vadd.f32 %v5148, %v5150
    %v5153 = vadd.f32 %v5149, %v5151
    %5154 = vmatprep.subr.mxu0 %v489
    %5155 = vmatpush1.msra.mxu0 %v488
    %5156 = vmatprep.subr.mxu0 %v495
    %5157 = vmatpush1.msra.mxu0 %v494
    %5158 = vmatprep.subr.mxu0 %v501
    %5159 = vmatpush1.msra.mxu0 %v500
    %5160 = vmatprep.subr.mxu0 %v507
    %5161 = vmatpush1.msra.mxu0 %v506
    %5162 = vmatprep.subr.mxu0 %v513
    %5163 = vmatpush1.msra.mxu0 %v512
    %5164 = vmatprep.subr.mxu0 %v519
    %5165 = vmatpush1.msra.mxu0 %v518
    %5166 = vmatprep.subr.mxu0 %v525
    %5167 = vmatpush1.msra.mxu0 %v524
    %5168 = vmatprep.subr.mxu0 %v531
    %5169 = vmatpush1.msra.mxu0 %v530
    %5170 = vmatprep.subr.mxu0 %v537
    %5171 = vmatpush1.msra.mxu0 %v536
    %5172 = vmatprep.subr.mxu0 %v543
    %5173 = vmatpush1.msra.mxu0 %v542
    %5174 = vmatprep.subr.mxu0 %v549
    %5175 = vmatpush1.msra.mxu0 %v548
    %5176 = vmatprep.subr.mxu0 %v555
    %5177 = vmatpush1.msra.mxu0 %v554
    %5178 = vmatprep.subr.mxu0 %v561
    %5179 = vmatpush1.msra.mxu0 %v560
    %5180 = vmatprep.subr.mxu0 %v567
    %5181 = vmatpush1.msra.mxu0 %v566
    %5182 = vmatprep.subr.mxu0 %v573
    %5183 = vmatpush1.msra.mxu0 %v572
    %5184 = vmatprep.subr.mxu0 %v579
    %5185 = vmatpush1.msra.mxu0 %v578
    %5186 = vmatprep.subr.mxu0 %v585
    %5187 = vmatpush1.msra.mxu0 %v584
    %5188 = vmatprep.subr.mxu0 %v591
    %5189 = vmatpush1.msra.mxu0 %v590
    %5190 = vmatprep.subr.mxu0 %v597
    %5191 = vmatpush1.msra.mxu0 %v596
    %5192 = vmatprep.subr.mxu0 %v603
    %5193 = vmatpush1.msra.mxu0 %v602
    %5194 = vmatprep.subr.mxu0 %v609
    %5195 = vmatpush1.msra.mxu0 %v608
    %5196 = vmatprep.subr.mxu0 %v615
    %5197 = vmatpush1.msra.mxu0 %v614
    %5198 = vmatprep.subr.mxu0 %v621
    %5199 = vmatpush1.msra.mxu0 %v620
    %5200 = vmatprep.subr.mxu0 %v627
    %5201 = vmatpush1.msra.mxu0 %v626
    %5202 = vmatprep.subr.mxu0 %v633
    %5203 = vmatpush1.msra.mxu0 %v632
    %5204 = vmatprep.subr.mxu0 %v639
    %5205 = vmatpush1.msra.mxu0 %v638
    %5206 = vmatprep.subr.mxu0 %v645
    %5207 = vmatpush1.msra.mxu0 %v644
    %5208 = vmatprep.subr.mxu0 %v651
    %5209 = vmatpush1.msra.mxu0 %v650
    %5210 = vmatprep.subr.mxu0 %v657
    %5211 = vmatpush1.msra.mxu0 %v656
    %5212 = vmatprep.subr.mxu0 %v663
    %5213 = vmatpush1.msra.mxu0 %v662
    %5214 = vmatprep.subr.mxu0 %v669
    %5215 = vmatpush1.msra.mxu0 %v668
    %5216 = vmatprep.subr.mxu0 %v675
    %5217 = vmatpush1.msra.mxu0 %v674
    %5218 = vmatprep.mubr.f32.mxu0 %v5153
    %5219 = vmatmul.mubr.f32.gmra.mrb[0].mxu0 %v5152
    %v5220 = vpop.f32.mrb[0].mxu0
    %v5221 = vadd.f32 %v1411, %v5220
    %v5222 = vpop.f32.mrb[0].mxu0
    %v5223 = vadd.f32 %v1415, %v5222
    %5224 = vdwg.mxu0
    %5225 = vmatprep.subr.mxu0 %v491
    %5226 = vmatpush1.msra.mxu0 %v490
    %5227 = vmatprep.subr.mxu0 %v497
    %5228 = vmatpush1.msra.mxu0 %v496
    %5229 = vmatprep.subr.mxu0 %v503
    %5230 = vmatpush1.msra.mxu0 %v502
    %5231 = vmatprep.subr.mxu0 %v509
    %5232 = vmatpush1.msra.mxu0 %v508
    %5233 = vmatprep.subr.mxu0 %v515
    %5234 = vmatpush1.msra.mxu0 %v514
    %5235 = vmatprep.subr.mxu0 %v521
    %5236 = vmatpush1.msra.mxu0 %v520
    %5237 = vmatprep.subr.mxu0 %v527
    %5238 = vmatpush1.msra.mxu0 %v526
    %5239 = vmatprep.subr.mxu0 %v533
    %5240 = vmatpush1.msra.mxu0 %v532
    %5241 = vmatprep.subr.mxu0 %v539
    %5242 = vmatpush1.msra.mxu0 %v538
    %5243 = vmatprep.subr.mxu0 %v545
    %5244 = vmatpush1.msra.mxu0 %v544
    %5245 = vmatprep.subr.mxu0 %v551
    %5246 = vmatpush1.msra.mxu0 %v550
    %5247 = vmatprep.subr.mxu0 %v557
    %5248 = vmatpush1.msra.mxu0 %v556
    %5249 = vmatprep.subr.mxu0 %v563
    %5250 = vmatpush1.msra.mxu0 %v562
    %5251 = vmatprep.subr.mxu0 %v569
    %5252 = vmatpush1.msra.mxu0 %v568
    %5253 = vmatprep.subr.mxu0 %v575
    %5254 = vmatpush1.msra.mxu0 %v574
    %5255 = vmatprep.subr.mxu0 %v581
    %5256 = vmatpush1.msra.mxu0 %v580
    %5257 = vmatprep.subr.mxu0 %v587
    %5258 = vmatpush1.msra.mxu0 %v586
    %5259 = vmatprep.subr.mxu0 %v593
    %5260 = vmatpush1.msra.mxu0 %v592
    %5261 = vmatprep.subr.mxu0 %v599
    %5262 = vmatpush1.msra.mxu0 %v598
    %5263 = vmatprep.subr.mxu0 %v605
    %5264 = vmatpush1.msra.mxu0 %v604
    %5265 = vmatprep.subr.mxu0 %v611
    %5266 = vmatpush1.msra.mxu0 %v610
    %5267 = vmatprep.subr.mxu0 %v617
    %5268 = vmatpush1.msra.mxu0 %v616
    %5269 = vmatprep.subr.mxu0 %v623
    %5270 = vmatpush1.msra.mxu0 %v622
    %5271 = vmatprep.subr.mxu0 %v629
    %5272 = vmatpush1.msra.mxu0 %v628
    %5273 = vmatprep.subr.mxu0 %v635
    %5274 = vmatpush1.msra.mxu0 %v634
    %5275 = vmatprep.subr.mxu0 %v641
    %5276 = vmatpush1.msra.mxu0 %v640
    %5277 = vmatprep.subr.mxu0 %v647
    %5278 = vmatpush1.msra.mxu0 %v646
    %5279 = vmatprep.subr.mxu0 %v653
    %5280 = vmatpush1.msra.mxu0 %v652
    %5281 = vmatprep.subr.mxu0 %v659
    %5282 = vmatpush1.msra.mxu0 %v658
    %5283 = vmatprep.subr.mxu0 %v665
    %5284 = vmatpush1.msra.mxu0 %v664
    %5285 = vmatprep.subr.mxu0 %v671
    %5286 = vmatpush1.msra.mxu0 %v670
    %5287 = vmatprep.subr.mxu0 %v677
    %5288 = vmatpush1.msra.mxu0 %v676
    %5289 = vmatprep.mubr.f32.mxu0 %v5153
    %5290 = vmatmul.mubr.f32.gmra.mrb[0].mxu0 %v5152
    %v5291 = vpop.f32.mrb[0].mxu0
    %v5292 = vadd.f32 %v1419, %v5291
    %v5293 = vpop.f32.mrb[0].mxu0
    %v5294 = vadd.f32 %v1423, %v5293
    %5295 = vdwg.mxu0
    %5296 = vmatprep.subr.mxu0 %v493
    %5297 = vmatpush1.msra.mxu0 %v492
    %5298 = vmatprep.subr.mxu0 %v499
    %5299 = vmatpush1.msra.mxu0 %v498
    %5300 = vmatprep.subr.mxu0 %v505
    %5301 = vmatpush1.msra.mxu0 %v504
    %5302 = vmatprep.subr.mxu0 %v511
    %5303 = vmatpush1.msra.mxu0 %v510
    %5304 = vmatprep.subr.mxu0 %v517
    %5305 = vmatpush1.msra.mxu0 %v516
    %5306 = vmatprep.subr.mxu0 %v523
    %5307 = vmatpush1.msra.mxu0 %v522
    %5308 = vmatprep.subr.mxu0 %v529
    %5309 = vmatpush1.msra.mxu0 %v528
    %5310 = vmatprep.subr.mxu0 %v535
    %5311 = vmatpush1.msra.mxu0 %v534
    %5312 = vmatprep.subr.mxu0 %v541
    %5313 = vmatpush1.msra.mxu0 %v540
    %5314 = vmatprep.subr.mxu0 %v547
    %5315 = vmatpush1.msra.mxu0 %v546
    %5316 = vmatprep.subr.mxu0 %v553
    %5317 = vmatpush1.msra.mxu0 %v552
    %5318 = vmatprep.subr.mxu0 %v559
    %5319 = vmatpush1.msra.mxu0 %v558
    %5320 = vmatprep.subr.mxu0 %v565
    %5321 = vmatpush1.msra.mxu0 %v564
    %5322 = vmatprep.subr.mxu0 %v571
    %5323 = vmatpush1.msra.mxu0 %v570
    %5324 = vmatprep.subr.mxu0 %v577
    %5325 = vmatpush1.msra.mxu0 %v576
    %5326 = vmatprep.subr.mxu0 %v583
    %5327 = vmatpush1.msra.mxu0 %v582
    %5328 = vmatprep.subr.mxu0 %v589
    %5329 = vmatpush1.msra.mxu0 %v588
    %5330 = vmatprep.subr.mxu0 %v595
    %5331 = vmatpush1.msra.mxu0 %v594
    %5332 = vmatprep.subr.mxu0 %v601
    %5333 = vmatpush1.msra.mxu0 %v600
    %5334 = vmatprep.subr.mxu0 %v607
    %5335 = vmatpush1.msra.mxu0 %v606
    %5336 = vmatprep.subr.mxu0 %v613
    %5337 = vmatpush1.msra.mxu0 %v612
    %5338 = vmatprep.subr.mxu0 %v619
    %5339 = vmatpush1.msra.mxu0 %v618
    %5340 = vmatprep.subr.mxu0 %v625
    %5341 = vmatpush1.msra.mxu0 %v624
    %5342 = vmatprep.subr.mxu0 %v631
    %5343 = vmatpush1.msra.mxu0 %v630
    %5344 = vmatprep.subr.mxu0 %v637
    %5345 = vmatpush1.msra.mxu0 %v636
    %5346 = vmatprep.subr.mxu0 %v643
    %5347 = vmatpush1.msra.mxu0 %v642
    %5348 = vmatprep.subr.mxu0 %v649
    %5349 = vmatpush1.msra.mxu0 %v648
    %5350 = vmatprep.subr.mxu0 %v655
    %5351 = vmatpush1.msra.mxu0 %v654
    %5352 = vmatprep.subr.mxu0 %v661
    %5353 = vmatpush1.msra.mxu0 %v660
    %5354 = vmatprep.subr.mxu0 %v667
    %5355 = vmatpush1.msra.mxu0 %v666
    %5356 = vmatprep.subr.mxu0 %v673
    %5357 = vmatpush1.msra.mxu0 %v672
    %5358 = vmatprep.subr.mxu0 %v679
    %5359 = vmatpush1.msra.mxu0 %v678
    %5360 = vmatprep.mubr.f32.mxu0 %v5153
    %5361 = vmatmul.mubr.f32.gmra.mrb[0].mxu0 %v5152
    %v5362 = vpop.f32.mrb[0].mxu0
    %v5363 = vadd.f32 %v1427, %v5362
    %v5364 = vpop.f32.mrb[0].mxu0
    %v5365 = vadd.f32 %v1431, %v5364
    %5366 = vdwg.mxu0
    %5367 = vmatprep.subr.mxu0 %v295
    %5368 = vmatpush1.msra.mxu0 %v294
    %5369 = vmatprep.subr.mxu0 %v301
    %5370 = vmatpush1.msra.mxu0 %v300
    %5371 = vmatprep.subr.mxu0 %v307
    %5372 = vmatpush1.msra.mxu0 %v306
    %5373 = vmatprep.subr.mxu0 %v313
    %5374 = vmatpush1.msra.mxu0 %v312
    %5375 = vmatprep.subr.mxu0 %v319
    %5376 = vmatpush1.msra.mxu0 %v318
    %5377 = vmatprep.subr.mxu0 %v325
    %5378 = vmatpush1.msra.mxu0 %v324
    %5379 = vmatprep.subr.mxu0 %v331
    %5380 = vmatpush1.msra.mxu0 %v330
    %5381 = vmatprep.subr.mxu0 %v337
    %5382 = vmatpush1.msra.mxu0 %v336
    %5383 = vmatprep.subr.mxu0 %v343
    %5384 = vmatpush1.msra.mxu0 %v342
    %5385 = vmatprep.subr.mxu0 %v349
    %5386 = vmatpush1.msra.mxu0 %v348
    %5387 = vmatprep.subr.mxu0 %v355
    %5388 = vmatpush1.msra.mxu0 %v354
    %5389 = vmatprep.subr.mxu0 %v361
    %5390 = vmatpush1.msra.mxu0 %v360
    %5391 = vmatprep.subr.mxu0 %v367
    %5392 = vmatpush1.msra.mxu0 %v366
    %5393 = vmatprep.subr.mxu0 %v373
    %5394 = vmatpush1.msra.mxu0 %v372
    %5395 = vmatprep.subr.mxu0 %v379
    %5396 = vmatpush1.msra.mxu0 %v378
    %5397 = vmatprep.subr.mxu0 %v385
    %5398 = vmatpush1.msra.mxu0 %v384
    %5399 = vmatprep.subr.mxu0 %v391
    %5400 = vmatpush1.msra.mxu0 %v390
    %5401 = vmatprep.subr.mxu0 %v397
    %5402 = vmatpush1.msra.mxu0 %v396
    %5403 = vmatprep.subr.mxu0 %v403
    %5404 = vmatpush1.msra.mxu0 %v402
    %5405 = vmatprep.subr.mxu0 %v409
    %5406 = vmatpush1.msra.mxu0 %v408
    %5407 = vmatprep.subr.mxu0 %v415
    %5408 = vmatpush1.msra.mxu0 %v414
    %5409 = vmatprep.subr.mxu0 %v421
    %5410 = vmatpush1.msra.mxu0 %v420
    %5411 = vmatprep.subr.mxu0 %v427
    %5412 = vmatpush1.msra.mxu0 %v426
    %5413 = vmatprep.subr.mxu0 %v433
    %5414 = vmatpush1.msra.mxu0 %v432
    %5415 = vmatprep.subr.mxu0 %v439
    %5416 = vmatpush1.msra.mxu0 %v438
    %5417 = vmatprep.subr.mxu0 %v445
    %5418 = vmatpush1.msra.mxu0 %v444
    %5419 = vmatprep.subr.mxu0 %v451
    %5420 = vmatpush1.msra.mxu0 %v450
    %5421 = vmatprep.subr.mxu0 %v457
    %5422 = vmatpush1.msra.mxu0 %v456
    %5423 = vmatprep.subr.mxu0 %v463
    %5424 = vmatpush1.msra.mxu0 %v462
    %5425 = vmatprep.subr.mxu0 %v469
    %5426 = vmatpush1.msra.mxu0 %v468
    %5427 = vmatprep.subr.mxu0 %v475
    %5428 = vmatpush1.msra.mxu0 %v474
    %5429 = vmatprep.subr.mxu0 %v481
    %5430 = vmatpush1.msra.mxu0 %v480
    %5431 = vmatprep.mubr.f32.mxu0 %v4882
    %5432 = vmatmul.mubr.f32.gmra.mrb[0].mxu0 %v4881
    %v5433 = vpop.f32.mrb[0].mxu0
    %v5434 = vadd.f32 0.0, %v5433
    %v5435 = vpop.f32.mrb[0].mxu0
    %v5436 = vadd.f32 0.0, %v5435
    %5437 = vdwg.mxu0
    %5438 = vmatprep.subr.mxu0 %v297
    %5439 = vmatpush1.msra.mxu0 %v296
    %5440 = vmatprep.subr.mxu0 %v303
    %5441 = vmatpush1.msra.mxu0 %v302
    %5442 = vmatprep.subr.mxu0 %v309
    %5443 = vmatpush1.msra.mxu0 %v308
    %5444 = vmatprep.subr.mxu0 %v315
    %5445 = vmatpush1.msra.mxu0 %v314
    %5446 = vmatprep.subr.mxu0 %v321
    %5447 = vmatpush1.msra.mxu0 %v320
    %5448 = vmatprep.subr.mxu0 %v327
    %5449 = vmatpush1.msra.mxu0 %v326
    %5450 = vmatprep.subr.mxu0 %v333
    %5451 = vmatpush1.msra.mxu0 %v332
    %5452 = vmatprep.subr.mxu0 %v339
    %5453 = vmatpush1.msra.mxu0 %v338
    %5454 = vmatprep.subr.mxu0 %v345
    %5455 = vmatpush1.msra.mxu0 %v344
    %5456 = vmatprep.subr.mxu0 %v351
    %5457 = vmatpush1.msra.mxu0 %v350
    %5458 = vmatprep.subr.mxu0 %v357
    %5459 = vmatpush1.msra.mxu0 %v356
    %5460 = vmatprep.subr.mxu0 %v363
    %5461 = vmatpush1.msra.mxu0 %v362
    %5462 = vmatprep.subr.mxu0 %v369
    %5463 = vmatpush1.msra.mxu0 %v368
    %5464 = vmatprep.subr.mxu0 %v375
    %5465 = vmatpush1.msra.mxu0 %v374
    %5466 = vmatprep.subr.mxu0 %v381
    %5467 = vmatpush1.msra.mxu0 %v380
    %5468 = vmatprep.subr.mxu0 %v387
    %5469 = vmatpush1.msra.mxu0 %v386
    %5470 = vmatprep.subr.mxu0 %v393
    %5471 = vmatpush1.msra.mxu0 %v392
    %5472 = vmatprep.subr.mxu0 %v399
    %5473 = vmatpush1.msra.mxu0 %v398
    %5474 = vmatprep.subr.mxu0 %v405
    %5475 = vmatpush1.msra.mxu0 %v404
    %5476 = vmatprep.subr.mxu0 %v411
    %5477 = vmatpush1.msra.mxu0 %v410
    %5478 = vmatprep.subr.mxu0 %v417
    %5479 = vmatpush1.msra.mxu0 %v416
    %5480 = vmatprep.subr.mxu0 %v423
    %5481 = vmatpush1.msra.mxu0 %v422
    %5482 = vmatprep.subr.mxu0 %v429
    %5483 = vmatpush1.msra.mxu0 %v428
    %5484 = vmatprep.subr.mxu0 %v435
    %5485 = vmatpush1.msra.mxu0 %v434
    %5486 = vmatprep.subr.mxu0 %v441
    %5487 = vmatpush1.msra.mxu0 %v440
    %5488 = vmatprep.subr.mxu0 %v447
    %5489 = vmatpush1.msra.mxu0 %v446
    %5490 = vmatprep.subr.mxu0 %v453
    %5491 = vmatpush1.msra.mxu0 %v452
    %5492 = vmatprep.subr.mxu0 %v459
    %5493 = vmatpush1.msra.mxu0 %v458
    %5494 = vmatprep.subr.mxu0 %v465
    %5495 = vmatpush1.msra.mxu0 %v464
    %5496 = vmatprep.subr.mxu0 %v471
    %5497 = vmatpush1.msra.mxu0 %v470
    %5498 = vmatprep.subr.mxu0 %v477
    %5499 = vmatpush1.msra.mxu0 %v476
    %5500 = vmatprep.subr.mxu0 %v483
    %5501 = vmatpush1.msra.mxu0 %v482
    %5502 = vmatprep.mubr.f32.mxu0 %v4882
    %5503 = vmatmul.mubr.f32.gmra.mrb[0].mxu0 %v4881
    %v5504 = vpop.f32.mrb[0].mxu0
    %v5505 = vadd.f32 0.0, %v5504
    %v5506 = vpop.f32.mrb[0].mxu0
    %v5507 = vadd.f32 0.0, %v5506
    %5508 = vdwg.mxu0
    %5509 = vmatprep.subr.mxu0 %v299
    %5510 = vmatpush1.msra.mxu0 %v298
    %5511 = vmatprep.subr.mxu0 %v305
    %5512 = vmatpush1.msra.mxu0 %v304
    %5513 = vmatprep.subr.mxu0 %v311
    %5514 = vmatpush1.msra.mxu0 %v310
    %5515 = vmatprep.subr.mxu0 %v317
    %5516 = vmatpush1.msra.mxu0 %v316
    %5517 = vmatprep.subr.mxu0 %v323
    %5518 = vmatpush1.msra.mxu0 %v322
    %5519 = vmatprep.subr.mxu0 %v329
    %5520 = vmatpush1.msra.mxu0 %v328
    %5521 = vmatprep.subr.mxu0 %v335
    %5522 = vmatpush1.msra.mxu0 %v334
    %5523 = vmatprep.subr.mxu0 %v341
    %5524 = vmatpush1.msra.mxu0 %v340
    %5525 = vmatprep.subr.mxu0 %v347
    %5526 = vmatpush1.msra.mxu0 %v346
    %5527 = vmatprep.subr.mxu0 %v353
    %5528 = vmatpush1.msra.mxu0 %v352
    %5529 = vmatprep.subr.mxu0 %v359
    %5530 = vmatpush1.msra.mxu0 %v358
    %5531 = vmatprep.subr.mxu0 %v365
    %5532 = vmatpush1.msra.mxu0 %v364
    %5533 = vmatprep.subr.mxu0 %v371
    %5534 = vmatpush1.msra.mxu0 %v370
    %5535 = vmatprep.subr.mxu0 %v377
    %5536 = vmatpush1.msra.mxu0 %v376
    %5537 = vmatprep.subr.mxu0 %v383
    %5538 = vmatpush1.msra.mxu0 %v382
    %5539 = vmatprep.subr.mxu0 %v389
    %5540 = vmatpush1.msra.mxu0 %v388
    %5541 = vmatprep.subr.mxu0 %v395
    %5542 = vmatpush1.msra.mxu0 %v394
    %5543 = vmatprep.subr.mxu0 %v401
    %5544 = vmatpush1.msra.mxu0 %v400
    %5545 = vmatprep.subr.mxu0 %v407
    %5546 = vmatpush1.msra.mxu0 %v406
    %5547 = vmatprep.subr.mxu0 %v413
    %5548 = vmatpush1.msra.mxu0 %v412
    %5549 = vmatprep.subr.mxu0 %v419
    %5550 = vmatpush1.msra.mxu0 %v418
    %5551 = vmatprep.subr.mxu0 %v425
    %5552 = vmatpush1.msra.mxu0 %v424
    %5553 = vmatprep.subr.mxu0 %v431
    %5554 = vmatpush1.msra.mxu0 %v430
    %5555 = vmatprep.subr.mxu0 %v437
    %5556 = vmatpush1.msra.mxu0 %v436
    %5557 = vmatprep.subr.mxu0 %v443
    %5558 = vmatpush1.msra.mxu0 %v442
    %5559 = vmatprep.subr.mxu0 %v449
    %5560 = vmatpush1.msra.mxu0 %v448
    %5561 = vmatprep.subr.mxu0 %v455
    %5562 = vmatpush1.msra.mxu0 %v454
    %5563 = vmatprep.subr.mxu0 %v461
    %5564 = vmatpush1.msra.mxu0 %v460
    %5565 = vmatprep.subr.mxu0 %v467
    %5566 = vmatpush1.msra.mxu0 %v466
    %5567 = vmatprep.subr.mxu0 %v473
    %5568 = vmatpush1.msra.mxu0 %v472
    %5569 = vmatprep.subr.mxu0 %v479
    %5570 = vmatpush1.msra.mxu0 %v478
    %5571 = vmatprep.subr.mxu0 %v485
    %5572 = vmatpush1.msra.mxu0 %v484
    %5573 = vmatprep.mubr.f32.mxu0 %v4882
    %5574 = vmatmul.mubr.f32.gmra.mrb[0].mxu0 %v4881
    %v5575 = vpop.f32.mrb[0].mxu0
    %v5576 = vadd.f32 0.0, %v5575
    %v5577 = vpop.f32.mrb[0].mxu0
    %v5578 = vadd.f32 0.0, %v5577
    %5579 = vdwg.mxu0
    %v5580 = vadd.f32 %v5221, %v5434
    %v5581 = vadd.f32 %v5223, %v5436
    %v5582 = vxor.u32 %v5580, 2147483648
    %v5583 = vxor.u32 %v5581, 2147483648
    %v5584 = vmul.f32 %v5582, 1.442695
    %v5585 = vpow.pop %v5584
    %v5586 = vmul.f32 %v5583, 1.442695
    %v5587 = vpow.pop %v5586
    %v5588 = vadd.f32 %v5585, 1.0
    %v5589 = vadd.f32 %v5587, 1.0
    %v5590 = vrcp.pop %v5588
    %v5591 = vmul.f32 1.0, %v5590
    %v5592 = vrcp.pop %v5589
    %v5593 = vmul.f32 1.0, %v5592
    %v5594 = vadd.f32 %v5292, %v5505
    %v5595 = vadd.f32 %v5294, %v5507
    %v5596 = vxor.u32 %v5594, 2147483648
    %v5597 = vxor.u32 %v5595, 2147483648
    %v5598 = vmul.f32 %v5596, 1.442695
    %v5599 = vpow.pop %v5598
    %v5600 = vmul.f32 %v5597, 1.442695
    %v5601 = vpow.pop %v5600
    %v5602 = vadd.f32 %v5599, 1.0
    %v5603 = vadd.f32 %v5601, 1.0
    %v5604 = vrcp.pop %v5602
    %v5605 = vmul.f32 1.0, %v5604
    %v5606 = vrcp.pop %v5603
    %v5607 = vmul.f32 1.0, %v5606
    %v5608 = vadd.f32 %v5576, %v1896
    %v5609 = vadd.f32 %v5578, %v1900
    %v5610 = vmul.f32 %v5591, %v5608
    %v5611 = vmul.f32 %v5593, %v5609
    %v5612 = vadd.f32 %v5363, %v5610
    %v5613 = vadd.f32 %v5365, %v5611
    %v5614 = vtanh.pop %v5612
    %v5615 = vtanh.pop %v5613
    %v5616 = vsub.f32 1.0, %v5605
    %v5617 = vsub.f32 1.0, %v5607
    %v5618 = vmul.f32 %v5616, %v5614
    %v5619 = vmul.f32 %v5617, %v5615
    %v5620 = vmul.f32 %v5605, %v4881
    %v5621 = vmul.f32 %v5607, %v4882
    %v5622 = vadd.f32 %v5618, %v5620
    %v5623 = vadd.f32 %v5619, %v5621
    %vm5624 = vcmp.eq.s32.totalorder %v1132, 6
    %v5625 = vsel %vm5624, 1, 0
    %5626 = vset.pattern.permute.xlu0 0
    %5627 = vperm.xlu0 %5626, %v5625
    %v5628 = vpop.permute.xlu0 %5627
    %vm5629 = vcmp.eq.s32.totalorder %v5628, 1
    %v5630 = vsel %vm5629, %v5622, %v4889
    %v5631 = vsel %vm5629, %v5623, %v4890
    %v5632 = vld [vmem:[#allocation2 + $0x120] sm:$0xff]
    %v5633 = vld [vmem:[#allocation2 + $0x128] sm:$0xff]
    %v5634 = vld [vmem:[#allocation2 + $0x130] sm:$0xff]
    %v5635 = vld [vmem:[#allocation2 + $0x138] sm:$0xff]
    %v5636 = vld [vmem:[#allocation2 + $0x140] sm:$0xff]
    %v5637 = vld [vmem:[#allocation2 + $0x148] sm:$0xff]
    %5638 = vmatprep.subr.mxu0 %v103
    %5639 = vmatpush1.msra.mxu0 %v102
    %5640 = vmatprep.subr.mxu0 %v109
    %5641 = vmatpush1.msra.mxu0 %v108
    %5642 = vmatprep.subr.mxu0 %v115
    %5643 = vmatpush1.msra.mxu0 %v114
    %5644 = vmatprep.subr.mxu0 %v121
    %5645 = vmatpush1.msra.mxu0 %v120
    %5646 = vmatprep.subr.mxu0 %v127
    %5647 = vmatpush1.msra.mxu0 %v126
    %5648 = vmatprep.subr.mxu0 %v133
    %5649 = vmatpush1.msra.mxu0 %v132
    %5650 = vmatprep.subr.mxu0 %v139
    %5651 = vmatpush1.msra.mxu0 %v138
    %5652 = vmatprep.subr.mxu0 %v145
    %5653 = vmatpush1.msra.mxu0 %v144
    %5654 = vmatprep.subr.mxu0 %v151
    %5655 = vmatpush1.msra.mxu0 %v150
    %5656 = vmatprep.subr.mxu0 %v157
    %5657 = vmatpush1.msra.mxu0 %v156
    %5658 = vmatprep.subr.mxu0 %v163
    %5659 = vmatpush1.msra.mxu0 %v162
    %5660 = vmatprep.subr.mxu0 %v169
    %5661 = vmatpush1.msra.mxu0 %v168
    %5662 = vmatprep.subr.mxu0 %v175
    %5663 = vmatpush1.msra.mxu0 %v174
    %5664 = vmatprep.subr.mxu0 %v181
    %5665 = vmatpush1.msra.mxu0 %v180
    %5666 = vmatprep.subr.mxu0 %v187
    %5667 = vmatpush1.msra.mxu0 %v186
    %5668 = vmatprep.subr.mxu0 %v193
    %5669 = vmatpush1.msra.mxu0 %v192
    %5670 = vmatprep.subr.mxu0 %v199
    %5671 = vmatpush1.msra.mxu0 %v198
    %5672 = vmatprep.subr.mxu0 %v205
    %5673 = vmatpush1.msra.mxu0 %v204
    %5674 = vmatprep.subr.mxu0 %v211
    %5675 = vmatpush1.msra.mxu0 %v210
    %5676 = vmatprep.subr.mxu0 %v217
    %5677 = vmatpush1.msra.mxu0 %v216
    %5678 = vmatprep.subr.mxu0 %v223
    %5679 = vmatpush1.msra.mxu0 %v222
    %5680 = vmatprep.subr.mxu0 %v229
    %5681 = vmatpush1.msra.mxu0 %v228
    %5682 = vmatprep.subr.mxu0 %v235
    %5683 = vmatpush1.msra.mxu0 %v234
    %5684 = vmatprep.subr.mxu0 %v241
    %5685 = vmatpush1.msra.mxu0 %v240
    %5686 = vmatprep.subr.mxu0 %v247
    %5687 = vmatpush1.msra.mxu0 %v246
    %5688 = vmatprep.subr.mxu0 %v253
    %5689 = vmatpush1.msra.mxu0 %v252
    %5690 = vmatprep.subr.mxu0 %v259
    %5691 = vmatpush1.msra.mxu0 %v258
    %5692 = vmatprep.subr.mxu0 %v265
    %5693 = vmatpush1.msra.mxu0 %v264
    %5694 = vmatprep.subr.mxu0 %v271
    %5695 = vmatpush1.msra.mxu0 %v270
    %5696 = vmatprep.subr.mxu0 %v277
    %5697 = vmatpush1.msra.mxu0 %v276
    %5698 = vmatprep.subr.mxu0 %v283
    %5699 = vmatpush1.msra.mxu0 %v282
    %5700 = vmatprep.subr.mxu0 %v289
    %5701 = vmatpush1.msra.mxu0 %v288
    %5702 = vmatprep.mubr.f32.mxu0 %v5153
    %5703 = vmatmul.mubr.f32.gmra.mrb[0].mxu0 %v5152
    %v5704 = vpop.f32.mrb[0].mxu0
    %v5705 = vadd.f32 0.0, %v5704
    %v5706 = vpop.f32.mrb[0].mxu0
    %v5707 = vadd.f32 0.0, %v5706
    %5708 = vdwg.mxu0
    %5709 = vmatprep.subr.mxu0 %v105
    %5710 = vmatpush1.msra.mxu0 %v104
    %5711 = vmatprep.subr.mxu0 %v111
    %5712 = vmatpush1.msra.mxu0 %v110
    %5713 = vmatprep.subr.mxu0 %v117
    %5714 = vmatpush1.msra.mxu0 %v116
    %5715 = vmatprep.subr.mxu0 %v123
    %5716 = vmatpush1.msra.mxu0 %v122
    %5717 = vmatprep.subr.mxu0 %v129
    %5718 = vmatpush1.msra.mxu0 %v128
    %5719 = vmatprep.subr.mxu0 %v135
    %5720 = vmatpush1.msra.mxu0 %v134
    %5721 = vmatprep.subr.mxu0 %v141
    %5722 = vmatpush1.msra.mxu0 %v140
    %5723 = vmatprep.subr.mxu0 %v147
    %5724 = vmatpush1.msra.mxu0 %v146
    %5725 = vmatprep.subr.mxu0 %v153
    %5726 = vmatpush1.msra.mxu0 %v152
    %5727 = vmatprep.subr.mxu0 %v159
    %5728 = vmatpush1.msra.mxu0 %v158
    %5729 = vmatprep.subr.mxu0 %v165
    %5730 = vmatpush1.msra.mxu0 %v164
    %5731 = vmatprep.subr.mxu0 %v171
    %5732 = vmatpush1.msra.mxu0 %v170
    %5733 = vmatprep.subr.mxu0 %v177
    %5734 = vmatpush1.msra.mxu0 %v176
    %5735 = vmatprep.subr.mxu0 %v183
    %5736 = vmatpush1.msra.mxu0 %v182
    %5737 = vmatprep.subr.mxu0 %v189
    %5738 = vmatpush1.msra.mxu0 %v188
    %5739 = vmatprep.subr.mxu0 %v195
    %5740 = vmatpush1.msra.mxu0 %v194
    %5741 = vmatprep.subr.mxu0 %v201
    %5742 = vmatpush1.msra.mxu0 %v200
    %5743 = vmatprep.subr.mxu0 %v207
    %5744 = vmatpush1.msra.mxu0 %v206
    %5745 = vmatprep.subr.mxu0 %v213
    %5746 = vmatpush1.msra.mxu0 %v212
    %5747 = vmatprep.subr.mxu0 %v219
    %5748 = vmatpush1.msra.mxu0 %v218
    %5749 = vmatprep.subr.mxu0 %v225
    %5750 = vmatpush1.msra.mxu0 %v224
    %5751 = vmatprep.subr.mxu0 %v231
    %5752 = vmatpush1.msra.mxu0 %v230
    %5753 = vmatprep.subr.mxu0 %v237
    %5754 = vmatpush1.msra.mxu0 %v236
    %5755 = vmatprep.subr.mxu0 %v243
    %5756 = vmatpush1.msra.mxu0 %v242
    %5757 = vmatprep.subr.mxu0 %v249
    %5758 = vmatpush1.msra.mxu0 %v248
    %5759 = vmatprep.subr.mxu0 %v255
    %5760 = vmatpush1.msra.mxu0 %v254
    %5761 = vmatprep.subr.mxu0 %v261
    %5762 = vmatpush1.msra.mxu0 %v260
    %5763 = vmatprep.subr.mxu0 %v267
    %5764 = vmatpush1.msra.mxu0 %v266
    %5765 = vmatprep.subr.mxu0 %v273
    %5766 = vmatpush1.msra.mxu0 %v272
    %5767 = vmatprep.subr.mxu0 %v279
    %5768 = vmatpush1.msra.mxu0 %v278
    %5769 = vmatprep.subr.mxu0 %v285
    %5770 = vmatpush1.msra.mxu0 %v284
    %5771 = vmatprep.subr.mxu0 %v291
    %5772 = vmatpush1.msra.mxu0 %v290
    %5773 = vmatprep.mubr.f32.mxu0 %v5153
    %5774 = vmatmul.mubr.f32.gmra.mrb[0].mxu0 %v5152
    %v5775 = vpop.f32.mrb[0].mxu0
    %v5776 = vadd.f32 0.0, %v5775
    %v5777 = vpop.f32.mrb[0].mxu0
    %v5778 = vadd.f32 0.0, %v5777
    %5779 = vdwg.mxu0
    %5780 = vmatprep.subr.mxu0 %v107
    %5781 = vmatpush1.msra.mxu0 %v106
    %5782 = vmatprep.subr.mxu0 %v113
    %5783 = vmatpush1.msra.mxu0 %v112
    %5784 = vmatprep.subr.mxu0 %v119
    %5785 = vmatpush1.msra.mxu0 %v118
    %5786 = vmatprep.subr.mxu0 %v125
    %5787 = vmatpush1.msra.mxu0 %v124
    %5788 = vmatprep.subr.mxu0 %v131
    %5789 = vmatpush1.msra.mxu0 %v130
    %5790 = vmatprep.subr.mxu0 %v137
    %5791 = vmatpush1.msra.mxu0 %v136
    %5792 = vmatprep.subr.mxu0 %v143
    %5793 = vmatpush1.msra.mxu0 %v142
    %5794 = vmatprep.subr.mxu0 %v149
    %5795 = vmatpush1.msra.mxu0 %v148
    %5796 = vmatprep.subr.mxu0 %v155
    %5797 = vmatpush1.msra.mxu0 %v154
    %5798 = vmatprep.subr.mxu0 %v161
    %5799 = vmatpush1.msra.mxu0 %v160
    %5800 = vmatprep.subr.mxu0 %v167
    %5801 = vmatpush1.msra.mxu0 %v166
    %5802 = vmatprep.subr.mxu0 %v173
    %5803 = vmatpush1.msra.mxu0 %v172
    %5804 = vmatprep.subr.mxu0 %v179
    %5805 = vmatpush1.msra.mxu0 %v178
    %5806 = vmatprep.subr.mxu0 %v185
    %5807 = vmatpush1.msra.mxu0 %v184
    %5808 = vmatprep.subr.mxu0 %v191
    %5809 = vmatpush1.msra.mxu0 %v190
    %5810 = vmatprep.subr.mxu0 %v197
    %5811 = vmatpush1.msra.mxu0 %v196
    %5812 = vmatprep.subr.mxu0 %v203
    %5813 = vmatpush1.msra.mxu0 %v202
    %5814 = vmatprep.subr.mxu0 %v209
    %5815 = vmatpush1.msra.mxu0 %v208
    %5816 = vmatprep.subr.mxu0 %v215
    %5817 = vmatpush1.msra.mxu0 %v214
    %5818 = vmatprep.subr.mxu0 %v221
    %5819 = vmatpush1.msra.mxu0 %v220
    %5820 = vmatprep.subr.mxu0 %v227
    %5821 = vmatpush1.msra.mxu0 %v226
    %5822 = vmatprep.subr.mxu0 %v233
    %5823 = vmatpush1.msra.mxu0 %v232
    %5824 = vmatprep.subr.mxu0 %v239
    %5825 = vmatpush1.msra.mxu0 %v238
    %5826 = vmatprep.subr.mxu0 %v245
    %5827 = vmatpush1.msra.mxu0 %v244
    %5828 = vmatprep.subr.mxu0 %v251
    %5829 = vmatpush1.msra.mxu0 %v250
    %5830 = vmatprep.subr.mxu0 %v257
    %5831 = vmatpush1.msra.mxu0 %v256
    %5832 = vmatprep.subr.mxu0 %v263
    %5833 = vmatpush1.msra.mxu0 %v262
    %5834 = vmatprep.subr.mxu0 %v269
    %5835 = vmatpush1.msra.mxu0 %v268
    %5836 = vmatprep.subr.mxu0 %v275
    %5837 = vmatpush1.msra.mxu0 %v274
    %5838 = vmatprep.subr.mxu0 %v281
    %5839 = vmatpush1.msra.mxu0 %v280
    %5840 = vmatprep.subr.mxu0 %v287
    %5841 = vmatpush1.msra.mxu0 %v286
    %5842 = vmatprep.subr.mxu0 %v293
    %5843 = vmatpush1.msra.mxu0 %v292
    %5844 = vmatprep.mubr.f32.mxu0 %v5153
    %5845 = vmatmul.mubr.f32.gmra.mrb[0].mxu0 %v5152
    %v5846 = vpop.f32.mrb[0].mxu0
    %v5847 = vadd.f32 0.0, %v5846
    %v5848 = vpop.f32.mrb[0].mxu0
    %v5849 = vadd.f32 0.0, %v5848
    %5850 = vdwg.mxu0
    %v5851 = vadd.f32 %v5632, %v5705
    %v5852 = vadd.f32 %v5633, %v5707
    %v5853 = vxor.u32 %v5851, 2147483648
    %v5854 = vxor.u32 %v5852, 2147483648
    %v5855 = vmul.f32 %v5853, 1.442695
    %v5856 = vpow.pop %v5855
    %v5857 = vmul.f32 %v5854, 1.442695
    %v5858 = vpow.pop %v5857
    %v5859 = vadd.f32 %v5856, 1.0
    %v5860 = vadd.f32 %v5858, 1.0
    %v5861 = vrcp.pop %v5859
    %v5862 = vmul.f32 1.0, %v5861
    %v5863 = vrcp.pop %v5860
    %v5864 = vmul.f32 1.0, %v5863
    %v5865 = vadd.f32 %v5634, %v5776
    %v5866 = vadd.f32 %v5635, %v5778
    %v5867 = vxor.u32 %v5865, 2147483648
    %v5868 = vxor.u32 %v5866, 2147483648
    %v5869 = vmul.f32 %v5867, 1.442695
    %v5870 = vpow.pop %v5869
    %v5871 = vmul.f32 %v5868, 1.442695
    %v5872 = vpow.pop %v5871
    %v5873 = vadd.f32 %v5870, 1.0
    %v5874 = vadd.f32 %v5872, 1.0
    %v5875 = vrcp.pop %v5873
    %v5876 = vmul.f32 1.0, %v5875
    %v5877 = vrcp.pop %v5874
    %v5878 = vmul.f32 1.0, %v5877
    %v5879 = vadd.f32 %v5847, %v1384
    %v5880 = vadd.f32 %v5849, %v1388
    %v5881 = vmul.f32 %v5862, %v5879
    %v5882 = vmul.f32 %v5864, %v5880
    %v5883 = vadd.f32 %v5636, %v5881
    %v5884 = vadd.f32 %v5637, %v5882
    %v5885 = vtanh.pop %v5883
    %v5886 = vtanh.pop %v5884
    %v5887 = vsub.f32 1.0, %v5876
    %v5888 = vsub.f32 1.0, %v5878
    %v5889 = vmul.f32 %v5887, %v5885
    %v5890 = vmul.f32 %v5888, %v5886
    %v5891 = vmul.f32 %v5876, %v5152
    %v5892 = vmul.f32 %v5878, %v5153
    %v5893 = vadd.f32 %v5889, %v5891
    %v5894 = vadd.f32 %v5890, %v5892
    %5895 = vmatprep.subr.mxu0 %v489
    %5896 = vmatpush1.msra.mxu0 %v488
    %5897 = vmatprep.subr.mxu0 %v495
    %5898 = vmatpush1.msra.mxu0 %v494
    %5899 = vmatprep.subr.mxu0 %v501
    %5900 = vmatpush1.msra.mxu0 %v500
    %5901 = vmatprep.subr.mxu0 %v507
    %5902 = vmatpush1.msra.mxu0 %v506
    %5903 = vmatprep.subr.mxu0 %v513
    %5904 = vmatpush1.msra.mxu0 %v512
    %5905 = vmatprep.subr.mxu0 %v519
    %5906 = vmatpush1.msra.mxu0 %v518
    %5907 = vmatprep.subr.mxu0 %v525
    %5908 = vmatpush1.msra.mxu0 %v524
    %5909 = vmatprep.subr.mxu0 %v531
    %5910 = vmatpush1.msra.mxu0 %v530
    %5911 = vmatprep.subr.mxu0 %v537
    %5912 = vmatpush1.msra.mxu0 %v536
    %5913 = vmatprep.subr.mxu0 %v543
    %5914 = vmatpush1.msra.mxu0 %v542
    %5915 = vmatprep.subr.mxu0 %v549
    %5916 = vmatpush1.msra.mxu0 %v548
    %5917 = vmatprep.subr.mxu0 %v555
    %5918 = vmatpush1.msra.mxu0 %v554
    %5919 = vmatprep.subr.mxu0 %v561
    %5920 = vmatpush1.msra.mxu0 %v560
    %5921 = vmatprep.subr.mxu0 %v567
    %5922 = vmatpush1.msra.mxu0 %v566
    %5923 = vmatprep.subr.mxu0 %v573
    %5924 = vmatpush1.msra.mxu0 %v572
    %5925 = vmatprep.subr.mxu0 %v579
    %5926 = vmatpush1.msra.mxu0 %v578
    %5927 = vmatprep.subr.mxu0 %v585
    %5928 = vmatpush1.msra.mxu0 %v584
    %5929 = vmatprep.subr.mxu0 %v591
    %5930 = vmatpush1.msra.mxu0 %v590
    %5931 = vmatprep.subr.mxu0 %v597
    %5932 = vmatpush1.msra.mxu0 %v596
    %5933 = vmatprep.subr.mxu0 %v603
    %5934 = vmatpush1.msra.mxu0 %v602
    %5935 = vmatprep.subr.mxu0 %v609
    %5936 = vmatpush1.msra.mxu0 %v608
    %5937 = vmatprep.subr.mxu0 %v615
    %5938 = vmatpush1.msra.mxu0 %v614
    %5939 = vmatprep.subr.mxu0 %v621
    %5940 = vmatpush1.msra.mxu0 %v620
    %5941 = vmatprep.subr.mxu0 %v627
    %5942 = vmatpush1.msra.mxu0 %v626
    %5943 = vmatprep.subr.mxu0 %v633
    %5944 = vmatpush1.msra.mxu0 %v632
    %5945 = vmatprep.subr.mxu0 %v639
    %5946 = vmatpush1.msra.mxu0 %v638
    %5947 = vmatprep.subr.mxu0 %v645
    %5948 = vmatpush1.msra.mxu0 %v644
    %5949 = vmatprep.subr.mxu0 %v651
    %5950 = vmatpush1.msra.mxu0 %v650
    %5951 = vmatprep.subr.mxu0 %v657
    %5952 = vmatpush1.msra.mxu0 %v656
    %5953 = vmatprep.subr.mxu0 %v663
    %5954 = vmatpush1.msra.mxu0 %v662
    %5955 = vmatprep.subr.mxu0 %v669
    %5956 = vmatpush1.msra.mxu0 %v668
    %5957 = vmatprep.subr.mxu0 %v675
    %5958 = vmatpush1.msra.mxu0 %v674
    %5959 = vmatprep.mubr.f32.mxu0 %v5894
    %5960 = vmatmul.mubr.f32.gmra.mrb[0].mxu0 %v5893
    %v5961 = vpop.f32.mrb[0].mxu0
    %v5962 = vadd.f32 %v1411, %v5961
    %v5963 = vpop.f32.mrb[0].mxu0
    %v5964 = vadd.f32 %v1415, %v5963
    %5965 = vdwg.mxu0
    %5966 = vmatprep.subr.mxu0 %v491
    %5967 = vmatpush1.msra.mxu0 %v490
    %5968 = vmatprep.subr.mxu0 %v497
    %5969 = vmatpush1.msra.mxu0 %v496
    %5970 = vmatprep.subr.mxu0 %v503
    %5971 = vmatpush1.msra.mxu0 %v502
    %5972 = vmatprep.subr.mxu0 %v509
    %5973 = vmatpush1.msra.mxu0 %v508
    %5974 = vmatprep.subr.mxu0 %v515
    %5975 = vmatpush1.msra.mxu0 %v514
    %5976 = vmatprep.subr.mxu0 %v521
    %5977 = vmatpush1.msra.mxu0 %v520
    %5978 = vmatprep.subr.mxu0 %v527
    %5979 = vmatpush1.msra.mxu0 %v526
    %5980 = vmatprep.subr.mxu0 %v533
    %5981 = vmatpush1.msra.mxu0 %v532
    %5982 = vmatprep.subr.mxu0 %v539
    %5983 = vmatpush1.msra.mxu0 %v538
    %5984 = vmatprep.subr.mxu0 %v545
    %5985 = vmatpush1.msra.mxu0 %v544
    %5986 = vmatprep.subr.mxu0 %v551
    %5987 = vmatpush1.msra.mxu0 %v550
    %5988 = vmatprep.subr.mxu0 %v557
    %5989 = vmatpush1.msra.mxu0 %v556
    %5990 = vmatprep.subr.mxu0 %v563
    %5991 = vmatpush1.msra.mxu0 %v562
    %5992 = vmatprep.subr.mxu0 %v569
    %5993 = vmatpush1.msra.mxu0 %v568
    %5994 = vmatprep.subr.mxu0 %v575
    %5995 = vmatpush1.msra.mxu0 %v574
    %5996 = vmatprep.subr.mxu0 %v581
    %5997 = vmatpush1.msra.mxu0 %v580
    %5998 = vmatprep.subr.mxu0 %v587
    %5999 = vmatpush1.msra.mxu0 %v586
    %6000 = vmatprep.subr.mxu0 %v593
    %6001 = vmatpush1.msra.mxu0 %v592
    %6002 = vmatprep.subr.mxu0 %v599
    %6003 = vmatpush1.msra.mxu0 %v598
    %6004 = vmatprep.subr.mxu0 %v605
    %6005 = vmatpush1.msra.mxu0 %v604
    %6006 = vmatprep.subr.mxu0 %v611
    %6007 = vmatpush1.msra.mxu0 %v610
    %6008 = vmatprep.subr.mxu0 %v617
    %6009 = vmatpush1.msra.mxu0 %v616
    %6010 = vmatprep.subr.mxu0 %v623
    %6011 = vmatpush1.msra.mxu0 %v622
    %6012 = vmatprep.subr.mxu0 %v629
    %6013 = vmatpush1.msra.mxu0 %v628
    %6014 = vmatprep.subr.mxu0 %v635
    %6015 = vmatpush1.msra.mxu0 %v634
    %6016 = vmatprep.subr.mxu0 %v641
    %6017 = vmatpush1.msra.mxu0 %v640
    %6018 = vmatprep.subr.mxu0 %v647
    %6019 = vmatpush1.msra.mxu0 %v646
    %6020 = vmatprep.subr.mxu0 %v653
    %6021 = vmatpush1.msra.mxu0 %v652
    %6022 = vmatprep.subr.mxu0 %v659
    %6023 = vmatpush1.msra.mxu0 %v658
    %6024 = vmatprep.subr.mxu0 %v665
    %6025 = vmatpush1.msra.mxu0 %v664
    %6026 = vmatprep.subr.mxu0 %v671
    %6027 = vmatpush1.msra.mxu0 %v670
    %6028 = vmatprep.subr.mxu0 %v677
    %6029 = vmatpush1.msra.mxu0 %v676
    %6030 = vmatprep.mubr.f32.mxu0 %v5894
    %6031 = vmatmul.mubr.f32.gmra.mrb[0].mxu0 %v5893
    %v6032 = vpop.f32.mrb[0].mxu0
    %v6033 = vadd.f32 %v1419, %v6032
    %v6034 = vpop.f32.mrb[0].mxu0
    %v6035 = vadd.f32 %v1423, %v6034
    %6036 = vdwg.mxu0
    %6037 = vmatprep.subr.mxu0 %v493
    %6038 = vmatpush1.msra.mxu0 %v492
    %6039 = vmatprep.subr.mxu0 %v499
    %6040 = vmatpush1.msra.mxu0 %v498
    %6041 = vmatprep.subr.mxu0 %v505
    %6042 = vmatpush1.msra.mxu0 %v504
    %6043 = vmatprep.subr.mxu0 %v511
    %6044 = vmatpush1.msra.mxu0 %v510
    %6045 = vmatprep.subr.mxu0 %v517
    %6046 = vmatpush1.msra.mxu0 %v516
    %6047 = vmatprep.subr.mxu0 %v523
    %6048 = vmatpush1.msra.mxu0 %v522
    %6049 = vmatprep.subr.mxu0 %v529
    %6050 = vmatpush1.msra.mxu0 %v528
    %6051 = vmatprep.subr.mxu0 %v535
    %6052 = vmatpush1.msra.mxu0 %v534
    %6053 = vmatprep.subr.mxu0 %v541
    %6054 = vmatpush1.msra.mxu0 %v540
    %6055 = vmatprep.subr.mxu0 %v547
    %6056 = vmatpush1.msra.mxu0 %v546
    %6057 = vmatprep.subr.mxu0 %v553
    %6058 = vmatpush1.msra.mxu0 %v552
    %6059 = vmatprep.subr.mxu0 %v559
    %6060 = vmatpush1.msra.mxu0 %v558
    %6061 = vmatprep.subr.mxu0 %v565
    %6062 = vmatpush1.msra.mxu0 %v564
    %6063 = vmatprep.subr.mxu0 %v571
    %6064 = vmatpush1.msra.mxu0 %v570
    %6065 = vmatprep.subr.mxu0 %v577
    %6066 = vmatpush1.msra.mxu0 %v576
    %6067 = vmatprep.subr.mxu0 %v583
    %6068 = vmatpush1.msra.mxu0 %v582
    %6069 = vmatprep.subr.mxu0 %v589
    %6070 = vmatpush1.msra.mxu0 %v588
    %6071 = vmatprep.subr.mxu0 %v595
    %6072 = vmatpush1.msra.mxu0 %v594
    %6073 = vmatprep.subr.mxu0 %v601
    %6074 = vmatpush1.msra.mxu0 %v600
    %6075 = vmatprep.subr.mxu0 %v607
    %6076 = vmatpush1.msra.mxu0 %v606
    %6077 = vmatprep.subr.mxu0 %v613
    %6078 = vmatpush1.msra.mxu0 %v612
    %6079 = vmatprep.subr.mxu0 %v619
    %6080 = vmatpush1.msra.mxu0 %v618
    %6081 = vmatprep.subr.mxu0 %v625
    %6082 = vmatpush1.msra.mxu0 %v624
    %6083 = vmatprep.subr.mxu0 %v631
    %6084 = vmatpush1.msra.mxu0 %v630
    %6085 = vmatprep.subr.mxu0 %v637
    %6086 = vmatpush1.msra.mxu0 %v636
    %6087 = vmatprep.subr.mxu0 %v643
    %6088 = vmatpush1.msra.mxu0 %v642
    %6089 = vmatprep.subr.mxu0 %v649
    %6090 = vmatpush1.msra.mxu0 %v648
    %6091 = vmatprep.subr.mxu0 %v655
    %6092 = vmatpush1.msra.mxu0 %v654
    %6093 = vmatprep.subr.mxu0 %v661
    %6094 = vmatpush1.msra.mxu0 %v660
    %6095 = vmatprep.subr.mxu0 %v667
    %6096 = vmatpush1.msra.mxu0 %v666
    %6097 = vmatprep.subr.mxu0 %v673
    %6098 = vmatpush1.msra.mxu0 %v672
    %6099 = vmatprep.subr.mxu0 %v679
    %6100 = vmatpush1.msra.mxu0 %v678
    %6101 = vmatprep.mubr.f32.mxu0 %v5894
    %6102 = vmatmul.mubr.f32.gmra.mrb[0].mxu0 %v5893
    %v6103 = vpop.f32.mrb[0].mxu0
    %v6104 = vadd.f32 %v1427, %v6103
    %v6105 = vpop.f32.mrb[0].mxu0
    %v6106 = vadd.f32 %v1431, %v6105
    %6107 = vdwg.mxu0
    %6108 = vmatprep.subr.mxu0 %v295
    %6109 = vmatpush1.msra.mxu0 %v294
    %6110 = vmatprep.subr.mxu0 %v301
    %6111 = vmatpush1.msra.mxu0 %v300
    %6112 = vmatprep.subr.mxu0 %v307
    %6113 = vmatpush1.msra.mxu0 %v306
    %6114 = vmatprep.subr.mxu0 %v313
    %6115 = vmatpush1.msra.mxu0 %v312
    %6116 = vmatprep.subr.mxu0 %v319
    %6117 = vmatpush1.msra.mxu0 %v318
    %6118 = vmatprep.subr.mxu0 %v325
    %6119 = vmatpush1.msra.mxu0 %v324
    %6120 = vmatprep.subr.mxu0 %v331
    %6121 = vmatpush1.msra.mxu0 %v330
    %6122 = vmatprep.subr.mxu0 %v337
    %6123 = vmatpush1.msra.mxu0 %v336
    %6124 = vmatprep.subr.mxu0 %v343
    %6125 = vmatpush1.msra.mxu0 %v342
    %6126 = vmatprep.subr.mxu0 %v349
    %6127 = vmatpush1.msra.mxu0 %v348
    %6128 = vmatprep.subr.mxu0 %v355
    %6129 = vmatpush1.msra.mxu0 %v354
    %6130 = vmatprep.subr.mxu0 %v361
    %6131 = vmatpush1.msra.mxu0 %v360
    %6132 = vmatprep.subr.mxu0 %v367
    %6133 = vmatpush1.msra.mxu0 %v366
    %6134 = vmatprep.subr.mxu0 %v373
    %6135 = vmatpush1.msra.mxu0 %v372
    %6136 = vmatprep.subr.mxu0 %v379
    %6137 = vmatpush1.msra.mxu0 %v378
    %6138 = vmatprep.subr.mxu0 %v385
    %6139 = vmatpush1.msra.mxu0 %v384
    %6140 = vmatprep.subr.mxu0 %v391
    %6141 = vmatpush1.msra.mxu0 %v390
    %6142 = vmatprep.subr.mxu0 %v397
    %6143 = vmatpush1.msra.mxu0 %v396
    %6144 = vmatprep.subr.mxu0 %v403
    %6145 = vmatpush1.msra.mxu0 %v402
    %6146 = vmatprep.subr.mxu0 %v409
    %6147 = vmatpush1.msra.mxu0 %v408
    %6148 = vmatprep.subr.mxu0 %v415
    %6149 = vmatpush1.msra.mxu0 %v414
    %6150 = vmatprep.subr.mxu0 %v421
    %6151 = vmatpush1.msra.mxu0 %v420
    %6152 = vmatprep.subr.mxu0 %v427
    %6153 = vmatpush1.msra.mxu0 %v426
    %6154 = vmatprep.subr.mxu0 %v433
    %6155 = vmatpush1.msra.mxu0 %v432
    %6156 = vmatprep.subr.mxu0 %v439
    %6157 = vmatpush1.msra.mxu0 %v438
    %6158 = vmatprep.subr.mxu0 %v445
    %6159 = vmatpush1.msra.mxu0 %v444
    %6160 = vmatprep.subr.mxu0 %v451
    %6161 = vmatpush1.msra.mxu0 %v450
    %6162 = vmatprep.subr.mxu0 %v457
    %6163 = vmatpush1.msra.mxu0 %v456
    %6164 = vmatprep.subr.mxu0 %v463
    %6165 = vmatpush1.msra.mxu0 %v462
    %6166 = vmatprep.subr.mxu0 %v469
    %6167 = vmatpush1.msra.mxu0 %v468
    %6168 = vmatprep.subr.mxu0 %v475
    %6169 = vmatpush1.msra.mxu0 %v474
    %6170 = vmatprep.subr.mxu0 %v481
    %6171 = vmatpush1.msra.mxu0 %v480
    %6172 = vmatprep.mubr.f32.mxu0 %v5623
    %6173 = vmatmul.mubr.f32.gmra.mrb[0].mxu0 %v5622
    %v6174 = vpop.f32.mrb[0].mxu0
    %v6175 = vadd.f32 0.0, %v6174
    %v6176 = vpop.f32.mrb[0].mxu0
    %v6177 = vadd.f32 0.0, %v6176
    %6178 = vdwg.mxu0
    %6179 = vmatprep.subr.mxu0 %v297
    %6180 = vmatpush1.msra.mxu0 %v296
    %6181 = vmatprep.subr.mxu0 %v303
    %6182 = vmatpush1.msra.mxu0 %v302
    %6183 = vmatprep.subr.mxu0 %v309
    %6184 = vmatpush1.msra.mxu0 %v308
    %6185 = vmatprep.subr.mxu0 %v315
    %6186 = vmatpush1.msra.mxu0 %v314
    %6187 = vmatprep.subr.mxu0 %v321
    %6188 = vmatpush1.msra.mxu0 %v320
    %6189 = vmatprep.subr.mxu0 %v327
    %6190 = vmatpush1.msra.mxu0 %v326
    %6191 = vmatprep.subr.mxu0 %v333
    %6192 = vmatpush1.msra.mxu0 %v332
    %6193 = vmatprep.subr.mxu0 %v339
    %6194 = vmatpush1.msra.mxu0 %v338
    %6195 = vmatprep.subr.mxu0 %v345
    %6196 = vmatpush1.msra.mxu0 %v344
    %6197 = vmatprep.subr.mxu0 %v351
    %6198 = vmatpush1.msra.mxu0 %v350
    %6199 = vmatprep.subr.mxu0 %v357
    %6200 = vmatpush1.msra.mxu0 %v356
    %6201 = vmatprep.subr.mxu0 %v363
    %6202 = vmatpush1.msra.mxu0 %v362
    %6203 = vmatprep.subr.mxu0 %v369
    %6204 = vmatpush1.msra.mxu0 %v368
    %6205 = vmatprep.subr.mxu0 %v375
    %6206 = vmatpush1.msra.mxu0 %v374
    %6207 = vmatprep.subr.mxu0 %v381
    %6208 = vmatpush1.msra.mxu0 %v380
    %6209 = vmatprep.subr.mxu0 %v387
    %6210 = vmatpush1.msra.mxu0 %v386
    %6211 = vmatprep.subr.mxu0 %v393
    %6212 = vmatpush1.msra.mxu0 %v392
    %6213 = vmatprep.subr.mxu0 %v399
    %6214 = vmatpush1.msra.mxu0 %v398
    %6215 = vmatprep.subr.mxu0 %v405
    %6216 = vmatpush1.msra.mxu0 %v404
    %6217 = vmatprep.subr.mxu0 %v411
    %6218 = vmatpush1.msra.mxu0 %v410
    %6219 = vmatprep.subr.mxu0 %v417
    %6220 = vmatpush1.msra.mxu0 %v416
    %6221 = vmatprep.subr.mxu0 %v423
    %6222 = vmatpush1.msra.mxu0 %v422
    %6223 = vmatprep.subr.mxu0 %v429
    %6224 = vmatpush1.msra.mxu0 %v428
    %6225 = vmatprep.subr.mxu0 %v435
    %6226 = vmatpush1.msra.mxu0 %v434
    %6227 = vmatprep.subr.mxu0 %v441
    %6228 = vmatpush1.msra.mxu0 %v440
    %6229 = vmatprep.subr.mxu0 %v447
    %6230 = vmatpush1.msra.mxu0 %v446
    %6231 = vmatprep.subr.mxu0 %v453
    %6232 = vmatpush1.msra.mxu0 %v452
    %6233 = vmatprep.subr.mxu0 %v459
    %6234 = vmatpush1.msra.mxu0 %v458
    %6235 = vmatprep.subr.mxu0 %v465
    %6236 = vmatpush1.msra.mxu0 %v464
    %6237 = vmatprep.subr.mxu0 %v471
    %6238 = vmatpush1.msra.mxu0 %v470
    %6239 = vmatprep.subr.mxu0 %v477
    %6240 = vmatpush1.msra.mxu0 %v476
    %6241 = vmatprep.subr.mxu0 %v483
    %6242 = vmatpush1.msra.mxu0 %v482
    %6243 = vmatprep.mubr.f32.mxu0 %v5623
    %6244 = vmatmul.mubr.f32.gmra.mrb[0].mxu0 %v5622
    %v6245 = vpop.f32.mrb[0].mxu0
    %v6246 = vadd.f32 0.0, %v6245
    %v6247 = vpop.f32.mrb[0].mxu0
    %v6248 = vadd.f32 0.0, %v6247
    %6249 = vdwg.mxu0
    %6250 = vmatprep.subr.mxu0 %v299
    %6251 = vmatpush1.msra.mxu0 %v298
    %6252 = vmatprep.subr.mxu0 %v305
    %6253 = vmatpush1.msra.mxu0 %v304
    %6254 = vmatprep.subr.mxu0 %v311
    %6255 = vmatpush1.msra.mxu0 %v310
    %6256 = vmatprep.subr.mxu0 %v317
    %6257 = vmatpush1.msra.mxu0 %v316
    %6258 = vmatprep.subr.mxu0 %v323
    %6259 = vmatpush1.msra.mxu0 %v322
    %6260 = vmatprep.subr.mxu0 %v329
    %6261 = vmatpush1.msra.mxu0 %v328
    %6262 = vmatprep.subr.mxu0 %v335
    %6263 = vmatpush1.msra.mxu0 %v334
    %6264 = vmatprep.subr.mxu0 %v341
    %6265 = vmatpush1.msra.mxu0 %v340
    %6266 = vmatprep.subr.mxu0 %v347
    %6267 = vmatpush1.msra.mxu0 %v346
    %6268 = vmatprep.subr.mxu0 %v353
    %6269 = vmatpush1.msra.mxu0 %v352
    %6270 = vmatprep.subr.mxu0 %v359
    %6271 = vmatpush1.msra.mxu0 %v358
    %6272 = vmatprep.subr.mxu0 %v365
    %6273 = vmatpush1.msra.mxu0 %v364
    %6274 = vmatprep.subr.mxu0 %v371
    %6275 = vmatpush1.msra.mxu0 %v370
    %6276 = vmatprep.subr.mxu0 %v377
    %6277 = vmatpush1.msra.mxu0 %v376
    %6278 = vmatprep.subr.mxu0 %v383
    %6279 = vmatpush1.msra.mxu0 %v382
    %6280 = vmatprep.subr.mxu0 %v389
    %6281 = vmatpush1.msra.mxu0 %v388
    %6282 = vmatprep.subr.mxu0 %v395
    %6283 = vmatpush1.msra.mxu0 %v394
    %6284 = vmatprep.subr.mxu0 %v401
    %6285 = vmatpush1.msra.mxu0 %v400
    %6286 = vmatprep.subr.mxu0 %v407
    %6287 = vmatpush1.msra.mxu0 %v406
    %6288 = vmatprep.subr.mxu0 %v413
    %6289 = vmatpush1.msra.mxu0 %v412
    %6290 = vmatprep.subr.mxu0 %v419
    %6291 = vmatpush1.msra.mxu0 %v418
    %6292 = vmatprep.subr.mxu0 %v425
    %6293 = vmatpush1.msra.mxu0 %v424
    %6294 = vmatprep.subr.mxu0 %v431
    %6295 = vmatpush1.msra.mxu0 %v430
    %6296 = vmatprep.subr.mxu0 %v437
    %6297 = vmatpush1.msra.mxu0 %v436
    %6298 = vmatprep.subr.mxu0 %v443
    %6299 = vmatpush1.msra.mxu0 %v442
    %6300 = vmatprep.subr.mxu0 %v449
    %6301 = vmatpush1.msra.mxu0 %v448
    %6302 = vmatprep.subr.mxu0 %v455
    %6303 = vmatpush1.msra.mxu0 %v454
    %6304 = vmatprep.subr.mxu0 %v461
    %6305 = vmatpush1.msra.mxu0 %v460
    %6306 = vmatprep.subr.mxu0 %v467
    %6307 = vmatpush1.msra.mxu0 %v466
    %6308 = vmatprep.subr.mxu0 %v473
    %6309 = vmatpush1.msra.mxu0 %v472
    %6310 = vmatprep.subr.mxu0 %v479
    %6311 = vmatpush1.msra.mxu0 %v478
    %6312 = vmatprep.subr.mxu0 %v485
    %6313 = vmatpush1.msra.mxu0 %v484
    %6314 = vmatprep.mubr.f32.mxu0 %v5623
    %6315 = vmatmul.mubr.f32.gmra.mrb[0].mxu0 %v5622
    %v6316 = vpop.f32.mrb[0].mxu0
    %v6317 = vadd.f32 0.0, %v6316
    %v6318 = vpop.f32.mrb[0].mxu0
    %v6319 = vadd.f32 0.0, %v6318
    %6320 = vdwg.mxu0
    %v6321 = vadd.f32 %v5962, %v6175
    %v6322 = vadd.f32 %v5964, %v6177
    %v6323 = vxor.u32 %v6321, 2147483648
    %v6324 = vxor.u32 %v6322, 2147483648
    %v6325 = vmul.f32 %v6323, 1.442695
    %v6326 = vpow.pop %v6325
    %v6327 = vmul.f32 %v6324, 1.442695
    %v6328 = vpow.pop %v6327
    %v6329 = vadd.f32 %v6326, 1.0
    %v6330 = vadd.f32 %v6328, 1.0
    %v6331 = vrcp.pop %v6329
    %v6332 = vmul.f32 1.0, %v6331
    %v6333 = vrcp.pop %v6330
    %v6334 = vmul.f32 1.0, %v6333
    %v6335 = vadd.f32 %v6033, %v6246
    %v6336 = vadd.f32 %v6035, %v6248
    %v6337 = vxor.u32 %v6335, 2147483648
    %v6338 = vxor.u32 %v6336, 2147483648
    %v6339 = vmul.f32 %v6337, 1.442695
    %v6340 = vpow.pop %v6339
    %v6341 = vmul.f32 %v6338, 1.442695
    %v6342 = vpow.pop %v6341
    %v6343 = vadd.f32 %v6340, 1.0
    %v6344 = vadd.f32 %v6342, 1.0
    %v6345 = vrcp.pop %v6343
    %v6346 = vmul.f32 1.0, %v6345
    %v6347 = vrcp.pop %v6344
    %v6348 = vmul.f32 1.0, %v6347
    %v6349 = vadd.f32 %v6317, %v1896
    %v6350 = vadd.f32 %v6319, %v1900
    %v6351 = vmul.f32 %v6332, %v6349
    %v6352 = vmul.f32 %v6334, %v6350
    %v6353 = vadd.f32 %v6104, %v6351
    %v6354 = vadd.f32 %v6106, %v6352
    %v6355 = vtanh.pop %v6353
    %v6356 = vtanh.pop %v6354
    %v6357 = vsub.f32 1.0, %v6346
    %v6358 = vsub.f32 1.0, %v6348
    %v6359 = vmul.f32 %v6357, %v6355
    %v6360 = vmul.f32 %v6358, %v6356
    %v6361 = vmul.f32 %v6346, %v5622
    %v6362 = vmul.f32 %v6348, %v5623
    %v6363 = vadd.f32 %v6359, %v6361
    %v6364 = vadd.f32 %v6360, %v6362
    %vm6365 = vcmp.eq.s32.totalorder %v1132, 7
    %v6366 = vsel %vm6365, 1, 0
    %6367 = vset.pattern.permute.xlu0 0
    %6368 = vperm.xlu0 %6367, %v6366
    %v6369 = vpop.permute.xlu0 %6368
    %vm6370 = vcmp.eq.s32.totalorder %v6369, 1
    %v6371 = vsel %vm6370, %v6363, %v5630
    %v6372 = vsel %vm6370, %v6364, %v5631
    %v6373 = vld [vmem:[#allocation2 + $0x150] sm:$0xff]
    %v6374 = vld [vmem:[#allocation2 + $0x158] sm:$0xff]
    %v6375 = vld [vmem:[#allocation2 + $0x160] sm:$0xff]
    %v6376 = vld [vmem:[#allocation2 + $0x168] sm:$0xff]
    %v6377 = vld [vmem:[#allocation2 + $0x170] sm:$0xff]
    %v6378 = vld [vmem:[#allocation2 + $0x178] sm:$0xff]
    %6379 = vmatprep.subr.mxu0 %v103
    %6380 = vmatpush1.msra.mxu0 %v102
    %6381 = vmatprep.subr.mxu0 %v109
    %6382 = vmatpush1.msra.mxu0 %v108
    %6383 = vmatprep.subr.mxu0 %v115
    %6384 = vmatpush1.msra.mxu0 %v114
    %6385 = vmatprep.subr.mxu0 %v121
    %6386 = vmatpush1.msra.mxu0 %v120
    %6387 = vmatprep.subr.mxu0 %v127
    %6388 = vmatpush1.msra.mxu0 %v126
    %6389 = vmatprep.subr.mxu0 %v133
    %6390 = vmatpush1.msra.mxu0 %v132
    %6391 = vmatprep.subr.mxu0 %v139
    %6392 = vmatpush1.msra.mxu0 %v138
    %6393 = vmatprep.subr.mxu0 %v145
    %6394 = vmatpush1.msra.mxu0 %v144
    %6395 = vmatprep.subr.mxu0 %v151
    %6396 = vmatpush1.msra.mxu0 %v150
    %6397 = vmatprep.subr.mxu0 %v157
    %6398 = vmatpush1.msra.mxu0 %v156
    %6399 = vmatprep.subr.mxu0 %v163
    %6400 = vmatpush1.msra.mxu0 %v162
    %6401 = vmatprep.subr.mxu0 %v169
    %6402 = vmatpush1.msra.mxu0 %v168
    %6403 = vmatprep.subr.mxu0 %v175
    %6404 = vmatpush1.msra.mxu0 %v174
    %6405 = vmatprep.subr.mxu0 %v181
    %6406 = vmatpush1.msra.mxu0 %v180
    %6407 = vmatprep.subr.mxu0 %v187
    %6408 = vmatpush1.msra.mxu0 %v186
    %6409 = vmatprep.subr.mxu0 %v193
    %6410 = vmatpush1.msra.mxu0 %v192
    %6411 = vmatprep.subr.mxu0 %v199
    %6412 = vmatpush1.msra.mxu0 %v198
    %6413 = vmatprep.subr.mxu0 %v205
    %6414 = vmatpush1.msra.mxu0 %v204
    %6415 = vmatprep.subr.mxu0 %v211
    %6416 = vmatpush1.msra.mxu0 %v210
    %6417 = vmatprep.subr.mxu0 %v217
    %6418 = vmatpush1.msra.mxu0 %v216
    %6419 = vmatprep.subr.mxu0 %v223
    %6420 = vmatpush1.msra.mxu0 %v222
    %6421 = vmatprep.subr.mxu0 %v229
    %6422 = vmatpush1.msra.mxu0 %v228
    %6423 = vmatprep.subr.mxu0 %v235
    %6424 = vmatpush1.msra.mxu0 %v234
    %6425 = vmatprep.subr.mxu0 %v241
    %6426 = vmatpush1.msra.mxu0 %v240
    %6427 = vmatprep.subr.mxu0 %v247
    %6428 = vmatpush1.msra.mxu0 %v246
    %6429 = vmatprep.subr.mxu0 %v253
    %6430 = vmatpush1.msra.mxu0 %v252
    %6431 = vmatprep.subr.mxu0 %v259
    %6432 = vmatpush1.msra.mxu0 %v258
    %6433 = vmatprep.subr.mxu0 %v265
    %6434 = vmatpush1.msra.mxu0 %v264
    %6435 = vmatprep.subr.mxu0 %v271
    %6436 = vmatpush1.msra.mxu0 %v270
    %6437 = vmatprep.subr.mxu0 %v277
    %6438 = vmatpush1.msra.mxu0 %v276
    %6439 = vmatprep.subr.mxu0 %v283
    %6440 = vmatpush1.msra.mxu0 %v282
    %6441 = vmatprep.subr.mxu0 %v289
    %6442 = vmatpush1.msra.mxu0 %v288
    %6443 = vmatprep.mubr.f32.mxu0 %v5894
    %6444 = vmatmul.mubr.f32.gmra.mrb[0].mxu0 %v5893
    %v6445 = vpop.f32.mrb[0].mxu0
    %v6446 = vadd.f32 0.0, %v6445
    %v6447 = vpop.f32.mrb[0].mxu0
    %v6448 = vadd.f32 0.0, %v6447
    %6449 = vdwg.mxu0
    %6450 = vmatprep.subr.mxu0 %v105
    %6451 = vmatpush1.msra.mxu0 %v104
    %6452 = vmatprep.subr.mxu0 %v111
    %6453 = vmatpush1.msra.mxu0 %v110
    %6454 = vmatprep.subr.mxu0 %v117
    %6455 = vmatpush1.msra.mxu0 %v116
    %6456 = vmatprep.subr.mxu0 %v123
    %6457 = vmatpush1.msra.mxu0 %v122
    %6458 = vmatprep.subr.mxu0 %v129
    %6459 = vmatpush1.msra.mxu0 %v128
    %6460 = vmatprep.subr.mxu0 %v135
    %6461 = vmatpush1.msra.mxu0 %v134
    %6462 = vmatprep.subr.mxu0 %v141
    %6463 = vmatpush1.msra.mxu0 %v140
    %6464 = vmatprep.subr.mxu0 %v147
    %6465 = vmatpush1.msra.mxu0 %v146
    %6466 = vmatprep.subr.mxu0 %v153
    %6467 = vmatpush1.msra.mxu0 %v152
    %6468 = vmatprep.subr.mxu0 %v159
    %6469 = vmatpush1.msra.mxu0 %v158
    %6470 = vmatprep.subr.mxu0 %v165
    %6471 = vmatpush1.msra.mxu0 %v164
    %6472 = vmatprep.subr.mxu0 %v171
    %6473 = vmatpush1.msra.mxu0 %v170
    %6474 = vmatprep.subr.mxu0 %v177
    %6475 = vmatpush1.msra.mxu0 %v176
    %6476 = vmatprep.subr.mxu0 %v183
    %6477 = vmatpush1.msra.mxu0 %v182
    %6478 = vmatprep.subr.mxu0 %v189
    %6479 = vmatpush1.msra.mxu0 %v188
    %6480 = vmatprep.subr.mxu0 %v195
    %6481 = vmatpush1.msra.mxu0 %v194
    %6482 = vmatprep.subr.mxu0 %v201
    %6483 = vmatpush1.msra.mxu0 %v200
    %6484 = vmatprep.subr.mxu0 %v207
    %6485 = vmatpush1.msra.mxu0 %v206
    %6486 = vmatprep.subr.mxu0 %v213
    %6487 = vmatpush1.msra.mxu0 %v212
    %6488 = vmatprep.subr.mxu0 %v219
    %6489 = vmatpush1.msra.mxu0 %v218
    %6490 = vmatprep.subr.mxu0 %v225
    %6491 = vmatpush1.msra.mxu0 %v224
    %6492 = vmatprep.subr.mxu0 %v231
    %6493 = vmatpush1.msra.mxu0 %v230
    %6494 = vmatprep.subr.mxu0 %v237
    %6495 = vmatpush1.msra.mxu0 %v236
    %6496 = vmatprep.subr.mxu0 %v243
    %6497 = vmatpush1.msra.mxu0 %v242
    %6498 = vmatprep.subr.mxu0 %v249
    %6499 = vmatpush1.msra.mxu0 %v248
    %6500 = vmatprep.subr.mxu0 %v255
    %6501 = vmatpush1.msra.mxu0 %v254
    %6502 = vmatprep.subr.mxu0 %v261
    %6503 = vmatpush1.msra.mxu0 %v260
    %6504 = vmatprep.subr.mxu0 %v267
    %6505 = vmatpush1.msra.mxu0 %v266
    %6506 = vmatprep.subr.mxu0 %v273
    %6507 = vmatpush1.msra.mxu0 %v272
    %6508 = vmatprep.subr.mxu0 %v279
    %6509 = vmatpush1.msra.mxu0 %v278
    %6510 = vmatprep.subr.mxu0 %v285
    %6511 = vmatpush1.msra.mxu0 %v284
    %6512 = vmatprep.subr.mxu0 %v291
    %6513 = vmatpush1.msra.mxu0 %v290
    %6514 = vmatprep.mubr.f32.mxu0 %v5894
    %6515 = vmatmul.mubr.f32.gmra.mrb[0].mxu0 %v5893
    %v6516 = vpop.f32.mrb[0].mxu0
    %v6517 = vadd.f32 0.0, %v6516
    %v6518 = vpop.f32.mrb[0].mxu0
    %v6519 = vadd.f32 0.0, %v6518
    %6520 = vdwg.mxu0
    %6521 = vmatprep.subr.mxu0 %v107
    %6522 = vmatpush1.msra.mxu0 %v106
    %6523 = vmatprep.subr.mxu0 %v113
    %6524 = vmatpush1.msra.mxu0 %v112
    %6525 = vmatprep.subr.mxu0 %v119
    %6526 = vmatpush1.msra.mxu0 %v118
    %6527 = vmatprep.subr.mxu0 %v125
    %6528 = vmatpush1.msra.mxu0 %v124
    %6529 = vmatprep.subr.mxu0 %v131
    %6530 = vmatpush1.msra.mxu0 %v130
    %6531 = vmatprep.subr.mxu0 %v137
    %6532 = vmatpush1.msra.mxu0 %v136
    %6533 = vmatprep.subr.mxu0 %v143
    %6534 = vmatpush1.msra.mxu0 %v142
    %6535 = vmatprep.subr.mxu0 %v149
    %6536 = vmatpush1.msra.mxu0 %v148
    %6537 = vmatprep.subr.mxu0 %v155
    %6538 = vmatpush1.msra.mxu0 %v154
    %6539 = vmatprep.subr.mxu0 %v161
    %6540 = vmatpush1.msra.mxu0 %v160
    %6541 = vmatprep.subr.mxu0 %v167
    %6542 = vmatpush1.msra.mxu0 %v166
    %6543 = vmatprep.subr.mxu0 %v173
    %6544 = vmatpush1.msra.mxu0 %v172
    %6545 = vmatprep.subr.mxu0 %v179
    %6546 = vmatpush1.msra.mxu0 %v178
    %6547 = vmatprep.subr.mxu0 %v185
    %6548 = vmatpush1.msra.mxu0 %v184
    %6549 = vmatprep.subr.mxu0 %v191
    %6550 = vmatpush1.msra.mxu0 %v190
    %6551 = vmatprep.subr.mxu0 %v197
    %6552 = vmatpush1.msra.mxu0 %v196
    %6553 = vmatprep.subr.mxu0 %v203
    %6554 = vmatpush1.msra.mxu0 %v202
    %6555 = vmatprep.subr.mxu0 %v209
    %6556 = vmatpush1.msra.mxu0 %v208
    %6557 = vmatprep.subr.mxu0 %v215
    %6558 = vmatpush1.msra.mxu0 %v214
    %6559 = vmatprep.subr.mxu0 %v221
    %6560 = vmatpush1.msra.mxu0 %v220
    %6561 = vmatprep.subr.mxu0 %v227
    %6562 = vmatpush1.msra.mxu0 %v226
    %6563 = vmatprep.subr.mxu0 %v233
    %6564 = vmatpush1.msra.mxu0 %v232
    %6565 = vmatprep.subr.mxu0 %v239
    %6566 = vmatpush1.msra.mxu0 %v238
    %6567 = vmatprep.subr.mxu0 %v245
    %6568 = vmatpush1.msra.mxu0 %v244
    %6569 = vmatprep.subr.mxu0 %v251
    %6570 = vmatpush1.msra.mxu0 %v250
    %6571 = vmatprep.subr.mxu0 %v257
    %6572 = vmatpush1.msra.mxu0 %v256
    %6573 = vmatprep.subr.mxu0 %v263
    %6574 = vmatpush1.msra.mxu0 %v262
    %6575 = vmatprep.subr.mxu0 %v269
    %6576 = vmatpush1.msra.mxu0 %v268
    %6577 = vmatprep.subr.mxu0 %v275
    %6578 = vmatpush1.msra.mxu0 %v274
    %6579 = vmatprep.subr.mxu0 %v281
    %6580 = vmatpush1.msra.mxu0 %v280
    %6581 = vmatprep.subr.mxu0 %v287
    %6582 = vmatpush1.msra.mxu0 %v286
    %6583 = vmatprep.subr.mxu0 %v293
    %6584 = vmatpush1.msra.mxu0 %v292
    %6585 = vmatprep.mubr.f32.mxu0 %v5894
    %6586 = vmatmul.mubr.f32.gmra.mrb[0].mxu0 %v5893
    %v6587 = vpop.f32.mrb[0].mxu0
    %v6588 = vadd.f32 0.0, %v6587
    %v6589 = vpop.f32.mrb[0].mxu0
    %v6590 = vadd.f32 0.0, %v6589
    %6591 = vdwg.mxu0
    %v6592 = vadd.f32 %v6373, %v6446
    %v6593 = vadd.f32 %v6374, %v6448
    %v6594 = vxor.u32 %v6592, 2147483648
    %v6595 = vxor.u32 %v6593, 2147483648
    %v6596 = vmul.f32 %v6594, 1.442695
    %v6597 = vpow.pop %v6596
    %v6598 = vmul.f32 %v6595, 1.442695
    %v6599 = vpow.pop %v6598
    %v6600 = vadd.f32 %v6597, 1.0
    %v6601 = vadd.f32 %v6599, 1.0
    %v6602 = vrcp.pop %v6600
    %v6603 = vmul.f32 1.0, %v6602
    %v6604 = vrcp.pop %v6601
    %v6605 = vmul.f32 1.0, %v6604
    %v6606 = vadd.f32 %v6375, %v6517
    %v6607 = vadd.f32 %v6376, %v6519
    %v6608 = vxor.u32 %v6606, 2147483648
    %v6609 = vxor.u32 %v6607, 2147483648
    %v6610 = vmul.f32 %v6608, 1.442695
    %v6611 = vpow.pop %v6610
    %v6612 = vmul.f32 %v6609, 1.442695
    %v6613 = vpow.pop %v6612
    %v6614 = vadd.f32 %v6611, 1.0
    %v6615 = vadd.f32 %v6613, 1.0
    %v6616 = vrcp.pop %v6614
    %v6617 = vmul.f32 1.0, %v6616
    %v6618 = vrcp.pop %v6615
    %v6619 = vmul.f32 1.0, %v6618
    %v6620 = vadd.f32 %v6588, %v1384
    %v6621 = vadd.f32 %v6590, %v1388
    %v6622 = vmul.f32 %v6603, %v6620
    %v6623 = vmul.f32 %v6605, %v6621
    %v6624 = vadd.f32 %v6377, %v6622
    %v6625 = vadd.f32 %v6378, %v6623
    %v6626 = vtanh.pop %v6624
    %v6627 = vtanh.pop %v6625
    %v6628 = vsub.f32 1.0, %v6617
    %v6629 = vsub.f32 1.0, %v6619
    %v6630 = vmul.f32 %v6628, %v6626
    %v6631 = vmul.f32 %v6629, %v6627
    %v6632 = vmul.f32 %v6617, %v5893
    %v6633 = vmul.f32 %v6619, %v5894
    %v6634 = vadd.f32 %v6630, %v6632
    %v6635 = vadd.f32 %v6631, %v6633
    %6636 = vmatprep.subr.mxu0 %v489
    %6637 = vmatpush1.msra.mxu0 %v488
    %6638 = vmatprep.subr.mxu0 %v495
    %6639 = vmatpush1.msra.mxu0 %v494
    %6640 = vmatprep.subr.mxu0 %v501
    %6641 = vmatpush1.msra.mxu0 %v500
    %6642 = vmatprep.subr.mxu0 %v507
    %6643 = vmatpush1.msra.mxu0 %v506
    %6644 = vmatprep.subr.mxu0 %v513
    %6645 = vmatpush1.msra.mxu0 %v512
    %6646 = vmatprep.subr.mxu0 %v519
    %6647 = vmatpush1.msra.mxu0 %v518
    %6648 = vmatprep.subr.mxu0 %v525
    %6649 = vmatpush1.msra.mxu0 %v524
    %6650 = vmatprep.subr.mxu0 %v531
    %6651 = vmatpush1.msra.mxu0 %v530
    %6652 = vmatprep.subr.mxu0 %v537
    %6653 = vmatpush1.msra.mxu0 %v536
    %6654 = vmatprep.subr.mxu0 %v543
    %6655 = vmatpush1.msra.mxu0 %v542
    %6656 = vmatprep.subr.mxu0 %v549
    %6657 = vmatpush1.msra.mxu0 %v548
    %6658 = vmatprep.subr.mxu0 %v555
    %6659 = vmatpush1.msra.mxu0 %v554
    %6660 = vmatprep.subr.mxu0 %v561
    %6661 = vmatpush1.msra.mxu0 %v560
    %6662 = vmatprep.subr.mxu0 %v567
    %6663 = vmatpush1.msra.mxu0 %v566
    %6664 = vmatprep.subr.mxu0 %v573
    %6665 = vmatpush1.msra.mxu0 %v572
    %6666 = vmatprep.subr.mxu0 %v579
    %6667 = vmatpush1.msra.mxu0 %v578
    %6668 = vmatprep.subr.mxu0 %v585
    %6669 = vmatpush1.msra.mxu0 %v584
    %6670 = vmatprep.subr.mxu0 %v591
    %6671 = vmatpush1.msra.mxu0 %v590
    %6672 = vmatprep.subr.mxu0 %v597
    %6673 = vmatpush1.msra.mxu0 %v596
    %6674 = vmatprep.subr.mxu0 %v603
    %6675 = vmatpush1.msra.mxu0 %v602
    %6676 = vmatprep.subr.mxu0 %v609
    %6677 = vmatpush1.msra.mxu0 %v608
    %6678 = vmatprep.subr.mxu0 %v615
    %6679 = vmatpush1.msra.mxu0 %v614
    %6680 = vmatprep.subr.mxu0 %v621
    %6681 = vmatpush1.msra.mxu0 %v620
    %6682 = vmatprep.subr.mxu0 %v627
    %6683 = vmatpush1.msra.mxu0 %v626
    %6684 = vmatprep.subr.mxu0 %v633
    %6685 = vmatpush1.msra.mxu0 %v632
    %6686 = vmatprep.subr.mxu0 %v639
    %6687 = vmatpush1.msra.mxu0 %v638
    %6688 = vmatprep.subr.mxu0 %v645
    %6689 = vmatpush1.msra.mxu0 %v644
    %6690 = vmatprep.subr.mxu0 %v651
    %6691 = vmatpush1.msra.mxu0 %v650
    %6692 = vmatprep.subr.mxu0 %v657
    %6693 = vmatpush1.msra.mxu0 %v656
    %6694 = vmatprep.subr.mxu0 %v663
    %6695 = vmatpush1.msra.mxu0 %v662
    %6696 = vmatprep.subr.mxu0 %v669
    %6697 = vmatpush1.msra.mxu0 %v668
    %6698 = vmatprep.subr.mxu0 %v675
    %6699 = vmatpush1.msra.mxu0 %v674
    %6700 = vmatprep.mubr.f32.mxu0 %v6635
    %6701 = vmatmul.mubr.f32.gmra.mrb[0].mxu0 %v6634
    %v6702 = vpop.f32.mrb[0].mxu0
    %v6703 = vadd.f32 %v1411, %v6702
    %v6704 = vpop.f32.mrb[0].mxu0
    %v6705 = vadd.f32 %v1415, %v6704
    %6706 = vdwg.mxu0
    %6707 = vmatprep.subr.mxu0 %v491
    %6708 = vmatpush1.msra.mxu0 %v490
    %6709 = vmatprep.subr.mxu0 %v497
    %6710 = vmatpush1.msra.mxu0 %v496
    %6711 = vmatprep.subr.mxu0 %v503
    %6712 = vmatpush1.msra.mxu0 %v502
    %6713 = vmatprep.subr.mxu0 %v509
    %6714 = vmatpush1.msra.mxu0 %v508
    %6715 = vmatprep.subr.mxu0 %v515
    %6716 = vmatpush1.msra.mxu0 %v514
    %6717 = vmatprep.subr.mxu0 %v521
    %6718 = vmatpush1.msra.mxu0 %v520
    %6719 = vmatprep.subr.mxu0 %v527
    %6720 = vmatpush1.msra.mxu0 %v526
    %6721 = vmatprep.subr.mxu0 %v533
    %6722 = vmatpush1.msra.mxu0 %v532
    %6723 = vmatprep.subr.mxu0 %v539
    %6724 = vmatpush1.msra.mxu0 %v538
    %6725 = vmatprep.subr.mxu0 %v545
    %6726 = vmatpush1.msra.mxu0 %v544
    %6727 = vmatprep.subr.mxu0 %v551
    %6728 = vmatpush1.msra.mxu0 %v550
    %6729 = vmatprep.subr.mxu0 %v557
    %6730 = vmatpush1.msra.mxu0 %v556
    %6731 = vmatprep.subr.mxu0 %v563
    %6732 = vmatpush1.msra.mxu0 %v562
    %6733 = vmatprep.subr.mxu0 %v569
    %6734 = vmatpush1.msra.mxu0 %v568
    %6735 = vmatprep.subr.mxu0 %v575
    %6736 = vmatpush1.msra.mxu0 %v574
    %6737 = vmatprep.subr.mxu0 %v581
    %6738 = vmatpush1.msra.mxu0 %v580
    %6739 = vmatprep.subr.mxu0 %v587
    %6740 = vmatpush1.msra.mxu0 %v586
    %6741 = vmatprep.subr.mxu0 %v593
    %6742 = vmatpush1.msra.mxu0 %v592
    %6743 = vmatprep.subr.mxu0 %v599
    %6744 = vmatpush1.msra.mxu0 %v598
    %6745 = vmatprep.subr.mxu0 %v605
    %6746 = vmatpush1.msra.mxu0 %v604
    %6747 = vmatprep.subr.mxu0 %v611
    %6748 = vmatpush1.msra.mxu0 %v610
    %6749 = vmatprep.subr.mxu0 %v617
    %6750 = vmatpush1.msra.mxu0 %v616
    %6751 = vmatprep.subr.mxu0 %v623
    %6752 = vmatpush1.msra.mxu0 %v622
    %6753 = vmatprep.subr.mxu0 %v629
    %6754 = vmatpush1.msra.mxu0 %v628
    %6755 = vmatprep.subr.mxu0 %v635
    %6756 = vmatpush1.msra.mxu0 %v634
    %6757 = vmatprep.subr.mxu0 %v641
    %6758 = vmatpush1.msra.mxu0 %v640
    %6759 = vmatprep.subr.mxu0 %v647
    %6760 = vmatpush1.msra.mxu0 %v646
    %6761 = vmatprep.subr.mxu0 %v653
    %6762 = vmatpush1.msra.mxu0 %v652
    %6763 = vmatprep.subr.mxu0 %v659
    %6764 = vmatpush1.msra.mxu0 %v658
    %6765 = vmatprep.subr.mxu0 %v665
    %6766 = vmatpush1.msra.mxu0 %v664
    %6767 = vmatprep.subr.mxu0 %v671
    %6768 = vmatpush1.msra.mxu0 %v670
    %6769 = vmatprep.subr.mxu0 %v677
    %6770 = vmatpush1.msra.mxu0 %v676
    %6771 = vmatprep.mubr.f32.mxu0 %v6635
    %6772 = vmatmul.mubr.f32.gmra.mrb[0].mxu0 %v6634
    %v6773 = vpop.f32.mrb[0].mxu0
    %v6774 = vadd.f32 %v1419, %v6773
    %v6775 = vpop.f32.mrb[0].mxu0
    %v6776 = vadd.f32 %v1423, %v6775
    %6777 = vdwg.mxu0
    %6778 = vmatprep.subr.mxu0 %v493
    %6779 = vmatpush1.msra.mxu0 %v492
    %6780 = vmatprep.subr.mxu0 %v499
    %6781 = vmatpush1.msra.mxu0 %v498
    %6782 = vmatprep.subr.mxu0 %v505
    %6783 = vmatpush1.msra.mxu0 %v504
    %6784 = vmatprep.subr.mxu0 %v511
    %6785 = vmatpush1.msra.mxu0 %v510
    %6786 = vmatprep.subr.mxu0 %v517
    %6787 = vmatpush1.msra.mxu0 %v516
    %6788 = vmatprep.subr.mxu0 %v523
    %6789 = vmatpush1.msra.mxu0 %v522
    %6790 = vmatprep.subr.mxu0 %v529
    %6791 = vmatpush1.msra.mxu0 %v528
    %6792 = vmatprep.subr.mxu0 %v535
    %6793 = vmatpush1.msra.mxu0 %v534
    %6794 = vmatprep.subr.mxu0 %v541
    %6795 = vmatpush1.msra.mxu0 %v540
    %6796 = vmatprep.subr.mxu0 %v547
    %6797 = vmatpush1.msra.mxu0 %v546
    %6798 = vmatprep.subr.mxu0 %v553
    %6799 = vmatpush1.msra.mxu0 %v552
    %6800 = vmatprep.subr.mxu0 %v559
    %6801 = vmatpush1.msra.mxu0 %v558
    %6802 = vmatprep.subr.mxu0 %v565
    %6803 = vmatpush1.msra.mxu0 %v564
    %6804 = vmatprep.subr.mxu0 %v571
    %6805 = vmatpush1.msra.mxu0 %v570
    %6806 = vmatprep.subr.mxu0 %v577
    %6807 = vmatpush1.msra.mxu0 %v576
    %6808 = vmatprep.subr.mxu0 %v583
    %6809 = vmatpush1.msra.mxu0 %v582
    %6810 = vmatprep.subr.mxu0 %v589
    %6811 = vmatpush1.msra.mxu0 %v588
    %6812 = vmatprep.subr.mxu0 %v595
    %6813 = vmatpush1.msra.mxu0 %v594
    %6814 = vmatprep.subr.mxu0 %v601
    %6815 = vmatpush1.msra.mxu0 %v600
    %6816 = vmatprep.subr.mxu0 %v607
    %6817 = vmatpush1.msra.mxu0 %v606
    %6818 = vmatprep.subr.mxu0 %v613
    %6819 = vmatpush1.msra.mxu0 %v612
    %6820 = vmatprep.subr.mxu0 %v619
    %6821 = vmatpush1.msra.mxu0 %v618
    %6822 = vmatprep.subr.mxu0 %v625
    %6823 = vmatpush1.msra.mxu0 %v624
    %6824 = vmatprep.subr.mxu0 %v631
    %6825 = vmatpush1.msra.mxu0 %v630
    %6826 = vmatprep.subr.mxu0 %v637
    %6827 = vmatpush1.msra.mxu0 %v636
    %6828 = vmatprep.subr.mxu0 %v643
    %6829 = vmatpush1.msra.mxu0 %v642
    %6830 = vmatprep.subr.mxu0 %v649
    %6831 = vmatpush1.msra.mxu0 %v648
    %6832 = vmatprep.subr.mxu0 %v655
    %6833 = vmatpush1.msra.mxu0 %v654
    %6834 = vmatprep.subr.mxu0 %v661
    %6835 = vmatpush1.msra.mxu0 %v660
    %6836 = vmatprep.subr.mxu0 %v667
    %6837 = vmatpush1.msra.mxu0 %v666
    %6838 = vmatprep.subr.mxu0 %v673
    %6839 = vmatpush1.msra.mxu0 %v672
    %6840 = vmatprep.subr.mxu0 %v679
    %6841 = vmatpush1.msra.mxu0 %v678
    %6842 = vmatprep.mubr.f32.mxu0 %v6635
    %6843 = vmatmul.mubr.f32.gmra.mrb[0].mxu0 %v6634
    %v6844 = vpop.f32.mrb[0].mxu0
    %v6845 = vadd.f32 %v1427, %v6844
    %v6846 = vpop.f32.mrb[0].mxu0
    %v6847 = vadd.f32 %v1431, %v6846
    %6848 = vdwg.mxu0
    %6849 = vmatprep.subr.mxu0 %v295
    %6850 = vmatpush1.msra.mxu0 %v294
    %6851 = vmatprep.subr.mxu0 %v301
    %6852 = vmatpush1.msra.mxu0 %v300
    %6853 = vmatprep.subr.mxu0 %v307
    %6854 = vmatpush1.msra.mxu0 %v306
    %6855 = vmatprep.subr.mxu0 %v313
    %6856 = vmatpush1.msra.mxu0 %v312
    %6857 = vmatprep.subr.mxu0 %v319
    %6858 = vmatpush1.msra.mxu0 %v318
    %6859 = vmatprep.subr.mxu0 %v325
    %6860 = vmatpush1.msra.mxu0 %v324
    %6861 = vmatprep.subr.mxu0 %v331
    %6862 = vmatpush1.msra.mxu0 %v330
    %6863 = vmatprep.subr.mxu0 %v337
    %6864 = vmatpush1.msra.mxu0 %v336
    %6865 = vmatprep.subr.mxu0 %v343
    %6866 = vmatpush1.msra.mxu0 %v342
    %6867 = vmatprep.subr.mxu0 %v349
    %6868 = vmatpush1.msra.mxu0 %v348
    %6869 = vmatprep.subr.mxu0 %v355
    %6870 = vmatpush1.msra.mxu0 %v354
    %6871 = vmatprep.subr.mxu0 %v361
    %6872 = vmatpush1.msra.mxu0 %v360
    %6873 = vmatprep.subr.mxu0 %v367
    %6874 = vmatpush1.msra.mxu0 %v366
    %6875 = vmatprep.subr.mxu0 %v373
    %6876 = vmatpush1.msra.mxu0 %v372
    %6877 = vmatprep.subr.mxu0 %v379
    %6878 = vmatpush1.msra.mxu0 %v378
    %6879 = vmatprep.subr.mxu0 %v385
    %6880 = vmatpush1.msra.mxu0 %v384
    %6881 = vmatprep.subr.mxu0 %v391
    %6882 = vmatpush1.msra.mxu0 %v390
    %6883 = vmatprep.subr.mxu0 %v397
    %6884 = vmatpush1.msra.mxu0 %v396
    %6885 = vmatprep.subr.mxu0 %v403
    %6886 = vmatpush1.msra.mxu0 %v402
    %6887 = vmatprep.subr.mxu0 %v409
    %6888 = vmatpush1.msra.mxu0 %v408
    %6889 = vmatprep.subr.mxu0 %v415
    %6890 = vmatpush1.msra.mxu0 %v414
    %6891 = vmatprep.subr.mxu0 %v421
    %6892 = vmatpush1.msra.mxu0 %v420
    %6893 = vmatprep.subr.mxu0 %v427
    %6894 = vmatpush1.msra.mxu0 %v426
    %6895 = vmatprep.subr.mxu0 %v433
    %6896 = vmatpush1.msra.mxu0 %v432
    %6897 = vmatprep.subr.mxu0 %v439
    %6898 = vmatpush1.msra.mxu0 %v438
    %6899 = vmatprep.subr.mxu0 %v445
    %6900 = vmatpush1.msra.mxu0 %v444
    %6901 = vmatprep.subr.mxu0 %v451
    %6902 = vmatpush1.msra.mxu0 %v450
    %6903 = vmatprep.subr.mxu0 %v457
    %6904 = vmatpush1.msra.mxu0 %v456
    %6905 = vmatprep.subr.mxu0 %v463
    %6906 = vmatpush1.msra.mxu0 %v462
    %6907 = vmatprep.subr.mxu0 %v469
    %6908 = vmatpush1.msra.mxu0 %v468
    %6909 = vmatprep.subr.mxu0 %v475
    %6910 = vmatpush1.msra.mxu0 %v474
    %6911 = vmatprep.subr.mxu0 %v481
    %6912 = vmatpush1.msra.mxu0 %v480
    %6913 = vmatprep.mubr.f32.mxu0 %v6364
    %6914 = vmatmul.mubr.f32.gmra.mrb[0].mxu0 %v6363
    %v6915 = vpop.f32.mrb[0].mxu0
    %v6916 = vadd.f32 0.0, %v6915
    %v6917 = vpop.f32.mrb[0].mxu0
    %v6918 = vadd.f32 0.0, %v6917
    %6919 = vdwg.mxu0
    %6920 = vmatprep.subr.mxu0 %v297
    %6921 = vmatpush1.msra.mxu0 %v296
    %6922 = vmatprep.subr.mxu0 %v303
    %6923 = vmatpush1.msra.mxu0 %v302
    %6924 = vmatprep.subr.mxu0 %v309
    %6925 = vmatpush1.msra.mxu0 %v308
    %6926 = vmatprep.subr.mxu0 %v315
    %6927 = vmatpush1.msra.mxu0 %v314
    %6928 = vmatprep.subr.mxu0 %v321
    %6929 = vmatpush1.msra.mxu0 %v320
    %6930 = vmatprep.subr.mxu0 %v327
    %6931 = vmatpush1.msra.mxu0 %v326
    %6932 = vmatprep.subr.mxu0 %v333
    %6933 = vmatpush1.msra.mxu0 %v332
    %6934 = vmatprep.subr.mxu0 %v339
    %6935 = vmatpush1.msra.mxu0 %v338
    %6936 = vmatprep.subr.mxu0 %v345
    %6937 = vmatpush1.msra.mxu0 %v344
    %6938 = vmatprep.subr.mxu0 %v351
    %6939 = vmatpush1.msra.mxu0 %v350
    %6940 = vmatprep.subr.mxu0 %v357
    %6941 = vmatpush1.msra.mxu0 %v356
    %6942 = vmatprep.subr.mxu0 %v363
    %6943 = vmatpush1.msra.mxu0 %v362
    %6944 = vmatprep.subr.mxu0 %v369
    %6945 = vmatpush1.msra.mxu0 %v368
    %6946 = vmatprep.subr.mxu0 %v375
    %6947 = vmatpush1.msra.mxu0 %v374
    %6948 = vmatprep.subr.mxu0 %v381
    %6949 = vmatpush1.msra.mxu0 %v380
    %6950 = vmatprep.subr.mxu0 %v387
    %6951 = vmatpush1.msra.mxu0 %v386
    %6952 = vmatprep.subr.mxu0 %v393
    %6953 = vmatpush1.msra.mxu0 %v392
    %6954 = vmatprep.subr.mxu0 %v399
    %6955 = vmatpush1.msra.mxu0 %v398
    %6956 = vmatprep.subr.mxu0 %v405
    %6957 = vmatpush1.msra.mxu0 %v404
    %6958 = vmatprep.subr.mxu0 %v411
    %6959 = vmatpush1.msra.mxu0 %v410
    %6960 = vmatprep.subr.mxu0 %v417
    %6961 = vmatpush1.msra.mxu0 %v416
    %6962 = vmatprep.subr.mxu0 %v423
    %6963 = vmatpush1.msra.mxu0 %v422
    %6964 = vmatprep.subr.mxu0 %v429
    %6965 = vmatpush1.msra.mxu0 %v428
    %6966 = vmatprep.subr.mxu0 %v435
    %6967 = vmatpush1.msra.mxu0 %v434
    %6968 = vmatprep.subr.mxu0 %v441
    %6969 = vmatpush1.msra.mxu0 %v440
    %6970 = vmatprep.subr.mxu0 %v447
    %6971 = vmatpush1.msra.mxu0 %v446
    %6972 = vmatprep.subr.mxu0 %v453
    %6973 = vmatpush1.msra.mxu0 %v452
    %6974 = vmatprep.subr.mxu0 %v459
    %6975 = vmatpush1.msra.mxu0 %v458
    %6976 = vmatprep.subr.mxu0 %v465
    %6977 = vmatpush1.msra.mxu0 %v464
    %6978 = vmatprep.subr.mxu0 %v471
    %6979 = vmatpush1.msra.mxu0 %v470
    %6980 = vmatprep.subr.mxu0 %v477
    %6981 = vmatpush1.msra.mxu0 %v476
    %6982 = vmatprep.subr.mxu0 %v483
    %6983 = vmatpush1.msra.mxu0 %v482
    %6984 = vmatprep.mubr.f32.mxu0 %v6364
    %6985 = vmatmul.mubr.f32.gmra.mrb[0].mxu0 %v6363
    %v6986 = vpop.f32.mrb[0].mxu0
    %v6987 = vadd.f32 0.0, %v6986
    %v6988 = vpop.f32.mrb[0].mxu0
    %v6989 = vadd.f32 0.0, %v6988
    %6990 = vdwg.mxu0
    %6991 = vmatprep.subr.mxu0 %v299
    %6992 = vmatpush1.msra.mxu0 %v298
    %6993 = vmatprep.subr.mxu0 %v305
    %6994 = vmatpush1.msra.mxu0 %v304
    %6995 = vmatprep.subr.mxu0 %v311
    %6996 = vmatpush1.msra.mxu0 %v310
    %6997 = vmatprep.subr.mxu0 %v317
    %6998 = vmatpush1.msra.mxu0 %v316
    %6999 = vmatprep.subr.mxu0 %v323
    %7000 = vmatpush1.msra.mxu0 %v322
    %7001 = vmatprep.subr.mxu0 %v329
    %7002 = vmatpush1.msra.mxu0 %v328
    %7003 = vmatprep.subr.mxu0 %v335
    %7004 = vmatpush1.msra.mxu0 %v334
    %7005 = vmatprep.subr.mxu0 %v341
    %7006 = vmatpush1.msra.mxu0 %v340
    %7007 = vmatprep.subr.mxu0 %v347
    %7008 = vmatpush1.msra.mxu0 %v346
    %7009 = vmatprep.subr.mxu0 %v353
    %7010 = vmatpush1.msra.mxu0 %v352
    %7011 = vmatprep.subr.mxu0 %v359
    %7012 = vmatpush1.msra.mxu0 %v358
    %7013 = vmatprep.subr.mxu0 %v365
    %7014 = vmatpush1.msra.mxu0 %v364
    %7015 = vmatprep.subr.mxu0 %v371
    %7016 = vmatpush1.msra.mxu0 %v370
    %7017 = vmatprep.subr.mxu0 %v377
    %7018 = vmatpush1.msra.mxu0 %v376
    %7019 = vmatprep.subr.mxu0 %v383
    %7020 = vmatpush1.msra.mxu0 %v382
    %7021 = vmatprep.subr.mxu0 %v389
    %7022 = vmatpush1.msra.mxu0 %v388
    %7023 = vmatprep.subr.mxu0 %v395
    %7024 = vmatpush1.msra.mxu0 %v394
    %7025 = vmatprep.subr.mxu0 %v401
    %7026 = vmatpush1.msra.mxu0 %v400
    %7027 = vmatprep.subr.mxu0 %v407
    %7028 = vmatpush1.msra.mxu0 %v406
    %7029 = vmatprep.subr.mxu0 %v413
    %7030 = vmatpush1.msra.mxu0 %v412
    %7031 = vmatprep.subr.mxu0 %v419
    %7032 = vmatpush1.msra.mxu0 %v418
    %7033 = vmatprep.subr.mxu0 %v425
    %7034 = vmatpush1.msra.mxu0 %v424
    %7035 = vmatprep.subr.mxu0 %v431
    %7036 = vmatpush1.msra.mxu0 %v430
    %7037 = vmatprep.subr.mxu0 %v437
    %7038 = vmatpush1.msra.mxu0 %v436
    %7039 = vmatprep.subr.mxu0 %v443
    %7040 = vmatpush1.msra.mxu0 %v442
    %7041 = vmatprep.subr.mxu0 %v449
    %7042 = vmatpush1.msra.mxu0 %v448
    %7043 = vmatprep.subr.mxu0 %v455
    %7044 = vmatpush1.msra.mxu0 %v454
    %7045 = vmatprep.subr.mxu0 %v461
    %7046 = vmatpush1.msra.mxu0 %v460
    %7047 = vmatprep.subr.mxu0 %v467
    %7048 = vmatpush1.msra.mxu0 %v466
    %7049 = vmatprep.subr.mxu0 %v473
    %7050 = vmatpush1.msra.mxu0 %v472
    %7051 = vmatprep.subr.mxu0 %v479
    %7052 = vmatpush1.msra.mxu0 %v478
    %7053 = vmatprep.subr.mxu0 %v485
    %7054 = vmatpush1.msra.mxu0 %v484
    %7055 = vmatprep.mubr.f32.mxu0 %v6364
    %7056 = vmatmul.mubr.f32.gmra.mrb[0].mxu0 %v6363
    %v7057 = vpop.f32.mrb[0].mxu0
    %v7058 = vadd.f32 0.0, %v7057
    %v7059 = vpop.f32.mrb[0].mxu0
    %v7060 = vadd.f32 0.0, %v7059
    %7061 = vdwg.mxu0
    %v7062 = vadd.f32 %v6703, %v6916
    %v7063 = vadd.f32 %v6705, %v6918
    %v7064 = vxor.u32 %v7062, 2147483648
    %v7065 = vxor.u32 %v7063, 2147483648
    %v7066 = vmul.f32 %v7064, 1.442695
    %v7067 = vpow.pop %v7066
    %v7068 = vmul.f32 %v7065, 1.442695
    %v7069 = vpow.pop %v7068
    %v7070 = vadd.f32 %v7067, 1.0
    %v7071 = vadd.f32 %v7069, 1.0
    %v7072 = vrcp.pop %v7070
    %v7073 = vmul.f32 1.0, %v7072
    %v7074 = vrcp.pop %v7071
    %v7075 = vmul.f32 1.0, %v7074
    %v7076 = vadd.f32 %v6774, %v6987
    %v7077 = vadd.f32 %v6776, %v6989
    %v7078 = vxor.u32 %v7076, 2147483648
    %v7079 = vxor.u32 %v7077, 2147483648
    %v7080 = vmul.f32 %v7078, 1.442695
    %v7081 = vpow.pop %v7080
    %v7082 = vmul.f32 %v7079, 1.442695
    %v7083 = vpow.pop %v7082
    %v7084 = vadd.f32 %v7081, 1.0
    %v7085 = vadd.f32 %v7083, 1.0
    %v7086 = vrcp.pop %v7084
    %v7087 = vmul.f32 1.0, %v7086
    %v7088 = vrcp.pop %v7085
    %v7089 = vmul.f32 1.0, %v7088
    %v7090 = vadd.f32 %v7058, %v1896
    %v7091 = vadd.f32 %v7060, %v1900
    %v7092 = vmul.f32 %v7073, %v7090
    %v7093 = vmul.f32 %v7075, %v7091
    %v7094 = vadd.f32 %v6845, %v7092
    %v7095 = vadd.f32 %v6847, %v7093
    %v7096 = vtanh.pop %v7094
    %v7097 = vtanh.pop %v7095
    %v7098 = vsub.f32 1.0, %v7087
    %v7099 = vsub.f32 1.0, %v7089
    %v7100 = vmul.f32 %v7098, %v7096
    %v7101 = vmul.f32 %v7099, %v7097
    %v7102 = vmul.f32 %v7087, %v6363
    %v7103 = vmul.f32 %v7089, %v6364
    %v7104 = vadd.f32 %v7100, %v7102
    %v7105 = vadd.f32 %v7101, %v7103
    %vm7106 = vcmp.eq.s32.totalorder %v1132, 8
    %v7107 = vsel %vm7106, 1, 0
    %7108 = vset.pattern.permute.xlu0 0
    %7109 = vperm.xlu0 %7108, %v7107
    %v7110 = vpop.permute.xlu0 %7109
    %vm7111 = vcmp.eq.s32.totalorder %v7110, 1
    %v7112 = vsel %vm7111, %v7104, %v6371
    %v7113 = vsel %vm7111, %v7105, %v6372
    %7114 = vst [vmem:[#allocation11] sm:$0xff] %v7112
    %7115 = vst [vmem:[#allocation11 + $0x8] sm:$0xff] %v7113
    // Predicated region
    $region58: #{tpu_custom_call.1} parent=1 // pred_check
      _
    $region59: #{tpu_custom_call.1} parent=1 // pred_check_branch
      %7117 = sbr.rel (0) target = $region61
    $region60: #{tpu_custom_call.1} parent=1 // pred_region
      %s7119 = ssub.s32 256, 256
      %7120 = vsyncadd [#allocation5], %s7119
      %s7122 = sshll.u32 [#allocation11], 4
      %s7123 = int_to_ptr.vmem [resolvable:$true] %s7122
      %7125 = dma.vmem_to_hbm [thread:$0]  %s7123, 256, %s10, [#allocation5]
    $region61: #{tpu_custom_call.1} parent=1 // pred_fallthru
      _
    // Predicated region
    $region62: #{tpu_custom_call.1} parent=1 // pred_check
      _
    $region63: #{tpu_custom_call.1} parent=1 // pred_check_branch
      %7127 = sbr.rel (0) target = $region65
    $region64: #{tpu_custom_call.1} parent=1 // pred_region
      %7128 = dma.done [#allocation5], 256
    $region65: #{tpu_custom_call.1} parent=1 // pred_fallthru
      _
    %7129 = vsyncpa [#allocation4], 1
    %7130 = vsyncpa [#allocation7], 1
    %7131 = vsyncpa [#allocation10], 1
    %7132 = vsyncpa [#allocation5], 1

</llo_original>
